<compile_context>
chip_gen: v5e
topology: v5e:2x2
jax: 0.10.0
libtpu: 0.0.40
codegen_flags: <defaults>
</compile_context>

<pallas_src>
import functools

import jax
import jax.numpy as jnp
from jax.experimental import pallas as pl
from jax.experimental.pallas import tpu as pltpu


# ============================================================================
# Pallas kernels
# ============================================================================
def fc_bn_relu_kernel(x_ref, w_ref, scale_ref, shift_ref, o_ref):
    """Layer 1: whole-batch (B, Cin) x (Cin, 16*Cout) matmul + folded BN + ReLU."""
    acc = jnp.dot(x_ref[...], w_ref[...], preferred_element_type=jnp.float32)
    y = acc * scale_ref[...] + shift_ref[...]
    o_ref[...] = jnp.maximum(y, 0.0).astype(o_ref.dtype)


def deconv_phase_kernel(x_ref, w_ref, scale_ref, shift_ref, o_ref, *, H, W, act):
    """One output phase of a stride-2 ConvTranspose2d (+folded BN +act), one item.

    x_ref:     (1, H+1, W+1, Cin)  phase-shifted, edge-padded input window
    w_ref:     (1, 4*Cin, Cout)    phase weight, 2x2 taps stacked along rows
    scale_ref: (1, Cout)           folded BN scale
    shift_ref: (1, Cout)           folded BN shift (+ conv bias)
    o_ref:     (1, H*W, Cout)      this phase's output pixels (row-major)
    """
    x = x_ref[0]                                   # (H+1, W+1, Cin)
    Cin = x.shape[-1]
    taps = []
    for a in range(2):
        for b in range(2):
            taps.append(x[a:a + H, b:b + W, :].reshape(H * W, Cin))
    slab = jnp.concatenate(taps, axis=1)           # (H*W, 4*Cin) im2col slab
    acc = jnp.dot(slab, w_ref[0], preferred_element_type=jnp.float32)
    y = acc * scale_ref[...] + shift_ref[...]
    if act == "relu":
        y = jnp.maximum(y, 0.0)
    elif act == "tanh":
        y = jnp.tanh(y)
    o_ref[0] = y.astype(o_ref.dtype)


def deconv_phase_cout1_kernel(x_ref, w_ref, bias_ref, o_ref, *, H, W):
    """Final layer (Cout=1): VPU weighted-sum over Cin + bias + tanh.

    x_ref:    (1, H+1, W+1, Cin)
    w_ref:    (1, 4, Cin)   per-tap weight vectors for this phase
    bias_ref: (1, 1)
    o_ref:    (1, H, W)     lane-dense phase output
    """
    x = x_ref[0]                                   # (H+1, W+1, Cin)
    Cin = x.shape[-1]
    w_all = w_ref[0].astype(jnp.float32)           # (4, Cin)
    acc = jnp.zeros((H, W), jnp.float32)
    t = 0
    for a in range(2):
        for b in range(2):
            xs = x[a:a + H, b:b + W, :].astype(jnp.float32)
            wv = w_all[t:t + 1, :].reshape(1, 1, Cin)
            acc = acc + jnp.sum(xs * wv, axis=-1)  # lane reduce over Cin
            t += 1
    o_ref[0] = jnp.tanh(acc + bias_ref[...]).astype(o_ref.dtype)


# ============================================================================
# Layer wrappers (layout glue in JAX, compute in Pallas)
# ============================================================================
def _phase_views(x_nhwc, compute_dtype):
    """(B,H,W,Cin) -> (B*4, H+1, W+1, Cin): edge-pad by 1 and take the 4
    phase-shifted windows of the sub-pixel decomposition.  Pure layout glue."""
    B, H, W, Cin = x_nhwc.shape
    xp = jnp.pad(x_nhwc, ((0, 0), (1, 1), (1, 1), (0, 0))).astype(compute_dtype)
    views = [xp[:, py:py + H + 1, px:px + W + 1, :]
             for py in range(2) for px in range(2)]
    x5 = jnp.stack(views, axis=1)                  # (B, 4, H+1, W+1, Cin)
    return x5.reshape(B * 4, H + 1, W + 1, Cin)


def deconv1_1x1(x_vec, w1m, scale16, shift16):
    """Layer 1: ConvTranspose2d(Cin0, Cout, 4, 1, 0) on a 1x1 input == matmul."""
    B, Cin0 = x_vec.shape
    N = w1m.shape[1]
    cout = N // 16
    flops = 2 * B * Cin0 * N
    bytes_accessed = B * Cin0 * 2 + Cin0 * N * 2 + 2 * N * 4 + B * N * 4
    out = pl.pallas_call(
        fc_bn_relu_kernel,
        out_shape=jax.ShapeDtypeStruct((B, N), jnp.float32),
        grid=(1,),
        in_specs=[
            pl.BlockSpec((B, Cin0), lambda i: (0, 0)),
            pl.BlockSpec((Cin0, N), lambda i: (0, 0)),
            pl.BlockSpec((1, N), lambda i: (0, 0)),
            pl.BlockSpec((1, N), lambda i: (0, 0)),
        ],
        out_specs=pl.BlockSpec((B, N), lambda i: (0, 0)),
        compiler_params=pltpu.CompilerParams(dimension_semantics=("arbitrary",)),
        cost_estimate=pl.CostEstimate(flops=flops, transcendentals=0,
                                      bytes_accessed=bytes_accessed),
    )(x_vec.astype(w1m.dtype), w1m, scale16, shift16)
    return out.reshape(B, 4, 4, cout)              # NHWC 4x4 (glue reshape)


def deconv_stride2(x_nhwc, wph, scale, shift, *, act):
    """Stride-2 ConvTranspose2d (K=4, pad=1) + folded BN + activation."""
    B, H, W, Cin = x_nhwc.shape
    Cout = wph.shape[-1]
    OH, OW = 2 * H, 2 * W
    x5 = _phase_views(x_nhwc, wph.dtype)           # (B*4, H+1, W+1, Cin)

    flops = 2 * B * 4 * (H * W) * (4 * Cin) * Cout
    bytes_accessed = (x5.size * x5.dtype.itemsize
                      + wph.size * wph.dtype.itemsize
                      + (scale.size + shift.size) * 4
                      + B * 4 * H * W * Cout * 4)
    out = pl.pallas_call(
        functools.partial(deconv_phase_kernel, H=H, W=W, act=act),
        out_shape=jax.ShapeDtypeStruct((B * 4, H * W, Cout), jnp.float32),
        grid=(4, B),                               # batch innermost: weight reuse
        in_specs=[
            pl.BlockSpec((1, H + 1, W + 1, Cin), lambda p, b: (b * 4 + p, 0, 0, 0)),
            pl.BlockSpec((1, 4 * Cin, Cout), lambda p, b: (p, 0, 0)),
            pl.BlockSpec((1, Cout), lambda p, b: (0, 0)),
            pl.BlockSpec((1, Cout), lambda p, b: (0, 0)),
        ],
        out_specs=pl.BlockSpec((1, H * W, Cout), lambda p, b: (b * 4 + p, 0, 0)),
        compiler_params=pltpu.CompilerParams(
            dimension_semantics=("parallel", "parallel")),
        cost_estimate=pl.CostEstimate(flops=flops, transcendentals=0,
                                      bytes_accessed=bytes_accessed),
    )(x5, wph, scale, shift)

    # Interleave the 4 phase outputs into the 2x-upsampled NHWC result. (glue)
    out = out.reshape(B, 2, 2, H, W, Cout)
    out = jnp.transpose(out, (0, 3, 1, 4, 2, 5)).reshape(B, OH, OW, Cout)
    return out


def deconv_stride2_cout1(x_nhwc, w5, bias):
    """Final stride-2 ConvTranspose2d with Cout=1, + bias + tanh."""
    B, H, W, Cin = x_nhwc.shape
    OH, OW = 2 * H, 2 * W
    x5 = _phase_views(x_nhwc, w5.dtype)            # (B*4, H+1, W+1, Cin)

    flops = 2 * B * 4 * H * W * 4 * Cin
    bytes_accessed = (x5.size * x5.dtype.itemsize
                      + w5.size * w5.dtype.itemsize + 4 + B * 4 * H * W * 4)
    out = pl.pallas_call(
        functools.partial(deconv_phase_cout1_kernel, H=H, W=W),
        out_shape=jax.ShapeDtypeStruct((B * 4, H, W), jnp.float32),
        grid=(4, B),
        in_specs=[
            pl.BlockSpec((1, H + 1, W + 1, Cin), lambda p, b: (b * 4 + p, 0, 0, 0)),
            pl.BlockSpec((1, 4, Cin), lambda p, b: (p, 0, 0)),
            pl.BlockSpec((1, 1), lambda p, b: (0, 0)),
        ],
        out_specs=pl.BlockSpec((1, H, W), lambda p, b: (b * 4 + p, 0, 0)),
        compiler_params=pltpu.CompilerParams(
            dimension_semantics=("parallel", "parallel")),
        cost_estimate=pl.CostEstimate(flops=flops, transcendentals=B * OH * OW,
                                      bytes_accessed=bytes_accessed),
    )(x5, w5, bias)

    out = out.reshape(B, 2, 2, H, W)
    out = jnp.transpose(out, (0, 3, 1, 4, 2)).reshape(B, OH, OW)
    return out[..., None]                          # (B, OH, OW, 1)


# ============================================================================
# Parameter construction (deterministic, synthetic) and one-time repacking
# ============================================================================
def make_params(key, d, num_classes, embedding_dim):
    ks = jax.random.split(key, 32)
    it = iter(ks)

    def nrm(shape, std):
        return std * jax.random.normal(next(it), shape, jnp.float32)

    def uni(shape, lo, hi):
        return jax.random.uniform(next(it), shape, jnp.float32, lo, hi)

    p = {}
    p["emb"] = nrm((num_classes, embedding_dim), 1.0)

    def deconv(cin, cout):
        return {"w": nrm((cin, cout, 4, 4), 0.02),
                "b": jnp.zeros((cout,), jnp.float32)}

    def bn(c):
        return {"gamma": uni((c,), 0.5, 1.5),
                "beta": nrm((c,), 0.1),
                "rm": nrm((c,), 0.1),
                "rv": uni((c,), 0.5, 1.5)}

    cin0 = 100 + embedding_dim
    p["deconv1"], p["bn1"] = deconv(cin0, d * 8), bn(d * 8)
    p["deconv2"], p["bn2"] = deconv(d * 8, d * 4), bn(d * 4)
    p["deconv3"], p["bn3"] = deconv(d * 4, d * 2), bn(d * 2)
    p["deconv4"], p["bn4"] = deconv(d * 2, d), bn(d)
    p["deconv5"] = deconv(d, 1)
    return p


def fold_bn(conv_bias, bn, eps=1e-5):
    """Fold eval-mode BatchNorm (and the conv bias) into scale/shift."""
    scale = bn["gamma"] / jnp.sqrt(bn["rv"] + eps)
    shift = bn["beta"] - bn["rm"] * scale + conv_bias * scale
    return scale, shift


def make_phase_weight(w_pt):
    """(Cin, Cout, 4, 4) PyTorch ConvTranspose2d weight -> (4, 4*Cin, Cout).

    Phase p = py*2 + px, taps t = a*2 + b stacked along rows:
    rows [t*Cin:(t+1)*Cin] hold w[ci, co, 3 - 2a - py, 3 - 2b - px]."""
    phases = []
    for py in range(2):
        for px in range(2):
            taps = []
            for a in range(2):
                for b in range(2):
                    taps.append(w_pt[:, :, 3 - 2 * a - py, 3 - 2 * b - px])
            phases.append(jnp.concatenate(taps, axis=0))   # (4*Cin, Cout)
    return jnp.stack(phases, axis=0)                        # (4, 4*Cin, Cout)


def make_phase_weight_cout1(w_pt):
    """(Cin, 1, 4, 4) -> (4 phases, 4 taps, Cin) for the VPU weighted-sum path."""
    phases = []
    for py in range(2):
        for px in range(2):
            taps = []
            for a in range(2):
                for b in range(2):
                    taps.append(w_pt[:, 0, 3 - 2 * a - py, 3 - 2 * b - px])
            phases.append(jnp.stack(taps, axis=0))          # (4, Cin)
    return jnp.stack(phases, axis=0)                         # (4, 4, Cin)


def prepare_params(raw, eps=1e-5):
    """One-time repack: phase-decomposed weights, folded BN, bf16 MXU weights."""
    prep = {"emb": raw["emb"]}

    w = raw["deconv1"]["w"]                                  # (Cin0, Cout, 4, 4)
    cin0, cout1 = w.shape[0], w.shape[1]
    s, t = fold_bn(raw["deconv1"]["b"], raw["bn1"], eps)
    prep["l1"] = {
        "w": jnp.transpose(w, (0, 2, 3, 1)).reshape(cin0, 16 * cout1)
                 .astype(jnp.bfloat16),
        "scale": jnp.tile(s, 16).reshape(1, 16 * cout1).astype(jnp.float32),
        "shift": jnp.tile(t, 16).reshape(1, 16 * cout1).astype(jnp.float32),
    }

    for i in (2, 3, 4):
        w = raw[f"deconv{i}"]["w"]
        cout = w.shape[1]
        s, t = fold_bn(raw[f"deconv{i}"]["b"], raw[f"bn{i}"], eps)
        prep[f"l{i}"] = {
            "w": make_phase_weight(w).astype(jnp.bfloat16),   # (4, 4*Cin, Cout)
            "scale": s.reshape(1, cout).astype(jnp.float32),
            "shift": t.reshape(1, cout).astype(jnp.float32),
        }

    w = raw["deconv5"]["w"]                                   # (Cin, 1, 4, 4)
    prep["l5"] = {
        "w": make_phase_weight_cout1(w).astype(jnp.bfloat16), # (4, 4, Cin)
        "bias": raw["deconv5"]["b"].reshape(1, 1).astype(jnp.float32),
    }
    return prep


# ============================================================================
# Full forward pass
# ============================================================================
def conditional_generator_forward(prep, noise, labels):
    emb = prep["emb"][labels]                       # (B, E) embedding gather (glue)
    x = jnp.concatenate([noise, emb], axis=1)       # (B, 100+E)

    l1 = prep["l1"]
    x = deconv1_1x1(x, l1["w"], l1["scale"], l1["shift"])          # (B,4,4,8d)
    for name in ("l2", "l3", "l4"):
        li = prep[name]
        x = deconv_stride2(x, li["w"], li["scale"], li["shift"], act="relu")
    l5 = prep["l5"]
    x = deconv_stride2_cout1(x, l5["w"], l5["bias"])               # (B,64,64,1)

    return jnp.transpose(x, (0, 3, 1, 2))           # NCHW like PyTorch


# ----------------------------------------------------------------------------
if __name__ == "__main__":
    # Small configuration consistent with the module (noise dim 100 is fixed
    # by the architecture; d scaled down for a fast synthetic run).
    d = 16
    num_classes = 10
    embedding_dim = 8
    batch = 2

    key = jax.random.PRNGKey(0)
    k_params, k_noise, k_labels = jax.random.split(key, 3)

    raw = make_params(k_params, d, num_classes, embedding_dim)
    prep = prepare_params(raw)
    noise = jax.random.normal(k_noise, (batch, 100), jnp.float32)
    labels = jax.random.randint(k_labels, (batch,), 0, num_classes)

    fwd = jax.jit(conditional_generator_forward)
    out = jax.block_until_ready(fwd(prep, noise, labels))

    assert out.shape == (batch, 1, 64, 64), out.shape
    assert out.dtype == jnp.float32
    assert bool(jnp.all(jnp.isfinite(out)))
    assert bool(jnp.all(jnp.abs(out) <= 1.0 + 1e-6))   # tanh range
    print("KERNEL_OK")
</pallas_src>

<mosaic_0001>
module attributes {stable_mosaic.version = 11 : i64} {
  func.func @fc_bn_relu_kernel(%arg0: i32, %arg1: memref<2x108xbf16, #tpu.memory_space<vmem>>, %arg2: memref<108x2048xbf16, #tpu.memory_space<vmem>>, %arg3: memref<1x2048xf32, #tpu.memory_space<vmem>>, %arg4: memref<1x2048xf32, #tpu.memory_space<vmem>>, %arg5: memref<2x2048xf32, #tpu.memory_space<vmem>>) attributes {dimension_semantics = [#tpu.dimension_semantics<arbitrary>], iteration_bounds = array<i64: 1>, scalar_prefetch = 0 : i64, scratch_operands = 0 : i64, tpu.core_type = #tpu.core_type<tc>, window_params = [{pipeline_mode = #tpu.pipeline_mode<synchronous>, transform_indices = @transform_0, window_bounds = array<i64: 2, 108>}, {pipeline_mode = #tpu.pipeline_mode<synchronous>, transform_indices = @transform_1, window_bounds = array<i64: 108, 2048>}, {pipeline_mode = #tpu.pipeline_mode<synchronous>, transform_indices = @transform_2, window_bounds = array<i64: 1, 2048>}, {pipeline_mode = #tpu.pipeline_mode<synchronous>, transform_indices = @transform_3, window_bounds = array<i64: 1, 2048>}, {pipeline_mode = #tpu.pipeline_mode<synchronous>, transform_indices = @transform_4, window_bounds = array<i64: 2, 2048>}]} {
    %c0 = arith.constant 0 : index
    %c0_0 = arith.constant 0 : index
    %0 = vector.load %arg1[%c0, %c0_0] : memref<2x108xbf16, #tpu.memory_space<vmem>>, vector<2x108xbf16>
    %c0_1 = arith.constant 0 : index
    %c0_2 = arith.constant 0 : index
    %1 = vector.load %arg2[%c0_1, %c0_2] : memref<108x2048xbf16, #tpu.memory_space<vmem>>, vector<108x2048xbf16>
    %cst = arith.constant dense<0.000000e+00> : vector<2x2048xf32>
    %2 = tpu.matmul %0, %1, %cst {dimension_numbers = #tpu.dot_dimension_numbers<[1], [0], [0], [1], [0, 0, 1, 1], [], []>} : vector<2x108xbf16>, vector<108x2048xbf16>, vector<2x2048xf32> -> vector<2x2048xf32>
    %c0_3 = arith.constant 0 : index
    %c0_4 = arith.constant 0 : index
    %3 = vector.load %arg3[%c0_3, %c0_4] : memref<1x2048xf32, #tpu.memory_space<vmem>>, vector<1x2048xf32>
    %4 = vector.broadcast %3 : vector<1x2048xf32> to vector<2x2048xf32>
    %5 = arith.mulf %2, %4 : vector<2x2048xf32>
    %c0_5 = arith.constant 0 : index
    %c0_6 = arith.constant 0 : index
    %6 = vector.load %arg4[%c0_5, %c0_6] : memref<1x2048xf32, #tpu.memory_space<vmem>>, vector<1x2048xf32>
    %7 = vector.broadcast %6 : vector<1x2048xf32> to vector<2x2048xf32>
    %8 = arith.addf %5, %7 : vector<2x2048xf32>
    %cst_7 = arith.constant 0.000000e+00 : f32
    %9 = vector.broadcast %cst_7 : f32 to vector<2x2048xf32>
    %10 = arith.maximumf %8, %9 : vector<2x2048xf32>
    %c0_8 = arith.constant 0 : index
    %c0_9 = arith.constant 0 : index
    %11 = vector.load %arg5[%c0_8, %c0_9] : memref<2x2048xf32, #tpu.memory_space<vmem>>, vector<2x2048xf32>
    tpu.vector_store %arg5[%c0_8, %c0_9], %10 {strides = array<i32>} : memref<2x2048xf32, #tpu.memory_space<vmem>>, vector<2x2048xf32>,
    return
  }
  func.func @transform_0(%arg0: i32) -> (i32, i32) {
    %c0_i32 = arith.constant 0 : i32
    %c0_i32_0 = arith.constant 0 : i32
    %c0_i32_1 = arith.constant 0 : i32
    return %c0_i32, %c0_i32_0 : i32, i32
  }
  func.func @transform_1(%arg0: i32) -> (i32, i32) {
    %c0_i32 = arith.constant 0 : i32
    %c0_i32_0 = arith.constant 0 : i32
    %c0_i32_1 = arith.constant 0 : i32
    return %c0_i32, %c0_i32_0 : i32, i32
  }
  func.func @transform_2(%arg0: i32) -> (i32, i32) {
    %c0_i32 = arith.constant 0 : i32
    %c0_i32_0 = arith.constant 0 : i32
    %c0_i32_1 = arith.constant 0 : i32
    return %c0_i32, %c0_i32_0 : i32, i32
  }
  func.func @transform_3(%arg0: i32) -> (i32, i32) {
    %c0_i32 = arith.constant 0 : i32
    %c0_i32_0 = arith.constant 0 : i32
    %c0_i32_1 = arith.constant 0 : i32
    return %c0_i32, %c0_i32_0 : i32, i32
  }
  func.func @transform_4(%arg0: i32) -> (i32, i32) {
    %c0_i32 = arith.constant 0 : i32
    %c0_i32_0 = arith.constant 0 : i32
    %c0_i32_1 = arith.constant 0 : i32
    return %c0_i32, %c0_i32_0 : i32, i32
  }
}

module attributes {stable_mosaic.version = 11 : i64} {
  func.func @deconv_phase_kernel(%arg0: i32, %arg1: i32, %arg2: memref<1x5x5x128xbf16, #tpu.memory_space<vmem>>, %arg3: memref<1x512x64xbf16, #tpu.memory_space<vmem>>, %arg4: memref<1x64xf32, #tpu.memory_space<vmem>>, %arg5: memref<1x64xf32, #tpu.memory_space<vmem>>, %arg6: memref<1x16x64xf32, #tpu.memory_space<vmem>>) attributes {dimension_semantics = [#tpu.dimension_semantics<parallel>, #tpu.dimension_semantics<parallel>], iteration_bounds = array<i64: 4, 2>, scalar_prefetch = 0 : i64, scratch_operands = 0 : i64, tpu.core_type = #tpu.core_type<tc>, window_params = [{transform_indices = @transform_0, window_bounds = array<i64: 1, 5, 5, 128>}, {transform_indices = @transform_1, window_bounds = array<i64: 1, 512, 64>}, {pipeline_mode = #tpu.pipeline_mode<synchronous>, transform_indices = @transform_2, window_bounds = array<i64: 1, 64>}, {pipeline_mode = #tpu.pipeline_mode<synchronous>, transform_indices = @transform_3, window_bounds = array<i64: 1, 64>}, {transform_indices = @transform_4, window_bounds = array<i64: 1, 16, 64>}]} {
    %c0 = arith.constant 0 : index
    %c0_0 = arith.constant 0 : index
    %c0_1 = arith.constant 0 : index
    %c0_2 = arith.constant 0 : index
    %0 = vector.load %arg2[%c0, %c0_0, %c0_1, %c0_2] : memref<1x5x5x128xbf16, #tpu.memory_space<vmem>>, vector<1x5x5x128xbf16>
    %1 = vector.shape_cast %0 : vector<1x5x5x128xbf16> to vector<5x5x128xbf16>
    %2 = vector.extract_strided_slice %1 {offsets = [0, 0, 0], sizes = [4, 4, 128], strides = [1, 1, 1]} : vector<5x5x128xbf16> to vector<4x4x128xbf16>
    %3 = vector.shape_cast %2 : vector<4x4x128xbf16> to vector<16x128xbf16>
    %4 = vector.extract_strided_slice %1 {offsets = [0, 1, 0], sizes = [4, 4, 128], strides = [1, 1, 1]} : vector<5x5x128xbf16> to vector<4x4x128xbf16>
    %5 = vector.shape_cast %4 : vector<4x4x128xbf16> to vector<16x128xbf16>
    %6 = vector.extract_strided_slice %1 {offsets = [1, 0, 0], sizes = [4, 4, 128], strides = [1, 1, 1]} : vector<5x5x128xbf16> to vector<4x4x128xbf16>
    %7 = vector.shape_cast %6 : vector<4x4x128xbf16> to vector<16x128xbf16>
    %8 = vector.extract_strided_slice %1 {offsets = [1, 1, 0], sizes = [4, 4, 128], strides = [1, 1, 1]} : vector<5x5x128xbf16> to vector<4x4x128xbf16>
    %9 = vector.shape_cast %8 : vector<4x4x128xbf16> to vector<16x128xbf16>
    %10 = tpu.concatenate %3, %5, %7, %9 in 1 : vector<16x128xbf16>, vector<16x128xbf16>, vector<16x128xbf16>, vector<16x128xbf16> -> vector<16x512xbf16>
    %c0_3 = arith.constant 0 : index
    %c0_4 = arith.constant 0 : index
    %c0_5 = arith.constant 0 : index
    %11 = vector.load %arg3[%c0_3, %c0_4, %c0_5] : memref<1x512x64xbf16, #tpu.memory_space<vmem>>, vector<1x512x64xbf16>
    %12 = vector.shape_cast %11 : vector<1x512x64xbf16> to vector<512x64xbf16>
    %cst = arith.constant dense<0.000000e+00> : vector<16x64xf32>
    %13 = tpu.matmul %10, %12, %cst {dimension_numbers = #tpu.dot_dimension_numbers<[1], [0], [0], [1], [0, 0, 1, 1], [], []>} : vector<16x512xbf16>, vector<512x64xbf16>, vector<16x64xf32> -> vector<16x64xf32>
    %c0_6 = arith.constant 0 : index
    %c0_7 = arith.constant 0 : index
    %14 = vector.load %arg4[%c0_6, %c0_7] : memref<1x64xf32, #tpu.memory_space<vmem>>, vector<1x64xf32>
    %15 = vector.broadcast %14 : vector<1x64xf32> to vector<16x64xf32>
    %16 = arith.mulf %13, %15 : vector<16x64xf32>
    %c0_8 = arith.constant 0 : index
    %c0_9 = arith.constant 0 : index
    %17 = vector.load %arg5[%c0_8, %c0_9] : memref<1x64xf32, #tpu.memory_space<vmem>>, vector<1x64xf32>
    %18 = vector.broadcast %17 : vector<1x64xf32> to vector<16x64xf32>
    %19 = arith.addf %16, %18 : vector<16x64xf32>
    %cst_10 = arith.constant 0.000000e+00 : f32
    %20 = vector.broadcast %cst_10 : f32 to vector<16x64xf32>
    %21 = arith.maximumf %19, %20 : vector<16x64xf32>
    %c0_11 = arith.constant 0 : index
    %c0_12 = arith.constant 0 : index
    %c0_13 = arith.constant 0 : index
    %22 = vector.load %arg6[%c0_11, %c0_12, %c0_13] : memref<1x16x64xf32, #tpu.memory_space<vmem>>, vector<1x16x64xf32>
    %23 = vector.shape_cast %22 : vector<1x16x64xf32> to vector<16x64xf32>
    %24 = vector.shape_cast %21 : vector<16x64xf32> to vector<1x16x64xf32>
    tpu.vector_store %arg6[%c0_11, %c0_12, %c0_13], %24 {strides = array<i32>} : memref<1x16x64xf32, #tpu.memory_space<vmem>>, vector<1x16x64xf32>,
    return
  }
  func.func @transform_0(%arg0: i32, %arg1: i32) -> (i32, i32, i32, i32) {
    %c4_i32 = arith.constant 4 : i32
    %0 = arith.muli %arg1, %c4_i32 : i32
    %1 = arith.addi %0, %arg0 : i32
    %c0_i32 = arith.constant 0 : i32
    %c0_i32_0 = arith.constant 0 : i32
    %c0_i32_1 = arith.constant 0 : i32
    %c0_i32_2 = arith.constant 0 : i32
    return %1, %c0_i32, %c0_i32_0, %c0_i32_1 : i32, i32, i32, i32
  }
  func.func @transform_1(%arg0: i32, %arg1: i32) -> (i32, i32, i32) {
    %c0_i32 = arith.constant 0 : i32
    %c0_i32_0 = arith.constant 0 : i32
    %c0_i32_1 = arith.constant 0 : i32
    return %arg0, %c0_i32, %c0_i32_0 : i32, i32, i32
  }
  func.func @transform_2(%arg0: i32, %arg1: i32) -> (i32, i32) {
    %c0_i32 = arith.constant 0 : i32
    %c0_i32_0 = arith.constant 0 : i32
    %c0_i32_1 = arith.constant 0 : i32
    return %c0_i32, %c0_i32_0 : i32, i32
  }
  func.func @transform_3(%arg0: i32, %arg1: i32) -> (i32, i32) {
    %c0_i32 = arith.constant 0 : i32
    %c0_i32_0 = arith.constant 0 : i32
    %c0_i32_1 = arith.constant 0 : i32
    return %c0_i32, %c0_i32_0 : i32, i32
  }
  func.func @transform_4(%arg0: i32, %arg1: i32) -> (i32, i32, i32) {
    %c4_i32 = arith.constant 4 : i32
    %0 = arith.muli %arg1, %c4_i32 : i32
    %1 = arith.addi %0, %arg0 : i32
    %c0_i32 = arith.constant 0 : i32
    %c0_i32_0 = arith.constant 0 : i32
    %c0_i32_1 = arith.constant 0 : i32
    return %1, %c0_i32, %c0_i32_0 : i32, i32, i32
  }
}

module attributes {stable_mosaic.version = 11 : i64} {
  func.func @deconv_phase_kernel(%arg0: i32, %arg1: i32, %arg2: memref<1x9x9x64xbf16, #tpu.memory_space<vmem>>, %arg3: memref<1x256x32xbf16, #tpu.memory_space<vmem>>, %arg4: memref<1x32xf32, #tpu.memory_space<vmem>>, %arg5: memref<1x32xf32, #tpu.memory_space<vmem>>, %arg6: memref<1x64x32xf32, #tpu.memory_space<vmem>>) attributes {dimension_semantics = [#tpu.dimension_semantics<parallel>, #tpu.dimension_semantics<parallel>], iteration_bounds = array<i64: 4, 2>, scalar_prefetch = 0 : i64, scratch_operands = 0 : i64, tpu.core_type = #tpu.core_type<tc>, window_params = [{transform_indices = @transform_0, window_bounds = array<i64: 1, 9, 9, 64>}, {transform_indices = @transform_1, window_bounds = array<i64: 1, 256, 32>}, {pipeline_mode = #tpu.pipeline_mode<synchronous>, transform_indices = @transform_2, window_bounds = array<i64: 1, 32>}, {pipeline_mode = #tpu.pipeline_mode<synchronous>, transform_indices = @transform_3, window_bounds = array<i64: 1, 32>}, {transform_indices = @transform_4, window_bounds = array<i64: 1, 64, 32>}]} {
    %c0 = arith.constant 0 : index
    %c0_0 = arith.constant 0 : index
    %c0_1 = arith.constant 0 : index
    %c0_2 = arith.constant 0 : index
    %0 = vector.load %arg2[%c0, %c0_0, %c0_1, %c0_2] : memref<1x9x9x64xbf16, #tpu.memory_space<vmem>>, vector<1x9x9x64xbf16>
    %1 = vector.shape_cast %0 : vector<1x9x9x64xbf16> to vector<9x9x64xbf16>
    %2 = vector.extract_strided_slice %1 {offsets = [0, 0, 0], sizes = [8, 8, 64], strides = [1, 1, 1]} : vector<9x9x64xbf16> to vector<8x8x64xbf16>
    %3 = vector.shape_cast %2 : vector<8x8x64xbf16> to vector<64x64xbf16>
    %4 = vector.extract_strided_slice %1 {offsets = [0, 1, 0], sizes = [8, 8, 64], strides = [1, 1, 1]} : vector<9x9x64xbf16> to vector<8x8x64xbf16>
    %5 = vector.shape_cast %4 : vector<8x8x64xbf16> to vector<64x64xbf16>
    %6 = vector.extract_strided_slice %1 {offsets = [1, 0, 0], sizes = [8, 8, 64], strides = [1, 1, 1]} : vector<9x9x64xbf16> to vector<8x8x64xbf16>
    %7 = vector.shape_cast %6 : vector<8x8x64xbf16> to vector<64x64xbf16>
    %8 = vector.extract_strided_slice %1 {offsets = [1, 1, 0], sizes = [8, 8, 64], strides = [1, 1, 1]} : vector<9x9x64xbf16> to vector<8x8x64xbf16>
    %9 = vector.shape_cast %8 : vector<8x8x64xbf16> to vector<64x64xbf16>
    %10 = tpu.concatenate %3, %5, %7, %9 in 1 : vector<64x64xbf16>, vector<64x64xbf16>, vector<64x64xbf16>, vector<64x64xbf16> -> vector<64x256xbf16>
    %c0_3 = arith.constant 0 : index
    %c0_4 = arith.constant 0 : index
    %c0_5 = arith.constant 0 : index
    %11 = vector.load %arg3[%c0_3, %c0_4, %c0_5] : memref<1x256x32xbf16, #tpu.memory_space<vmem>>, vector<1x256x32xbf16>
    %12 = vector.shape_cast %11 : vector<1x256x32xbf16> to vector<256x32xbf16>
    %cst = arith.constant dense<0.000000e+00> : vector<64x32xf32>
    %13 = tpu.matmul %10, %12, %cst {dimension_numbers = #tpu.dot_dimension_numbers<[1], [0], [0], [1], [0, 0, 1, 1], [], []>} : vector<64x256xbf16>, vector<256x32xbf16>, vector<64x32xf32> -> vector<64x32xf32>
    %c0_6 = arith.constant 0 : index
    %c0_7 = arith.constant 0 : index
    %14 = vector.load %arg4[%c0_6, %c0_7] : memref<1x32xf32, #tpu.memory_space<vmem>>, vector<1x32xf32>
    %15 = vector.broadcast %14 : vector<1x32xf32> to vector<64x32xf32>
    %16 = arith.mulf %13, %15 : vector<64x32xf32>
    %c0_8 = arith.constant 0 : index
    %c0_9 = arith.constant 0 : index
    %17 = vector.load %arg5[%c0_8, %c0_9] : memref<1x32xf32, #tpu.memory_space<vmem>>, vector<1x32xf32>
    %18 = vector.broadcast %17 : vector<1x32xf32> to vector<64x32xf32>
    %19 = arith.addf %16, %18 : vector<64x32xf32>
    %cst_10 = arith.constant 0.000000e+00 : f32
    %20 = vector.broadcast %cst_10 : f32 to vector<64x32xf32>
    %21 = arith.maximumf %19, %20 : vector<64x32xf32>
    %c0_11 = arith.constant 0 : index
    %c0_12 = arith.constant 0 : index
    %c0_13 = arith.constant 0 : index
    %22 = vector.load %arg6[%c0_11, %c0_12, %c0_13] : memref<1x64x32xf32, #tpu.memory_space<vmem>>, vector<1x64x32xf32>
    %23 = vector.shape_cast %22 : vector<1x64x32xf32> to vector<64x32xf32>
    %24 = vector.shape_cast %21 : vector<64x32xf32> to vector<1x64x32xf32>
    tpu.vector_store %arg6[%c0_11, %c0_12, %c0_13], %24 {strides = array<i32>} : memref<1x64x32xf32, #tpu.memory_space<vmem>>, vector<1x64x32xf32>,
    return
  }
  func.func @transform_0(%arg0: i32, %arg1: i32) -> (i32, i32, i32, i32) {
    %c4_i32 = arith.constant 4 : i32
    %0 = arith.muli %arg1, %c4_i32 : i32
    %1 = arith.addi %0, %arg0 : i32
    %c0_i32 = arith.constant 0 : i32
    %c0_i32_0 = arith.constant 0 : i32
    %c0_i32_1 = arith.constant 0 : i32
    %c0_i32_2 = arith.constant 0 : i32
    return %1, %c0_i32, %c0_i32_0, %c0_i32_1 : i32, i32, i32, i32
  }
  func.func @transform_1(%arg0: i32, %arg1: i32) -> (i32, i32, i32) {
    %c0_i32 = arith.constant 0 : i32
    %c0_i32_0 = arith.constant 0 : i32
    %c0_i32_1 = arith.constant 0 : i32
    return %arg0, %c0_i32, %c0_i32_0 : i32, i32, i32
  }
  func.func @transform_2(%arg0: i32, %arg1: i32) -> (i32, i32) {
    %c0_i32 = arith.constant 0 : i32
    %c0_i32_0 = arith.constant 0 : i32
    %c0_i32_1 = arith.constant 0 : i32
    return %c0_i32, %c0_i32_0 : i32, i32
  }
  func.func @transform_3(%arg0: i32, %arg1: i32) -> (i32, i32) {
    %c0_i32 = arith.constant 0 : i32
    %c0_i32_0 = arith.constant 0 : i32
    %c0_i32_1 = arith.constant 0 : i32
    return %c0_i32, %c0_i32_0 : i32, i32
  }
  func.func @transform_4(%arg0: i32, %arg1: i32) -> (i32, i32, i32) {
    %c4_i32 = arith.constant 4 : i32
    %0 = arith.muli %arg1, %c4_i32 : i32
    %1 = arith.addi %0, %arg0 : i32
    %c0_i32 = arith.constant 0 : i32
    %c0_i32_0 = arith.constant 0 : i32
    %c0_i32_1 = arith.constant 0 : i32
    return %1, %c0_i32, %c0_i32_0 : i32, i32, i32
  }
}

module attributes {stable_mosaic.version = 11 : i64} {
  func.func @deconv_phase_kernel(%arg0: i32, %arg1: i32, %arg2: memref<1x17x17x32xbf16, #tpu.memory_space<vmem>>, %arg3: memref<1x128x16xbf16, #tpu.memory_space<vmem>>, %arg4: memref<1x16xf32, #tpu.memory_space<vmem>>, %arg5: memref<1x16xf32, #tpu.memory_space<vmem>>, %arg6: memref<1x256x16xf32, #tpu.memory_space<vmem>>) attributes {dimension_semantics = [#tpu.dimension_semantics<parallel>, #tpu.dimension_semantics<parallel>], iteration_bounds = array<i64: 4, 2>, scalar_prefetch = 0 : i64, scratch_operands = 0 : i64, tpu.core_type = #tpu.core_type<tc>, window_params = [{transform_indices = @transform_0, window_bounds = array<i64: 1, 17, 17, 32>}, {transform_indices = @transform_1, window_bounds = array<i64: 1, 128, 16>}, {pipeline_mode = #tpu.pipeline_mode<synchronous>, transform_indices = @transform_2, window_bounds = array<i64: 1, 16>}, {pipeline_mode = #tpu.pipeline_mode<synchronous>, transform_indices = @transform_3, window_bounds = array<i64: 1, 16>}, {transform_indices = @transform_4, window_bounds = array<i64: 1, 256, 16>}]} {
    %c0 = arith.constant 0 : index
    %c0_0 = arith.constant 0 : index
    %c0_1 = arith.constant 0 : index
    %c0_2 = arith.constant 0 : index
    %0 = vector.load %arg2[%c0, %c0_0, %c0_1, %c0_2] : memref<1x17x17x32xbf16, #tpu.memory_space<vmem>>, vector<1x17x17x32xbf16>
    %1 = vector.shape_cast %0 : vector<1x17x17x32xbf16> to vector<17x17x32xbf16>
    %2 = vector.extract_strided_slice %1 {offsets = [0, 0, 0], sizes = [16, 16, 32], strides = [1, 1, 1]} : vector<17x17x32xbf16> to vector<16x16x32xbf16>
    %3 = vector.shape_cast %2 : vector<16x16x32xbf16> to vector<256x32xbf16>
    %4 = vector.extract_strided_slice %1 {offsets = [0, 1, 0], sizes = [16, 16, 32], strides = [1, 1, 1]} : vector<17x17x32xbf16> to vector<16x16x32xbf16>
    %5 = vector.shape_cast %4 : vector<16x16x32xbf16> to vector<256x32xbf16>
    %6 = vector.extract_strided_slice %1 {offsets = [1, 0, 0], sizes = [16, 16, 32], strides = [1, 1, 1]} : vector<17x17x32xbf16> to vector<16x16x32xbf16>
    %7 = vector.shape_cast %6 : vector<16x16x32xbf16> to vector<256x32xbf16>
    %8 = vector.extract_strided_slice %1 {offsets = [1, 1, 0], sizes = [16, 16, 32], strides = [1, 1, 1]} : vector<17x17x32xbf16> to vector<16x16x32xbf16>
    %9 = vector.shape_cast %8 : vector<16x16x32xbf16> to vector<256x32xbf16>
    %10 = tpu.concatenate %3, %5, %7, %9 in 1 : vector<256x32xbf16>, vector<256x32xbf16>, vector<256x32xbf16>, vector<256x32xbf16> -> vector<256x128xbf16>
    %c0_3 = arith.constant 0 : index
    %c0_4 = arith.constant 0 : index
    %c0_5 = arith.constant 0 : index
    %11 = vector.load %arg3[%c0_3, %c0_4, %c0_5] : memref<1x128x16xbf16, #tpu.memory_space<vmem>>, vector<1x128x16xbf16>
    %12 = vector.shape_cast %11 : vector<1x128x16xbf16> to vector<128x16xbf16>
    %cst = arith.constant dense<0.000000e+00> : vector<256x16xf32>
    %13 = tpu.matmul %10, %12, %cst {dimension_numbers = #tpu.dot_dimension_numbers<[1], [0], [0], [1], [0, 0, 1, 1], [], []>} : vector<256x128xbf16>, vector<128x16xbf16>, vector<256x16xf32> -> vector<256x16xf32>
    %c0_6 = arith.constant 0 : index
    %c0_7 = arith.constant 0 : index
    %14 = vector.load %arg4[%c0_6, %c0_7] : memref<1x16xf32, #tpu.memory_space<vmem>>, vector<1x16xf32>
    %15 = vector.broadcast %14 : vector<1x16xf32> to vector<256x16xf32>
    %16 = arith.mulf %13, %15 : vector<256x16xf32>
    %c0_8 = arith.constant 0 : index
    %c0_9 = arith.constant 0 : index
    %17 = vector.load %arg5[%c0_8, %c0_9] : memref<1x16xf32, #tpu.memory_space<vmem>>, vector<1x16xf32>
    %18 = vector.broadcast %17 : vector<1x16xf32> to vector<256x16xf32>
    %19 = arith.addf %16, %18 : vector<256x16xf32>
    %cst_10 = arith.constant 0.000000e+00 : f32
    %20 = vector.broadcast %cst_10 : f32 to vector<256x16xf32>
    %21 = arith.maximumf %19, %20 : vector<256x16xf32>
    %c0_11 = arith.constant 0 : index
    %c0_12 = arith.constant 0 : index
    %c0_13 = arith.constant 0 : index
    %22 = vector.load %arg6[%c0_11, %c0_12, %c0_13] : memref<1x256x16xf32, #tpu.memory_space<vmem>>, vector<1x256x16xf32>
    %23 = vector.shape_cast %22 : vector<1x256x16xf32> to vector<256x16xf32>
    %24 = vector.shape_cast %21 : vector<256x16xf32> to vector<1x256x16xf32>
    tpu.vector_store %arg6[%c0_11, %c0_12, %c0_13], %24 {strides = array<i32>} : memref<1x256x16xf32, #tpu.memory_space<vmem>>, vector<1x256x16xf32>,
    return
  }
  func.func @transform_0(%arg0: i32, %arg1: i32) -> (i32, i32, i32, i32) {
    %c4_i32 = arith.constant 4 : i32
    %0 = arith.muli %arg1, %c4_i32 : i32
    %1 = arith.addi %0, %arg0 : i32
    %c0_i32 = arith.constant 0 : i32
    %c0_i32_0 = arith.constant 0 : i32
    %c0_i32_1 = arith.constant 0 : i32
    %c0_i32_2 = arith.constant 0 : i32
    return %1, %c0_i32, %c0_i32_0, %c0_i32_1 : i32, i32, i32, i32
  }
  func.func @transform_1(%arg0: i32, %arg1: i32) -> (i32, i32, i32) {
    %c0_i32 = arith.constant 0 : i32
    %c0_i32_0 = arith.constant 0 : i32
    %c0_i32_1 = arith.constant 0 : i32
    return %arg0, %c0_i32, %c0_i32_0 : i32, i32, i32
  }
  func.func @transform_2(%arg0: i32, %arg1: i32) -> (i32, i32) {
    %c0_i32 = arith.constant 0 : i32
    %c0_i32_0 = arith.constant 0 : i32
    %c0_i32_1 = arith.constant 0 : i32
    return %c0_i32, %c0_i32_0 : i32, i32
  }
  func.func @transform_3(%arg0: i32, %arg1: i32) -> (i32, i32) {
    %c0_i32 = arith.constant 0 : i32
    %c0_i32_0 = arith.constant 0 : i32
    %c0_i32_1 = arith.constant 0 : i32
    return %c0_i32, %c0_i32_0 : i32, i32
  }
  func.func @transform_4(%arg0: i32, %arg1: i32) -> (i32, i32, i32) {
    %c4_i32 = arith.constant 4 : i32
    %0 = arith.muli %arg1, %c4_i32 : i32
    %1 = arith.addi %0, %arg0 : i32
    %c0_i32 = arith.constant 0 : i32
    %c0_i32_0 = arith.constant 0 : i32
    %c0_i32_1 = arith.constant 0 : i32
    return %1, %c0_i32, %c0_i32_0 : i32, i32, i32
  }
}

module attributes {stable_mosaic.version = 11 : i64} {
  func.func @deconv_phase_cout1_kernel(%arg0: i32, %arg1: i32, %arg2: memref<1x33x33x16xbf16, #tpu.memory_space<vmem>>, %arg3: memref<1x4x16xbf16, #tpu.memory_space<vmem>>, %arg4: memref<1x1xf32, #tpu.memory_space<vmem>>, %arg5: memref<1x32x32xf32, #tpu.memory_space<vmem>>) attributes {dimension_semantics = [#tpu.dimension_semantics<parallel>, #tpu.dimension_semantics<parallel>], iteration_bounds = array<i64: 4, 2>, scalar_prefetch = 0 : i64, scratch_operands = 0 : i64, tpu.core_type = #tpu.core_type<tc>, window_params = [{transform_indices = @transform_0, window_bounds = array<i64: 1, 33, 33, 16>}, {transform_indices = @transform_1, window_bounds = array<i64: 1, 4, 16>}, {pipeline_mode = #tpu.pipeline_mode<synchronous>, transform_indices = @transform_2, window_bounds = array<i64: 1, 1>}, {transform_indices = @transform_3, window_bounds = array<i64: 1, 32, 32>}]} {
    %c0 = arith.constant 0 : index
    %c0_0 = arith.constant 0 : index
    %c0_1 = arith.constant 0 : index
    %c0_2 = arith.constant 0 : index
    %0 = vector.load %arg2[%c0, %c0_0, %c0_1, %c0_2] : memref<1x33x33x16xbf16, #tpu.memory_space<vmem>>, vector<1x33x33x16xbf16>
    %1 = vector.shape_cast %0 : vector<1x33x33x16xbf16> to vector<33x33x16xbf16>
    %c0_3 = arith.constant 0 : index
    %c0_4 = arith.constant 0 : index
    %c0_5 = arith.constant 0 : index
    %2 = vector.load %arg3[%c0_3, %c0_4, %c0_5] : memref<1x4x16xbf16, #tpu.memory_space<vmem>>, vector<1x4x16xbf16>
    %3 = vector.shape_cast %2 : vector<1x4x16xbf16> to vector<4x16xbf16>
    %4 = arith.extf %3 : vector<4x16xbf16> to vector<4x16xf32>
    %cst = arith.constant 0.000000e+00 : f32
    %5 = vector.broadcast %cst : f32 to vector<32x32xf32>
    %6 = vector.extract_strided_slice %1 {offsets = [0, 0, 0], sizes = [32, 32, 16], strides = [1, 1, 1]} : vector<33x33x16xbf16> to vector<32x32x16xbf16>
    %7 = arith.extf %6 : vector<32x32x16xbf16> to vector<32x32x16xf32>
    %8 = vector.extract_strided_slice %4 {offsets = [0, 0], sizes = [1, 16], strides = [1, 1]} : vector<4x16xf32> to vector<1x16xf32>
    %9 = vector.shape_cast %8 : vector<1x16xf32> to vector<1x1x16xf32>
    %10 = vector.broadcast %9 : vector<1x1x16xf32> to vector<32x32x16xf32>
    %11 = arith.mulf %7, %10 : vector<32x32x16xf32>
    %cst_6 = arith.constant dense<0.000000e+00> : vector<32x32xf32>
    %12 = vector.multi_reduction <add>, %11, %cst_6 [2] : vector<32x32x16xf32> to vector<32x32xf32>
    %13 = arith.addf %5, %12 : vector<32x32xf32>
    %14 = vector.extract_strided_slice %1 {offsets = [0, 1, 0], sizes = [32, 32, 16], strides = [1, 1, 1]} : vector<33x33x16xbf16> to vector<32x32x16xbf16>
    %15 = arith.extf %14 : vector<32x32x16xbf16> to vector<32x32x16xf32>
    %16 = vector.extract_strided_slice %4 {offsets = [1, 0], sizes = [1, 16], strides = [1, 1]} : vector<4x16xf32> to vector<1x16xf32>
    %17 = vector.shape_cast %16 : vector<1x16xf32> to vector<1x1x16xf32>
    %18 = vector.broadcast %17 : vector<1x1x16xf32> to vector<32x32x16xf32>
    %19 = arith.mulf %15, %18 : vector<32x32x16xf32>
    %cst_7 = arith.constant dense<0.000000e+00> : vector<32x32xf32>
    %20 = vector.multi_reduction <add>, %19, %cst_7 [2] : vector<32x32x16xf32> to vector<32x32xf32>
    %21 = arith.addf %13, %20 : vector<32x32xf32>
    %22 = vector.extract_strided_slice %1 {offsets = [1, 0, 0], sizes = [32, 32, 16], strides = [1, 1, 1]} : vector<33x33x16xbf16> to vector<32x32x16xbf16>
    %23 = arith.extf %22 : vector<32x32x16xbf16> to vector<32x32x16xf32>
    %24 = vector.extract_strided_slice %4 {offsets = [2, 0], sizes = [1, 16], strides = [1, 1]} : vector<4x16xf32> to vector<1x16xf32>
    %25 = vector.shape_cast %24 : vector<1x16xf32> to vector<1x1x16xf32>
    %26 = vector.broadcast %25 : vector<1x1x16xf32> to vector<32x32x16xf32>
    %27 = arith.mulf %23, %26 : vector<32x32x16xf32>
    %cst_8 = arith.constant dense<0.000000e+00> : vector<32x32xf32>
    %28 = vector.multi_reduction <add>, %27, %cst_8 [2] : vector<32x32x16xf32> to vector<32x32xf32>
    %29 = arith.addf %21, %28 : vector<32x32xf32>
    %30 = vector.extract_strided_slice %1 {offsets = [1, 1, 0], sizes = [32, 32, 16], strides = [1, 1, 1]} : vector<33x33x16xbf16> to vector<32x32x16xbf16>
    %31 = arith.extf %30 : vector<32x32x16xbf16> to vector<32x32x16xf32>
    %32 = vector.extract_strided_slice %4 {offsets = [3, 0], sizes = [1, 16], strides = [1, 1]} : vector<4x16xf32> to vector<1x16xf32>
    %33 = vector.shape_cast %32 : vector<1x16xf32> to vector<1x1x16xf32>
    %34 = vector.broadcast %33 : vector<1x1x16xf32> to vector<32x32x16xf32>
    %35 = arith.mulf %31, %34 : vector<32x32x16xf32>
    %cst_9 = arith.constant dense<0.000000e+00> : vector<32x32xf32>
    %36 = vector.multi_reduction <add>, %35, %cst_9 [2] : vector<32x32x16xf32> to vector<32x32xf32>
    %37 = arith.addf %29, %36 : vector<32x32xf32>
    %c0_10 = arith.constant 0 : index
    %c0_11 = arith.constant 0 : index
    %38 = vector.load %arg4[%c0_10, %c0_11] : memref<1x1xf32, #tpu.memory_space<vmem>>, vector<1x1xf32>
    %39 = vector.broadcast %38 : vector<1x1xf32> to vector<32x32xf32>
    %40 = arith.addf %37, %39 : vector<32x32xf32>
    %41 = math.tanh %40 : vector<32x32xf32>
    %c0_12 = arith.constant 0 : index
    %c0_13 = arith.constant 0 : index
    %c0_14 = arith.constant 0 : index
    %42 = vector.load %arg5[%c0_12, %c0_13, %c0_14] : memref<1x32x32xf32, #tpu.memory_space<vmem>>, vector<1x32x32xf32>
    %43 = vector.shape_cast %42 : vector<1x32x32xf32> to vector<32x32xf32>
    %44 = vector.shape_cast %41 : vector<32x32xf32> to vector<1x32x32xf32>
    tpu.vector_store %arg5[%c0_12, %c0_13, %c0_14], %44 {strides = array<i32>} : memref<1x32x32xf32, #tpu.memory_space<vmem>>, vector<1x32x32xf32>,
    return
  }
  func.func @transform_0(%arg0: i32, %arg1: i32) -> (i32, i32, i32, i32) {
    %c4_i32 = arith.constant 4 : i32
    %0 = arith.muli %arg1, %c4_i32 : i32
    %1 = arith.addi %0, %arg0 : i32
    %c0_i32 = arith.constant 0 : i32
    %c0_i32_0 = arith.constant 0 : i32
    %c0_i32_1 = arith.constant 0 : i32
    %c0_i32_2 = arith.constant 0 : i32
    return %1, %c0_i32, %c0_i32_0, %c0_i32_1 : i32, i32, i32, i32
  }
  func.func @transform_1(%arg0: i32, %arg1: i32) -> (i32, i32, i32) {
    %c0_i32 = arith.constant 0 : i32
    %c0_i32_0 = arith.constant 0 : i32
    %c0_i32_1 = arith.constant 0 : i32
    return %arg0, %c0_i32, %c0_i32_0 : i32, i32, i32
  }
  func.func @transform_2(%arg0: i32, %arg1: i32) -> (i32, i32) {
    %c0_i32 = arith.constant 0 : i32
    %c0_i32_0 = arith.constant 0 : i32
    %c0_i32_1 = arith.constant 0 : i32
    return %c0_i32, %c0_i32_0 : i32, i32
  }
  func.func @transform_3(%arg0: i32, %arg1: i32) -> (i32, i32, i32) {
    %c4_i32 = arith.constant 4 : i32
    %0 = arith.muli %arg1, %c4_i32 : i32
    %1 = arith.addi %0, %arg0 : i32
    %c0_i32 = arith.constant 0 : i32
    %c0_i32_0 = arith.constant 0 : i32
    %c0_i32_1 = arith.constant 0 : i32
    return %1, %c0_i32, %c0_i32_0 : i32, i32, i32
  }
}

</mosaic_0001>

<llo_original>
// kernel: conditional_generator_forward.6
$region0: #{conditional_generator_forward.6}
  #allocation0 [shape = 'u32[]', space=smem, size = 0x4, offset = 0x4, fixed_abs, tag = 'smem constant byte address 0x4 - core index']
  #allocation1 [shape = 'u32[72,128]{1,0:T(1,128)}', space=vmem, size = 0x9000, scoped, tag = 'internal scratch']
  %s0 = inlined_call_operand.vmem [shape: bf16[8,5,5,128], index: 0, kind: input, shape index: {}]
  %s1 = inlined_call_operand.vmem [shape: bf16[4,512,64], index: 1, kind: input, shape index: {}]
  %s2 = inlined_call_operand.hbm [shape: f32[1,64], index: 2, kind: input, shape index: {}]
  %s3 = inlined_call_operand.hbm [shape: f32[1,64], index: 3, kind: input, shape index: {}]
  %s4 = inlined_call_operand.vmem [shape: f32[8,16,64], index: 4, kind: output, shape index: {}]
  %s5 = sld [smem:[#allocation0]]
  $region57: #{conditional_generator_forward.6} parent=0
    _
  %s7 = ssub.s32 1, %s5
  %s8 = scalar_select 0, %s7, %s5
  $region1: #{conditional_generator_forward.6} parent=0
    #allocation2 [shape = 'u8[512]{0}', space=vmem, size = 0x400, scoped, tag = 'input window, operand 2, single buffered']
    #allocation3 [shape = 's32[2]{0}', space=sflag, size = 0x8, scoped, tag = 'scoped memory for conditional_generator_forward.6']
    #allocation4 [shape = 'u8[512]{0}', space=vmem, size = 0x400, scoped, tag = 'input window, operand 3, single buffered']
    #allocation5 [shape = 's32[1]{0}', space=sflag, size = 0x4, scoped, tag = 'scoped memory for conditional_generator_forward.6']
    %9 = vsyncpa [#allocation3], 0
    %10 = vsyncpa [#allocation5], 0
    loop: start=0, step=1, limit=10
    $region2: #{conditional_generator_forward.6} parent=1 // loop_pre_header
      _
    $region3: #{conditional_generator_forward.6} parent=1 // loop_header
      %s12 = sphi 0, %s16
      %p13 = scmp.ge.s32.totalorder %s12, 10
      %s19 = sphi 0, %s31
      %s20 = sphi 0, %s27
      %s21 = sphi 0, %s19
      %s22 = sphi 0, %s20
      %s23 = sphi 0, %s21
      %s24 = sphi 0, %s22
      %s38 = sphi 0, %s40
      %s41 = sphi 0, %s38
      %s42 = sphi 0, %s41
      %s58 = sphi 0, %s42
      %s64 = sphi 0, %s66
      %s67 = sphi 0, %s64
      %s68 = sphi 0, %s67
      %s84 = sphi 0, %s68
      %s88 = sphi 0, %s88
      %s90 = sphi 0, %s88
      %s91 = sphi 0, %s90
      %s105 = sphi 0, %s91
      %s109 = sphi 0, %s109
      %s111 = sphi 0, %s109
      %s112 = sphi 0, %s111
      %s126 = sphi 0, %s112
      %s136 = sphi 0, %s138
      %s139 = sphi 0, %s136
      %s140 = sphi 0, %s139
      %s156 = sphi 0, %s140
    $region4: #{conditional_generator_forward.6} parent=1 // loop_header_branch
      %15 = sbr.rel (%p13) target = $region8
    $region5: #{conditional_generator_forward.6} parent=1 // loop_body
      %s17 = ssub.s32 %s12, 1
      %s18 = ssub.s32 %s12, 2
      %s25 = sadd.s32 1, %s20
      %p26 = scmp.ge.s32.totalorder %s25, 2
      %s27 = scalar_select %p26, 0, %s25
      %s28 = sadd.s32 1, %s19
      %s29 = scalar_select %p26, %s28, %s19
      %p30 = scmp.ge.s32.totalorder %s29, 4
      %s31 = scalar_select %p30, 0, %s29
      %s32 = smul.u32 %s20, 4
      %s33 = sadd.s32 %s32, %s19
      %s34 = smul.u32 %s27, 4
      %s35 = sadd.s32 %s34, %s31
      %s36 = ssub.s32 %s33, %s35
      %p37 = scmp.eq.s32.totalorder %s36, 0
      %s39 = sadd.s32 %s38, 1
      %s40 = scalar_select %p37, %s38, %s39
      %p43 = pneg %p37
      %p44 = scmp.eq.s32.totalorder %s12, 7
      %p45 = por %p43, %p44
      %p46 = scmp.ne.s32.totalorder %s38, %s41
      %p47 = scmp.eq.s32.totalorder %s12, 0
      %p48 = por %p46, %p47
      %p49 = scmp.ne.s32.totalorder %s38, %s41
      %p50 = scmp.eq.s32.totalorder %s17, 7
      %p51 = por %p49, %p50
      %p52 = scmp.ne.s32.totalorder %s41, %s42
      %p53 = scmp.eq.s32.totalorder %s17, 0
      %p54 = por %p52, %p53
      %p55 = scmp.ne.s32.totalorder %s41, %s42
      %p56 = scmp.eq.s32.totalorder %s18, 7
      %p57 = por %p55, %p56
      %p59 = scmp.ne.s32.totalorder %s42, %s58
      %p60 = scmp.eq.s32.totalorder %s18, 0
      %p61 = por %p59, %p60
      %s62 = ssub.s32 %s19, %s31
      %p63 = scmp.eq.s32.totalorder %s62, 0
      %s65 = sadd.s32 %s64, 1
      %s66 = scalar_select %p63, %s64, %s65
      %p69 = pneg %p63
      %p70 = scmp.eq.s32.totalorder %s12, 7
      %p71 = por %p69, %p70
      %p72 = scmp.ne.s32.totalorder %s64, %s67
      %p73 = scmp.eq.s32.totalorder %s12, 0
      %p74 = por %p72, %p73
      %p75 = scmp.ne.s32.totalorder %s64, %s67
      %p76 = scmp.eq.s32.totalorder %s17, 7
      %p77 = por %p75, %p76
      %p78 = scmp.ne.s32.totalorder %s67, %s68
      %p79 = scmp.eq.s32.totalorder %s17, 0
      %p80 = por %p78, %p79
      %p81 = scmp.ne.s32.totalorder %s67, %s68
      %p82 = scmp.eq.s32.totalorder %s18, 7
      %p83 = por %p81, %p82
      %p85 = scmp.ne.s32.totalorder %s68, %s84
      %p86 = scmp.eq.s32.totalorder %s18, 0
      %p87 = por %p85, %p86
      %s89 = sadd.s32 %s88, 1
      %p92 = scmp.eq.s32.totalorder %s12, 7
      %p93 = scmp.ne.s32.totalorder %s88, %s90
      %p94 = scmp.eq.s32.totalorder %s12, 0
      %p95 = por %p93, %p94
      %p96 = scmp.ne.s32.totalorder %s88, %s90
      %p97 = scmp.eq.s32.totalorder %s17, 7
      %p98 = por %p96, %p97
      %p99 = scmp.ne.s32.totalorder %s90, %s91
      %p100 = scmp.eq.s32.totalorder %s17, 0
      %p101 = por %p99, %p100
      %p102 = scmp.ne.s32.totalorder %s90, %s91
      %p103 = scmp.eq.s32.totalorder %s18, 7
      %p104 = por %p102, %p103
      %p106 = scmp.ne.s32.totalorder %s91, %s105
      %p107 = scmp.eq.s32.totalorder %s18, 0
      %p108 = por %p106, %p107
      %s110 = sadd.s32 %s109, 1
      %p113 = scmp.eq.s32.totalorder %s12, 7
      %p114 = scmp.ne.s32.totalorder %s109, %s111
      %p115 = scmp.eq.s32.totalorder %s12, 0
      %p116 = por %p114, %p115
      %p117 = scmp.ne.s32.totalorder %s109, %s111
      %p118 = scmp.eq.s32.totalorder %s17, 7
      %p119 = por %p117, %p118
      %p120 = scmp.ne.s32.totalorder %s111, %s112
      %p121 = scmp.eq.s32.totalorder %s17, 0
      %p122 = por %p120, %p121
      %p123 = scmp.ne.s32.totalorder %s111, %s112
      %p124 = scmp.eq.s32.totalorder %s18, 7
      %p125 = por %p123, %p124
      %p127 = scmp.ne.s32.totalorder %s112, %s126
      %p128 = scmp.eq.s32.totalorder %s18, 0
      %p129 = por %p127, %p128
      %s130 = smul.u32 %s20, 4
      %s131 = sadd.s32 %s130, %s19
      %s132 = smul.u32 %s27, 4
      %s133 = sadd.s32 %s132, %s31
      %s134 = ssub.s32 %s131, %s133
      %p135 = scmp.eq.s32.totalorder %s134, 0
      %s137 = sadd.s32 %s136, 1
      %s138 = scalar_select %p135, %s136, %s137
      %p141 = pneg %p135
      %p142 = scmp.eq.s32.totalorder %s12, 7
      %p143 = por %p141, %p142
      %p144 = scmp.ne.s32.totalorder %s136, %s139
      %p145 = scmp.eq.s32.totalorder %s12, 0
      %p146 = por %p144, %p145
      %p147 = scmp.ne.s32.totalorder %s136, %s139
      %p148 = scmp.eq.s32.totalorder %s17, 7
      %p149 = por %p147, %p148
      %p150 = scmp.ne.s32.totalorder %s139, %s140
      %p151 = scmp.eq.s32.totalorder %s17, 0
      %p152 = por %p150, %p151
      %p153 = scmp.ne.s32.totalorder %s139, %s140
      %p154 = scmp.eq.s32.totalorder %s18, 7
      %p155 = por %p153, %p154
      %p157 = scmp.ne.s32.totalorder %s140, %s156
      %p158 = scmp.eq.s32.totalorder %s18, 0
      %p159 = por %p157, %p158
      %p160 = scmp.le.s32.totalorder 1, %s12
      %p161 = scmp.lt.s32.totalorder %s12, 9
      %p162 = pnand %p160, %p161
      %p163 = pneg %p162
      // Predicated region
      $region9: #{conditional_generator_forward.6} parent=5 // pred_check
        _
      $region10: #{conditional_generator_forward.6} parent=5 // pred_check_branch
        %165 = sbr.rel (%p162) target = $region12
      $region11: #{conditional_generator_forward.6} parent=5 // pred_region
        %s166 = ssub.s32 %s12, 1
        // Predicated region
        $region13: #{conditional_generator_forward.6} parent=11 // pred_check
          %p167 = pneg %p101
        $region14: #{conditional_generator_forward.6} parent=11 // pred_check_branch
          %169 = sbr.rel (%p167) target = $region16
        $region15: #{conditional_generator_forward.6} parent=11 // pred_region
          %171 = vsyncadd [#allocation3], 0
          %s173 = sshll.u32 %s2, 4
          %s174 = int_to_ptr.hbm [resolvable:$true] %s173
          %s175 = sshll.u32 [#allocation2], 4
          %s176 = int_to_ptr.vmem [resolvable:$true] %s175
          %178 = dma.hbm_to_vmem [thread:$0]  %s174, 16, %s176, [#allocation3]
        $region16: #{conditional_generator_forward.6} parent=11 // pred_fallthru
          _
        // Predicated region
        $region17: #{conditional_generator_forward.6} parent=11 // pred_check
          %p179 = pneg %p122
        $region18: #{conditional_generator_forward.6} parent=11 // pred_check_branch
          %181 = sbr.rel (%p179) target = $region20
        $region19: #{conditional_generator_forward.6} parent=11 // pred_region
          %183 = vsyncadd [#allocation5], 0
          %s185 = sshll.u32 %s3, 4
          %s186 = int_to_ptr.hbm [resolvable:$true] %s185
          %s187 = sshll.u32 [#allocation4], 4
          %s188 = int_to_ptr.vmem [resolvable:$true] %s187
          %190 = dma.hbm_to_vmem [thread:$0]  %s186, 16, %s188, [#allocation5]
        $region20: #{conditional_generator_forward.6} parent=11 // pred_fallthru
          _
      $region12: #{conditional_generator_forward.6} parent=5 // pred_fallthru
        _
      %p191 = scmp.lt.s32.totalorder %s12, 8
      // Predicated region
      $region21: #{conditional_generator_forward.6} parent=5 // pred_check
        %p192 = pneg %p191
      $region22: #{conditional_generator_forward.6} parent=5 // pred_check_branch
        %194 = sbr.rel (%p192) target = $region24
      $region23: #{conditional_generator_forward.6} parent=5 // pred_region
        // Predicated region
        $region25: #{conditional_generator_forward.6} parent=23 // pred_check
          %p195 = pneg %p48
        $region26: #{conditional_generator_forward.6} parent=23 // pred_check_branch
          %197 = sbr.rel (%p195) target = $region28
        $region27: #{conditional_generator_forward.6} parent=23 // pred_region
          %s198 = smul.u32 %s20, 4
          %s199 = sadd.s32 %s198, %s19
          %p200 = scmp.lt.s32.totalorder %s199, 7
          %s201 = scalar_select %p200, %s199, 7
          %s202 = smul.addr %s201, 5
          %s203 = smul.addr %s202, 4
          %s204 = scalar_lea.vmem %s0, %s203
          %s205 = smul.u32 %s20, 4
          %s206 = sadd.s32 %s205, %s19
        $region28: #{conditional_generator_forward.6} parent=23 // pred_fallthru
          _
        // Predicated region
        $region29: #{conditional_generator_forward.6} parent=23 // pred_check
          %p207 = pneg %p74
        $region30: #{conditional_generator_forward.6} parent=23 // pred_check_branch
          %209 = sbr.rel (%p207) target = $region32
        $region31: #{conditional_generator_forward.6} parent=23 // pred_region
          %p210 = scmp.lt.s32.totalorder %s19, 3
          %s211 = scalar_select %p210, %s19, 3
          %s212 = smul.addr %s211, 64
          %s213 = smul.addr %s212, 4
          %s214 = scalar_lea.vmem %s1, %s213
        $region32: #{conditional_generator_forward.6} parent=23 // pred_fallthru
          _
      $region24: #{conditional_generator_forward.6} parent=5 // pred_fallthru
        _
      %p215 = scmp.le.s32.totalorder 1, %s12
      %p216 = scmp.lt.s32.totalorder %s12, 9
      %p217 = pnand %p215, %p216
      %p218 = pneg %p217
      // Predicated region
      $region33: #{conditional_generator_forward.6} parent=5 // pred_check
        _
      $region34: #{conditional_generator_forward.6} parent=5 // pred_check_branch
        %220 = sbr.rel (%p217) target = $region36
      $region35: #{conditional_generator_forward.6} parent=5 // pred_region
        %s221 = ssub.s32 %s12, 1
        // Predicated region
        $region37: #{conditional_generator_forward.6} parent=35 // pred_check
          %p222 = pneg %p101
        $region38: #{conditional_generator_forward.6} parent=35 // pred_check_branch
          %224 = sbr.rel (%p222) target = $region40
        $region39: #{conditional_generator_forward.6} parent=35 // pred_region
          %226 = dma.done [#allocation3], 16
        $region40: #{conditional_generator_forward.6} parent=35 // pred_fallthru
          _
        // Predicated region
        $region41: #{conditional_generator_forward.6} parent=35 // pred_check
          %p227 = pneg %p122
        $region42: #{conditional_generator_forward.6} parent=35 // pred_check_branch
          %229 = sbr.rel (%p227) target = $region44
        $region43: #{conditional_generator_forward.6} parent=35 // pred_region
          %231 = dma.done [#allocation5], 16
        $region44: #{conditional_generator_forward.6} parent=35 // pred_fallthru
          _
        %s232 = smul.u32 %s22, 4
        %s233 = sadd.s32 %s232, %s21
        %p234 = scmp.lt.s32.totalorder %s233, 7
        %s235 = scalar_select %p234, %s233, 7
        %s236 = smul.addr %s235, 5
        %s237 = smul.addr %s236, 4
        %s238 = scalar_lea.vmem %s0, %s237
        %p239 = pneg %p54
        %p240 = pneg %p51
        %p241 = scmp.lt.s32.totalorder %s21, 3
        %s242 = scalar_select %p241, %s21, 3
        %s243 = smul.addr %s242, 64
        %s244 = smul.addr %s243, 4
        %s245 = scalar_lea.vmem %s1, %s244
        %p246 = pneg %p80
        %p247 = pneg %p77
        %p248 = pneg %p101
        %p249 = pneg %p98
        %p250 = pneg %p122
        %p251 = pneg %p119
        %p252 = pneg %p152
        %p253 = pneg %p149
        %s254 = smul.u32 %s22, 4
        %s255 = sadd.s32 %s254, %s21
        %p256 = scmp.lt.s32.totalorder %s255, 7
        %s257 = scalar_select %p256, %s255, 7
        %s258 = smul.addr %s257, 2
        %s259 = smul.addr %s258, 8
        %s260 = scalar_lea.vmem %s4, %s259
        %s261 = smul.u32 %s22, 4
        %s262 = sadd.s32 %s261, %s21
        %p263 = scmp.lt.s32.totalorder %s262, 7
        %s264 = scalar_select %p263, %s262, 7
        %s265 = smul.addr %s264, 5
        %s266 = smul.addr %s265, 4
        %s267 = scalar_lea.vmem %s0, %s266
        %s268 = smul.u32 %s22, 4
        %s269 = sadd.s32 %s268, %s21
        %p270 = scmp.lt.s32.totalorder %s21, 3
        %s271 = scalar_select %p270, %s21, 3
        %s272 = smul.addr %s271, 64
        %s273 = smul.addr %s272, 4
        %s274 = scalar_lea.vmem %s1, %s273
        %s275 = smul.u32 %s22, 4
        %s276 = sadd.s32 %s275, %s21
        %p277 = scmp.lt.s32.totalorder %s276, 7
        %s278 = scalar_select %p277, %s276, 7
        %s279 = smul.addr %s278, 2
        %s280 = smul.addr %s279, 8
        %s281 = scalar_lea.vmem %s4, %s280
        %s282 = smul.u32 %s22, 4
        %s283 = sadd.s32 %s282, %s21
        %v284 = vld [vmem:[%s267] sm:$0x7]
        %v285 = vld [vmem:[%s267 + $0x4] sm:$0x7]
        %v286 = vld [vmem:[%s267 + $0x8] sm:$0x7]
        %v287 = vld [vmem:[%s267 + $0xc] sm:$0x7]
        %v288 = vld [vmem:[%s267 + $0x10] sm:$0x7]
        %v293 = vrot.slane %v284, 2
        %v294 = vrot.slane %v285, 2
        %v295 = vrot.slane %v286, 2
        %v296 = vrot.slane %v287, 2
        %vm297 = vcmask 1041408
        %v300 = vsel %vm297, %v284, %v293
        %vm301 = vcmask 1043458
        %v302 = vsel %vm301, %v284, %v293
        %v304 = vrot.slane %v302, 2
        %v307 = vsel %vm297, %v285, %v294
        %v308 = vsel %vm301, %v285, %v294
        %v310 = vrot.slane %v308, 2
        %v313 = vsel %vm297, %v286, %v295
        %v314 = vsel %vm301, %v286, %v295
        %v316 = vrot.slane %v314, 2
        %v319 = vsel %vm297, %v287, %v296
        %v320 = vsel %vm301, %v287, %v296
        %v322 = vrot.slane %v320, 2
        %vm323 = vsmask.f32 1280
        %vm324 = vsmask.f32 3336
        %vm325 = vmor %vm323, %vm324
        %vm326 = vsmask.f32 5392
        %vm327 = vmor %vm325, %vm326
        %vm328 = vsmask.f32 7448
        %vm329 = vmor %vm327, %vm328
        %v330 = vshrl.u32 %v300, 16
        %v332 = vrot.slane %v330, 6
        %v333 = vshll.u32 %v300, 16
        %v335 = vrot.slane %v333, 7
        %v336 = vor.u32 %v332, %v335
        %v337 = vrot.slane %v336, 2
        %v339 = vshll.u32 %v304, 16
        %v341 = vrot.slane %v339, 7
        %v342 = vsel %vm329, %v337, %v341
        %v343 = vshrl.u32 %v307, 16
        %v345 = vrot.slane %v343, 6
        %v346 = vshll.u32 %v307, 16
        %v348 = vrot.slane %v346, 7
        %v349 = vor.u32 %v345, %v348
        %v350 = vrot.slane %v349, 2
        %v352 = vshll.u32 %v310, 16
        %v354 = vrot.slane %v352, 7
        %v355 = vsel %vm329, %v350, %v354
        %v356 = vshrl.u32 %v313, 16
        %v358 = vrot.slane %v356, 6
        %v359 = vshll.u32 %v313, 16
        %v361 = vrot.slane %v359, 7
        %v362 = vor.u32 %v358, %v361
        %v363 = vrot.slane %v362, 2
        %v365 = vshll.u32 %v316, 16
        %v367 = vrot.slane %v365, 7
        %v368 = vsel %vm329, %v363, %v367
        %v369 = vshrl.u32 %v319, 16
        %v371 = vrot.slane %v369, 6
        %v372 = vshll.u32 %v319, 16
        %v374 = vrot.slane %v372, 7
        %v375 = vor.u32 %v371, %v374
        %v376 = vrot.slane %v375, 2
        %v378 = vshll.u32 %v322, 16
        %v380 = vrot.slane %v378, 7
        %v381 = vsel %vm329, %v376, %v380
        %v383 = vrot.slane %v288, 2
        %v386 = vsel %vm297, %v288, %v383
        %v387 = vsel %vm301, %v288, %v383
        %v389 = vrot.slane %v387, 2
        %v390 = vshrl.u32 %v386, 16
        %v392 = vrot.slane %v390, 6
        %v393 = vshll.u32 %v386, 16
        %v395 = vrot.slane %v393, 7
        %v396 = vor.u32 %v392, %v395
        %v397 = vrot.slane %v396, 2
        %v399 = vshll.u32 %v389, 16
        %v401 = vrot.slane %v399, 7
        %v402 = vsel %vm329, %v397, %v401
        %403 = vst [vmem:[#allocation1] ss:$4 sm:$0xff] %v284
        %s404 = scalar_lea.vmem [#allocation1], 1
        %405 = vst [vmem:[%s404] ss:$4 sm:$0xff] %v285
        %s406 = scalar_lea.vmem [#allocation1], 2
        %407 = vst [vmem:[%s406] ss:$4 sm:$0xff] %v286
        %s408 = scalar_lea.vmem [#allocation1], 3
        %409 = vst [vmem:[%s408] ss:$4 sm:$0xff] %v287
        %v410 = vld.sshfl [vmem:[#allocation1] sm:$0xff pattern:$0x73625140]
        %413 = vst [vmem:[#allocation1] ss:$4 sm:$0xff] %v342
        %s415 = scalar_lea.vmem [#allocation1], 1
        %416 = vst [vmem:[%s415] ss:$4 sm:$0xff] %v355
        %s418 = scalar_lea.vmem [#allocation1], 2
        %419 = vst [vmem:[%s418] ss:$4 sm:$0xff] %v368
        %s421 = scalar_lea.vmem [#allocation1], 3
        %422 = vst [vmem:[%s421] ss:$4 sm:$0xff] %v381
        %v423 = vld.sshfl [vmem:[#allocation1] sm:$0xff pattern:$0x73625140]
        %425 = vst [vmem:[#allocation1] ss:$4 sm:$0xff] %v285
        %s426 = scalar_lea.vmem [#allocation1], 1
        %427 = vst [vmem:[%s426] ss:$4 sm:$0xff] %v286
        %s428 = scalar_lea.vmem [#allocation1], 2
        %429 = vst [vmem:[%s428] ss:$4 sm:$0xff] %v287
        %s430 = scalar_lea.vmem [#allocation1], 3
        %431 = vst [vmem:[%s430] ss:$4 sm:$0xff] %v288
        %v432 = vld.sshfl [vmem:[#allocation1] sm:$0xff pattern:$0x73625140]
        %434 = vst [vmem:[#allocation1] ss:$4 sm:$0xff] %v355
        %s435 = scalar_lea.vmem [#allocation1], 1
        %436 = vst [vmem:[%s435] ss:$4 sm:$0xff] %v368
        %s437 = scalar_lea.vmem [#allocation1], 2
        %438 = vst [vmem:[%s437] ss:$4 sm:$0xff] %v381
        %s440 = scalar_lea.vmem [#allocation1], 3
        %441 = vst [vmem:[%s440] ss:$4 sm:$0xff] %v402
        %v442 = vld.sshfl [vmem:[#allocation1] sm:$0xff pattern:$0x73625140]
        %v444 = vld [vmem:[%s274] sm:$0xf]
        %v445 = vld [vmem:[%s274 + $0x4] sm:$0xf]
        %v446 = vld [vmem:[%s274 + $0x8] sm:$0xf]
        %v447 = vld [vmem:[%s274 + $0xc] sm:$0xf]
        %v448 = vld [vmem:[%s274 + $0x10] sm:$0xf]
        %v449 = vld [vmem:[%s274 + $0x14] sm:$0xf]
        %v450 = vld [vmem:[%s274 + $0x18] sm:$0xf]
        %v451 = vld [vmem:[%s274 + $0x1c] sm:$0xf]
        %v452 = vld [vmem:[%s274 + $0x20] sm:$0xf]
        %v453 = vld [vmem:[%s274 + $0x24] sm:$0xf]
        %v454 = vld [vmem:[%s274 + $0x28] sm:$0xf]
        %v455 = vld [vmem:[%s274 + $0x2c] sm:$0xf]
        %v456 = vld [vmem:[%s274 + $0x30] sm:$0xf]
        %v457 = vld [vmem:[%s274 + $0x34] sm:$0xf]
        %v458 = vld [vmem:[%s274 + $0x38] sm:$0xf]
        %v459 = vld [vmem:[%s274 + $0x3c] sm:$0xf]
        %v460 = vld [vmem:[%s274 + $0x40] sm:$0xf]
        %v461 = vld [vmem:[%s274 + $0x44] sm:$0xf]
        %v462 = vld [vmem:[%s274 + $0x48] sm:$0xf]
        %v463 = vld [vmem:[%s274 + $0x4c] sm:$0xf]
        %v464 = vld [vmem:[%s274 + $0x50] sm:$0xf]
        %v465 = vld [vmem:[%s274 + $0x54] sm:$0xf]
        %v466 = vld [vmem:[%s274 + $0x58] sm:$0xf]
        %v467 = vld [vmem:[%s274 + $0x5c] sm:$0xf]
        %v468 = vld [vmem:[%s274 + $0x60] sm:$0xf]
        %v469 = vld [vmem:[%s274 + $0x64] sm:$0xf]
        %v470 = vld [vmem:[%s274 + $0x68] sm:$0xf]
        %v471 = vld [vmem:[%s274 + $0x6c] sm:$0xf]
        %v472 = vld [vmem:[%s274 + $0x70] sm:$0xf]
        %v473 = vld [vmem:[%s274 + $0x74] sm:$0xf]
        %v474 = vld [vmem:[%s274 + $0x78] sm:$0xf]
        %v475 = vld [vmem:[%s274 + $0x7c] sm:$0xf]
        %v476 = vld [vmem:[%s274 + $0x80] sm:$0xf]
        %v477 = vld [vmem:[%s274 + $0x84] sm:$0xf]
        %v478 = vld [vmem:[%s274 + $0x88] sm:$0xf]
        %v479 = vld [vmem:[%s274 + $0x8c] sm:$0xf]
        %v480 = vld [vmem:[%s274 + $0x90] sm:$0xf]
        %v481 = vld [vmem:[%s274 + $0x94] sm:$0xf]
        %v482 = vld [vmem:[%s274 + $0x98] sm:$0xf]
        %v483 = vld [vmem:[%s274 + $0x9c] sm:$0xf]
        %v484 = vld [vmem:[%s274 + $0xa0] sm:$0xf]
        %v485 = vld [vmem:[%s274 + $0xa4] sm:$0xf]
        %v486 = vld [vmem:[%s274 + $0xa8] sm:$0xf]
        %v487 = vld [vmem:[%s274 + $0xac] sm:$0xf]
        %v488 = vld [vmem:[%s274 + $0xb0] sm:$0xf]
        %v489 = vld [vmem:[%s274 + $0xb4] sm:$0xf]
        %v490 = vld [vmem:[%s274 + $0xb8] sm:$0xf]
        %v491 = vld [vmem:[%s274 + $0xbc] sm:$0xf]
        %v492 = vld [vmem:[%s274 + $0xc0] sm:$0xf]
        %v493 = vld [vmem:[%s274 + $0xc4] sm:$0xf]
        %v494 = vld [vmem:[%s274 + $0xc8] sm:$0xf]
        %v495 = vld [vmem:[%s274 + $0xcc] sm:$0xf]
        %v496 = vld [vmem:[%s274 + $0xd0] sm:$0xf]
        %v497 = vld [vmem:[%s274 + $0xd4] sm:$0xf]
        %v498 = vld [vmem:[%s274 + $0xd8] sm:$0xf]
        %v499 = vld [vmem:[%s274 + $0xdc] sm:$0xf]
        %v500 = vld [vmem:[%s274 + $0xe0] sm:$0xf]
        %v501 = vld [vmem:[%s274 + $0xe4] sm:$0xf]
        %v502 = vld [vmem:[%s274 + $0xe8] sm:$0xf]
        %v503 = vld [vmem:[%s274 + $0xec] sm:$0xf]
        %v504 = vld [vmem:[%s274 + $0xf0] sm:$0xf]
        %v505 = vld [vmem:[%s274 + $0xf4] sm:$0xf]
        %v506 = vld [vmem:[%s274 + $0xf8] sm:$0xf]
        %v507 = vld [vmem:[%s274 + $0xfc] sm:$0xf]
        %v572 = vunpack.c.l.b16 %v444
        %v573 = vunpack.c.l.b16 %v445
        %v574 = vunpack.c.l.b16 %v446
        %v575 = vunpack.c.l.b16 %v447
        %v576 = vunpack.c.l.b16 %v448
        %v577 = vunpack.c.l.b16 %v449
        %v578 = vunpack.c.l.b16 %v450
        %v579 = vunpack.c.l.b16 %v451
        %v580 = vunpack.c.l.b16 %v452
        %v581 = vunpack.c.l.b16 %v453
        %v582 = vunpack.c.l.b16 %v454
        %v583 = vunpack.c.l.b16 %v455
        %v584 = vunpack.c.l.b16 %v456
        %v585 = vunpack.c.l.b16 %v457
        %v586 = vunpack.c.l.b16 %v458
        %v587 = vunpack.c.l.b16 %v459
        %v588 = vunpack.c.l.b16 %v460
        %v589 = vunpack.c.l.b16 %v461
        %v590 = vunpack.c.l.b16 %v462
        %v591 = vunpack.c.l.b16 %v463
        %v592 = vunpack.c.l.b16 %v464
        %v593 = vunpack.c.l.b16 %v465
        %v594 = vunpack.c.l.b16 %v466
        %v595 = vunpack.c.l.b16 %v467
        %v596 = vunpack.c.l.b16 %v468
        %v597 = vunpack.c.l.b16 %v469
        %v598 = vunpack.c.l.b16 %v470
        %v599 = vunpack.c.l.b16 %v471
        %v600 = vunpack.c.l.b16 %v472
        %v601 = vunpack.c.l.b16 %v473
        %v602 = vunpack.c.l.b16 %v474
        %v603 = vunpack.c.l.b16 %v475
        %v604 = vunpack.c.l.b16 %v476
        %v605 = vunpack.c.l.b16 %v477
        %v606 = vunpack.c.l.b16 %v478
        %v607 = vunpack.c.l.b16 %v479
        %v608 = vunpack.c.l.b16 %v480
        %v609 = vunpack.c.l.b16 %v481
        %v610 = vunpack.c.l.b16 %v482
        %v611 = vunpack.c.l.b16 %v483
        %v612 = vunpack.c.l.b16 %v484
        %v613 = vunpack.c.l.b16 %v485
        %v614 = vunpack.c.l.b16 %v486
        %v615 = vunpack.c.l.b16 %v487
        %v616 = vunpack.c.l.b16 %v488
        %v617 = vunpack.c.l.b16 %v489
        %v618 = vunpack.c.l.b16 %v490
        %v619 = vunpack.c.l.b16 %v491
        %v620 = vunpack.c.l.b16 %v492
        %v621 = vunpack.c.l.b16 %v493
        %v622 = vunpack.c.l.b16 %v494
        %v623 = vunpack.c.l.b16 %v495
        %v624 = vunpack.c.l.b16 %v496
        %v625 = vunpack.c.l.b16 %v497
        %v626 = vunpack.c.l.b16 %v498
        %v627 = vunpack.c.l.b16 %v499
        %v628 = vunpack.c.l.b16 %v500
        %v629 = vunpack.c.l.b16 %v501
        %v630 = vunpack.c.l.b16 %v502
        %v631 = vunpack.c.l.b16 %v503
        %v632 = vunpack.c.l.b16 %v504
        %v633 = vunpack.c.l.b16 %v505
        %v634 = vunpack.c.l.b16 %v506
        %v635 = vunpack.c.l.b16 %v507
        %v636 = vpack.c.b16 %v573, %v572
        %v637 = vpack.c.b16 %v575, %v574
        %v638 = vpack.c.b16 %v577, %v576
        %v639 = vpack.c.b16 %v579, %v578
        %v640 = vpack.c.b16 %v581, %v580
        %v641 = vpack.c.b16 %v583, %v582
        %v642 = vpack.c.b16 %v585, %v584
        %v643 = vpack.c.b16 %v587, %v586
        %v644 = vpack.c.b16 %v589, %v588
        %v645 = vpack.c.b16 %v591, %v590
        %v646 = vpack.c.b16 %v593, %v592
        %v647 = vpack.c.b16 %v595, %v594
        %v648 = vpack.c.b16 %v597, %v596
        %v649 = vpack.c.b16 %v599, %v598
        %v650 = vpack.c.b16 %v601, %v600
        %v651 = vpack.c.b16 %v603, %v602
        %v652 = vpack.c.b16 %v605, %v604
        %v653 = vpack.c.b16 %v607, %v606
        %v654 = vpack.c.b16 %v609, %v608
        %v655 = vpack.c.b16 %v611, %v610
        %v656 = vpack.c.b16 %v613, %v612
        %v657 = vpack.c.b16 %v615, %v614
        %v658 = vpack.c.b16 %v617, %v616
        %v659 = vpack.c.b16 %v619, %v618
        %v660 = vpack.c.b16 %v621, %v620
        %v661 = vpack.c.b16 %v623, %v622
        %v662 = vpack.c.b16 %v625, %v624
        %v663 = vpack.c.b16 %v627, %v626
        %v664 = vpack.c.b16 %v629, %v628
        %v665 = vpack.c.b16 %v631, %v630
        %v666 = vpack.c.b16 %v633, %v632
        %v667 = vpack.c.b16 %v635, %v634
        %700 = vmatpush.bf16.msra.mxu0 %v643
        %701 = vmatpush.bf16.msra.mxu0 %v642
        %702 = vmatpush.bf16.msra.mxu0 %v641
        %703 = vmatpush.bf16.msra.mxu0 %v640
        %704 = vmatpush.bf16.msra.mxu0 %v639
        %705 = vmatpush.bf16.msra.mxu0 %v638
        %706 = vmatpush.bf16.msra.mxu0 %v637
        %707 = vmatpush.bf16.msra.mxu0 %v636
        %708 = vmatmul.bf16.gmra.mxu0 %v410
        %v709 = vpop.f32.mrf.mxu0
        %v710 = vadd.f32 0.0, %v709
        %v711 = vpop.f32.mrf.mxu0
        %v712 = vadd.f32 0.0, %v711
        %713 = vdwg.mxu0
        %714 = vmatpush.bf16.msra.mxu0 %v651
        %715 = vmatpush.bf16.msra.mxu0 %v650
        %716 = vmatpush.bf16.msra.mxu0 %v649
        %717 = vmatpush.bf16.msra.mxu0 %v648
        %718 = vmatpush.bf16.msra.mxu0 %v647
        %719 = vmatpush.bf16.msra.mxu0 %v646
        %720 = vmatpush.bf16.msra.mxu0 %v645
        %721 = vmatpush.bf16.msra.mxu0 %v644
        %722 = vmatmul.bf16.gmra.mxu0 %v423
        %v723 = vpop.f32.mrf.mxu0
        %v724 = vadd.f32 %v710, %v723
        %v725 = vpop.f32.mrf.mxu0
        %v726 = vadd.f32 %v712, %v725
        %727 = vdwg.mxu0
        %728 = vmatpush.bf16.msra.mxu0 %v659
        %729 = vmatpush.bf16.msra.mxu0 %v658
        %730 = vmatpush.bf16.msra.mxu0 %v657
        %731 = vmatpush.bf16.msra.mxu0 %v656
        %732 = vmatpush.bf16.msra.mxu0 %v655
        %733 = vmatpush.bf16.msra.mxu0 %v654
        %734 = vmatpush.bf16.msra.mxu0 %v653
        %735 = vmatpush.bf16.msra.mxu0 %v652
        %736 = vmatmul.bf16.gmra.mxu0 %v432
        %v737 = vpop.f32.mrf.mxu0
        %v738 = vadd.f32 %v724, %v737
        %v739 = vpop.f32.mrf.mxu0
        %v740 = vadd.f32 %v726, %v739
        %741 = vdwg.mxu0
        %742 = vmatpush.bf16.msra.mxu0 %v667
        %743 = vmatpush.bf16.msra.mxu0 %v666
        %744 = vmatpush.bf16.msra.mxu0 %v665
        %745 = vmatpush.bf16.msra.mxu0 %v664
        %746 = vmatpush.bf16.msra.mxu0 %v663
        %747 = vmatpush.bf16.msra.mxu0 %v662
        %748 = vmatpush.bf16.msra.mxu0 %v661
        %749 = vmatpush.bf16.msra.mxu0 %v660
        %750 = vmatmul.bf16.gmra.mxu0 %v442
        %v751 = vpop.f32.mrf.mxu0
        %v752 = vadd.f32 %v738, %v751
        %v753 = vpop.f32.mrf.mxu0
        %v754 = vadd.f32 %v740, %v753
        %755 = vdwg.mxu0
        %v756 = vld [vmem:[#allocation2] sm:$0x1]
        %v758 = vperm.slane %v756, 0
        %v760 = vmul.f32 %v752, %v758
        %v761 = vmul.f32 %v754, %v758
        %v762 = vld [vmem:[#allocation4] sm:$0x1]
        %v764 = vperm.slane %v762, 0
        %v766 = vadd.f32 %v760, %v764
        %v767 = vadd.f32 %v761, %v764
        %v768 = vmax.f32 %v766, 0.0
        %v769 = vmax.f32 %v767, 0.0
        %vm770 = vcmask 523264
        %771 = vst.msk [vmem:[%s281] sm:$0xff] %vm770, %v768
        %772 = vst.msk [vmem:[%s281 + $0x8] sm:$0xff] %vm770, %v769
        %s773 = smul.u32 %s22, 4
        %s774 = sadd.s32 %s773, %s21
        %p775 = scmp.lt.s32.totalorder %s774, 7
        %s776 = scalar_select %p775, %s774, 7
        %s777 = smul.addr %s776, 2
        %s778 = smul.addr %s777, 8
        %s779 = scalar_lea.vmem %s4, %s778
        // Predicated region
        $region45: #{conditional_generator_forward.6} parent=35 // pred_check
          %p780 = pneg %p149
        $region46: #{conditional_generator_forward.6} parent=35 // pred_check_branch
          %782 = sbr.rel (%p780) target = $region48
        $region47: #{conditional_generator_forward.6} parent=35 // pred_region
          %s783 = smul.u32 %s22, 4
          %s784 = sadd.s32 %s783, %s21
        $region48: #{conditional_generator_forward.6} parent=35 // pred_fallthru
          _
      $region36: #{conditional_generator_forward.6} parent=5 // pred_fallthru
        _
      %p785 = scmp.le.s32.totalorder 2, %s12
      // Predicated region
      $region49: #{conditional_generator_forward.6} parent=5 // pred_check
        %p786 = pneg %p785
      $region50: #{conditional_generator_forward.6} parent=5 // pred_check_branch
        %788 = sbr.rel (%p786) target = $region52
      $region51: #{conditional_generator_forward.6} parent=5 // pred_region
        %s789 = ssub.s32 %s12, 2
        // Predicated region
        $region53: #{conditional_generator_forward.6} parent=51 // pred_check
          %p790 = pneg %p155
        $region54: #{conditional_generator_forward.6} parent=51 // pred_check_branch
          %792 = sbr.rel (%p790) target = $region56
        $region55: #{conditional_generator_forward.6} parent=51 // pred_region
          %s793 = smul.u32 %s24, 4
          %s794 = sadd.s32 %s793, %s23
          %p795 = scmp.lt.s32.totalorder %s794, 7
          %s796 = scalar_select %p795, %s794, 7
          %s797 = smul.addr %s796, 2
          %s798 = smul.addr %s797, 8
          %s799 = scalar_lea.vmem %s4, %s798
        $region56: #{conditional_generator_forward.6} parent=51 // pred_fallthru
          _
      $region52: #{conditional_generator_forward.6} parent=5 // pred_fallthru
        _
    $region6: #{conditional_generator_forward.6} parent=1 // loop_footer
      %s16 = sadd.s32 1, %s12
    $region7: #{conditional_generator_forward.6} parent=1 // loop_footer_branch
      %11 = sbr.rel target = $region3
    $region8: #{conditional_generator_forward.6} parent=1 // loop_exit
      _
    %800 = vsyncpa [#allocation3], 1
    %s801 = scalar_lea.sflag [#allocation3], 1
    %802 = vsyncpa %s801, 1
    %803 = vsyncpa [#allocation5], 1

// kernel: conditional_generator_forward.5
$region0: #{conditional_generator_forward.5}
  #allocation0 [shape = 'u32[]', space=smem, size = 0x4, offset = 0x4, fixed_abs, tag = 'smem constant byte address 0x4 - core index']
  #allocation1 [shape = 'u32[72,128]{1,0:T(1,128)}', space=vmem, size = 0x9000, scoped, tag = 'internal scratch']
  %s0 = inlined_call_operand.vmem [shape: bf16[2,108], index: 0, kind: input, shape index: {}]
  %s1 = inlined_call_operand.hbm [shape: bf16[108,2048], index: 1, kind: input, shape index: {}]
  %s2 = inlined_call_operand.hbm [shape: f32[1,2048], index: 2, kind: input, shape index: {}]
  %s3 = inlined_call_operand.hbm [shape: f32[1,2048], index: 3, kind: input, shape index: {}]
  %s4 = inlined_call_operand.vmem [shape: f32[2,2048], index: 4, kind: output, shape index: {}]
  %s5 = sld [smem:[#allocation0]]
  $region38: #{conditional_generator_forward.5} parent=0
    _
  %s7 = ssub.s32 1, %s5
  %s8 = scalar_select 0, %s7, %s5
  $region1: #{conditional_generator_forward.5} parent=0
    #allocation2 [shape = 'u8[458752]{0}', space=vmem, size = 0x70000, scoped, tag = 'input window, operand 1, single buffered']
    #allocation3 [shape = 's32[1]{0}', space=sflag, size = 0x4, scoped, tag = 'scoped memory for conditional_generator_forward.5']
    #allocation4 [shape = 'u8[8192]{0}', space=vmem, size = 0x2000, scoped, tag = 'input window, operand 2, single buffered']
    #allocation5 [shape = 's32[1]{0}', space=sflag, size = 0x4, scoped, tag = 'scoped memory for conditional_generator_forward.5']
    #allocation6 [shape = 'u8[8192]{0}', space=vmem, size = 0x2000, scoped, tag = 'input window, operand 3, single buffered']
    %9 = vsyncpa [#allocation3], 0
    %10 = vsyncpa [#allocation5], 0
    // Predicated region
    $region2: #{conditional_generator_forward.5} parent=1 // pred_check
      _
    $region3: #{conditional_generator_forward.5} parent=1 // pred_check_branch
      %12 = sbr.rel (0) target = $region5
    $region4: #{conditional_generator_forward.5} parent=1 // pred_region
      _
    $region5: #{conditional_generator_forward.5} parent=1 // pred_fallthru
      _
    // Predicated region
    $region6: #{conditional_generator_forward.5} parent=1 // pred_check
      _
    $region7: #{conditional_generator_forward.5} parent=1 // pred_check_branch
      %14 = sbr.rel (0) target = $region9
    $region8: #{conditional_generator_forward.5} parent=1 // pred_region
      %16 = vsyncadd [#allocation3], 0
      %s17 = sshll.u32 %s1, 4
      %s18 = int_to_ptr.hbm [resolvable:$true] %s17
      %s19 = sshll.u32 [#allocation2], 4
      %s20 = int_to_ptr.vmem [resolvable:$true] %s19
      %25 = dma.hbm_to_vmem [thread:$0]  %s18, 14336, %s20, [#allocation3], 1024, 1024, 64
    $region9: #{conditional_generator_forward.5} parent=1 // pred_fallthru
      _
    // Predicated region
    $region10: #{conditional_generator_forward.5} parent=1 // pred_check
      _
    $region11: #{conditional_generator_forward.5} parent=1 // pred_check_branch
      %27 = sbr.rel (0) target = $region13
    $region12: #{conditional_generator_forward.5} parent=1 // pred_region
      %29 = vsyncadd [#allocation5], 0
      %s31 = sshll.u32 %s2, 4
      %s32 = int_to_ptr.hbm [resolvable:$true] %s31
      %s33 = sshll.u32 [#allocation4], 4
      %s34 = int_to_ptr.vmem [resolvable:$true] %s33
      %36 = dma.hbm_to_vmem [thread:$0]  %s32, 256, %s34, [#allocation5]
    $region13: #{conditional_generator_forward.5} parent=1 // pred_fallthru
      _
    // Predicated region
    $region14: #{conditional_generator_forward.5} parent=1 // pred_check
      _
    $region15: #{conditional_generator_forward.5} parent=1 // pred_check_branch
      %38 = sbr.rel (0) target = $region17
    $region16: #{conditional_generator_forward.5} parent=1 // pred_region
      %40 = vsyncadd [#allocation5], 0
      %s42 = sshll.u32 %s3, 4
      %s43 = int_to_ptr.hbm [resolvable:$true] %s42
      %s44 = sshll.u32 [#allocation6], 4
      %s45 = int_to_ptr.vmem [resolvable:$true] %s44
      %47 = dma.hbm_to_vmem [thread:$0]  %s43, 256, %s45, [#allocation5]
    $region17: #{conditional_generator_forward.5} parent=1 // pred_fallthru
      _
    // Predicated region
    $region18: #{conditional_generator_forward.5} parent=1 // pred_check
      _
    $region19: #{conditional_generator_forward.5} parent=1 // pred_check_branch
      %49 = sbr.rel (0) target = $region21
    $region20: #{conditional_generator_forward.5} parent=1 // pred_region
      %51 = dma.done [#allocation3], 14336
    $region21: #{conditional_generator_forward.5} parent=1 // pred_fallthru
      _
    // Predicated region
    $region22: #{conditional_generator_forward.5} parent=1 // pred_check
      _
    $region23: #{conditional_generator_forward.5} parent=1 // pred_check_branch
      %53 = sbr.rel (0) target = $region25
    $region24: #{conditional_generator_forward.5} parent=1 // pred_region
      %55 = dma.done [#allocation5], 256
    $region25: #{conditional_generator_forward.5} parent=1 // pred_fallthru
      _
    // Predicated region
    $region26: #{conditional_generator_forward.5} parent=1 // pred_check
      _
    $region27: #{conditional_generator_forward.5} parent=1 // pred_check_branch
      %57 = sbr.rel (0) target = $region29
    $region28: #{conditional_generator_forward.5} parent=1 // pred_region
      %59 = dma.done [#allocation5], 256
    $region29: #{conditional_generator_forward.5} parent=1 // pred_fallthru
      _
    %v61 = vld [vmem:[%s0] sm:$0x1]
    %v62 = vld [vmem:[#allocation2] sm:$0xff]
    %v63 = vld [vmem:[#allocation2 + $0x8] sm:$0xff]
    %v64 = vld [vmem:[#allocation2 + $0x10] sm:$0xff]
    %v65 = vld [vmem:[#allocation2 + $0x18] sm:$0xff]
    %v66 = vld [vmem:[#allocation2 + $0x20] sm:$0xff]
    %v67 = vld [vmem:[#allocation2 + $0x28] sm:$0xff]
    %v68 = vld [vmem:[#allocation2 + $0x30] sm:$0xff]
    %v69 = vld [vmem:[#allocation2 + $0x38] sm:$0xff]
    %v70 = vld [vmem:[#allocation2 + $0x40] sm:$0xff]
    %v71 = vld [vmem:[#allocation2 + $0x48] sm:$0xff]
    %v72 = vld [vmem:[#allocation2 + $0x50] sm:$0xff]
    %v73 = vld [vmem:[#allocation2 + $0x58] sm:$0xff]
    %v74 = vld [vmem:[#allocation2 + $0x60] sm:$0xff]
    %v75 = vld [vmem:[#allocation2 + $0x68] sm:$0xff]
    %v76 = vld [vmem:[#allocation2 + $0x70] sm:$0xff]
    %v77 = vld [vmem:[#allocation2 + $0x78] sm:$0xff]
    %v78 = vld [vmem:[#allocation2 + $0x80] sm:$0xff]
    %v79 = vld [vmem:[#allocation2 + $0x88] sm:$0xff]
    %v80 = vld [vmem:[#allocation2 + $0x90] sm:$0xff]
    %v81 = vld [vmem:[#allocation2 + $0x98] sm:$0xff]
    %v82 = vld [vmem:[#allocation2 + $0xa0] sm:$0xff]
    %v83 = vld [vmem:[#allocation2 + $0xa8] sm:$0xff]
    %v84 = vld [vmem:[#allocation2 + $0xb0] sm:$0xff]
    %v85 = vld [vmem:[#allocation2 + $0xb8] sm:$0xff]
    %v86 = vld [vmem:[#allocation2 + $0xc0] sm:$0xff]
    %v87 = vld [vmem:[#allocation2 + $0xc8] sm:$0xff]
    %v88 = vld [vmem:[#allocation2 + $0xd0] sm:$0xff]
    %v89 = vld [vmem:[#allocation2 + $0xd8] sm:$0xff]
    %v90 = vld [vmem:[#allocation2 + $0xe0] sm:$0xff]
    %v91 = vld [vmem:[#allocation2 + $0xe8] sm:$0xff]
    %v92 = vld [vmem:[#allocation2 + $0xf0] sm:$0xff]
    %v93 = vld [vmem:[#allocation2 + $0xf8] sm:$0xff]
    %v94 = vld [vmem:[#allocation2 + $0x100] sm:$0xff]
    %v95 = vld [vmem:[#allocation2 + $0x108] sm:$0xff]
    %v96 = vld [vmem:[#allocation2 + $0x110] sm:$0xff]
    %v97 = vld [vmem:[#allocation2 + $0x118] sm:$0xff]
    %v98 = vld [vmem:[#allocation2 + $0x120] sm:$0xff]
    %v99 = vld [vmem:[#allocation2 + $0x128] sm:$0xff]
    %v100 = vld [vmem:[#allocation2 + $0x130] sm:$0xff]
    %v101 = vld [vmem:[#allocation2 + $0x138] sm:$0xff]
    %v102 = vld [vmem:[#allocation2 + $0x140] sm:$0xff]
    %v103 = vld [vmem:[#allocation2 + $0x148] sm:$0xff]
    %v104 = vld [vmem:[#allocation2 + $0x150] sm:$0xff]
    %v105 = vld [vmem:[#allocation2 + $0x158] sm:$0xff]
    %v106 = vld [vmem:[#allocation2 + $0x160] sm:$0xff]
    %v107 = vld [vmem:[#allocation2 + $0x168] sm:$0xff]
    %v108 = vld [vmem:[#allocation2 + $0x170] sm:$0xff]
    %v109 = vld [vmem:[#allocation2 + $0x178] sm:$0xff]
    %v110 = vld [vmem:[#allocation2 + $0x180] sm:$0xff]
    %v111 = vld [vmem:[#allocation2 + $0x188] sm:$0xff]
    %v112 = vld [vmem:[#allocation2 + $0x190] sm:$0xff]
    %v113 = vld [vmem:[#allocation2 + $0x198] sm:$0xff]
    %v114 = vld [vmem:[#allocation2 + $0x1a0] sm:$0xff]
    %v115 = vld [vmem:[#allocation2 + $0x1a8] sm:$0xff]
    %v116 = vld [vmem:[#allocation2 + $0x1b0] sm:$0xff]
    %v117 = vld [vmem:[#allocation2 + $0x1b8] sm:$0xff]
    %v118 = vld [vmem:[#allocation2 + $0x1c0] sm:$0xff]
    %v119 = vld [vmem:[#allocation2 + $0x1c8] sm:$0xff]
    %v120 = vld [vmem:[#allocation2 + $0x1d0] sm:$0xff]
    %v121 = vld [vmem:[#allocation2 + $0x1d8] sm:$0xff]
    %v122 = vld [vmem:[#allocation2 + $0x1e0] sm:$0xff]
    %v123 = vld [vmem:[#allocation2 + $0x1e8] sm:$0xff]
    %v124 = vld [vmem:[#allocation2 + $0x1f0] sm:$0xff]
    %v125 = vld [vmem:[#allocation2 + $0x1f8] sm:$0xff]
    %v126 = vld [vmem:[#allocation2 + $0x200] sm:$0xff]
    %v127 = vld [vmem:[#allocation2 + $0x208] sm:$0xff]
    %v128 = vld [vmem:[#allocation2 + $0x210] sm:$0xff]
    %v129 = vld [vmem:[#allocation2 + $0x218] sm:$0xff]
    %v130 = vld [vmem:[#allocation2 + $0x220] sm:$0xff]
    %v131 = vld [vmem:[#allocation2 + $0x228] sm:$0xff]
    %v132 = vld [vmem:[#allocation2 + $0x230] sm:$0xff]
    %v133 = vld [vmem:[#allocation2 + $0x238] sm:$0xff]
    %v134 = vld [vmem:[#allocation2 + $0x240] sm:$0xff]
    %v135 = vld [vmem:[#allocation2 + $0x248] sm:$0xff]
    %v136 = vld [vmem:[#allocation2 + $0x250] sm:$0xff]
    %v137 = vld [vmem:[#allocation2 + $0x258] sm:$0xff]
    %v138 = vld [vmem:[#allocation2 + $0x260] sm:$0xff]
    %v139 = vld [vmem:[#allocation2 + $0x268] sm:$0xff]
    %v140 = vld [vmem:[#allocation2 + $0x270] sm:$0xff]
    %v141 = vld [vmem:[#allocation2 + $0x278] sm:$0xff]
    %v142 = vld [vmem:[#allocation2 + $0x280] sm:$0xff]
    %v143 = vld [vmem:[#allocation2 + $0x288] sm:$0xff]
    %v144 = vld [vmem:[#allocation2 + $0x290] sm:$0xff]
    %v145 = vld [vmem:[#allocation2 + $0x298] sm:$0xff]
    %v146 = vld [vmem:[#allocation2 + $0x2a0] sm:$0xff]
    %v147 = vld [vmem:[#allocation2 + $0x2a8] sm:$0xff]
    %v148 = vld [vmem:[#allocation2 + $0x2b0] sm:$0xff]
    %v149 = vld [vmem:[#allocation2 + $0x2b8] sm:$0xff]
    %v150 = vld [vmem:[#allocation2 + $0x2c0] sm:$0xff]
    %v151 = vld [vmem:[#allocation2 + $0x2c8] sm:$0xff]
    %v152 = vld [vmem:[#allocation2 + $0x2d0] sm:$0xff]
    %v153 = vld [vmem:[#allocation2 + $0x2d8] sm:$0xff]
    %v154 = vld [vmem:[#allocation2 + $0x2e0] sm:$0xff]
    %v155 = vld [vmem:[#allocation2 + $0x2e8] sm:$0xff]
    %v156 = vld [vmem:[#allocation2 + $0x2f0] sm:$0xff]
    %v157 = vld [vmem:[#allocation2 + $0x2f8] sm:$0xff]
    %v158 = vld [vmem:[#allocation2 + $0x300] sm:$0xff]
    %v159 = vld [vmem:[#allocation2 + $0x308] sm:$0xff]
    %v160 = vld [vmem:[#allocation2 + $0x310] sm:$0xff]
    %v161 = vld [vmem:[#allocation2 + $0x318] sm:$0xff]
    %v162 = vld [vmem:[#allocation2 + $0x320] sm:$0xff]
    %v163 = vld [vmem:[#allocation2 + $0x328] sm:$0xff]
    %v164 = vld [vmem:[#allocation2 + $0x330] sm:$0xff]
    %v165 = vld [vmem:[#allocation2 + $0x338] sm:$0xff]
    %v166 = vld [vmem:[#allocation2 + $0x340] sm:$0x33]
    %v167 = vld [vmem:[#allocation2 + $0x348] sm:$0x33]
    %v168 = vld [vmem:[#allocation2 + $0x350] sm:$0x33]
    %v169 = vld [vmem:[#allocation2 + $0x358] sm:$0x33]
    %v170 = vld [vmem:[#allocation2 + $0x360] sm:$0x33]
    %v171 = vld [vmem:[#allocation2 + $0x368] sm:$0x33]
    %v172 = vld [vmem:[#allocation2 + $0x370] sm:$0x33]
    %v173 = vld [vmem:[#allocation2 + $0x378] sm:$0x33]
    %v286 = vunpack.c.l.b16 %v62
    %v287 = vunpack.c.h.b16 %v62
    %v288 = vunpack.c.l.b16 %v63
    %v289 = vunpack.c.h.b16 %v63
    %v290 = vunpack.c.l.b16 %v64
    %v291 = vunpack.c.h.b16 %v64
    %v292 = vunpack.c.l.b16 %v65
    %v293 = vunpack.c.h.b16 %v65
    %v294 = vunpack.c.l.b16 %v66
    %v295 = vunpack.c.h.b16 %v66
    %v296 = vunpack.c.l.b16 %v67
    %v297 = vunpack.c.h.b16 %v67
    %v298 = vunpack.c.l.b16 %v68
    %v299 = vunpack.c.h.b16 %v68
    %v300 = vunpack.c.l.b16 %v69
    %v301 = vunpack.c.h.b16 %v69
    %v302 = vunpack.c.l.b16 %v70
    %v303 = vunpack.c.h.b16 %v70
    %v304 = vunpack.c.l.b16 %v71
    %v305 = vunpack.c.h.b16 %v71
    %v306 = vunpack.c.l.b16 %v72
    %v307 = vunpack.c.h.b16 %v72
    %v308 = vunpack.c.l.b16 %v73
    %v309 = vunpack.c.h.b16 %v73
    %v310 = vunpack.c.l.b16 %v74
    %v311 = vunpack.c.h.b16 %v74
    %v312 = vunpack.c.l.b16 %v75
    %v313 = vunpack.c.h.b16 %v75
    %v314 = vunpack.c.l.b16 %v76
    %v315 = vunpack.c.h.b16 %v76
    %v316 = vunpack.c.l.b16 %v77
    %v317 = vunpack.c.h.b16 %v77
    %v318 = vunpack.c.l.b16 %v78
    %v319 = vunpack.c.h.b16 %v78
    %v320 = vunpack.c.l.b16 %v79
    %v321 = vunpack.c.h.b16 %v79
    %v322 = vunpack.c.l.b16 %v80
    %v323 = vunpack.c.h.b16 %v80
    %v324 = vunpack.c.l.b16 %v81
    %v325 = vunpack.c.h.b16 %v81
    %v326 = vunpack.c.l.b16 %v82
    %v327 = vunpack.c.h.b16 %v82
    %v328 = vunpack.c.l.b16 %v83
    %v329 = vunpack.c.h.b16 %v83
    %v330 = vunpack.c.l.b16 %v84
    %v331 = vunpack.c.h.b16 %v84
    %v332 = vunpack.c.l.b16 %v85
    %v333 = vunpack.c.h.b16 %v85
    %v334 = vunpack.c.l.b16 %v86
    %v335 = vunpack.c.h.b16 %v86
    %v336 = vunpack.c.l.b16 %v87
    %v337 = vunpack.c.h.b16 %v87
    %v338 = vunpack.c.l.b16 %v88
    %v339 = vunpack.c.h.b16 %v88
    %v340 = vunpack.c.l.b16 %v89
    %v341 = vunpack.c.h.b16 %v89
    %v342 = vunpack.c.l.b16 %v90
    %v343 = vunpack.c.h.b16 %v90
    %v344 = vunpack.c.l.b16 %v91
    %v345 = vunpack.c.h.b16 %v91
    %v346 = vunpack.c.l.b16 %v92
    %v347 = vunpack.c.h.b16 %v92
    %v348 = vunpack.c.l.b16 %v93
    %v349 = vunpack.c.h.b16 %v93
    %v350 = vunpack.c.l.b16 %v94
    %v351 = vunpack.c.h.b16 %v94
    %v352 = vunpack.c.l.b16 %v95
    %v353 = vunpack.c.h.b16 %v95
    %v354 = vunpack.c.l.b16 %v96
    %v355 = vunpack.c.h.b16 %v96
    %v356 = vunpack.c.l.b16 %v97
    %v357 = vunpack.c.h.b16 %v97
    %v358 = vunpack.c.l.b16 %v98
    %v359 = vunpack.c.h.b16 %v98
    %v360 = vunpack.c.l.b16 %v99
    %v361 = vunpack.c.h.b16 %v99
    %v362 = vunpack.c.l.b16 %v100
    %v363 = vunpack.c.h.b16 %v100
    %v364 = vunpack.c.l.b16 %v101
    %v365 = vunpack.c.h.b16 %v101
    %v366 = vunpack.c.l.b16 %v102
    %v367 = vunpack.c.h.b16 %v102
    %v368 = vunpack.c.l.b16 %v103
    %v369 = vunpack.c.h.b16 %v103
    %v370 = vunpack.c.l.b16 %v104
    %v371 = vunpack.c.h.b16 %v104
    %v372 = vunpack.c.l.b16 %v105
    %v373 = vunpack.c.h.b16 %v105
    %v374 = vunpack.c.l.b16 %v106
    %v375 = vunpack.c.h.b16 %v106
    %v376 = vunpack.c.l.b16 %v107
    %v377 = vunpack.c.h.b16 %v107
    %v378 = vunpack.c.l.b16 %v108
    %v379 = vunpack.c.h.b16 %v108
    %v380 = vunpack.c.l.b16 %v109
    %v381 = vunpack.c.h.b16 %v109
    %v382 = vunpack.c.l.b16 %v110
    %v383 = vunpack.c.h.b16 %v110
    %v384 = vunpack.c.l.b16 %v111
    %v385 = vunpack.c.h.b16 %v111
    %v386 = vunpack.c.l.b16 %v112
    %v387 = vunpack.c.h.b16 %v112
    %v388 = vunpack.c.l.b16 %v113
    %v389 = vunpack.c.h.b16 %v113
    %v390 = vunpack.c.l.b16 %v114
    %v391 = vunpack.c.h.b16 %v114
    %v392 = vunpack.c.l.b16 %v115
    %v393 = vunpack.c.h.b16 %v115
    %v394 = vunpack.c.l.b16 %v116
    %v395 = vunpack.c.h.b16 %v116
    %v396 = vunpack.c.l.b16 %v117
    %v397 = vunpack.c.h.b16 %v117
    %v398 = vunpack.c.l.b16 %v118
    %v399 = vunpack.c.h.b16 %v118
    %v400 = vunpack.c.l.b16 %v119
    %v401 = vunpack.c.h.b16 %v119
    %v402 = vunpack.c.l.b16 %v120
    %v403 = vunpack.c.h.b16 %v120
    %v404 = vunpack.c.l.b16 %v121
    %v405 = vunpack.c.h.b16 %v121
    %v406 = vunpack.c.l.b16 %v122
    %v407 = vunpack.c.h.b16 %v122
    %v408 = vunpack.c.l.b16 %v123
    %v409 = vunpack.c.h.b16 %v123
    %v410 = vunpack.c.l.b16 %v124
    %v411 = vunpack.c.h.b16 %v124
    %v412 = vunpack.c.l.b16 %v125
    %v413 = vunpack.c.h.b16 %v125
    %v414 = vunpack.c.l.b16 %v126
    %v415 = vunpack.c.h.b16 %v126
    %v416 = vunpack.c.l.b16 %v127
    %v417 = vunpack.c.h.b16 %v127
    %v418 = vunpack.c.l.b16 %v128
    %v419 = vunpack.c.h.b16 %v128
    %v420 = vunpack.c.l.b16 %v129
    %v421 = vunpack.c.h.b16 %v129
    %v422 = vunpack.c.l.b16 %v130
    %v423 = vunpack.c.h.b16 %v130
    %v424 = vunpack.c.l.b16 %v131
    %v425 = vunpack.c.h.b16 %v131
    %v426 = vunpack.c.l.b16 %v132
    %v427 = vunpack.c.h.b16 %v132
    %v428 = vunpack.c.l.b16 %v133
    %v429 = vunpack.c.h.b16 %v133
    %v430 = vunpack.c.l.b16 %v134
    %v431 = vunpack.c.h.b16 %v134
    %v432 = vunpack.c.l.b16 %v135
    %v433 = vunpack.c.h.b16 %v135
    %v434 = vunpack.c.l.b16 %v136
    %v435 = vunpack.c.h.b16 %v136
    %v436 = vunpack.c.l.b16 %v137
    %v437 = vunpack.c.h.b16 %v137
    %v438 = vunpack.c.l.b16 %v138
    %v439 = vunpack.c.h.b16 %v138
    %v440 = vunpack.c.l.b16 %v139
    %v441 = vunpack.c.h.b16 %v139
    %v442 = vunpack.c.l.b16 %v140
    %v443 = vunpack.c.h.b16 %v140
    %v444 = vunpack.c.l.b16 %v141
    %v445 = vunpack.c.h.b16 %v141
    %v446 = vunpack.c.l.b16 %v142
    %v447 = vunpack.c.h.b16 %v142
    %v448 = vunpack.c.l.b16 %v143
    %v449 = vunpack.c.h.b16 %v143
    %v450 = vunpack.c.l.b16 %v144
    %v451 = vunpack.c.h.b16 %v144
    %v452 = vunpack.c.l.b16 %v145
    %v453 = vunpack.c.h.b16 %v145
    %v454 = vunpack.c.l.b16 %v146
    %v455 = vunpack.c.h.b16 %v146
    %v456 = vunpack.c.l.b16 %v147
    %v457 = vunpack.c.h.b16 %v147
    %v458 = vunpack.c.l.b16 %v148
    %v459 = vunpack.c.h.b16 %v148
    %v460 = vunpack.c.l.b16 %v149
    %v461 = vunpack.c.h.b16 %v149
    %v462 = vunpack.c.l.b16 %v150
    %v463 = vunpack.c.h.b16 %v150
    %v464 = vunpack.c.l.b16 %v151
    %v465 = vunpack.c.h.b16 %v151
    %v466 = vunpack.c.l.b16 %v152
    %v467 = vunpack.c.h.b16 %v152
    %v468 = vunpack.c.l.b16 %v153
    %v469 = vunpack.c.h.b16 %v153
    %v470 = vunpack.c.l.b16 %v154
    %v471 = vunpack.c.h.b16 %v154
    %v472 = vunpack.c.l.b16 %v155
    %v473 = vunpack.c.h.b16 %v155
    %v474 = vunpack.c.l.b16 %v156
    %v475 = vunpack.c.h.b16 %v156
    %v476 = vunpack.c.l.b16 %v157
    %v477 = vunpack.c.h.b16 %v157
    %v478 = vunpack.c.l.b16 %v158
    %v479 = vunpack.c.h.b16 %v158
    %v480 = vunpack.c.l.b16 %v159
    %v481 = vunpack.c.h.b16 %v159
    %v482 = vunpack.c.l.b16 %v160
    %v483 = vunpack.c.h.b16 %v160
    %v484 = vunpack.c.l.b16 %v161
    %v485 = vunpack.c.h.b16 %v161
    %v486 = vunpack.c.l.b16 %v162
    %v487 = vunpack.c.h.b16 %v162
    %v488 = vunpack.c.l.b16 %v163
    %v489 = vunpack.c.h.b16 %v163
    %v490 = vunpack.c.l.b16 %v164
    %v491 = vunpack.c.h.b16 %v164
    %v492 = vunpack.c.l.b16 %v165
    %v493 = vunpack.c.h.b16 %v165
    %v494 = vunpack.c.l.b16 %v166
    %v495 = vunpack.c.h.b16 %v166
    %v496 = vunpack.c.l.b16 %v167
    %v497 = vunpack.c.h.b16 %v167
    %v498 = vunpack.c.l.b16 %v168
    %v499 = vunpack.c.h.b16 %v168
    %v500 = vunpack.c.l.b16 %v169
    %v501 = vunpack.c.h.b16 %v169
    %v502 = vunpack.c.l.b16 %v170
    %v503 = vunpack.c.h.b16 %v170
    %v504 = vunpack.c.l.b16 %v171
    %v505 = vunpack.c.h.b16 %v171
    %v506 = vunpack.c.l.b16 %v172
    %v507 = vunpack.c.h.b16 %v172
    %v508 = vunpack.c.l.b16 %v173
    %v509 = vunpack.c.h.b16 %v173
    %v510 = vpack.c.b16 %v302, %v286
    %v511 = vpack.c.b16 %v303, %v287
    %v512 = vpack.c.b16 %v304, %v288
    %v513 = vpack.c.b16 %v305, %v289
    %v514 = vpack.c.b16 %v306, %v290
    %v515 = vpack.c.b16 %v307, %v291
    %v516 = vpack.c.b16 %v308, %v292
    %v517 = vpack.c.b16 %v309, %v293
    %v518 = vpack.c.b16 %v310, %v294
    %v519 = vpack.c.b16 %v311, %v295
    %v520 = vpack.c.b16 %v312, %v296
    %v521 = vpack.c.b16 %v313, %v297
    %v522 = vpack.c.b16 %v314, %v298
    %v523 = vpack.c.b16 %v315, %v299
    %v524 = vpack.c.b16 %v316, %v300
    %v525 = vpack.c.b16 %v317, %v301
    %v526 = vpack.c.b16 %v334, %v318
    %v527 = vpack.c.b16 %v335, %v319
    %v528 = vpack.c.b16 %v336, %v320
    %v529 = vpack.c.b16 %v337, %v321
    %v530 = vpack.c.b16 %v338, %v322
    %v531 = vpack.c.b16 %v339, %v323
    %v532 = vpack.c.b16 %v340, %v324
    %v533 = vpack.c.b16 %v341, %v325
    %v534 = vpack.c.b16 %v342, %v326
    %v535 = vpack.c.b16 %v343, %v327
    %v536 = vpack.c.b16 %v344, %v328
    %v537 = vpack.c.b16 %v345, %v329
    %v538 = vpack.c.b16 %v346, %v330
    %v539 = vpack.c.b16 %v347, %v331
    %v540 = vpack.c.b16 %v348, %v332
    %v541 = vpack.c.b16 %v349, %v333
    %v542 = vpack.c.b16 %v366, %v350
    %v543 = vpack.c.b16 %v367, %v351
    %v544 = vpack.c.b16 %v368, %v352
    %v545 = vpack.c.b16 %v369, %v353
    %v546 = vpack.c.b16 %v370, %v354
    %v547 = vpack.c.b16 %v371, %v355
    %v548 = vpack.c.b16 %v372, %v356
    %v549 = vpack.c.b16 %v373, %v357
    %v550 = vpack.c.b16 %v374, %v358
    %v551 = vpack.c.b16 %v375, %v359
    %v552 = vpack.c.b16 %v376, %v360
    %v553 = vpack.c.b16 %v377, %v361
    %v554 = vpack.c.b16 %v378, %v362
    %v555 = vpack.c.b16 %v379, %v363
    %v556 = vpack.c.b16 %v380, %v364
    %v557 = vpack.c.b16 %v381, %v365
    %v558 = vpack.c.b16 %v398, %v382
    %v559 = vpack.c.b16 %v399, %v383
    %v560 = vpack.c.b16 %v400, %v384
    %v561 = vpack.c.b16 %v401, %v385
    %v562 = vpack.c.b16 %v402, %v386
    %v563 = vpack.c.b16 %v403, %v387
    %v564 = vpack.c.b16 %v404, %v388
    %v565 = vpack.c.b16 %v405, %v389
    %v566 = vpack.c.b16 %v406, %v390
    %v567 = vpack.c.b16 %v407, %v391
    %v568 = vpack.c.b16 %v408, %v392
    %v569 = vpack.c.b16 %v409, %v393
    %v570 = vpack.c.b16 %v410, %v394
    %v571 = vpack.c.b16 %v411, %v395
    %v572 = vpack.c.b16 %v412, %v396
    %v573 = vpack.c.b16 %v413, %v397
    %v574 = vpack.c.b16 %v430, %v414
    %v575 = vpack.c.b16 %v431, %v415
    %v576 = vpack.c.b16 %v432, %v416
    %v577 = vpack.c.b16 %v433, %v417
    %v578 = vpack.c.b16 %v434, %v418
    %v579 = vpack.c.b16 %v435, %v419
    %v580 = vpack.c.b16 %v436, %v420
    %v581 = vpack.c.b16 %v437, %v421
    %v582 = vpack.c.b16 %v438, %v422
    %v583 = vpack.c.b16 %v439, %v423
    %v584 = vpack.c.b16 %v440, %v424
    %v585 = vpack.c.b16 %v441, %v425
    %v586 = vpack.c.b16 %v442, %v426
    %v587 = vpack.c.b16 %v443, %v427
    %v588 = vpack.c.b16 %v444, %v428
    %v589 = vpack.c.b16 %v445, %v429
    %v590 = vpack.c.b16 %v462, %v446
    %v591 = vpack.c.b16 %v463, %v447
    %v592 = vpack.c.b16 %v464, %v448
    %v593 = vpack.c.b16 %v465, %v449
    %v594 = vpack.c.b16 %v466, %v450
    %v595 = vpack.c.b16 %v467, %v451
    %v596 = vpack.c.b16 %v468, %v452
    %v597 = vpack.c.b16 %v469, %v453
    %v598 = vpack.c.b16 %v470, %v454
    %v599 = vpack.c.b16 %v471, %v455
    %v600 = vpack.c.b16 %v472, %v456
    %v601 = vpack.c.b16 %v473, %v457
    %v602 = vpack.c.b16 %v474, %v458
    %v603 = vpack.c.b16 %v475, %v459
    %v604 = vpack.c.b16 %v476, %v460
    %v605 = vpack.c.b16 %v477, %v461
    %v606 = vpack.c.b16 %v494, %v478
    %v607 = vpack.c.b16 %v495, %v479
    %v608 = vpack.c.b16 %v496, %v480
    %v609 = vpack.c.b16 %v497, %v481
    %v610 = vpack.c.b16 %v498, %v482
    %v611 = vpack.c.b16 %v499, %v483
    %v612 = vpack.c.b16 %v500, %v484
    %v613 = vpack.c.b16 %v501, %v485
    %v614 = vpack.c.b16 %v502, %v486
    %v615 = vpack.c.b16 %v503, %v487
    %v616 = vpack.c.b16 %v504, %v488
    %v617 = vpack.c.b16 %v505, %v489
    %v618 = vpack.c.b16 %v506, %v490
    %v619 = vpack.c.b16 %v507, %v491
    %v620 = vpack.c.b16 %v508, %v492
    %v621 = vpack.c.b16 %v509, %v493
    %vm718 = vcmask 883712
    %v720 = vsel %vm718, %v61, 0
    %vm722 = vcmask 1045504
    %v724 = vsel %vm722, %v606, 0
    %v727 = vsel %vm722, %v607, 0
    %v730 = vsel %vm722, %v608, 0
    %v733 = vsel %vm722, %v609, 0
    %v736 = vsel %vm722, %v610, 0
    %v739 = vsel %vm722, %v611, 0
    %v742 = vsel %vm722, %v612, 0
    %v745 = vsel %vm722, %v613, 0
    %v748 = vsel %vm722, %v614, 0
    %v751 = vsel %vm722, %v615, 0
    %v754 = vsel %vm722, %v616, 0
    %v757 = vsel %vm722, %v617, 0
    %v760 = vsel %vm722, %v618, 0
    %v763 = vsel %vm722, %v619, 0
    %v766 = vsel %vm722, %v620, 0
    %v769 = vsel %vm722, %v621, 0
    %771 = vmatpush.bf16.msra.mxu0 0
    %772 = vmatpush.bf16.msra.mxu0 %v724
    %773 = vmatpush.bf16.msra.mxu0 %v590
    %774 = vmatpush.bf16.msra.mxu0 %v574
    %775 = vmatpush.bf16.msra.mxu0 %v558
    %776 = vmatpush.bf16.msra.mxu0 %v542
    %777 = vmatpush.bf16.msra.mxu0 %v526
    %778 = vmatpush.bf16.msra.mxu0 %v510
    %779 = vmatmul.bf16.gmra.mxu0 %v720
    %v780 = vpop.f32.mrf.mxu0
    %v781 = vadd.f32 0.0, %v780
    %v782 = vpop.f32.mrf.mxu0
    %783 = vdwg.mxu0
    %784 = vmatpush.bf16.msra.mxu0 0
    %785 = vmatpush.bf16.msra.mxu0 %v727
    %786 = vmatpush.bf16.msra.mxu0 %v591
    %787 = vmatpush.bf16.msra.mxu0 %v575
    %788 = vmatpush.bf16.msra.mxu0 %v559
    %789 = vmatpush.bf16.msra.mxu0 %v543
    %790 = vmatpush.bf16.msra.mxu0 %v527
    %791 = vmatpush.bf16.msra.mxu0 %v511
    %792 = vmatmul.bf16.gmra.mxu0 %v720
    %v793 = vpop.f32.mrf.mxu0
    %v794 = vadd.f32 0.0, %v793
    %v795 = vpop.f32.mrf.mxu0
    %796 = vdwg.mxu0
    %797 = vmatpush.bf16.msra.mxu0 0
    %798 = vmatpush.bf16.msra.mxu0 %v730
    %799 = vmatpush.bf16.msra.mxu0 %v592
    %800 = vmatpush.bf16.msra.mxu0 %v576
    %801 = vmatpush.bf16.msra.mxu0 %v560
    %802 = vmatpush.bf16.msra.mxu0 %v544
    %803 = vmatpush.bf16.msra.mxu0 %v528
    %804 = vmatpush.bf16.msra.mxu0 %v512
    %805 = vmatmul.bf16.gmra.mxu0 %v720
    %v806 = vpop.f32.mrf.mxu0
    %v807 = vadd.f32 0.0, %v806
    %v808 = vpop.f32.mrf.mxu0
    %809 = vdwg.mxu0
    %810 = vmatpush.bf16.msra.mxu0 0
    %811 = vmatpush.bf16.msra.mxu0 %v733
    %812 = vmatpush.bf16.msra.mxu0 %v593
    %813 = vmatpush.bf16.msra.mxu0 %v577
    %814 = vmatpush.bf16.msra.mxu0 %v561
    %815 = vmatpush.bf16.msra.mxu0 %v545
    %816 = vmatpush.bf16.msra.mxu0 %v529
    %817 = vmatpush.bf16.msra.mxu0 %v513
    %818 = vmatmul.bf16.gmra.mxu0 %v720
    %v819 = vpop.f32.mrf.mxu0
    %v820 = vadd.f32 0.0, %v819
    %v821 = vpop.f32.mrf.mxu0
    %822 = vdwg.mxu0
    %823 = vmatpush.bf16.msra.mxu0 0
    %824 = vmatpush.bf16.msra.mxu0 %v736
    %825 = vmatpush.bf16.msra.mxu0 %v594
    %826 = vmatpush.bf16.msra.mxu0 %v578
    %827 = vmatpush.bf16.msra.mxu0 %v562
    %828 = vmatpush.bf16.msra.mxu0 %v546
    %829 = vmatpush.bf16.msra.mxu0 %v530
    %830 = vmatpush.bf16.msra.mxu0 %v514
    %831 = vmatmul.bf16.gmra.mxu0 %v720
    %v832 = vpop.f32.mrf.mxu0
    %v833 = vadd.f32 0.0, %v832
    %v834 = vpop.f32.mrf.mxu0
    %835 = vdwg.mxu0
    %836 = vmatpush.bf16.msra.mxu0 0
    %837 = vmatpush.bf16.msra.mxu0 %v739
    %838 = vmatpush.bf16.msra.mxu0 %v595
    %839 = vmatpush.bf16.msra.mxu0 %v579
    %840 = vmatpush.bf16.msra.mxu0 %v563
    %841 = vmatpush.bf16.msra.mxu0 %v547
    %842 = vmatpush.bf16.msra.mxu0 %v531
    %843 = vmatpush.bf16.msra.mxu0 %v515
    %844 = vmatmul.bf16.gmra.mxu0 %v720
    %v845 = vpop.f32.mrf.mxu0
    %v846 = vadd.f32 0.0, %v845
    %v847 = vpop.f32.mrf.mxu0
    %848 = vdwg.mxu0
    %849 = vmatpush.bf16.msra.mxu0 0
    %850 = vmatpush.bf16.msra.mxu0 %v742
    %851 = vmatpush.bf16.msra.mxu0 %v596
    %852 = vmatpush.bf16.msra.mxu0 %v580
    %853 = vmatpush.bf16.msra.mxu0 %v564
    %854 = vmatpush.bf16.msra.mxu0 %v548
    %855 = vmatpush.bf16.msra.mxu0 %v532
    %856 = vmatpush.bf16.msra.mxu0 %v516
    %857 = vmatmul.bf16.gmra.mxu0 %v720
    %v858 = vpop.f32.mrf.mxu0
    %v859 = vadd.f32 0.0, %v858
    %v860 = vpop.f32.mrf.mxu0
    %861 = vdwg.mxu0
    %862 = vmatpush.bf16.msra.mxu0 0
    %863 = vmatpush.bf16.msra.mxu0 %v745
    %864 = vmatpush.bf16.msra.mxu0 %v597
    %865 = vmatpush.bf16.msra.mxu0 %v581
    %866 = vmatpush.bf16.msra.mxu0 %v565
    %867 = vmatpush.bf16.msra.mxu0 %v549
    %868 = vmatpush.bf16.msra.mxu0 %v533
    %869 = vmatpush.bf16.msra.mxu0 %v517
    %870 = vmatmul.bf16.gmra.mxu0 %v720
    %v871 = vpop.f32.mrf.mxu0
    %v872 = vadd.f32 0.0, %v871
    %v873 = vpop.f32.mrf.mxu0
    %874 = vdwg.mxu0
    %875 = vmatpush.bf16.msra.mxu0 0
    %876 = vmatpush.bf16.msra.mxu0 %v748
    %877 = vmatpush.bf16.msra.mxu0 %v598
    %878 = vmatpush.bf16.msra.mxu0 %v582
    %879 = vmatpush.bf16.msra.mxu0 %v566
    %880 = vmatpush.bf16.msra.mxu0 %v550
    %881 = vmatpush.bf16.msra.mxu0 %v534
    %882 = vmatpush.bf16.msra.mxu0 %v518
    %883 = vmatmul.bf16.gmra.mxu0 %v720
    %v884 = vpop.f32.mrf.mxu0
    %v885 = vadd.f32 0.0, %v884
    %v886 = vpop.f32.mrf.mxu0
    %887 = vdwg.mxu0
    %888 = vmatpush.bf16.msra.mxu0 0
    %889 = vmatpush.bf16.msra.mxu0 %v751
    %890 = vmatpush.bf16.msra.mxu0 %v599
    %891 = vmatpush.bf16.msra.mxu0 %v583
    %892 = vmatpush.bf16.msra.mxu0 %v567
    %893 = vmatpush.bf16.msra.mxu0 %v551
    %894 = vmatpush.bf16.msra.mxu0 %v535
    %895 = vmatpush.bf16.msra.mxu0 %v519
    %896 = vmatmul.bf16.gmra.mxu0 %v720
    %v897 = vpop.f32.mrf.mxu0
    %v898 = vadd.f32 0.0, %v897
    %v899 = vpop.f32.mrf.mxu0
    %900 = vdwg.mxu0
    %901 = vmatpush.bf16.msra.mxu0 0
    %902 = vmatpush.bf16.msra.mxu0 %v754
    %903 = vmatpush.bf16.msra.mxu0 %v600
    %904 = vmatpush.bf16.msra.mxu0 %v584
    %905 = vmatpush.bf16.msra.mxu0 %v568
    %906 = vmatpush.bf16.msra.mxu0 %v552
    %907 = vmatpush.bf16.msra.mxu0 %v536
    %908 = vmatpush.bf16.msra.mxu0 %v520
    %909 = vmatmul.bf16.gmra.mxu0 %v720
    %v910 = vpop.f32.mrf.mxu0
    %v911 = vadd.f32 0.0, %v910
    %v912 = vpop.f32.mrf.mxu0
    %913 = vdwg.mxu0
    %914 = vmatpush.bf16.msra.mxu0 0
    %915 = vmatpush.bf16.msra.mxu0 %v757
    %916 = vmatpush.bf16.msra.mxu0 %v601
    %917 = vmatpush.bf16.msra.mxu0 %v585
    %918 = vmatpush.bf16.msra.mxu0 %v569
    %919 = vmatpush.bf16.msra.mxu0 %v553
    %920 = vmatpush.bf16.msra.mxu0 %v537
    %921 = vmatpush.bf16.msra.mxu0 %v521
    %922 = vmatmul.bf16.gmra.mxu0 %v720
    %v923 = vpop.f32.mrf.mxu0
    %v924 = vadd.f32 0.0, %v923
    %v925 = vpop.f32.mrf.mxu0
    %926 = vdwg.mxu0
    %927 = vmatpush.bf16.msra.mxu0 0
    %928 = vmatpush.bf16.msra.mxu0 %v760
    %929 = vmatpush.bf16.msra.mxu0 %v602
    %930 = vmatpush.bf16.msra.mxu0 %v586
    %931 = vmatpush.bf16.msra.mxu0 %v570
    %932 = vmatpush.bf16.msra.mxu0 %v554
    %933 = vmatpush.bf16.msra.mxu0 %v538
    %934 = vmatpush.bf16.msra.mxu0 %v522
    %935 = vmatmul.bf16.gmra.mxu0 %v720
    %v936 = vpop.f32.mrf.mxu0
    %v937 = vadd.f32 0.0, %v936
    %v938 = vpop.f32.mrf.mxu0
    %939 = vdwg.mxu0
    %940 = vmatpush.bf16.msra.mxu0 0
    %941 = vmatpush.bf16.msra.mxu0 %v763
    %942 = vmatpush.bf16.msra.mxu0 %v603
    %943 = vmatpush.bf16.msra.mxu0 %v587
    %944 = vmatpush.bf16.msra.mxu0 %v571
    %945 = vmatpush.bf16.msra.mxu0 %v555
    %946 = vmatpush.bf16.msra.mxu0 %v539
    %947 = vmatpush.bf16.msra.mxu0 %v523
    %948 = vmatmul.bf16.gmra.mxu0 %v720
    %v949 = vpop.f32.mrf.mxu0
    %v950 = vadd.f32 0.0, %v949
    %v951 = vpop.f32.mrf.mxu0
    %952 = vdwg.mxu0
    %953 = vmatpush.bf16.msra.mxu0 0
    %954 = vmatpush.bf16.msra.mxu0 %v766
    %955 = vmatpush.bf16.msra.mxu0 %v604
    %956 = vmatpush.bf16.msra.mxu0 %v588
    %957 = vmatpush.bf16.msra.mxu0 %v572
    %958 = vmatpush.bf16.msra.mxu0 %v556
    %959 = vmatpush.bf16.msra.mxu0 %v540
    %960 = vmatpush.bf16.msra.mxu0 %v524
    %961 = vmatmul.bf16.gmra.mxu0 %v720
    %v962 = vpop.f32.mrf.mxu0
    %v963 = vadd.f32 0.0, %v962
    %v964 = vpop.f32.mrf.mxu0
    %965 = vdwg.mxu0
    %966 = vmatpush.bf16.msra.mxu0 0
    %967 = vmatpush.bf16.msra.mxu0 %v769
    %968 = vmatpush.bf16.msra.mxu0 %v605
    %969 = vmatpush.bf16.msra.mxu0 %v589
    %970 = vmatpush.bf16.msra.mxu0 %v573
    %971 = vmatpush.bf16.msra.mxu0 %v557
    %972 = vmatpush.bf16.msra.mxu0 %v541
    %973 = vmatpush.bf16.msra.mxu0 %v525
    %974 = vmatmul.bf16.gmra.mxu0 %v720
    %v975 = vpop.f32.mrf.mxu0
    %v976 = vadd.f32 0.0, %v975
    %v977 = vpop.f32.mrf.mxu0
    %978 = vdwg.mxu0
    %v979 = vld [vmem:[#allocation4] sm:$0xff]
    %v980 = vld [vmem:[#allocation4 + $0x8] sm:$0xff]
    %v983 = vperm.slane %v979, 0
    %v984 = vperm.slane %v979, 1
    %v985 = vperm.slane %v979, 2
    %v986 = vperm.slane %v979, 3
    %v987 = vperm.slane %v979, 4
    %v988 = vperm.slane %v979, 5
    %v989 = vperm.slane %v979, 6
    %v990 = vperm.slane %v979, 7
    %v991 = vperm.slane %v980, 0
    %v992 = vperm.slane %v980, 1
    %v993 = vperm.slane %v980, 2
    %v994 = vperm.slane %v980, 3
    %v995 = vperm.slane %v980, 4
    %v996 = vperm.slane %v980, 5
    %v997 = vperm.slane %v980, 6
    %v998 = vperm.slane %v980, 7
    %v1015 = vmul.f32 %v781, %v983
    %v1016 = vmul.f32 %v794, %v984
    %v1017 = vmul.f32 %v807, %v985
    %v1018 = vmul.f32 %v820, %v986
    %v1019 = vmul.f32 %v833, %v987
    %v1020 = vmul.f32 %v846, %v988
    %v1021 = vmul.f32 %v859, %v989
    %v1022 = vmul.f32 %v872, %v990
    %v1023 = vmul.f32 %v885, %v991
    %v1024 = vmul.f32 %v898, %v992
    %v1025 = vmul.f32 %v911, %v993
    %v1026 = vmul.f32 %v924, %v994
    %v1027 = vmul.f32 %v937, %v995
    %v1028 = vmul.f32 %v950, %v996
    %v1029 = vmul.f32 %v963, %v997
    %v1030 = vmul.f32 %v976, %v998
    %v1031 = vld [vmem:[#allocation6] sm:$0xff]
    %v1032 = vld [vmem:[#allocation6 + $0x8] sm:$0xff]
    %v1035 = vperm.slane %v1031, 0
    %v1036 = vperm.slane %v1031, 1
    %v1037 = vperm.slane %v1031, 2
    %v1038 = vperm.slane %v1031, 3
    %v1039 = vperm.slane %v1031, 4
    %v1040 = vperm.slane %v1031, 5
    %v1041 = vperm.slane %v1031, 6
    %v1042 = vperm.slane %v1031, 7
    %v1043 = vperm.slane %v1032, 0
    %v1044 = vperm.slane %v1032, 1
    %v1045 = vperm.slane %v1032, 2
    %v1046 = vperm.slane %v1032, 3
    %v1047 = vperm.slane %v1032, 4
    %v1048 = vperm.slane %v1032, 5
    %v1049 = vperm.slane %v1032, 6
    %v1050 = vperm.slane %v1032, 7
    %v1067 = vadd.f32 %v1015, %v1035
    %v1068 = vadd.f32 %v1016, %v1036
    %v1069 = vadd.f32 %v1017, %v1037
    %v1070 = vadd.f32 %v1018, %v1038
    %v1071 = vadd.f32 %v1019, %v1039
    %v1072 = vadd.f32 %v1020, %v1040
    %v1073 = vadd.f32 %v1021, %v1041
    %v1074 = vadd.f32 %v1022, %v1042
    %v1075 = vadd.f32 %v1023, %v1043
    %v1076 = vadd.f32 %v1024, %v1044
    %v1077 = vadd.f32 %v1025, %v1045
    %v1078 = vadd.f32 %v1026, %v1046
    %v1079 = vadd.f32 %v1027, %v1047
    %v1080 = vadd.f32 %v1028, %v1048
    %v1081 = vadd.f32 %v1029, %v1049
    %v1082 = vadd.f32 %v1030, %v1050
    %v1083 = vmax.f32 %v1067, 0.0
    %v1084 = vmax.f32 %v1068, 0.0
    %v1085 = vmax.f32 %v1069, 0.0
    %v1086 = vmax.f32 %v1070, 0.0
    %v1087 = vmax.f32 %v1071, 0.0
    %v1088 = vmax.f32 %v1072, 0.0
    %v1089 = vmax.f32 %v1073, 0.0
    %v1090 = vmax.f32 %v1074, 0.0
    %v1091 = vmax.f32 %v1075, 0.0
    %v1092 = vmax.f32 %v1076, 0.0
    %v1093 = vmax.f32 %v1077, 0.0
    %v1094 = vmax.f32 %v1078, 0.0
    %v1095 = vmax.f32 %v1079, 0.0
    %v1096 = vmax.f32 %v1080, 0.0
    %v1097 = vmax.f32 %v1081, 0.0
    %v1098 = vmax.f32 %v1082, 0.0
    %v1115 = vrot.slane %v1084, 6
    %v1116 = vrot.slane %v1085, 4
    %v1117 = vrot.slane %v1086, 2
    %v1118 = vrot.slane %v1088, 6
    %v1119 = vrot.slane %v1089, 4
    %v1120 = vrot.slane %v1090, 2
    %v1121 = vrot.slane %v1092, 6
    %v1122 = vrot.slane %v1093, 4
    %v1123 = vrot.slane %v1094, 2
    %v1124 = vrot.slane %v1096, 6
    %v1125 = vrot.slane %v1097, 4
    %v1126 = vrot.slane %v1098, 2
    %vm1127 = vcmask 1041408
    %v1128 = vsel %vm1127, %v1083, %v1115
    %vm1129 = vcmask 1045508
    %v1130 = vsel %vm1129, %v1116, %v1117
    %vm1131 = vcmask 1043456
    %v1132 = vsel %vm1131, %v1128, %v1130
    %v1133 = vsel %vm1127, %v1087, %v1118
    %v1134 = vsel %vm1129, %v1119, %v1120
    %v1135 = vsel %vm1131, %v1133, %v1134
    %v1136 = vsel %vm1127, %v1091, %v1121
    %v1137 = vsel %vm1129, %v1122, %v1123
    %v1138 = vsel %vm1131, %v1136, %v1137
    %v1139 = vsel %vm1127, %v1095, %v1124
    %v1140 = vsel %vm1129, %v1125, %v1126
    %v1141 = vsel %vm1131, %v1139, %v1140
    %1146 = vst [vmem:[%s4] sm:$0xff] %v1132
    %1147 = vst [vmem:[%s4 + $0x8] sm:$0xff] %v1135
    %1148 = vst [vmem:[%s4 + $0x10] sm:$0xff] %v1138
    %1149 = vst [vmem:[%s4 + $0x18] sm:$0xff] %v1141
    // Predicated region
    $region30: #{conditional_generator_forward.5} parent=1 // pred_check
      _
    $region31: #{conditional_generator_forward.5} parent=1 // pred_check_branch
      %1151 = sbr.rel (0) target = $region33
    $region32: #{conditional_generator_forward.5} parent=1 // pred_region
      _
    $region33: #{conditional_generator_forward.5} parent=1 // pred_fallthru
      _
    // Predicated region
    $region34: #{conditional_generator_forward.5} parent=1 // pred_check
      _
    $region35: #{conditional_generator_forward.5} parent=1 // pred_check_branch
      %1153 = sbr.rel (0) target = $region37
    $region36: #{conditional_generator_forward.5} parent=1 // pred_region
      _
    $region37: #{conditional_generator_forward.5} parent=1 // pred_fallthru
      _
    %1154 = vsyncpa [#allocation3], 1
    %1155 = vsyncpa [#allocation5], 1

// kernel: conditional_generator_forward.7
$region0: #{conditional_generator_forward.7}
  #allocation0 [shape = 'u32[]', space=smem, size = 0x4, offset = 0x4, fixed_abs, tag = 'smem constant byte address 0x4 - core index']
  #allocation1 [shape = 'u32[72,128]{1,0:T(1,128)}', space=vmem, size = 0x9000, scoped, tag = 'internal scratch']
  %s0 = inlined_call_operand.vmem [shape: bf16[8,9,9,64], index: 0, kind: input, shape index: {}]
  %s1 = inlined_call_operand.vmem [shape: bf16[4,256,32], index: 1, kind: input, shape index: {}]
  %s2 = inlined_call_operand.vmem [shape: f32[1,32], index: 2, kind: input, shape index: {}]
  %s3 = inlined_call_operand.vmem [shape: f32[1,32], index: 3, kind: input, shape index: {}]
  %s4 = inlined_call_operand.vmem [shape: f32[8,64,32], index: 4, kind: output, shape index: {}]
  %s5 = sld [smem:[#allocation0]]
  $region49: #{conditional_generator_forward.7} parent=0
    _
  %s7 = ssub.s32 1, %s5
  %s8 = scalar_select 0, %s7, %s5
  loop: start=0, step=1, limit=10
  $region2: #{conditional_generator_forward.7} parent=0 // loop_pre_header
    _
  $region3: #{conditional_generator_forward.7} parent=0 // loop_header
    %s10 = sphi 0, %s14
    %p11 = scmp.ge.s32.totalorder %s10, 10
    %s17 = sphi 0, %s29
    %s18 = sphi 0, %s25
    %s19 = sphi 0, %s17
    %s20 = sphi 0, %s18
    %s21 = sphi 0, %s19
    %s22 = sphi 0, %s20
    %s36 = sphi 0, %s38
    %s39 = sphi 0, %s36
    %s40 = sphi 0, %s39
    %s56 = sphi 0, %s40
    %s62 = sphi 0, %s64
    %s65 = sphi 0, %s62
    %s66 = sphi 0, %s65
    %s82 = sphi 0, %s66
    %s86 = sphi 0, %s86
    %s88 = sphi 0, %s86
    %s89 = sphi 0, %s88
    %s103 = sphi 0, %s89
    %s107 = sphi 0, %s107
    %s109 = sphi 0, %s107
    %s110 = sphi 0, %s109
    %s124 = sphi 0, %s110
    %s134 = sphi 0, %s136
    %s137 = sphi 0, %s134
    %s138 = sphi 0, %s137
    %s154 = sphi 0, %s138
  $region4: #{conditional_generator_forward.7} parent=0 // loop_header_branch
    %13 = sbr.rel (%p11) target = $region8
  $region5: #{conditional_generator_forward.7} parent=0 // loop_body
    %s15 = ssub.s32 %s10, 1
    %s16 = ssub.s32 %s10, 2
    %s23 = sadd.s32 1, %s18
    %p24 = scmp.ge.s32.totalorder %s23, 2
    %s25 = scalar_select %p24, 0, %s23
    %s26 = sadd.s32 1, %s17
    %s27 = scalar_select %p24, %s26, %s17
    %p28 = scmp.ge.s32.totalorder %s27, 4
    %s29 = scalar_select %p28, 0, %s27
    %s30 = smul.u32 %s18, 4
    %s31 = sadd.s32 %s30, %s17
    %s32 = smul.u32 %s25, 4
    %s33 = sadd.s32 %s32, %s29
    %s34 = ssub.s32 %s31, %s33
    %p35 = scmp.eq.s32.totalorder %s34, 0
    %s37 = sadd.s32 %s36, 1
    %s38 = scalar_select %p35, %s36, %s37
    %p41 = pneg %p35
    %p42 = scmp.eq.s32.totalorder %s10, 7
    %p43 = por %p41, %p42
    %p44 = scmp.ne.s32.totalorder %s36, %s39
    %p45 = scmp.eq.s32.totalorder %s10, 0
    %p46 = por %p44, %p45
    %p47 = scmp.ne.s32.totalorder %s36, %s39
    %p48 = scmp.eq.s32.totalorder %s15, 7
    %p49 = por %p47, %p48
    %p50 = scmp.ne.s32.totalorder %s39, %s40
    %p51 = scmp.eq.s32.totalorder %s15, 0
    %p52 = por %p50, %p51
    %p53 = scmp.ne.s32.totalorder %s39, %s40
    %p54 = scmp.eq.s32.totalorder %s16, 7
    %p55 = por %p53, %p54
    %p57 = scmp.ne.s32.totalorder %s40, %s56
    %p58 = scmp.eq.s32.totalorder %s16, 0
    %p59 = por %p57, %p58
    %s60 = ssub.s32 %s17, %s29
    %p61 = scmp.eq.s32.totalorder %s60, 0
    %s63 = sadd.s32 %s62, 1
    %s64 = scalar_select %p61, %s62, %s63
    %p67 = pneg %p61
    %p68 = scmp.eq.s32.totalorder %s10, 7
    %p69 = por %p67, %p68
    %p70 = scmp.ne.s32.totalorder %s62, %s65
    %p71 = scmp.eq.s32.totalorder %s10, 0
    %p72 = por %p70, %p71
    %p73 = scmp.ne.s32.totalorder %s62, %s65
    %p74 = scmp.eq.s32.totalorder %s15, 7
    %p75 = por %p73, %p74
    %p76 = scmp.ne.s32.totalorder %s65, %s66
    %p77 = scmp.eq.s32.totalorder %s15, 0
    %p78 = por %p76, %p77
    %p79 = scmp.ne.s32.totalorder %s65, %s66
    %p80 = scmp.eq.s32.totalorder %s16, 7
    %p81 = por %p79, %p80
    %p83 = scmp.ne.s32.totalorder %s66, %s82
    %p84 = scmp.eq.s32.totalorder %s16, 0
    %p85 = por %p83, %p84
    %s87 = sadd.s32 %s86, 1
    %p90 = scmp.eq.s32.totalorder %s10, 7
    %p91 = scmp.ne.s32.totalorder %s86, %s88
    %p92 = scmp.eq.s32.totalorder %s10, 0
    %p93 = por %p91, %p92
    %p94 = scmp.ne.s32.totalorder %s86, %s88
    %p95 = scmp.eq.s32.totalorder %s15, 7
    %p96 = por %p94, %p95
    %p97 = scmp.ne.s32.totalorder %s88, %s89
    %p98 = scmp.eq.s32.totalorder %s15, 0
    %p99 = por %p97, %p98
    %p100 = scmp.ne.s32.totalorder %s88, %s89
    %p101 = scmp.eq.s32.totalorder %s16, 7
    %p102 = por %p100, %p101
    %p104 = scmp.ne.s32.totalorder %s89, %s103
    %p105 = scmp.eq.s32.totalorder %s16, 0
    %p106 = por %p104, %p105
    %s108 = sadd.s32 %s107, 1
    %p111 = scmp.eq.s32.totalorder %s10, 7
    %p112 = scmp.ne.s32.totalorder %s107, %s109
    %p113 = scmp.eq.s32.totalorder %s10, 0
    %p114 = por %p112, %p113
    %p115 = scmp.ne.s32.totalorder %s107, %s109
    %p116 = scmp.eq.s32.totalorder %s15, 7
    %p117 = por %p115, %p116
    %p118 = scmp.ne.s32.totalorder %s109, %s110
    %p119 = scmp.eq.s32.totalorder %s15, 0
    %p120 = por %p118, %p119
    %p121 = scmp.ne.s32.totalorder %s109, %s110
    %p122 = scmp.eq.s32.totalorder %s16, 7
    %p123 = por %p121, %p122
    %p125 = scmp.ne.s32.totalorder %s110, %s124
    %p126 = scmp.eq.s32.totalorder %s16, 0
    %p127 = por %p125, %p126
    %s128 = smul.u32 %s18, 4
    %s129 = sadd.s32 %s128, %s17
    %s130 = smul.u32 %s25, 4
    %s131 = sadd.s32 %s130, %s29
    %s132 = ssub.s32 %s129, %s131
    %p133 = scmp.eq.s32.totalorder %s132, 0
    %s135 = sadd.s32 %s134, 1
    %s136 = scalar_select %p133, %s134, %s135
    %p139 = pneg %p133
    %p140 = scmp.eq.s32.totalorder %s10, 7
    %p141 = por %p139, %p140
    %p142 = scmp.ne.s32.totalorder %s134, %s137
    %p143 = scmp.eq.s32.totalorder %s10, 0
    %p144 = por %p142, %p143
    %p145 = scmp.ne.s32.totalorder %s134, %s137
    %p146 = scmp.eq.s32.totalorder %s15, 7
    %p147 = por %p145, %p146
    %p148 = scmp.ne.s32.totalorder %s137, %s138
    %p149 = scmp.eq.s32.totalorder %s15, 0
    %p150 = por %p148, %p149
    %p151 = scmp.ne.s32.totalorder %s137, %s138
    %p152 = scmp.eq.s32.totalorder %s16, 7
    %p153 = por %p151, %p152
    %p155 = scmp.ne.s32.totalorder %s138, %s154
    %p156 = scmp.eq.s32.totalorder %s16, 0
    %p157 = por %p155, %p156
    %p158 = scmp.le.s32.totalorder 1, %s10
    %p159 = scmp.lt.s32.totalorder %s10, 9
    %p160 = pnand %p158, %p159
    %p161 = pneg %p160
    // Predicated region
    $region9: #{conditional_generator_forward.7} parent=5 // pred_check
      _
    $region10: #{conditional_generator_forward.7} parent=5 // pred_check_branch
      %163 = sbr.rel (%p160) target = $region12
    $region11: #{conditional_generator_forward.7} parent=5 // pred_region
      %s164 = ssub.s32 %s10, 1
      // Predicated region
      $region13: #{conditional_generator_forward.7} parent=11 // pred_check
        %p165 = pneg %p99
      $region14: #{conditional_generator_forward.7} parent=11 // pred_check_branch
        %167 = sbr.rel (%p165) target = $region16
      $region15: #{conditional_generator_forward.7} parent=11 // pred_region
        _
      $region16: #{conditional_generator_forward.7} parent=11 // pred_fallthru
        _
      // Predicated region
      $region17: #{conditional_generator_forward.7} parent=11 // pred_check
        %p168 = pneg %p120
      $region18: #{conditional_generator_forward.7} parent=11 // pred_check_branch
        %170 = sbr.rel (%p168) target = $region20
      $region19: #{conditional_generator_forward.7} parent=11 // pred_region
        _
      $region20: #{conditional_generator_forward.7} parent=11 // pred_fallthru
        _
    $region12: #{conditional_generator_forward.7} parent=5 // pred_fallthru
      _
    %p171 = scmp.lt.s32.totalorder %s10, 8
    // Predicated region
    $region21: #{conditional_generator_forward.7} parent=5 // pred_check
      %p172 = pneg %p171
    $region22: #{conditional_generator_forward.7} parent=5 // pred_check_branch
      %174 = sbr.rel (%p172) target = $region24
    $region23: #{conditional_generator_forward.7} parent=5 // pred_region
      // Predicated region
      $region25: #{conditional_generator_forward.7} parent=23 // pred_check
        %p175 = pneg %p46
      $region26: #{conditional_generator_forward.7} parent=23 // pred_check_branch
        %177 = sbr.rel (%p175) target = $region28
      $region27: #{conditional_generator_forward.7} parent=23 // pred_region
        %s178 = smul.u32 %s18, 4
        %s179 = sadd.s32 %s178, %s17
        %p180 = scmp.lt.s32.totalorder %s179, 7
        %s181 = scalar_select %p180, %s179, 7
        %s182 = smul.addr %s181, 18
        %s183 = smul.addr %s182, 4
        %s184 = scalar_lea.vmem %s0, %s183
        %s185 = smul.u32 %s18, 4
        %s186 = sadd.s32 %s185, %s17
      $region28: #{conditional_generator_forward.7} parent=23 // pred_fallthru
        _
      // Predicated region
      $region29: #{conditional_generator_forward.7} parent=23 // pred_check
        %p187 = pneg %p72
      $region30: #{conditional_generator_forward.7} parent=23 // pred_check_branch
        %189 = sbr.rel (%p187) target = $region32
      $region31: #{conditional_generator_forward.7} parent=23 // pred_region
        %p190 = scmp.lt.s32.totalorder %s17, 3
        %s191 = scalar_select %p190, %s17, 3
        %s192 = smul.addr %s191, 32
        %s193 = smul.addr %s192, 4
        %s194 = scalar_lea.vmem %s1, %s193
      $region32: #{conditional_generator_forward.7} parent=23 // pred_fallthru
        _
    $region24: #{conditional_generator_forward.7} parent=5 // pred_fallthru
      _
    %p195 = scmp.le.s32.totalorder 1, %s10
    %p196 = scmp.lt.s32.totalorder %s10, 9
    %p197 = pnand %p195, %p196
    %p198 = pneg %p197
    // Predicated region
    $region33: #{conditional_generator_forward.7} parent=5 // pred_check
      _
    $region34: #{conditional_generator_forward.7} parent=5 // pred_check_branch
      %200 = sbr.rel (%p197) target = $region36
    $region35: #{conditional_generator_forward.7} parent=5 // pred_region
      %s201 = ssub.s32 %s10, 1
      %s202 = smul.u32 %s20, 4
      %s203 = sadd.s32 %s202, %s19
      %p204 = scmp.lt.s32.totalorder %s203, 7
      %s205 = scalar_select %p204, %s203, 7
      %s206 = smul.addr %s205, 18
      %s207 = smul.addr %s206, 4
      %s208 = scalar_lea.vmem %s0, %s207
      %p209 = pneg %p52
      %p210 = pneg %p49
      %p211 = scmp.lt.s32.totalorder %s19, 3
      %s212 = scalar_select %p211, %s19, 3
      %s213 = smul.addr %s212, 32
      %s214 = smul.addr %s213, 4
      %s215 = scalar_lea.vmem %s1, %s214
      %p216 = pneg %p78
      %p217 = pneg %p75
      %p218 = pneg %p99
      %p219 = pneg %p96
      %p220 = pneg %p120
      %p221 = pneg %p117
      %p222 = pneg %p150
      %p223 = pneg %p147
      %s224 = smul.u32 %s20, 4
      %s225 = sadd.s32 %s224, %s19
      %p226 = scmp.lt.s32.totalorder %s225, 7
      %s227 = scalar_select %p226, %s225, 7
      %s228 = smul.addr %s227, 8
      %s229 = smul.addr %s228, 8
      %s230 = scalar_lea.vmem %s4, %s229
      %s231 = smul.u32 %s20, 4
      %s232 = sadd.s32 %s231, %s19
      %p233 = scmp.lt.s32.totalorder %s232, 7
      %s234 = scalar_select %p233, %s232, 7
      %s235 = smul.addr %s234, 18
      %s236 = smul.addr %s235, 4
      %s237 = scalar_lea.vmem %s0, %s236
      %s238 = smul.u32 %s20, 4
      %s239 = sadd.s32 %s238, %s19
      %p240 = scmp.lt.s32.totalorder %s19, 3
      %s241 = scalar_select %p240, %s19, 3
      %s242 = smul.addr %s241, 32
      %s243 = smul.addr %s242, 4
      %s244 = scalar_lea.vmem %s1, %s243
      %s245 = smul.u32 %s20, 4
      %s246 = sadd.s32 %s245, %s19
      %p247 = scmp.lt.s32.totalorder %s246, 7
      %s248 = scalar_select %p247, %s246, 7
      %s249 = smul.addr %s248, 8
      %s250 = smul.addr %s249, 8
      %s251 = scalar_lea.vmem %s4, %s250
      %s252 = smul.u32 %s20, 4
      %s253 = sadd.s32 %s252, %s19
      %v254 = vld [vmem:[%s237] sm:$0xf]
      %v255 = vld [vmem:[%s237 + $0x4] sm:$0x1]
      %v256 = vld [vmem:[%s237 + $0x8] sm:$0xf]
      %v257 = vld [vmem:[%s237 + $0xc] sm:$0x1]
      %v258 = vld [vmem:[%s237 + $0x10] sm:$0xf]
      %v259 = vld [vmem:[%s237 + $0x14] sm:$0x1]
      %v260 = vld [vmem:[%s237 + $0x18] sm:$0xf]
      %v261 = vld [vmem:[%s237 + $0x1c] sm:$0x1]
      %v262 = vld [vmem:[%s237 + $0x20] sm:$0xf]
      %v263 = vld [vmem:[%s237 + $0x24] sm:$0x1]
      %v264 = vld [vmem:[%s237 + $0x28] sm:$0xf]
      %v265 = vld [vmem:[%s237 + $0x2c] sm:$0x1]
      %v266 = vld [vmem:[%s237 + $0x30] sm:$0xf]
      %v267 = vld [vmem:[%s237 + $0x34] sm:$0x1]
      %v268 = vld [vmem:[%s237 + $0x38] sm:$0xf]
      %v269 = vld [vmem:[%s237 + $0x3c] sm:$0x1]
      %v270 = vld [vmem:[%s237 + $0x40] sm:$0xf]
      %v271 = vld [vmem:[%s237 + $0x44] sm:$0x1]
      %vm272 = vsmask.f32 3328
      %vm273 = vsmask.f32 7440
      %vm274 = vmor %vm272, %vm273
      %v276 = vshrl.u32 %v254, 16
      %v278 = vrot.slane %v276, 4
      %v279 = vshll.u32 %v254, 16
      %v281 = vrot.slane %v279, 5
      %v282 = vor.u32 %v278, %v281
      %v283 = vrot.slane %v282, 4
      %v285 = vshll.u32 %v255, 16
      %v287 = vrot.slane %v285, 5
      %v288 = vsel %vm274, %v283, %v287
      %v290 = vshrl.u32 %v256, 16
      %v292 = vrot.slane %v290, 4
      %v293 = vshll.u32 %v256, 16
      %v295 = vrot.slane %v293, 5
      %v296 = vor.u32 %v292, %v295
      %v297 = vrot.slane %v296, 4
      %v299 = vshll.u32 %v257, 16
      %v301 = vrot.slane %v299, 5
      %v302 = vsel %vm274, %v297, %v301
      %v304 = vshrl.u32 %v258, 16
      %v306 = vrot.slane %v304, 4
      %v307 = vshll.u32 %v258, 16
      %v309 = vrot.slane %v307, 5
      %v310 = vor.u32 %v306, %v309
      %v311 = vrot.slane %v310, 4
      %v313 = vshll.u32 %v259, 16
      %v315 = vrot.slane %v313, 5
      %v316 = vsel %vm274, %v311, %v315
      %v318 = vshrl.u32 %v260, 16
      %v320 = vrot.slane %v318, 4
      %v321 = vshll.u32 %v260, 16
      %v323 = vrot.slane %v321, 5
      %v324 = vor.u32 %v320, %v323
      %v325 = vrot.slane %v324, 4
      %v327 = vshll.u32 %v261, 16
      %v329 = vrot.slane %v327, 5
      %v330 = vsel %vm274, %v325, %v329
      %v332 = vshrl.u32 %v262, 16
      %v334 = vrot.slane %v332, 4
      %v335 = vshll.u32 %v262, 16
      %v337 = vrot.slane %v335, 5
      %v338 = vor.u32 %v334, %v337
      %v339 = vrot.slane %v338, 4
      %v341 = vshll.u32 %v263, 16
      %v343 = vrot.slane %v341, 5
      %v344 = vsel %vm274, %v339, %v343
      %v346 = vshrl.u32 %v264, 16
      %v348 = vrot.slane %v346, 4
      %v349 = vshll.u32 %v264, 16
      %v351 = vrot.slane %v349, 5
      %v352 = vor.u32 %v348, %v351
      %v353 = vrot.slane %v352, 4
      %v355 = vshll.u32 %v265, 16
      %v357 = vrot.slane %v355, 5
      %v358 = vsel %vm274, %v353, %v357
      %v360 = vshrl.u32 %v266, 16
      %v362 = vrot.slane %v360, 4
      %v363 = vshll.u32 %v266, 16
      %v365 = vrot.slane %v363, 5
      %v366 = vor.u32 %v362, %v365
      %v367 = vrot.slane %v366, 4
      %v369 = vshll.u32 %v267, 16
      %v371 = vrot.slane %v369, 5
      %v372 = vsel %vm274, %v367, %v371
      %v374 = vshrl.u32 %v268, 16
      %v376 = vrot.slane %v374, 4
      %v377 = vshll.u32 %v268, 16
      %v379 = vrot.slane %v377, 5
      %v380 = vor.u32 %v376, %v379
      %v381 = vrot.slane %v380, 4
      %v383 = vshll.u32 %v269, 16
      %v385 = vrot.slane %v383, 5
      %v386 = vsel %vm274, %v381, %v385
      %v388 = vshrl.u32 %v270, 16
      %v390 = vrot.slane %v388, 4
      %v391 = vshll.u32 %v270, 16
      %v393 = vrot.slane %v391, 5
      %v394 = vor.u32 %v390, %v393
      %v395 = vrot.slane %v394, 4
      %v397 = vshll.u32 %v271, 16
      %v399 = vrot.slane %v397, 5
      %v400 = vsel %vm274, %v395, %v399
      %v409 = vunpack.c.l.b16 %v254
      %v410 = vunpack.c.l.b16 %v256
      %v411 = vunpack.c.l.b16 %v258
      %v412 = vunpack.c.l.b16 %v260
      %v413 = vunpack.c.l.b16 %v262
      %v414 = vunpack.c.l.b16 %v264
      %v415 = vunpack.c.l.b16 %v266
      %v416 = vunpack.c.l.b16 %v268
      %v417 = vpack.c.b16 %v410, %v409
      %v418 = vpack.c.b16 %v412, %v411
      %v419 = vpack.c.b16 %v414, %v413
      %v420 = vpack.c.b16 %v416, %v415
      %v421 = vunpack.c.l.b16 %v288
      %v422 = vunpack.c.l.b16 %v302
      %v423 = vunpack.c.l.b16 %v316
      %v424 = vunpack.c.l.b16 %v330
      %v425 = vunpack.c.l.b16 %v344
      %v426 = vunpack.c.l.b16 %v358
      %v427 = vunpack.c.l.b16 %v372
      %v428 = vunpack.c.l.b16 %v386
      %v429 = vpack.c.b16 %v422, %v421
      %v430 = vpack.c.b16 %v424, %v423
      %v431 = vpack.c.b16 %v426, %v425
      %v432 = vpack.c.b16 %v428, %v427
      %433 = vrot.lane.b32.xlu0 %v429, 64
      %v434 = vpop.permute.xlu0 %433
      %435 = vrot.lane.b32.xlu0 %v430, 64
      %v436 = vpop.permute.xlu0 %435
      %437 = vrot.lane.b32.xlu0 %v431, 64
      %v438 = vpop.permute.xlu0 %437
      %439 = vrot.lane.b32.xlu0 %v432, 64
      %v440 = vpop.permute.xlu0 %439
      %v442 = vunpack.c.l.b16 %v270
      %v443 = vpack.c.b16 %v411, %v410
      %v444 = vpack.c.b16 %v413, %v412
      %v445 = vpack.c.b16 %v415, %v414
      %v446 = vpack.c.b16 %v442, %v416
      %v447 = vunpack.c.l.b16 %v400
      %v448 = vpack.c.b16 %v423, %v422
      %v449 = vpack.c.b16 %v425, %v424
      %v450 = vpack.c.b16 %v427, %v426
      %v451 = vpack.c.b16 %v447, %v428
      %452 = vrot.lane.b32.xlu0 %v448, 64
      %v453 = vpop.permute.xlu0 %452
      %454 = vrot.lane.b32.xlu0 %v449, 64
      %v455 = vpop.permute.xlu0 %454
      %456 = vrot.lane.b32.xlu0 %v450, 64
      %v457 = vpop.permute.xlu0 %456
      %458 = vrot.lane.b32.xlu0 %v451, 64
      %v459 = vpop.permute.xlu0 %458
      %vm460 = vcmask 523264
      %v463 = vsel %vm460, %v417, %v434
      %v467 = vsel %vm460, %v418, %v436
      %v471 = vsel %vm460, %v419, %v438
      %v475 = vsel %vm460, %v420, %v440
      %v479 = vsel %vm460, %v443, %v453
      %v483 = vsel %vm460, %v444, %v455
      %v487 = vsel %vm460, %v445, %v457
      %v491 = vsel %vm460, %v446, %v459
      %v493 = vld [vmem:[%s244] sm:$0xf]
      %v494 = vld [vmem:[%s244 + $0x4] sm:$0xf]
      %v495 = vld [vmem:[%s244 + $0x8] sm:$0xf]
      %v496 = vld [vmem:[%s244 + $0xc] sm:$0xf]
      %v497 = vld [vmem:[%s244 + $0x10] sm:$0xf]
      %v498 = vld [vmem:[%s244 + $0x14] sm:$0xf]
      %v499 = vld [vmem:[%s244 + $0x18] sm:$0xf]
      %v500 = vld [vmem:[%s244 + $0x1c] sm:$0xf]
      %v501 = vld [vmem:[%s244 + $0x20] sm:$0xf]
      %v502 = vld [vmem:[%s244 + $0x24] sm:$0xf]
      %v503 = vld [vmem:[%s244 + $0x28] sm:$0xf]
      %v504 = vld [vmem:[%s244 + $0x2c] sm:$0xf]
      %v505 = vld [vmem:[%s244 + $0x30] sm:$0xf]
      %v506 = vld [vmem:[%s244 + $0x34] sm:$0xf]
      %v507 = vld [vmem:[%s244 + $0x38] sm:$0xf]
      %v508 = vld [vmem:[%s244 + $0x3c] sm:$0xf]
      %v509 = vld [vmem:[%s244 + $0x40] sm:$0xf]
      %v510 = vld [vmem:[%s244 + $0x44] sm:$0xf]
      %v511 = vld [vmem:[%s244 + $0x48] sm:$0xf]
      %v512 = vld [vmem:[%s244 + $0x4c] sm:$0xf]
      %v513 = vld [vmem:[%s244 + $0x50] sm:$0xf]
      %v514 = vld [vmem:[%s244 + $0x54] sm:$0xf]
      %v515 = vld [vmem:[%s244 + $0x58] sm:$0xf]
      %v516 = vld [vmem:[%s244 + $0x5c] sm:$0xf]
      %v517 = vld [vmem:[%s244 + $0x60] sm:$0xf]
      %v518 = vld [vmem:[%s244 + $0x64] sm:$0xf]
      %v519 = vld [vmem:[%s244 + $0x68] sm:$0xf]
      %v520 = vld [vmem:[%s244 + $0x6c] sm:$0xf]
      %v521 = vld [vmem:[%s244 + $0x70] sm:$0xf]
      %v522 = vld [vmem:[%s244 + $0x74] sm:$0xf]
      %v523 = vld [vmem:[%s244 + $0x78] sm:$0xf]
      %v524 = vld [vmem:[%s244 + $0x7c] sm:$0xf]
      %v557 = vunpack.c.l.b16 %v493
      %v558 = vunpack.c.l.b16 %v494
      %v559 = vunpack.c.l.b16 %v495
      %v560 = vunpack.c.l.b16 %v496
      %v561 = vunpack.c.l.b16 %v497
      %v562 = vunpack.c.l.b16 %v498
      %v563 = vunpack.c.l.b16 %v499
      %v564 = vunpack.c.l.b16 %v500
      %v565 = vunpack.c.l.b16 %v501
      %v566 = vunpack.c.l.b16 %v502
      %v567 = vunpack.c.l.b16 %v503
      %v568 = vunpack.c.l.b16 %v504
      %v569 = vunpack.c.l.b16 %v505
      %v570 = vunpack.c.l.b16 %v506
      %v571 = vunpack.c.l.b16 %v507
      %v572 = vunpack.c.l.b16 %v508
      %v573 = vunpack.c.l.b16 %v509
      %v574 = vunpack.c.l.b16 %v510
      %v575 = vunpack.c.l.b16 %v511
      %v576 = vunpack.c.l.b16 %v512
      %v577 = vunpack.c.l.b16 %v513
      %v578 = vunpack.c.l.b16 %v514
      %v579 = vunpack.c.l.b16 %v515
      %v580 = vunpack.c.l.b16 %v516
      %v581 = vunpack.c.l.b16 %v517
      %v582 = vunpack.c.l.b16 %v518
      %v583 = vunpack.c.l.b16 %v519
      %v584 = vunpack.c.l.b16 %v520
      %v585 = vunpack.c.l.b16 %v521
      %v586 = vunpack.c.l.b16 %v522
      %v587 = vunpack.c.l.b16 %v523
      %v588 = vunpack.c.l.b16 %v524
      %v589 = vpack.c.b16 %v558, %v557
      %v590 = vpack.c.b16 %v560, %v559
      %v591 = vpack.c.b16 %v562, %v561
      %v592 = vpack.c.b16 %v564, %v563
      %v593 = vpack.c.b16 %v566, %v565
      %v594 = vpack.c.b16 %v568, %v567
      %v595 = vpack.c.b16 %v570, %v569
      %v596 = vpack.c.b16 %v572, %v571
      %v597 = vpack.c.b16 %v574, %v573
      %v598 = vpack.c.b16 %v576, %v575
      %v599 = vpack.c.b16 %v578, %v577
      %v600 = vpack.c.b16 %v580, %v579
      %v601 = vpack.c.b16 %v582, %v581
      %v602 = vpack.c.b16 %v584, %v583
      %v603 = vpack.c.b16 %v586, %v585
      %v604 = vpack.c.b16 %v588, %v587
      %621 = vmatpush.bf16.msra.mxu0 %v596
      %622 = vmatpush.bf16.msra.mxu0 %v595
      %623 = vmatpush.bf16.msra.mxu0 %v594
      %624 = vmatpush.bf16.msra.mxu0 %v593
      %625 = vmatpush.bf16.msra.mxu0 %v592
      %626 = vmatpush.bf16.msra.mxu0 %v591
      %627 = vmatpush.bf16.msra.mxu0 %v590
      %628 = vmatpush.bf16.msra.mxu0 %v589
      %629 = vmatmul.bf16.gmra.mxu0 %v463
      %v630 = vpop.f32.mrf.mxu0
      %v631 = vadd.f32 0.0, %v630
      %v632 = vpop.f32.mrf.mxu0
      %v633 = vadd.f32 0.0, %v632
      %634 = vmatmul.bf16.gmra.mxu0 %v467
      %v635 = vpop.f32.mrf.mxu0
      %v636 = vadd.f32 0.0, %v635
      %v637 = vpop.f32.mrf.mxu0
      %v638 = vadd.f32 0.0, %v637
      %639 = vmatmul.bf16.gmra.mxu0 %v471
      %v640 = vpop.f32.mrf.mxu0
      %v641 = vadd.f32 0.0, %v640
      %v642 = vpop.f32.mrf.mxu0
      %v643 = vadd.f32 0.0, %v642
      %644 = vmatmul.bf16.gmra.mxu0 %v475
      %v645 = vpop.f32.mrf.mxu0
      %v646 = vadd.f32 0.0, %v645
      %v647 = vpop.f32.mrf.mxu0
      %v648 = vadd.f32 0.0, %v647
      %649 = vdwg.mxu0
      %650 = vmatpush.bf16.msra.mxu0 %v604
      %651 = vmatpush.bf16.msra.mxu0 %v603
      %652 = vmatpush.bf16.msra.mxu0 %v602
      %653 = vmatpush.bf16.msra.mxu0 %v601
      %654 = vmatpush.bf16.msra.mxu0 %v600
      %655 = vmatpush.bf16.msra.mxu0 %v599
      %656 = vmatpush.bf16.msra.mxu0 %v598
      %657 = vmatpush.bf16.msra.mxu0 %v597
      %658 = vmatmul.bf16.gmra.mxu0 %v479
      %v659 = vpop.f32.mrf.mxu0
      %v660 = vadd.f32 %v631, %v659
      %v661 = vpop.f32.mrf.mxu0
      %v662 = vadd.f32 %v633, %v661
      %663 = vmatmul.bf16.gmra.mxu0 %v483
      %v664 = vpop.f32.mrf.mxu0
      %v665 = vadd.f32 %v636, %v664
      %v666 = vpop.f32.mrf.mxu0
      %v667 = vadd.f32 %v638, %v666
      %668 = vmatmul.bf16.gmra.mxu0 %v487
      %v669 = vpop.f32.mrf.mxu0
      %v670 = vadd.f32 %v641, %v669
      %v671 = vpop.f32.mrf.mxu0
      %v672 = vadd.f32 %v643, %v671
      %673 = vmatmul.bf16.gmra.mxu0 %v491
      %v674 = vpop.f32.mrf.mxu0
      %v675 = vadd.f32 %v646, %v674
      %v676 = vpop.f32.mrf.mxu0
      %v677 = vadd.f32 %v648, %v676
      %678 = vdwg.mxu0
      %v679 = vld [vmem:[%s2] sm:$0x1]
      %v681 = vperm.slane %v679, 0
      %v683 = vmul.f32 %v660, %v681
      %v684 = vmul.f32 %v662, %v681
      %v685 = vmul.f32 %v665, %v681
      %v686 = vmul.f32 %v667, %v681
      %v687 = vmul.f32 %v670, %v681
      %v688 = vmul.f32 %v672, %v681
      %v689 = vmul.f32 %v675, %v681
      %v690 = vmul.f32 %v677, %v681
      %v691 = vld [vmem:[%s3] sm:$0x1]
      %v693 = vperm.slane %v691, 0
      %v695 = vadd.f32 %v683, %v693
      %v696 = vadd.f32 %v684, %v693
      %v697 = vadd.f32 %v685, %v693
      %v698 = vadd.f32 %v686, %v693
      %v699 = vadd.f32 %v687, %v693
      %v700 = vadd.f32 %v688, %v693
      %v701 = vadd.f32 %v689, %v693
      %v702 = vadd.f32 %v690, %v693
      %v703 = vmax.f32 %v695, 0.0
      %v704 = vmax.f32 %v696, 0.0
      %v705 = vmax.f32 %v697, 0.0
      %v706 = vmax.f32 %v698, 0.0
      %v707 = vmax.f32 %v699, 0.0
      %v708 = vmax.f32 %v700, 0.0
      %v709 = vmax.f32 %v701, 0.0
      %v710 = vmax.f32 %v702, 0.0
      %vm711 = vcmask 261120
      %712 = vst.msk [vmem:[%s251] sm:$0xff] %vm711, %v703
      %713 = vst.msk [vmem:[%s251 + $0x8] sm:$0xff] %vm711, %v704
      %714 = vst.msk [vmem:[%s251 + $0x10] sm:$0xff] %vm711, %v705
      %715 = vst.msk [vmem:[%s251 + $0x18] sm:$0xff] %vm711, %v706
      %716 = vst.msk [vmem:[%s251 + $0x20] sm:$0xff] %vm711, %v707
      %717 = vst.msk [vmem:[%s251 + $0x28] sm:$0xff] %vm711, %v708
      %718 = vst.msk [vmem:[%s251 + $0x30] sm:$0xff] %vm711, %v709
      %719 = vst.msk [vmem:[%s251 + $0x38] sm:$0xff] %vm711, %v710
      %s720 = smul.u32 %s20, 4
      %s721 = sadd.s32 %s720, %s19
      %p722 = scmp.lt.s32.totalorder %s721, 7
      %s723 = scalar_select %p722, %s721, 7
      %s724 = smul.addr %s723, 8
      %s725 = smul.addr %s724, 8
      %s726 = scalar_lea.vmem %s4, %s725
      // Predicated region
      $region37: #{conditional_generator_forward.7} parent=35 // pred_check
        %p727 = pneg %p147
      $region38: #{conditional_generator_forward.7} parent=35 // pred_check_branch
        %729 = sbr.rel (%p727) target = $region40
      $region39: #{conditional_generator_forward.7} parent=35 // pred_region
        %s730 = smul.u32 %s20, 4
        %s731 = sadd.s32 %s730, %s19
      $region40: #{conditional_generator_forward.7} parent=35 // pred_fallthru
        _
    $region36: #{conditional_generator_forward.7} parent=5 // pred_fallthru
      _
    %p732 = scmp.le.s32.totalorder 2, %s10
    // Predicated region
    $region41: #{conditional_generator_forward.7} parent=5 // pred_check
      %p733 = pneg %p732
    $region42: #{conditional_generator_forward.7} parent=5 // pred_check_branch
      %735 = sbr.rel (%p733) target = $region44
    $region43: #{conditional_generator_forward.7} parent=5 // pred_region
      %s736 = ssub.s32 %s10, 2
      // Predicated region
      $region45: #{conditional_generator_forward.7} parent=43 // pred_check
        %p737 = pneg %p153
      $region46: #{conditional_generator_forward.7} parent=43 // pred_check_branch
        %739 = sbr.rel (%p737) target = $region48
      $region47: #{conditional_generator_forward.7} parent=43 // pred_region
        %s740 = smul.u32 %s22, 4
        %s741 = sadd.s32 %s740, %s21
        %p742 = scmp.lt.s32.totalorder %s741, 7
        %s743 = scalar_select %p742, %s741, 7
        %s744 = smul.addr %s743, 8
        %s745 = smul.addr %s744, 8
        %s746 = scalar_lea.vmem %s4, %s745
      $region48: #{conditional_generator_forward.7} parent=43 // pred_fallthru
        _
    $region44: #{conditional_generator_forward.7} parent=5 // pred_fallthru
      _
  $region6: #{conditional_generator_forward.7} parent=0 // loop_footer
    %s14 = sadd.s32 1, %s10
  $region7: #{conditional_generator_forward.7} parent=0 // loop_footer_branch
    %9 = sbr.rel target = $region3
  $region8: #{conditional_generator_forward.7} parent=0 // loop_exit
    _

// kernel: conditional_generator_forward.8
$region0: #{conditional_generator_forward.8}
  #allocation0 [shape = 'u32[]', space=smem, size = 0x4, offset = 0x4, fixed_abs, tag = 'smem constant byte address 0x4 - core index']
  #allocation1 [shape = 'u32[72,128]{1,0:T(1,128)}', space=vmem, size = 0x9000, scoped, tag = 'internal scratch']
  %s0 = inlined_call_operand.vmem [shape: bf16[8,17,17,32], index: 0, kind: input, shape index: {}]
  %s1 = inlined_call_operand.vmem [shape: bf16[4,128,16], index: 1, kind: input, shape index: {}]
  %s2 = inlined_call_operand.vmem [shape: f32[1,16], index: 2, kind: input, shape index: {}]
  %s3 = inlined_call_operand.vmem [shape: f32[1,16], index: 3, kind: input, shape index: {}]
  %s4 = inlined_call_operand.vmem [shape: f32[8,256,16], index: 4, kind: output, shape index: {}]
  %s5 = sld [smem:[#allocation0]]
  $region49: #{conditional_generator_forward.8} parent=0
    _
  %s7 = ssub.s32 1, %s5
  %s8 = scalar_select 0, %s7, %s5
  loop: start=0, step=1, limit=10
  $region2: #{conditional_generator_forward.8} parent=0 // loop_pre_header
    _
  $region3: #{conditional_generator_forward.8} parent=0 // loop_header
    %s10 = sphi 0, %s14
    %p11 = scmp.ge.s32.totalorder %s10, 10
    %s17 = sphi 0, %s29
    %s18 = sphi 0, %s25
    %s19 = sphi 0, %s17
    %s20 = sphi 0, %s18
    %s21 = sphi 0, %s19
    %s22 = sphi 0, %s20
    %s36 = sphi 0, %s38
    %s39 = sphi 0, %s36
    %s40 = sphi 0, %s39
    %s56 = sphi 0, %s40
    %s62 = sphi 0, %s64
    %s65 = sphi 0, %s62
    %s66 = sphi 0, %s65
    %s82 = sphi 0, %s66
    %s86 = sphi 0, %s86
    %s88 = sphi 0, %s86
    %s89 = sphi 0, %s88
    %s103 = sphi 0, %s89
    %s107 = sphi 0, %s107
    %s109 = sphi 0, %s107
    %s110 = sphi 0, %s109
    %s124 = sphi 0, %s110
    %s134 = sphi 0, %s136
    %s137 = sphi 0, %s134
    %s138 = sphi 0, %s137
    %s154 = sphi 0, %s138
  $region4: #{conditional_generator_forward.8} parent=0 // loop_header_branch
    %13 = sbr.rel (%p11) target = $region8
  $region5: #{conditional_generator_forward.8} parent=0 // loop_body
    %s15 = ssub.s32 %s10, 1
    %s16 = ssub.s32 %s10, 2
    %s23 = sadd.s32 1, %s18
    %p24 = scmp.ge.s32.totalorder %s23, 2
    %s25 = scalar_select %p24, 0, %s23
    %s26 = sadd.s32 1, %s17
    %s27 = scalar_select %p24, %s26, %s17
    %p28 = scmp.ge.s32.totalorder %s27, 4
    %s29 = scalar_select %p28, 0, %s27
    %s30 = smul.u32 %s18, 4
    %s31 = sadd.s32 %s30, %s17
    %s32 = smul.u32 %s25, 4
    %s33 = sadd.s32 %s32, %s29
    %s34 = ssub.s32 %s31, %s33
    %p35 = scmp.eq.s32.totalorder %s34, 0
    %s37 = sadd.s32 %s36, 1
    %s38 = scalar_select %p35, %s36, %s37
    %p41 = pneg %p35
    %p42 = scmp.eq.s32.totalorder %s10, 7
    %p43 = por %p41, %p42
    %p44 = scmp.ne.s32.totalorder %s36, %s39
    %p45 = scmp.eq.s32.totalorder %s10, 0
    %p46 = por %p44, %p45
    %p47 = scmp.ne.s32.totalorder %s36, %s39
    %p48 = scmp.eq.s32.totalorder %s15, 7
    %p49 = por %p47, %p48
    %p50 = scmp.ne.s32.totalorder %s39, %s40
    %p51 = scmp.eq.s32.totalorder %s15, 0
    %p52 = por %p50, %p51
    %p53 = scmp.ne.s32.totalorder %s39, %s40
    %p54 = scmp.eq.s32.totalorder %s16, 7
    %p55 = por %p53, %p54
    %p57 = scmp.ne.s32.totalorder %s40, %s56
    %p58 = scmp.eq.s32.totalorder %s16, 0
    %p59 = por %p57, %p58
    %s60 = ssub.s32 %s17, %s29
    %p61 = scmp.eq.s32.totalorder %s60, 0
    %s63 = sadd.s32 %s62, 1
    %s64 = scalar_select %p61, %s62, %s63
    %p67 = pneg %p61
    %p68 = scmp.eq.s32.totalorder %s10, 7
    %p69 = por %p67, %p68
    %p70 = scmp.ne.s32.totalorder %s62, %s65
    %p71 = scmp.eq.s32.totalorder %s10, 0
    %p72 = por %p70, %p71
    %p73 = scmp.ne.s32.totalorder %s62, %s65
    %p74 = scmp.eq.s32.totalorder %s15, 7
    %p75 = por %p73, %p74
    %p76 = scmp.ne.s32.totalorder %s65, %s66
    %p77 = scmp.eq.s32.totalorder %s15, 0
    %p78 = por %p76, %p77
    %p79 = scmp.ne.s32.totalorder %s65, %s66
    %p80 = scmp.eq.s32.totalorder %s16, 7
    %p81 = por %p79, %p80
    %p83 = scmp.ne.s32.totalorder %s66, %s82
    %p84 = scmp.eq.s32.totalorder %s16, 0
    %p85 = por %p83, %p84
    %s87 = sadd.s32 %s86, 1
    %p90 = scmp.eq.s32.totalorder %s10, 7
    %p91 = scmp.ne.s32.totalorder %s86, %s88
    %p92 = scmp.eq.s32.totalorder %s10, 0
    %p93 = por %p91, %p92
    %p94 = scmp.ne.s32.totalorder %s86, %s88
    %p95 = scmp.eq.s32.totalorder %s15, 7
    %p96 = por %p94, %p95
    %p97 = scmp.ne.s32.totalorder %s88, %s89
    %p98 = scmp.eq.s32.totalorder %s15, 0
    %p99 = por %p97, %p98
    %p100 = scmp.ne.s32.totalorder %s88, %s89
    %p101 = scmp.eq.s32.totalorder %s16, 7
    %p102 = por %p100, %p101
    %p104 = scmp.ne.s32.totalorder %s89, %s103
    %p105 = scmp.eq.s32.totalorder %s16, 0
    %p106 = por %p104, %p105
    %s108 = sadd.s32 %s107, 1
    %p111 = scmp.eq.s32.totalorder %s10, 7
    %p112 = scmp.ne.s32.totalorder %s107, %s109
    %p113 = scmp.eq.s32.totalorder %s10, 0
    %p114 = por %p112, %p113
    %p115 = scmp.ne.s32.totalorder %s107, %s109
    %p116 = scmp.eq.s32.totalorder %s15, 7
    %p117 = por %p115, %p116
    %p118 = scmp.ne.s32.totalorder %s109, %s110
    %p119 = scmp.eq.s32.totalorder %s15, 0
    %p120 = por %p118, %p119
    %p121 = scmp.ne.s32.totalorder %s109, %s110
    %p122 = scmp.eq.s32.totalorder %s16, 7
    %p123 = por %p121, %p122
    %p125 = scmp.ne.s32.totalorder %s110, %s124
    %p126 = scmp.eq.s32.totalorder %s16, 0
    %p127 = por %p125, %p126
    %s128 = smul.u32 %s18, 4
    %s129 = sadd.s32 %s128, %s17
    %s130 = smul.u32 %s25, 4
    %s131 = sadd.s32 %s130, %s29
    %s132 = ssub.s32 %s129, %s131
    %p133 = scmp.eq.s32.totalorder %s132, 0
    %s135 = sadd.s32 %s134, 1
    %s136 = scalar_select %p133, %s134, %s135
    %p139 = pneg %p133
    %p140 = scmp.eq.s32.totalorder %s10, 7
    %p141 = por %p139, %p140
    %p142 = scmp.ne.s32.totalorder %s134, %s137
    %p143 = scmp.eq.s32.totalorder %s10, 0
    %p144 = por %p142, %p143
    %p145 = scmp.ne.s32.totalorder %s134, %s137
    %p146 = scmp.eq.s32.totalorder %s15, 7
    %p147 = por %p145, %p146
    %p148 = scmp.ne.s32.totalorder %s137, %s138
    %p149 = scmp.eq.s32.totalorder %s15, 0
    %p150 = por %p148, %p149
    %p151 = scmp.ne.s32.totalorder %s137, %s138
    %p152 = scmp.eq.s32.totalorder %s16, 7
    %p153 = por %p151, %p152
    %p155 = scmp.ne.s32.totalorder %s138, %s154
    %p156 = scmp.eq.s32.totalorder %s16, 0
    %p157 = por %p155, %p156
    %p158 = scmp.le.s32.totalorder 1, %s10
    %p159 = scmp.lt.s32.totalorder %s10, 9
    %p160 = pnand %p158, %p159
    %p161 = pneg %p160
    // Predicated region
    $region9: #{conditional_generator_forward.8} parent=5 // pred_check
      _
    $region10: #{conditional_generator_forward.8} parent=5 // pred_check_branch
      %163 = sbr.rel (%p160) target = $region12
    $region11: #{conditional_generator_forward.8} parent=5 // pred_region
      %s164 = ssub.s32 %s10, 1
      // Predicated region
      $region13: #{conditional_generator_forward.8} parent=11 // pred_check
        %p165 = pneg %p99
      $region14: #{conditional_generator_forward.8} parent=11 // pred_check_branch
        %167 = sbr.rel (%p165) target = $region16
      $region15: #{conditional_generator_forward.8} parent=11 // pred_region
        _
      $region16: #{conditional_generator_forward.8} parent=11 // pred_fallthru
        _
      // Predicated region
      $region17: #{conditional_generator_forward.8} parent=11 // pred_check
        %p168 = pneg %p120
      $region18: #{conditional_generator_forward.8} parent=11 // pred_check_branch
        %170 = sbr.rel (%p168) target = $region20
      $region19: #{conditional_generator_forward.8} parent=11 // pred_region
        _
      $region20: #{conditional_generator_forward.8} parent=11 // pred_fallthru
        _
    $region12: #{conditional_generator_forward.8} parent=5 // pred_fallthru
      _
    %p171 = scmp.lt.s32.totalorder %s10, 8
    // Predicated region
    $region21: #{conditional_generator_forward.8} parent=5 // pred_check
      %p172 = pneg %p171
    $region22: #{conditional_generator_forward.8} parent=5 // pred_check_branch
      %174 = sbr.rel (%p172) target = $region24
    $region23: #{conditional_generator_forward.8} parent=5 // pred_region
      // Predicated region
      $region25: #{conditional_generator_forward.8} parent=23 // pred_check
        %p175 = pneg %p46
      $region26: #{conditional_generator_forward.8} parent=23 // pred_check_branch
        %177 = sbr.rel (%p175) target = $region28
      $region27: #{conditional_generator_forward.8} parent=23 // pred_region
        %s178 = smul.u32 %s18, 4
        %s179 = sadd.s32 %s178, %s17
        %p180 = scmp.lt.s32.totalorder %s179, 7
        %s181 = scalar_select %p180, %s179, 7
        %s182 = smul.addr %s181, 51
        %s183 = smul.addr %s182, 4
        %s184 = scalar_lea.vmem %s0, %s183
        %s185 = smul.u32 %s18, 4
        %s186 = sadd.s32 %s185, %s17
      $region28: #{conditional_generator_forward.8} parent=23 // pred_fallthru
        _
      // Predicated region
      $region29: #{conditional_generator_forward.8} parent=23 // pred_check
        %p187 = pneg %p72
      $region30: #{conditional_generator_forward.8} parent=23 // pred_check_branch
        %189 = sbr.rel (%p187) target = $region32
      $region31: #{conditional_generator_forward.8} parent=23 // pred_region
        %p190 = scmp.lt.s32.totalorder %s17, 3
        %s191 = scalar_select %p190, %s17, 3
        %s192 = smul.addr %s191, 16
        %s193 = smul.addr %s192, 4
        %s194 = scalar_lea.vmem %s1, %s193
      $region32: #{conditional_generator_forward.8} parent=23 // pred_fallthru
        _
    $region24: #{conditional_generator_forward.8} parent=5 // pred_fallthru
      _
    %p195 = scmp.le.s32.totalorder 1, %s10
    %p196 = scmp.lt.s32.totalorder %s10, 9
    %p197 = pnand %p195, %p196
    %p198 = pneg %p197
    // Predicated region
    $region33: #{conditional_generator_forward.8} parent=5 // pred_check
      _
    $region34: #{conditional_generator_forward.8} parent=5 // pred_check_branch
      %200 = sbr.rel (%p197) target = $region36
    $region35: #{conditional_generator_forward.8} parent=5 // pred_region
      %s201 = ssub.s32 %s10, 1
      %s202 = smul.u32 %s20, 4
      %s203 = sadd.s32 %s202, %s19
      %p204 = scmp.lt.s32.totalorder %s203, 7
      %s205 = scalar_select %p204, %s203, 7
      %s206 = smul.addr %s205, 51
      %s207 = smul.addr %s206, 4
      %s208 = scalar_lea.vmem %s0, %s207
      %p209 = pneg %p52
      %p210 = pneg %p49
      %p211 = scmp.lt.s32.totalorder %s19, 3
      %s212 = scalar_select %p211, %s19, 3
      %s213 = smul.addr %s212, 16
      %s214 = smul.addr %s213, 4
      %s215 = scalar_lea.vmem %s1, %s214
      %p216 = pneg %p78
      %p217 = pneg %p75
      %p218 = pneg %p99
      %p219 = pneg %p96
      %p220 = pneg %p120
      %p221 = pneg %p117
      %p222 = pneg %p150
      %p223 = pneg %p147
      %s224 = smul.u32 %s20, 4
      %s225 = sadd.s32 %s224, %s19
      %p226 = scmp.lt.s32.totalorder %s225, 7
      %s227 = scalar_select %p226, %s225, 7
      %s228 = smul.addr %s227, 32
      %s229 = smul.addr %s228, 8
      %s230 = scalar_lea.vmem %s4, %s229
      %s231 = smul.u32 %s20, 4
      %s232 = sadd.s32 %s231, %s19
      %p233 = scmp.lt.s32.totalorder %s232, 7
      %s234 = scalar_select %p233, %s232, 7
      %s235 = smul.addr %s234, 51
      %s236 = smul.addr %s235, 4
      %s237 = scalar_lea.vmem %s0, %s236
      %s238 = smul.u32 %s20, 4
      %s239 = sadd.s32 %s238, %s19
      %p240 = scmp.lt.s32.totalorder %s19, 3
      %s241 = scalar_select %p240, %s19, 3
      %s242 = smul.addr %s241, 16
      %s243 = smul.addr %s242, 4
      %s244 = scalar_lea.vmem %s1, %s243
      %s245 = smul.u32 %s20, 4
      %s246 = sadd.s32 %s245, %s19
      %p247 = scmp.lt.s32.totalorder %s246, 7
      %s248 = scalar_select %p247, %s246, 7
      %s249 = smul.addr %s248, 32
      %s250 = smul.addr %s249, 8
      %s251 = scalar_lea.vmem %s4, %s250
      %s252 = smul.u32 %s20, 4
      %s253 = sadd.s32 %s252, %s19
      %v254 = vld [vmem:[%s237] sm:$0xf]
      %v255 = vld [vmem:[%s237 + $0x4] sm:$0xf]
      %v256 = vld [vmem:[%s237 + $0x8] sm:$0x1]
      %v257 = vld [vmem:[%s237 + $0xc] sm:$0xf]
      %v258 = vld [vmem:[%s237 + $0x10] sm:$0xf]
      %v259 = vld [vmem:[%s237 + $0x14] sm:$0x1]
      %v260 = vld [vmem:[%s237 + $0x18] sm:$0xf]
      %v261 = vld [vmem:[%s237 + $0x1c] sm:$0xf]
      %v262 = vld [vmem:[%s237 + $0x20] sm:$0x1]
      %v263 = vld [vmem:[%s237 + $0x24] sm:$0xf]
      %v264 = vld [vmem:[%s237 + $0x28] sm:$0xf]
      %v265 = vld [vmem:[%s237 + $0x2c] sm:$0x1]
      %v266 = vld [vmem:[%s237 + $0x30] sm:$0xf]
      %v267 = vld [vmem:[%s237 + $0x34] sm:$0xf]
      %v268 = vld [vmem:[%s237 + $0x38] sm:$0x1]
      %v269 = vld [vmem:[%s237 + $0x3c] sm:$0xf]
      %v270 = vld [vmem:[%s237 + $0x40] sm:$0xf]
      %v271 = vld [vmem:[%s237 + $0x44] sm:$0x1]
      %v272 = vld [vmem:[%s237 + $0x48] sm:$0xf]
      %v273 = vld [vmem:[%s237 + $0x4c] sm:$0xf]
      %v274 = vld [vmem:[%s237 + $0x50] sm:$0x1]
      %v275 = vld [vmem:[%s237 + $0x54] sm:$0xf]
      %v276 = vld [vmem:[%s237 + $0x58] sm:$0xf]
      %v277 = vld [vmem:[%s237 + $0x5c] sm:$0x1]
      %v278 = vld [vmem:[%s237 + $0x60] sm:$0xf]
      %v279 = vld [vmem:[%s237 + $0x64] sm:$0xf]
      %v280 = vld [vmem:[%s237 + $0x68] sm:$0x1]
      %v281 = vld [vmem:[%s237 + $0x6c] sm:$0xf]
      %v282 = vld [vmem:[%s237 + $0x70] sm:$0xf]
      %v283 = vld [vmem:[%s237 + $0x74] sm:$0x1]
      %v284 = vld [vmem:[%s237 + $0x78] sm:$0xf]
      %v285 = vld [vmem:[%s237 + $0x7c] sm:$0xf]
      %v286 = vld [vmem:[%s237 + $0x80] sm:$0x1]
      %v287 = vld [vmem:[%s237 + $0x84] sm:$0xf]
      %v288 = vld [vmem:[%s237 + $0x88] sm:$0xf]
      %v289 = vld [vmem:[%s237 + $0x8c] sm:$0x1]
      %v290 = vld [vmem:[%s237 + $0x90] sm:$0xf]
      %v291 = vld [vmem:[%s237 + $0x94] sm:$0xf]
      %v292 = vld [vmem:[%s237 + $0x98] sm:$0x1]
      %v293 = vld [vmem:[%s237 + $0x9c] sm:$0xf]
      %v294 = vld [vmem:[%s237 + $0xa0] sm:$0xf]
      %v295 = vld [vmem:[%s237 + $0xa4] sm:$0x1]
      %v296 = vld [vmem:[%s237 + $0xa8] sm:$0xf]
      %v297 = vld [vmem:[%s237 + $0xac] sm:$0xf]
      %v298 = vld [vmem:[%s237 + $0xb0] sm:$0x1]
      %v299 = vld [vmem:[%s237 + $0xb4] sm:$0xf]
      %v300 = vld [vmem:[%s237 + $0xb8] sm:$0xf]
      %v301 = vld [vmem:[%s237 + $0xbc] sm:$0x1]
      %v302 = vld [vmem:[%s237 + $0xc0] sm:$0xf]
      %v303 = vld [vmem:[%s237 + $0xc4] sm:$0xf]
      %v304 = vld [vmem:[%s237 + $0xc8] sm:$0x1]
      %vm305 = vsmask.f32 3328
      %vm306 = vsmask.f32 7440
      %vm307 = vmor %vm305, %vm306
      %v309 = vshrl.u32 %v254, 16
      %v311 = vrot.slane %v309, 4
      %v312 = vshll.u32 %v254, 16
      %v314 = vrot.slane %v312, 5
      %v315 = vor.u32 %v311, %v314
      %v316 = vrot.slane %v315, 4
      %v318 = vshll.u32 %v255, 16
      %v320 = vrot.slane %v318, 5
      %v321 = vsel %vm307, %v316, %v320
      %v322 = vshrl.u32 %v255, 16
      %v324 = vrot.slane %v322, 4
      %v325 = vor.u32 %v324, %v320
      %v326 = vrot.slane %v325, 4
      %v328 = vshll.u32 %v256, 16
      %v330 = vrot.slane %v328, 5
      %v331 = vsel %vm307, %v326, %v330
      %v333 = vshrl.u32 %v257, 16
      %v335 = vrot.slane %v333, 4
      %v336 = vshll.u32 %v257, 16
      %v338 = vrot.slane %v336, 5
      %v339 = vor.u32 %v335, %v338
      %v340 = vrot.slane %v339, 4
      %v342 = vshll.u32 %v258, 16
      %v344 = vrot.slane %v342, 5
      %v345 = vsel %vm307, %v340, %v344
      %v346 = vshrl.u32 %v258, 16
      %v348 = vrot.slane %v346, 4
      %v349 = vor.u32 %v348, %v344
      %v350 = vrot.slane %v349, 4
      %v352 = vshll.u32 %v259, 16
      %v354 = vrot.slane %v352, 5
      %v355 = vsel %vm307, %v350, %v354
      %v357 = vshrl.u32 %v260, 16
      %v359 = vrot.slane %v357, 4
      %v360 = vshll.u32 %v260, 16
      %v362 = vrot.slane %v360, 5
      %v363 = vor.u32 %v359, %v362
      %v364 = vrot.slane %v363, 4
      %v366 = vshll.u32 %v261, 16
      %v368 = vrot.slane %v366, 5
      %v369 = vsel %vm307, %v364, %v368
      %v370 = vshrl.u32 %v261, 16
      %v372 = vrot.slane %v370, 4
      %v373 = vor.u32 %v372, %v368
      %v374 = vrot.slane %v373, 4
      %v376 = vshll.u32 %v262, 16
      %v378 = vrot.slane %v376, 5
      %v379 = vsel %vm307, %v374, %v378
      %v381 = vshrl.u32 %v263, 16
      %v383 = vrot.slane %v381, 4
      %v384 = vshll.u32 %v263, 16
      %v386 = vrot.slane %v384, 5
      %v387 = vor.u32 %v383, %v386
      %v388 = vrot.slane %v387, 4
      %v390 = vshll.u32 %v264, 16
      %v392 = vrot.slane %v390, 5
      %v393 = vsel %vm307, %v388, %v392
      %v394 = vshrl.u32 %v264, 16
      %v396 = vrot.slane %v394, 4
      %v397 = vor.u32 %v396, %v392
      %v398 = vrot.slane %v397, 4
      %v400 = vshll.u32 %v265, 16
      %v402 = vrot.slane %v400, 5
      %v403 = vsel %vm307, %v398, %v402
      %v405 = vshrl.u32 %v266, 16
      %v407 = vrot.slane %v405, 4
      %v408 = vshll.u32 %v266, 16
      %v410 = vrot.slane %v408, 5
      %v411 = vor.u32 %v407, %v410
      %v412 = vrot.slane %v411, 4
      %v414 = vshll.u32 %v267, 16
      %v416 = vrot.slane %v414, 5
      %v417 = vsel %vm307, %v412, %v416
      %v418 = vshrl.u32 %v267, 16
      %v420 = vrot.slane %v418, 4
      %v421 = vor.u32 %v420, %v416
      %v422 = vrot.slane %v421, 4
      %v424 = vshll.u32 %v268, 16
      %v426 = vrot.slane %v424, 5
      %v427 = vsel %vm307, %v422, %v426
      %v429 = vshrl.u32 %v269, 16
      %v431 = vrot.slane %v429, 4
      %v432 = vshll.u32 %v269, 16
      %v434 = vrot.slane %v432, 5
      %v435 = vor.u32 %v431, %v434
      %v436 = vrot.slane %v435, 4
      %v438 = vshll.u32 %v270, 16
      %v440 = vrot.slane %v438, 5
      %v441 = vsel %vm307, %v436, %v440
      %v442 = vshrl.u32 %v270, 16
      %v444 = vrot.slane %v442, 4
      %v445 = vor.u32 %v444, %v440
      %v446 = vrot.slane %v445, 4
      %v448 = vshll.u32 %v271, 16
      %v450 = vrot.slane %v448, 5
      %v451 = vsel %vm307, %v446, %v450
      %v453 = vshrl.u32 %v272, 16
      %v455 = vrot.slane %v453, 4
      %v456 = vshll.u32 %v272, 16
      %v458 = vrot.slane %v456, 5
      %v459 = vor.u32 %v455, %v458
      %v460 = vrot.slane %v459, 4
      %v462 = vshll.u32 %v273, 16
      %v464 = vrot.slane %v462, 5
      %v465 = vsel %vm307, %v460, %v464
      %v466 = vshrl.u32 %v273, 16
      %v468 = vrot.slane %v466, 4
      %v469 = vor.u32 %v468, %v464
      %v470 = vrot.slane %v469, 4
      %v472 = vshll.u32 %v274, 16
      %v474 = vrot.slane %v472, 5
      %v475 = vsel %vm307, %v470, %v474
      %v477 = vshrl.u32 %v275, 16
      %v479 = vrot.slane %v477, 4
      %v480 = vshll.u32 %v275, 16
      %v482 = vrot.slane %v480, 5
      %v483 = vor.u32 %v479, %v482
      %v484 = vrot.slane %v483, 4
      %v486 = vshll.u32 %v276, 16
      %v488 = vrot.slane %v486, 5
      %v489 = vsel %vm307, %v484, %v488
      %v490 = vshrl.u32 %v276, 16
      %v492 = vrot.slane %v490, 4
      %v493 = vor.u32 %v492, %v488
      %v494 = vrot.slane %v493, 4
      %v496 = vshll.u32 %v277, 16
      %v498 = vrot.slane %v496, 5
      %v499 = vsel %vm307, %v494, %v498
      %v501 = vshrl.u32 %v278, 16
      %v503 = vrot.slane %v501, 4
      %v504 = vshll.u32 %v278, 16
      %v506 = vrot.slane %v504, 5
      %v507 = vor.u32 %v503, %v506
      %v508 = vrot.slane %v507, 4
      %v510 = vshll.u32 %v279, 16
      %v512 = vrot.slane %v510, 5
      %v513 = vsel %vm307, %v508, %v512
      %v514 = vshrl.u32 %v279, 16
      %v516 = vrot.slane %v514, 4
      %v517 = vor.u32 %v516, %v512
      %v518 = vrot.slane %v517, 4
      %v520 = vshll.u32 %v280, 16
      %v522 = vrot.slane %v520, 5
      %v523 = vsel %vm307, %v518, %v522
      %v525 = vshrl.u32 %v281, 16
      %v527 = vrot.slane %v525, 4
      %v528 = vshll.u32 %v281, 16
      %v530 = vrot.slane %v528, 5
      %v531 = vor.u32 %v527, %v530
      %v532 = vrot.slane %v531, 4
      %v534 = vshll.u32 %v282, 16
      %v536 = vrot.slane %v534, 5
      %v537 = vsel %vm307, %v532, %v536
      %v538 = vshrl.u32 %v282, 16
      %v540 = vrot.slane %v538, 4
      %v541 = vor.u32 %v540, %v536
      %v542 = vrot.slane %v541, 4
      %v544 = vshll.u32 %v283, 16
      %v546 = vrot.slane %v544, 5
      %v547 = vsel %vm307, %v542, %v546
      %v549 = vshrl.u32 %v284, 16
      %v551 = vrot.slane %v549, 4
      %v552 = vshll.u32 %v284, 16
      %v554 = vrot.slane %v552, 5
      %v555 = vor.u32 %v551, %v554
      %v556 = vrot.slane %v555, 4
      %v558 = vshll.u32 %v285, 16
      %v560 = vrot.slane %v558, 5
      %v561 = vsel %vm307, %v556, %v560
      %v562 = vshrl.u32 %v285, 16
      %v564 = vrot.slane %v562, 4
      %v565 = vor.u32 %v564, %v560
      %v566 = vrot.slane %v565, 4
      %v568 = vshll.u32 %v286, 16
      %v570 = vrot.slane %v568, 5
      %v571 = vsel %vm307, %v566, %v570
      %v573 = vshrl.u32 %v287, 16
      %v575 = vrot.slane %v573, 4
      %v576 = vshll.u32 %v287, 16
      %v578 = vrot.slane %v576, 5
      %v579 = vor.u32 %v575, %v578
      %v580 = vrot.slane %v579, 4
      %v582 = vshll.u32 %v288, 16
      %v584 = vrot.slane %v582, 5
      %v585 = vsel %vm307, %v580, %v584
      %v586 = vshrl.u32 %v288, 16
      %v588 = vrot.slane %v586, 4
      %v589 = vor.u32 %v588, %v584
      %v590 = vrot.slane %v589, 4
      %v592 = vshll.u32 %v289, 16
      %v594 = vrot.slane %v592, 5
      %v595 = vsel %vm307, %v590, %v594
      %v597 = vshrl.u32 %v290, 16
      %v599 = vrot.slane %v597, 4
      %v600 = vshll.u32 %v290, 16
      %v602 = vrot.slane %v600, 5
      %v603 = vor.u32 %v599, %v602
      %v604 = vrot.slane %v603, 4
      %v606 = vshll.u32 %v291, 16
      %v608 = vrot.slane %v606, 5
      %v609 = vsel %vm307, %v604, %v608
      %v610 = vshrl.u32 %v291, 16
      %v612 = vrot.slane %v610, 4
      %v613 = vor.u32 %v612, %v608
      %v614 = vrot.slane %v613, 4
      %v616 = vshll.u32 %v292, 16
      %v618 = vrot.slane %v616, 5
      %v619 = vsel %vm307, %v614, %v618
      %v621 = vshrl.u32 %v293, 16
      %v623 = vrot.slane %v621, 4
      %v624 = vshll.u32 %v293, 16
      %v626 = vrot.slane %v624, 5
      %v627 = vor.u32 %v623, %v626
      %v628 = vrot.slane %v627, 4
      %v630 = vshll.u32 %v294, 16
      %v632 = vrot.slane %v630, 5
      %v633 = vsel %vm307, %v628, %v632
      %v634 = vshrl.u32 %v294, 16
      %v636 = vrot.slane %v634, 4
      %v637 = vor.u32 %v636, %v632
      %v638 = vrot.slane %v637, 4
      %v640 = vshll.u32 %v295, 16
      %v642 = vrot.slane %v640, 5
      %v643 = vsel %vm307, %v638, %v642
      %v645 = vshrl.u32 %v296, 16
      %v647 = vrot.slane %v645, 4
      %v648 = vshll.u32 %v296, 16
      %v650 = vrot.slane %v648, 5
      %v651 = vor.u32 %v647, %v650
      %v652 = vrot.slane %v651, 4
      %v654 = vshll.u32 %v297, 16
      %v656 = vrot.slane %v654, 5
      %v657 = vsel %vm307, %v652, %v656
      %v658 = vshrl.u32 %v297, 16
      %v660 = vrot.slane %v658, 4
      %v661 = vor.u32 %v660, %v656
      %v662 = vrot.slane %v661, 4
      %v664 = vshll.u32 %v298, 16
      %v666 = vrot.slane %v664, 5
      %v667 = vsel %vm307, %v662, %v666
      %v669 = vshrl.u32 %v299, 16
      %v671 = vrot.slane %v669, 4
      %v672 = vshll.u32 %v299, 16
      %v674 = vrot.slane %v672, 5
      %v675 = vor.u32 %v671, %v674
      %v676 = vrot.slane %v675, 4
      %v678 = vshll.u32 %v300, 16
      %v680 = vrot.slane %v678, 5
      %v681 = vsel %vm307, %v676, %v680
      %v682 = vshrl.u32 %v300, 16
      %v684 = vrot.slane %v682, 4
      %v685 = vor.u32 %v684, %v680
      %v686 = vrot.slane %v685, 4
      %v688 = vshll.u32 %v301, 16
      %v690 = vrot.slane %v688, 5
      %v691 = vsel %vm307, %v686, %v690
      %v693 = vshrl.u32 %v302, 16
      %v695 = vrot.slane %v693, 4
      %v696 = vshll.u32 %v302, 16
      %v698 = vrot.slane %v696, 5
      %v699 = vor.u32 %v695, %v698
      %v700 = vrot.slane %v699, 4
      %v702 = vshll.u32 %v303, 16
      %v704 = vrot.slane %v702, 5
      %v705 = vsel %vm307, %v700, %v704
      %v706 = vshrl.u32 %v303, 16
      %v708 = vrot.slane %v706, 4
      %v709 = vor.u32 %v708, %v704
      %v710 = vrot.slane %v709, 4
      %v712 = vshll.u32 %v304, 16
      %v714 = vrot.slane %v712, 5
      %v715 = vsel %vm307, %v710, %v714
      %v748 = vunpack.c.l.b16 %v254
      %v749 = vunpack.c.l.b16 %v255
      %v750 = vunpack.c.l.b16 %v257
      %v751 = vunpack.c.l.b16 %v258
      %v752 = vunpack.c.l.b16 %v260
      %v753 = vunpack.c.l.b16 %v261
      %v754 = vunpack.c.l.b16 %v263
      %v755 = vunpack.c.l.b16 %v264
      %v756 = vunpack.c.l.b16 %v266
      %v757 = vunpack.c.l.b16 %v267
      %v758 = vunpack.c.l.b16 %v269
      %v759 = vunpack.c.l.b16 %v270
      %v760 = vunpack.c.l.b16 %v272
      %v761 = vunpack.c.l.b16 %v273
      %v762 = vunpack.c.l.b16 %v275
      %v763 = vunpack.c.l.b16 %v276
      %v764 = vunpack.c.l.b16 %v278
      %v765 = vunpack.c.l.b16 %v279
      %v766 = vunpack.c.l.b16 %v281
      %v767 = vunpack.c.l.b16 %v282
      %v768 = vunpack.c.l.b16 %v284
      %v769 = vunpack.c.l.b16 %v285
      %v770 = vunpack.c.l.b16 %v287
      %v771 = vunpack.c.l.b16 %v288
      %v772 = vunpack.c.l.b16 %v290
      %v773 = vunpack.c.l.b16 %v291
      %v774 = vunpack.c.l.b16 %v293
      %v775 = vunpack.c.l.b16 %v294
      %v776 = vunpack.c.l.b16 %v296
      %v777 = vunpack.c.l.b16 %v297
      %v778 = vunpack.c.l.b16 %v299
      %v779 = vunpack.c.l.b16 %v300
      %v780 = vpack.c.b16 %v749, %v748
      %v781 = vpack.c.b16 %v751, %v750
      %v782 = vpack.c.b16 %v753, %v752
      %v783 = vpack.c.b16 %v755, %v754
      %v784 = vpack.c.b16 %v757, %v756
      %v785 = vpack.c.b16 %v759, %v758
      %v786 = vpack.c.b16 %v761, %v760
      %v787 = vpack.c.b16 %v763, %v762
      %v788 = vpack.c.b16 %v765, %v764
      %v789 = vpack.c.b16 %v767, %v766
      %v790 = vpack.c.b16 %v769, %v768
      %v791 = vpack.c.b16 %v771, %v770
      %v792 = vpack.c.b16 %v773, %v772
      %v793 = vpack.c.b16 %v775, %v774
      %v794 = vpack.c.b16 %v777, %v776
      %v795 = vpack.c.b16 %v779, %v778
      %v796 = vunpack.c.l.b16 %v321
      %v797 = vunpack.c.l.b16 %v331
      %v798 = vunpack.c.l.b16 %v345
      %v799 = vunpack.c.l.b16 %v355
      %v800 = vunpack.c.l.b16 %v369
      %v801 = vunpack.c.l.b16 %v379
      %v802 = vunpack.c.l.b16 %v393
      %v803 = vunpack.c.l.b16 %v403
      %v804 = vunpack.c.l.b16 %v417
      %v805 = vunpack.c.l.b16 %v427
      %v806 = vunpack.c.l.b16 %v441
      %v807 = vunpack.c.l.b16 %v451
      %v808 = vunpack.c.l.b16 %v465
      %v809 = vunpack.c.l.b16 %v475
      %v810 = vunpack.c.l.b16 %v489
      %v811 = vunpack.c.l.b16 %v499
      %v812 = vunpack.c.l.b16 %v513
      %v813 = vunpack.c.l.b16 %v523
      %v814 = vunpack.c.l.b16 %v537
      %v815 = vunpack.c.l.b16 %v547
      %v816 = vunpack.c.l.b16 %v561
      %v817 = vunpack.c.l.b16 %v571
      %v818 = vunpack.c.l.b16 %v585
      %v819 = vunpack.c.l.b16 %v595
      %v820 = vunpack.c.l.b16 %v609
      %v821 = vunpack.c.l.b16 %v619
      %v822 = vunpack.c.l.b16 %v633
      %v823 = vunpack.c.l.b16 %v643
      %v824 = vunpack.c.l.b16 %v657
      %v825 = vunpack.c.l.b16 %v667
      %v826 = vunpack.c.l.b16 %v681
      %v827 = vunpack.c.l.b16 %v691
      %v828 = vpack.c.b16 %v797, %v796
      %v829 = vpack.c.b16 %v799, %v798
      %v830 = vpack.c.b16 %v801, %v800
      %v831 = vpack.c.b16 %v803, %v802
      %v832 = vpack.c.b16 %v805, %v804
      %v833 = vpack.c.b16 %v807, %v806
      %v834 = vpack.c.b16 %v809, %v808
      %v835 = vpack.c.b16 %v811, %v810
      %v836 = vpack.c.b16 %v813, %v812
      %v837 = vpack.c.b16 %v815, %v814
      %v838 = vpack.c.b16 %v817, %v816
      %v839 = vpack.c.b16 %v819, %v818
      %v840 = vpack.c.b16 %v821, %v820
      %v841 = vpack.c.b16 %v823, %v822
      %v842 = vpack.c.b16 %v825, %v824
      %v843 = vpack.c.b16 %v827, %v826
      %844 = vrot.lane.b32.xlu0 %v828, 32
      %v845 = vpop.permute.xlu0 %844
      %846 = vrot.lane.b32.xlu0 %v829, 32
      %v847 = vpop.permute.xlu0 %846
      %848 = vrot.lane.b32.xlu0 %v830, 32
      %v849 = vpop.permute.xlu0 %848
      %850 = vrot.lane.b32.xlu0 %v831, 32
      %v851 = vpop.permute.xlu0 %850
      %852 = vrot.lane.b32.xlu0 %v832, 32
      %v853 = vpop.permute.xlu0 %852
      %854 = vrot.lane.b32.xlu0 %v833, 32
      %v855 = vpop.permute.xlu0 %854
      %856 = vrot.lane.b32.xlu0 %v834, 32
      %v857 = vpop.permute.xlu0 %856
      %858 = vrot.lane.b32.xlu0 %v835, 32
      %v859 = vpop.permute.xlu0 %858
      %860 = vrot.lane.b32.xlu0 %v836, 32
      %v861 = vpop.permute.xlu0 %860
      %862 = vrot.lane.b32.xlu0 %v837, 32
      %v863 = vpop.permute.xlu0 %862
      %864 = vrot.lane.b32.xlu0 %v838, 32
      %v865 = vpop.permute.xlu0 %864
      %866 = vrot.lane.b32.xlu0 %v839, 32
      %v867 = vpop.permute.xlu0 %866
      %868 = vrot.lane.b32.xlu0 %v840, 32
      %v869 = vpop.permute.xlu0 %868
      %870 = vrot.lane.b32.xlu0 %v841, 32
      %v871 = vpop.permute.xlu0 %870
      %872 = vrot.lane.b32.xlu0 %v842, 32
      %v873 = vpop.permute.xlu0 %872
      %874 = vrot.lane.b32.xlu0 %v843, 32
      %v875 = vpop.permute.xlu0 %874
      %v878 = vunpack.c.l.b16 %v302
      %v879 = vunpack.c.l.b16 %v303
      %v880 = vpack.c.b16 %v879, %v878
      %881 = vrot.lane.b32.xlu0 %v781, 64
      %v882 = vpop.permute.xlu0 %881
      %883 = vrot.lane.b32.xlu0 %v782, 64
      %v884 = vpop.permute.xlu0 %883
      %885 = vrot.lane.b32.xlu0 %v783, 64
      %v886 = vpop.permute.xlu0 %885
      %887 = vrot.lane.b32.xlu0 %v784, 64
      %v888 = vpop.permute.xlu0 %887
      %889 = vrot.lane.b32.xlu0 %v785, 64
      %v890 = vpop.permute.xlu0 %889
      %891 = vrot.lane.b32.xlu0 %v786, 64
      %v892 = vpop.permute.xlu0 %891
      %893 = vrot.lane.b32.xlu0 %v787, 64
      %v894 = vpop.permute.xlu0 %893
      %895 = vrot.lane.b32.xlu0 %v788, 64
      %v896 = vpop.permute.xlu0 %895
      %897 = vrot.lane.b32.xlu0 %v789, 64
      %v898 = vpop.permute.xlu0 %897
      %899 = vrot.lane.b32.xlu0 %v790, 64
      %v900 = vpop.permute.xlu0 %899
      %901 = vrot.lane.b32.xlu0 %v791, 64
      %v902 = vpop.permute.xlu0 %901
      %903 = vrot.lane.b32.xlu0 %v792, 64
      %v904 = vpop.permute.xlu0 %903
      %905 = vrot.lane.b32.xlu0 %v793, 64
      %v906 = vpop.permute.xlu0 %905
      %907 = vrot.lane.b32.xlu0 %v794, 64
      %v908 = vpop.permute.xlu0 %907
      %909 = vrot.lane.b32.xlu0 %v795, 64
      %v910 = vpop.permute.xlu0 %909
      %911 = vrot.lane.b32.xlu0 %v880, 64
      %v912 = vpop.permute.xlu0 %911
      %v913 = vunpack.c.l.b16 %v705
      %v914 = vunpack.c.l.b16 %v715
      %v915 = vpack.c.b16 %v914, %v913
      %916 = vrot.lane.b32.xlu0 %v829, 96
      %v917 = vpop.permute.xlu0 %916
      %918 = vrot.lane.b32.xlu0 %v830, 96
      %v919 = vpop.permute.xlu0 %918
      %920 = vrot.lane.b32.xlu0 %v831, 96
      %v921 = vpop.permute.xlu0 %920
      %922 = vrot.lane.b32.xlu0 %v832, 96
      %v923 = vpop.permute.xlu0 %922
      %924 = vrot.lane.b32.xlu0 %v833, 96
      %v925 = vpop.permute.xlu0 %924
      %926 = vrot.lane.b32.xlu0 %v834, 96
      %v927 = vpop.permute.xlu0 %926
      %928 = vrot.lane.b32.xlu0 %v835, 96
      %v929 = vpop.permute.xlu0 %928
      %930 = vrot.lane.b32.xlu0 %v836, 96
      %v931 = vpop.permute.xlu0 %930
      %932 = vrot.lane.b32.xlu0 %v837, 96
      %v933 = vpop.permute.xlu0 %932
      %934 = vrot.lane.b32.xlu0 %v838, 96
      %v935 = vpop.permute.xlu0 %934
      %936 = vrot.lane.b32.xlu0 %v839, 96
      %v937 = vpop.permute.xlu0 %936
      %938 = vrot.lane.b32.xlu0 %v840, 96
      %v939 = vpop.permute.xlu0 %938
      %940 = vrot.lane.b32.xlu0 %v841, 96
      %v941 = vpop.permute.xlu0 %940
      %942 = vrot.lane.b32.xlu0 %v842, 96
      %v943 = vpop.permute.xlu0 %942
      %944 = vrot.lane.b32.xlu0 %v843, 96
      %v945 = vpop.permute.xlu0 %944
      %946 = vrot.lane.b32.xlu0 %v915, 96
      %v947 = vpop.permute.xlu0 %946
      %vm948 = vcmask 261120
      %v951 = vsel %vm948, %v780, %v845
      %v954 = vsel %vm948, %v781, %v847
      %v957 = vsel %vm948, %v782, %v849
      %v960 = vsel %vm948, %v783, %v851
      %v963 = vsel %vm948, %v784, %v853
      %v966 = vsel %vm948, %v785, %v855
      %v969 = vsel %vm948, %v786, %v857
      %v972 = vsel %vm948, %v787, %v859
      %v975 = vsel %vm948, %v788, %v861
      %v978 = vsel %vm948, %v789, %v863
      %v981 = vsel %vm948, %v790, %v865
      %v984 = vsel %vm948, %v791, %v867
      %v987 = vsel %vm948, %v792, %v869
      %v990 = vsel %vm948, %v793, %v871
      %v993 = vsel %vm948, %v794, %v873
      %v996 = vsel %vm948, %v795, %v875
      %vm997 = vcmask 523264
      %v999 = vsel %vm997, %v951, %v882
      %v1001 = vsel %vm997, %v954, %v884
      %v1003 = vsel %vm997, %v957, %v886
      %v1005 = vsel %vm997, %v960, %v888
      %v1007 = vsel %vm997, %v963, %v890
      %v1009 = vsel %vm997, %v966, %v892
      %v1011 = vsel %vm997, %v969, %v894
      %v1013 = vsel %vm997, %v972, %v896
      %v1015 = vsel %vm997, %v975, %v898
      %v1017 = vsel %vm997, %v978, %v900
      %v1019 = vsel %vm997, %v981, %v902
      %v1021 = vsel %vm997, %v984, %v904
      %v1023 = vsel %vm997, %v987, %v906
      %v1025 = vsel %vm997, %v990, %v908
      %v1027 = vsel %vm997, %v993, %v910
      %v1029 = vsel %vm997, %v996, %v912
      %vm1030 = vcmask 785408
      %v1032 = vsel %vm1030, %v999, %v917
      %v1035 = vsel %vm1030, %v1001, %v919
      %v1038 = vsel %vm1030, %v1003, %v921
      %v1041 = vsel %vm1030, %v1005, %v923
      %v1044 = vsel %vm1030, %v1007, %v925
      %v1047 = vsel %vm1030, %v1009, %v927
      %v1050 = vsel %vm1030, %v1011, %v929
      %v1053 = vsel %vm1030, %v1013, %v931
      %v1056 = vsel %vm1030, %v1015, %v933
      %v1059 = vsel %vm1030, %v1017, %v935
      %v1062 = vsel %vm1030, %v1019, %v937
      %v1065 = vsel %vm1030, %v1021, %v939
      %v1068 = vsel %vm1030, %v1023, %v941
      %v1071 = vsel %vm1030, %v1025, %v943
      %v1074 = vsel %vm1030, %v1027, %v945
      %v1077 = vsel %vm1030, %v1029, %v947
      %v1079 = vld [vmem:[%s244] sm:$0xf]
      %v1080 = vld [vmem:[%s244 + $0x4] sm:$0xf]
      %v1081 = vld [vmem:[%s244 + $0x8] sm:$0xf]
      %v1082 = vld [vmem:[%s244 + $0xc] sm:$0xf]
      %v1083 = vld [vmem:[%s244 + $0x10] sm:$0xf]
      %v1084 = vld [vmem:[%s244 + $0x14] sm:$0xf]
      %v1085 = vld [vmem:[%s244 + $0x18] sm:$0xf]
      %v1086 = vld [vmem:[%s244 + $0x1c] sm:$0xf]
      %v1087 = vld [vmem:[%s244 + $0x20] sm:$0xf]
      %v1088 = vld [vmem:[%s244 + $0x24] sm:$0xf]
      %v1089 = vld [vmem:[%s244 + $0x28] sm:$0xf]
      %v1090 = vld [vmem:[%s244 + $0x2c] sm:$0xf]
      %v1091 = vld [vmem:[%s244 + $0x30] sm:$0xf]
      %v1092 = vld [vmem:[%s244 + $0x34] sm:$0xf]
      %v1093 = vld [vmem:[%s244 + $0x38] sm:$0xf]
      %v1094 = vld [vmem:[%s244 + $0x3c] sm:$0xf]
      %v1111 = vunpack.c.l.b16 %v1079
      %v1112 = vunpack.c.l.b16 %v1080
      %v1113 = vunpack.c.l.b16 %v1081
      %v1114 = vunpack.c.l.b16 %v1082
      %v1115 = vunpack.c.l.b16 %v1083
      %v1116 = vunpack.c.l.b16 %v1084
      %v1117 = vunpack.c.l.b16 %v1085
      %v1118 = vunpack.c.l.b16 %v1086
      %v1119 = vunpack.c.l.b16 %v1087
      %v1120 = vunpack.c.l.b16 %v1088
      %v1121 = vunpack.c.l.b16 %v1089
      %v1122 = vunpack.c.l.b16 %v1090
      %v1123 = vunpack.c.l.b16 %v1091
      %v1124 = vunpack.c.l.b16 %v1092
      %v1125 = vunpack.c.l.b16 %v1093
      %v1126 = vunpack.c.l.b16 %v1094
      %v1127 = vpack.c.b16 %v1112, %v1111
      %v1128 = vpack.c.b16 %v1114, %v1113
      %v1129 = vpack.c.b16 %v1116, %v1115
      %v1130 = vpack.c.b16 %v1118, %v1117
      %v1131 = vpack.c.b16 %v1120, %v1119
      %v1132 = vpack.c.b16 %v1122, %v1121
      %v1133 = vpack.c.b16 %v1124, %v1123
      %v1134 = vpack.c.b16 %v1126, %v1125
      %1143 = vmatpush.bf16.msra.mxu0 %v1134
      %1144 = vmatpush.bf16.msra.mxu0 %v1133
      %1145 = vmatpush.bf16.msra.mxu0 %v1132
      %1146 = vmatpush.bf16.msra.mxu0 %v1131
      %1147 = vmatpush.bf16.msra.mxu0 %v1130
      %1148 = vmatpush.bf16.msra.mxu0 %v1129
      %1149 = vmatpush.bf16.msra.mxu0 %v1128
      %1150 = vmatpush.bf16.msra.mxu0 %v1127
      %1151 = vmatmul.bf16.gmra.mxu0 %v1032
      %v1152 = vpop.f32.mrf.mxu0
      %v1153 = vadd.f32 0.0, %v1152
      %v1154 = vpop.f32.mrf.mxu0
      %v1155 = vadd.f32 0.0, %v1154
      %1156 = vmatmul.bf16.gmra.mxu0 %v1035
      %v1157 = vpop.f32.mrf.mxu0
      %v1158 = vadd.f32 0.0, %v1157
      %v1159 = vpop.f32.mrf.mxu0
      %v1160 = vadd.f32 0.0, %v1159
      %1161 = vmatmul.bf16.gmra.mxu0 %v1038
      %v1162 = vpop.f32.mrf.mxu0
      %v1163 = vadd.f32 0.0, %v1162
      %v1164 = vpop.f32.mrf.mxu0
      %v1165 = vadd.f32 0.0, %v1164
      %1166 = vmatmul.bf16.gmra.mxu0 %v1041
      %v1167 = vpop.f32.mrf.mxu0
      %v1168 = vadd.f32 0.0, %v1167
      %v1169 = vpop.f32.mrf.mxu0
      %v1170 = vadd.f32 0.0, %v1169
      %1171 = vmatmul.bf16.gmra.mxu0 %v1044
      %v1172 = vpop.f32.mrf.mxu0
      %v1173 = vadd.f32 0.0, %v1172
      %v1174 = vpop.f32.mrf.mxu0
      %v1175 = vadd.f32 0.0, %v1174
      %1176 = vmatmul.bf16.gmra.mxu0 %v1047
      %v1177 = vpop.f32.mrf.mxu0
      %v1178 = vadd.f32 0.0, %v1177
      %v1179 = vpop.f32.mrf.mxu0
      %v1180 = vadd.f32 0.0, %v1179
      %1181 = vmatmul.bf16.gmra.mxu0 %v1050
      %v1182 = vpop.f32.mrf.mxu0
      %v1183 = vadd.f32 0.0, %v1182
      %v1184 = vpop.f32.mrf.mxu0
      %v1185 = vadd.f32 0.0, %v1184
      %1186 = vmatmul.bf16.gmra.mxu0 %v1053
      %v1187 = vpop.f32.mrf.mxu0
      %v1188 = vadd.f32 0.0, %v1187
      %v1189 = vpop.f32.mrf.mxu0
      %v1190 = vadd.f32 0.0, %v1189
      %1191 = vmatmul.bf16.gmra.mxu0 %v1056
      %v1192 = vpop.f32.mrf.mxu0
      %v1193 = vadd.f32 0.0, %v1192
      %v1194 = vpop.f32.mrf.mxu0
      %v1195 = vadd.f32 0.0, %v1194
      %1196 = vmatmul.bf16.gmra.mxu0 %v1059
      %v1197 = vpop.f32.mrf.mxu0
      %v1198 = vadd.f32 0.0, %v1197
      %v1199 = vpop.f32.mrf.mxu0
      %v1200 = vadd.f32 0.0, %v1199
      %1201 = vmatmul.bf16.gmra.mxu0 %v1062
      %v1202 = vpop.f32.mrf.mxu0
      %v1203 = vadd.f32 0.0, %v1202
      %v1204 = vpop.f32.mrf.mxu0
      %v1205 = vadd.f32 0.0, %v1204
      %1206 = vmatmul.bf16.gmra.mxu0 %v1065
      %v1207 = vpop.f32.mrf.mxu0
      %v1208 = vadd.f32 0.0, %v1207
      %v1209 = vpop.f32.mrf.mxu0
      %v1210 = vadd.f32 0.0, %v1209
      %1211 = vmatmul.bf16.gmra.mxu0 %v1068
      %v1212 = vpop.f32.mrf.mxu0
      %v1213 = vadd.f32 0.0, %v1212
      %v1214 = vpop.f32.mrf.mxu0
      %v1215 = vadd.f32 0.0, %v1214
      %1216 = vmatmul.bf16.gmra.mxu0 %v1071
      %v1217 = vpop.f32.mrf.mxu0
      %v1218 = vadd.f32 0.0, %v1217
      %v1219 = vpop.f32.mrf.mxu0
      %v1220 = vadd.f32 0.0, %v1219
      %1221 = vmatmul.bf16.gmra.mxu0 %v1074
      %v1222 = vpop.f32.mrf.mxu0
      %v1223 = vadd.f32 0.0, %v1222
      %v1224 = vpop.f32.mrf.mxu0
      %v1225 = vadd.f32 0.0, %v1224
      %1226 = vmatmul.bf16.gmra.mxu0 %v1077
      %v1227 = vpop.f32.mrf.mxu0
      %v1228 = vadd.f32 0.0, %v1227
      %v1229 = vpop.f32.mrf.mxu0
      %v1230 = vadd.f32 0.0, %v1229
      %1231 = vdwg.mxu0
      %v1232 = vld [vmem:[%s2] sm:$0x1]
      %v1234 = vperm.slane %v1232, 0
      %v1236 = vmul.f32 %v1153, %v1234
      %v1237 = vmul.f32 %v1155, %v1234
      %v1238 = vmul.f32 %v1158, %v1234
      %v1239 = vmul.f32 %v1160, %v1234
      %v1240 = vmul.f32 %v1163, %v1234
      %v1241 = vmul.f32 %v1165, %v1234
      %v1242 = vmul.f32 %v1168, %v1234
      %v1243 = vmul.f32 %v1170, %v1234
      %v1244 = vmul.f32 %v1173, %v1234
      %v1245 = vmul.f32 %v1175, %v1234
      %v1246 = vmul.f32 %v1178, %v1234
      %v1247 = vmul.f32 %v1180, %v1234
      %v1248 = vmul.f32 %v1183, %v1234
      %v1249 = vmul.f32 %v1185, %v1234
      %v1250 = vmul.f32 %v1188, %v1234
      %v1251 = vmul.f32 %v1190, %v1234
      %v1252 = vmul.f32 %v1193, %v1234
      %v1253 = vmul.f32 %v1195, %v1234
      %v1254 = vmul.f32 %v1198, %v1234
      %v1255 = vmul.f32 %v1200, %v1234
      %v1256 = vmul.f32 %v1203, %v1234
      %v1257 = vmul.f32 %v1205, %v1234
      %v1258 = vmul.f32 %v1208, %v1234
      %v1259 = vmul.f32 %v1210, %v1234
      %v1260 = vmul.f32 %v1213, %v1234
      %v1261 = vmul.f32 %v1215, %v1234
      %v1262 = vmul.f32 %v1218, %v1234
      %v1263 = vmul.f32 %v1220, %v1234
      %v1264 = vmul.f32 %v1223, %v1234
      %v1265 = vmul.f32 %v1225, %v1234
      %v1266 = vmul.f32 %v1228, %v1234
      %v1267 = vmul.f32 %v1230, %v1234
      %v1268 = vld [vmem:[%s3] sm:$0x1]
      %v1270 = vperm.slane %v1268, 0
      %v1272 = vadd.f32 %v1236, %v1270
      %v1273 = vadd.f32 %v1237, %v1270
      %v1274 = vadd.f32 %v1238, %v1270
      %v1275 = vadd.f32 %v1239, %v1270
      %v1276 = vadd.f32 %v1240, %v1270
      %v1277 = vadd.f32 %v1241, %v1270
      %v1278 = vadd.f32 %v1242, %v1270
      %v1279 = vadd.f32 %v1243, %v1270
      %v1280 = vadd.f32 %v1244, %v1270
      %v1281 = vadd.f32 %v1245, %v1270
      %v1282 = vadd.f32 %v1246, %v1270
      %v1283 = vadd.f32 %v1247, %v1270
      %v1284 = vadd.f32 %v1248, %v1270
      %v1285 = vadd.f32 %v1249, %v1270
      %v1286 = vadd.f32 %v1250, %v1270
      %v1287 = vadd.f32 %v1251, %v1270
      %v1288 = vadd.f32 %v1252, %v1270
      %v1289 = vadd.f32 %v1253, %v1270
      %v1290 = vadd.f32 %v1254, %v1270
      %v1291 = vadd.f32 %v1255, %v1270
      %v1292 = vadd.f32 %v1256, %v1270
      %v1293 = vadd.f32 %v1257, %v1270
      %v1294 = vadd.f32 %v1258, %v1270
      %v1295 = vadd.f32 %v1259, %v1270
      %v1296 = vadd.f32 %v1260, %v1270
      %v1297 = vadd.f32 %v1261, %v1270
      %v1298 = vadd.f32 %v1262, %v1270
      %v1299 = vadd.f32 %v1263, %v1270
      %v1300 = vadd.f32 %v1264, %v1270
      %v1301 = vadd.f32 %v1265, %v1270
      %v1302 = vadd.f32 %v1266, %v1270
      %v1303 = vadd.f32 %v1267, %v1270
      %v1304 = vmax.f32 %v1272, 0.0
      %v1305 = vmax.f32 %v1273, 0.0
      %v1306 = vmax.f32 %v1274, 0.0
      %v1307 = vmax.f32 %v1275, 0.0
      %v1308 = vmax.f32 %v1276, 0.0
      %v1309 = vmax.f32 %v1277, 0.0
      %v1310 = vmax.f32 %v1278, 0.0
      %v1311 = vmax.f32 %v1279, 0.0
      %v1312 = vmax.f32 %v1280, 0.0
      %v1313 = vmax.f32 %v1281, 0.0
      %v1314 = vmax.f32 %v1282, 0.0
      %v1315 = vmax.f32 %v1283, 0.0
      %v1316 = vmax.f32 %v1284, 0.0
      %v1317 = vmax.f32 %v1285, 0.0
      %v1318 = vmax.f32 %v1286, 0.0
      %v1319 = vmax.f32 %v1287, 0.0
      %v1320 = vmax.f32 %v1288, 0.0
      %v1321 = vmax.f32 %v1289, 0.0
      %v1322 = vmax.f32 %v1290, 0.0
      %v1323 = vmax.f32 %v1291, 0.0
      %v1324 = vmax.f32 %v1292, 0.0
      %v1325 = vmax.f32 %v1293, 0.0
      %v1326 = vmax.f32 %v1294, 0.0
      %v1327 = vmax.f32 %v1295, 0.0
      %v1328 = vmax.f32 %v1296, 0.0
      %v1329 = vmax.f32 %v1297, 0.0
      %v1330 = vmax.f32 %v1298, 0.0
      %v1331 = vmax.f32 %v1299, 0.0
      %v1332 = vmax.f32 %v1300, 0.0
      %v1333 = vmax.f32 %v1301, 0.0
      %v1334 = vmax.f32 %v1302, 0.0
      %v1335 = vmax.f32 %v1303, 0.0
      %vm1336 = vcmask 130048
      %1337 = vst.msk [vmem:[%s251] sm:$0xff] %vm1336, %v1304
      %1338 = vst.msk [vmem:[%s251 + $0x8] sm:$0xff] %vm1336, %v1305
      %1339 = vst.msk [vmem:[%s251 + $0x10] sm:$0xff] %vm1336, %v1306
      %1340 = vst.msk [vmem:[%s251 + $0x18] sm:$0xff] %vm1336, %v1307
      %1341 = vst.msk [vmem:[%s251 + $0x20] sm:$0xff] %vm1336, %v1308
      %1342 = vst.msk [vmem:[%s251 + $0x28] sm:$0xff] %vm1336, %v1309
      %1343 = vst.msk [vmem:[%s251 + $0x30] sm:$0xff] %vm1336, %v1310
      %1344 = vst.msk [vmem:[%s251 + $0x38] sm:$0xff] %vm1336, %v1311
      %1345 = vst.msk [vmem:[%s251 + $0x40] sm:$0xff] %vm1336, %v1312
      %1346 = vst.msk [vmem:[%s251 + $0x48] sm:$0xff] %vm1336, %v1313
      %1347 = vst.msk [vmem:[%s251 + $0x50] sm:$0xff] %vm1336, %v1314
      %1348 = vst.msk [vmem:[%s251 + $0x58] sm:$0xff] %vm1336, %v1315
      %1349 = vst.msk [vmem:[%s251 + $0x60] sm:$0xff] %vm1336, %v1316
      %1350 = vst.msk [vmem:[%s251 + $0x68] sm:$0xff] %vm1336, %v1317
      %1351 = vst.msk [vmem:[%s251 + $0x70] sm:$0xff] %vm1336, %v1318
      %1352 = vst.msk [vmem:[%s251 + $0x78] sm:$0xff] %vm1336, %v1319
      %1353 = vst.msk [vmem:[%s251 + $0x80] sm:$0xff] %vm1336, %v1320
      %1354 = vst.msk [vmem:[%s251 + $0x88] sm:$0xff] %vm1336, %v1321
      %1355 = vst.msk [vmem:[%s251 + $0x90] sm:$0xff] %vm1336, %v1322
      %1356 = vst.msk [vmem:[%s251 + $0x98] sm:$0xff] %vm1336, %v1323
      %1357 = vst.msk [vmem:[%s251 + $0xa0] sm:$0xff] %vm1336, %v1324
      %1358 = vst.msk [vmem:[%s251 + $0xa8] sm:$0xff] %vm1336, %v1325
      %1359 = vst.msk [vmem:[%s251 + $0xb0] sm:$0xff] %vm1336, %v1326
      %1360 = vst.msk [vmem:[%s251 + $0xb8] sm:$0xff] %vm1336, %v1327
      %1361 = vst.msk [vmem:[%s251 + $0xc0] sm:$0xff] %vm1336, %v1328
      %1362 = vst.msk [vmem:[%s251 + $0xc8] sm:$0xff] %vm1336, %v1329
      %1363 = vst.msk [vmem:[%s251 + $0xd0] sm:$0xff] %vm1336, %v1330
      %1364 = vst.msk [vmem:[%s251 + $0xd8] sm:$0xff] %vm1336, %v1331
      %1365 = vst.msk [vmem:[%s251 + $0xe0] sm:$0xff] %vm1336, %v1332
      %1366 = vst.msk [vmem:[%s251 + $0xe8] sm:$0xff] %vm1336, %v1333
      %1367 = vst.msk [vmem:[%s251 + $0xf0] sm:$0xff] %vm1336, %v1334
      %1368 = vst.msk [vmem:[%s251 + $0xf8] sm:$0xff] %vm1336, %v1335
      %s1369 = smul.u32 %s20, 4
      %s1370 = sadd.s32 %s1369, %s19
      %p1371 = scmp.lt.s32.totalorder %s1370, 7
      %s1372 = scalar_select %p1371, %s1370, 7
      %s1373 = smul.addr %s1372, 32
      %s1374 = smul.addr %s1373, 8
      %s1375 = scalar_lea.vmem %s4, %s1374
      // Predicated region
      $region37: #{conditional_generator_forward.8} parent=35 // pred_check
        %p1376 = pneg %p147
      $region38: #{conditional_generator_forward.8} parent=35 // pred_check_branch
        %1378 = sbr.rel (%p1376) target = $region40
      $region39: #{conditional_generator_forward.8} parent=35 // pred_region
        %s1379 = smul.u32 %s20, 4
        %s1380 = sadd.s32 %s1379, %s19
      $region40: #{conditional_generator_forward.8} parent=35 // pred_fallthru
        _
    $region36: #{conditional_generator_forward.8} parent=5 // pred_fallthru
      _
    %p1381 = scmp.le.s32.totalorder 2, %s10
    // Predicated region
    $region41: #{conditional_generator_forward.8} parent=5 // pred_check
      %p1382 = pneg %p1381
    $region42: #{conditional_generator_forward.8} parent=5 // pred_check_branch
      %1384 = sbr.rel (%p1382) target = $region44
    $region43: #{conditional_generator_forward.8} parent=5 // pred_region
      %s1385 = ssub.s32 %s10, 2
      // Predicated region
      $region45: #{conditional_generator_forward.8} parent=43 // pred_check
        %p1386 = pneg %p153
      $region46: #{conditional_generator_forward.8} parent=43 // pred_check_branch
        %1388 = sbr.rel (%p1386) target = $region48
      $region47: #{conditional_generator_forward.8} parent=43 // pred_region
        %s1389 = smul.u32 %s22, 4
        %s1390 = sadd.s32 %s1389, %s21
        %p1391 = scmp.lt.s32.totalorder %s1390, 7
        %s1392 = scalar_select %p1391, %s1390, 7
        %s1393 = smul.addr %s1392, 32
        %s1394 = smul.addr %s1393, 8
        %s1395 = scalar_lea.vmem %s4, %s1394
      $region48: #{conditional_generator_forward.8} parent=43 // pred_fallthru
        _
    $region44: #{conditional_generator_forward.8} parent=5 // pred_fallthru
      _
  $region6: #{conditional_generator_forward.8} parent=0 // loop_footer
    %s14 = sadd.s32 1, %s10
  $region7: #{conditional_generator_forward.8} parent=0 // loop_footer_branch
    %9 = sbr.rel target = $region3
  $region8: #{conditional_generator_forward.8} parent=0 // loop_exit
    _

// kernel: conditional_generator_forward.9
$region0: #{conditional_generator_forward.9}
  #allocation0 [shape = 'u32[]', space=smem, size = 0x4, offset = 0x4, fixed_abs, tag = 'smem constant byte address 0x4 - core index']
  #allocation1 [shape = 'u32[72,128]{1,0:T(1,128)}', space=vmem, size = 0x9000, scoped, tag = 'internal scratch']
  #allocation2 [shape = 'f32[1,1]{1,0:T(1,128)S(1)}', space=vmem, size = 0x200, scoped, tag = 'scoped memory for conditional_generator_forward.9']
  %s0 = inlined_call_operand.vmem [shape: bf16[8,33,33,16], index: 0, kind: input, shape index: {}]
  %s1 = inlined_call_operand.vmem [shape: bf16[4,4,16], index: 1, kind: input, shape index: {}]
  %s2 = inlined_call_operand.<no memory space> [shape: f32[1,1], index: 2, kind: input, shape index: {}]
  %s3 = inlined_call_operand.vmem [shape: f32[8,32,32], index: 3, kind: output, shape index: {}]
  %s4 = sld [smem:[#allocation0]]
  $region45: #{conditional_generator_forward.9} parent=0
    _
  %s6 = ssub.s32 1, %s4
  %s7 = scalar_select 0, %s6, %s4
  %v8 = vstv %s2
  %9 = vst [vmem:[#allocation2] sm:$0x1] %v8
  loop: start=0, step=1, limit=10
  $region2: #{conditional_generator_forward.9} parent=0 // loop_pre_header
    _
  $region3: #{conditional_generator_forward.9} parent=0 // loop_header
    %s11 = sphi 0, %s15
    %p12 = scmp.ge.s32.totalorder %s11, 10
    %s18 = sphi 0, %s30
    %s19 = sphi 0, %s26
    %s20 = sphi 0, %s18
    %s21 = sphi 0, %s19
    %s22 = sphi 0, %s20
    %s23 = sphi 0, %s21
    %s37 = sphi 0, %s39
    %s40 = sphi 0, %s37
    %s41 = sphi 0, %s40
    %s57 = sphi 0, %s41
    %s63 = sphi 0, %s65
    %s66 = sphi 0, %s63
    %s67 = sphi 0, %s66
    %s83 = sphi 0, %s67
    %s87 = sphi 0, %s87
    %s89 = sphi 0, %s87
    %s90 = sphi 0, %s89
    %s104 = sphi 0, %s90
    %s114 = sphi 0, %s116
    %s117 = sphi 0, %s114
    %s118 = sphi 0, %s117
    %s134 = sphi 0, %s118
  $region4: #{conditional_generator_forward.9} parent=0 // loop_header_branch
    %14 = sbr.rel (%p12) target = $region8
  $region5: #{conditional_generator_forward.9} parent=0 // loop_body
    %s16 = ssub.s32 %s11, 1
    %s17 = ssub.s32 %s11, 2
    %s24 = sadd.s32 1, %s19
    %p25 = scmp.ge.s32.totalorder %s24, 2
    %s26 = scalar_select %p25, 0, %s24
    %s27 = sadd.s32 1, %s18
    %s28 = scalar_select %p25, %s27, %s18
    %p29 = scmp.ge.s32.totalorder %s28, 4
    %s30 = scalar_select %p29, 0, %s28
    %s31 = smul.u32 %s19, 4
    %s32 = sadd.s32 %s31, %s18
    %s33 = smul.u32 %s26, 4
    %s34 = sadd.s32 %s33, %s30
    %s35 = ssub.s32 %s32, %s34
    %p36 = scmp.eq.s32.totalorder %s35, 0
    %s38 = sadd.s32 %s37, 1
    %s39 = scalar_select %p36, %s37, %s38
    %p42 = pneg %p36
    %p43 = scmp.eq.s32.totalorder %s11, 7
    %p44 = por %p42, %p43
    %p45 = scmp.ne.s32.totalorder %s37, %s40
    %p46 = scmp.eq.s32.totalorder %s11, 0
    %p47 = por %p45, %p46
    %p48 = scmp.ne.s32.totalorder %s37, %s40
    %p49 = scmp.eq.s32.totalorder %s16, 7
    %p50 = por %p48, %p49
    %p51 = scmp.ne.s32.totalorder %s40, %s41
    %p52 = scmp.eq.s32.totalorder %s16, 0
    %p53 = por %p51, %p52
    %p54 = scmp.ne.s32.totalorder %s40, %s41
    %p55 = scmp.eq.s32.totalorder %s17, 7
    %p56 = por %p54, %p55
    %p58 = scmp.ne.s32.totalorder %s41, %s57
    %p59 = scmp.eq.s32.totalorder %s17, 0
    %p60 = por %p58, %p59
    %s61 = ssub.s32 %s18, %s30
    %p62 = scmp.eq.s32.totalorder %s61, 0
    %s64 = sadd.s32 %s63, 1
    %s65 = scalar_select %p62, %s63, %s64
    %p68 = pneg %p62
    %p69 = scmp.eq.s32.totalorder %s11, 7
    %p70 = por %p68, %p69
    %p71 = scmp.ne.s32.totalorder %s63, %s66
    %p72 = scmp.eq.s32.totalorder %s11, 0
    %p73 = por %p71, %p72
    %p74 = scmp.ne.s32.totalorder %s63, %s66
    %p75 = scmp.eq.s32.totalorder %s16, 7
    %p76 = por %p74, %p75
    %p77 = scmp.ne.s32.totalorder %s66, %s67
    %p78 = scmp.eq.s32.totalorder %s16, 0
    %p79 = por %p77, %p78
    %p80 = scmp.ne.s32.totalorder %s66, %s67
    %p81 = scmp.eq.s32.totalorder %s17, 7
    %p82 = por %p80, %p81
    %p84 = scmp.ne.s32.totalorder %s67, %s83
    %p85 = scmp.eq.s32.totalorder %s17, 0
    %p86 = por %p84, %p85
    %s88 = sadd.s32 %s87, 1
    %p91 = scmp.eq.s32.totalorder %s11, 7
    %p92 = scmp.ne.s32.totalorder %s87, %s89
    %p93 = scmp.eq.s32.totalorder %s11, 0
    %p94 = por %p92, %p93
    %p95 = scmp.ne.s32.totalorder %s87, %s89
    %p96 = scmp.eq.s32.totalorder %s16, 7
    %p97 = por %p95, %p96
    %p98 = scmp.ne.s32.totalorder %s89, %s90
    %p99 = scmp.eq.s32.totalorder %s16, 0
    %p100 = por %p98, %p99
    %p101 = scmp.ne.s32.totalorder %s89, %s90
    %p102 = scmp.eq.s32.totalorder %s17, 7
    %p103 = por %p101, %p102
    %p105 = scmp.ne.s32.totalorder %s90, %s104
    %p106 = scmp.eq.s32.totalorder %s17, 0
    %p107 = por %p105, %p106
    %s108 = smul.u32 %s19, 4
    %s109 = sadd.s32 %s108, %s18
    %s110 = smul.u32 %s26, 4
    %s111 = sadd.s32 %s110, %s30
    %s112 = ssub.s32 %s109, %s111
    %p113 = scmp.eq.s32.totalorder %s112, 0
    %s115 = sadd.s32 %s114, 1
    %s116 = scalar_select %p113, %s114, %s115
    %p119 = pneg %p113
    %p120 = scmp.eq.s32.totalorder %s11, 7
    %p121 = por %p119, %p120
    %p122 = scmp.ne.s32.totalorder %s114, %s117
    %p123 = scmp.eq.s32.totalorder %s11, 0
    %p124 = por %p122, %p123
    %p125 = scmp.ne.s32.totalorder %s114, %s117
    %p126 = scmp.eq.s32.totalorder %s16, 7
    %p127 = por %p125, %p126
    %p128 = scmp.ne.s32.totalorder %s117, %s118
    %p129 = scmp.eq.s32.totalorder %s16, 0
    %p130 = por %p128, %p129
    %p131 = scmp.ne.s32.totalorder %s117, %s118
    %p132 = scmp.eq.s32.totalorder %s17, 7
    %p133 = por %p131, %p132
    %p135 = scmp.ne.s32.totalorder %s118, %s134
    %p136 = scmp.eq.s32.totalorder %s17, 0
    %p137 = por %p135, %p136
    %p138 = scmp.le.s32.totalorder 1, %s11
    %p139 = scmp.lt.s32.totalorder %s11, 9
    %p140 = pnand %p138, %p139
    %p141 = pneg %p140
    // Predicated region
    $region9: #{conditional_generator_forward.9} parent=5 // pred_check
      _
    $region10: #{conditional_generator_forward.9} parent=5 // pred_check_branch
      %143 = sbr.rel (%p140) target = $region12
    $region11: #{conditional_generator_forward.9} parent=5 // pred_region
      %s144 = ssub.s32 %s11, 1
      // Predicated region
      $region13: #{conditional_generator_forward.9} parent=11 // pred_check
        %p145 = pneg %p100
      $region14: #{conditional_generator_forward.9} parent=11 // pred_check_branch
        %147 = sbr.rel (%p145) target = $region16
      $region15: #{conditional_generator_forward.9} parent=11 // pred_region
        _
      $region16: #{conditional_generator_forward.9} parent=11 // pred_fallthru
        _
    $region12: #{conditional_generator_forward.9} parent=5 // pred_fallthru
      _
    %p148 = scmp.lt.s32.totalorder %s11, 8
    // Predicated region
    $region17: #{conditional_generator_forward.9} parent=5 // pred_check
      %p149 = pneg %p148
    $region18: #{conditional_generator_forward.9} parent=5 // pred_check_branch
      %151 = sbr.rel (%p149) target = $region20
    $region19: #{conditional_generator_forward.9} parent=5 // pred_region
      // Predicated region
      $region21: #{conditional_generator_forward.9} parent=19 // pred_check
        %p152 = pneg %p47
      $region22: #{conditional_generator_forward.9} parent=19 // pred_check_branch
        %154 = sbr.rel (%p152) target = $region24
      $region23: #{conditional_generator_forward.9} parent=19 // pred_region
        %s155 = smul.u32 %s19, 4
        %s156 = sadd.s32 %s155, %s18
        %p157 = scmp.lt.s32.totalorder %s156, 7
        %s158 = scalar_select %p157, %s156, 7
        %s159 = smul.addr %s158, 165
        %s160 = smul.addr %s159, 4
        %s161 = scalar_lea.vmem %s0, %s160
        %s162 = smul.u32 %s19, 4
        %s163 = sadd.s32 %s162, %s18
      $region24: #{conditional_generator_forward.9} parent=19 // pred_fallthru
        _
      // Predicated region
      $region25: #{conditional_generator_forward.9} parent=19 // pred_check
        %p164 = pneg %p73
      $region26: #{conditional_generator_forward.9} parent=19 // pred_check_branch
        %166 = sbr.rel (%p164) target = $region28
      $region27: #{conditional_generator_forward.9} parent=19 // pred_region
        %p167 = scmp.lt.s32.totalorder %s18, 3
        %s168 = scalar_select %p167, %s18, 3
        %s169 = smul.addr %s168, 2
        %s170 = scalar_lea.vmem %s1, %s169
      $region28: #{conditional_generator_forward.9} parent=19 // pred_fallthru
        _
    $region20: #{conditional_generator_forward.9} parent=5 // pred_fallthru
      _
    %p171 = scmp.le.s32.totalorder 1, %s11
    %p172 = scmp.lt.s32.totalorder %s11, 9
    %p173 = pnand %p171, %p172
    %p174 = pneg %p173
    // Predicated region
    $region29: #{conditional_generator_forward.9} parent=5 // pred_check
      _
    $region30: #{conditional_generator_forward.9} parent=5 // pred_check_branch
      %176 = sbr.rel (%p173) target = $region32
    $region31: #{conditional_generator_forward.9} parent=5 // pred_region
      %s177 = ssub.s32 %s11, 1
      %s178 = smul.u32 %s21, 4
      %s179 = sadd.s32 %s178, %s20
      %p180 = scmp.lt.s32.totalorder %s179, 7
      %s181 = scalar_select %p180, %s179, 7
      %s182 = smul.addr %s181, 165
      %s183 = smul.addr %s182, 4
      %s184 = scalar_lea.vmem %s0, %s183
      %p185 = pneg %p53
      %p186 = pneg %p50
      %p187 = scmp.lt.s32.totalorder %s20, 3
      %s188 = scalar_select %p187, %s20, 3
      %s189 = smul.addr %s188, 2
      %s190 = scalar_lea.vmem %s1, %s189
      %p191 = pneg %p79
      %p192 = pneg %p76
      %p193 = pneg %p100
      %p194 = pneg %p97
      %p195 = pneg %p130
      %p196 = pneg %p127
      %s197 = smul.u32 %s21, 4
      %s198 = sadd.s32 %s197, %s20
      %p199 = scmp.lt.s32.totalorder %s198, 7
      %s200 = scalar_select %p199, %s198, 7
      %s201 = smul.addr %s200, 4
      %s202 = smul.addr %s201, 8
      %s203 = scalar_lea.vmem %s3, %s202
      %s204 = smul.u32 %s21, 4
      %s205 = sadd.s32 %s204, %s20
      %p206 = scmp.lt.s32.totalorder %s205, 7
      %s207 = scalar_select %p206, %s205, 7
      %s208 = smul.addr %s207, 165
      %s209 = smul.addr %s208, 4
      %s210 = scalar_lea.vmem %s0, %s209
      %s211 = smul.u32 %s21, 4
      %s212 = sadd.s32 %s211, %s20
      %p213 = scmp.lt.s32.totalorder %s20, 3
      %s214 = scalar_select %p213, %s20, 3
      %s215 = smul.addr %s214, 2
      %s216 = scalar_lea.vmem %s1, %s215
      %s217 = smul.u32 %s21, 4
      %s218 = sadd.s32 %s217, %s20
      %p219 = scmp.lt.s32.totalorder %s218, 7
      %s220 = scalar_select %p219, %s218, 7
      %s221 = smul.addr %s220, 4
      %s222 = smul.addr %s221, 8
      %s223 = scalar_lea.vmem %s3, %s222
      %s224 = smul.u32 %s21, 4
      %s225 = sadd.s32 %s224, %s20
      %v226 = vld [vmem:[%s210] sm:$0xf]
      %v227 = vld [vmem:[%s210 + $0x4] sm:$0xf]
      %v228 = vld [vmem:[%s210 + $0x8] sm:$0xf]
      %v229 = vld [vmem:[%s210 + $0xc] sm:$0xf]
      %v230 = vld [vmem:[%s210 + $0x10] sm:$0x1]
      %v231 = vld [vmem:[%s210 + $0x14] sm:$0xf]
      %v232 = vld [vmem:[%s210 + $0x18] sm:$0xf]
      %v233 = vld [vmem:[%s210 + $0x1c] sm:$0xf]
      %v234 = vld [vmem:[%s210 + $0x20] sm:$0xf]
      %v235 = vld [vmem:[%s210 + $0x24] sm:$0x1]
      %v236 = vld [vmem:[%s210 + $0x28] sm:$0xf]
      %v237 = vld [vmem:[%s210 + $0x2c] sm:$0xf]
      %v238 = vld [vmem:[%s210 + $0x30] sm:$0xf]
      %v239 = vld [vmem:[%s210 + $0x34] sm:$0xf]
      %v240 = vld [vmem:[%s210 + $0x38] sm:$0x1]
      %v241 = vld [vmem:[%s210 + $0x3c] sm:$0xf]
      %v242 = vld [vmem:[%s210 + $0x40] sm:$0xf]
      %v243 = vld [vmem:[%s210 + $0x44] sm:$0xf]
      %v244 = vld [vmem:[%s210 + $0x48] sm:$0xf]
      %v245 = vld [vmem:[%s210 + $0x4c] sm:$0x1]
      %v246 = vld [vmem:[%s210 + $0x50] sm:$0xf]
      %v247 = vld [vmem:[%s210 + $0x54] sm:$0xf]
      %v248 = vld [vmem:[%s210 + $0x58] sm:$0xf]
      %v249 = vld [vmem:[%s210 + $0x5c] sm:$0xf]
      %v250 = vld [vmem:[%s210 + $0x60] sm:$0x1]
      %v251 = vld [vmem:[%s210 + $0x64] sm:$0xf]
      %v252 = vld [vmem:[%s210 + $0x68] sm:$0xf]
      %v253 = vld [vmem:[%s210 + $0x6c] sm:$0xf]
      %v254 = vld [vmem:[%s210 + $0x70] sm:$0xf]
      %v255 = vld [vmem:[%s210 + $0x74] sm:$0x1]
      %v256 = vld [vmem:[%s210 + $0x78] sm:$0xf]
      %v257 = vld [vmem:[%s210 + $0x7c] sm:$0xf]
      %v258 = vld [vmem:[%s210 + $0x80] sm:$0xf]
      %v259 = vld [vmem:[%s210 + $0x84] sm:$0xf]
      %v260 = vld [vmem:[%s210 + $0x88] sm:$0x1]
      %v261 = vld [vmem:[%s210 + $0x8c] sm:$0xf]
      %v262 = vld [vmem:[%s210 + $0x90] sm:$0xf]
      %v263 = vld [vmem:[%s210 + $0x94] sm:$0xf]
      %v264 = vld [vmem:[%s210 + $0x98] sm:$0xf]
      %v265 = vld [vmem:[%s210 + $0x9c] sm:$0x1]
      %v266 = vld [vmem:[%s210 + $0xa0] sm:$0xf]
      %v267 = vld [vmem:[%s210 + $0xa4] sm:$0xf]
      %v268 = vld [vmem:[%s210 + $0xa8] sm:$0xf]
      %v269 = vld [vmem:[%s210 + $0xac] sm:$0xf]
      %v270 = vld [vmem:[%s210 + $0xb0] sm:$0x1]
      %v271 = vld [vmem:[%s210 + $0xb4] sm:$0xf]
      %v272 = vld [vmem:[%s210 + $0xb8] sm:$0xf]
      %v273 = vld [vmem:[%s210 + $0xbc] sm:$0xf]
      %v274 = vld [vmem:[%s210 + $0xc0] sm:$0xf]
      %v275 = vld [vmem:[%s210 + $0xc4] sm:$0x1]
      %v276 = vld [vmem:[%s210 + $0xc8] sm:$0xf]
      %v277 = vld [vmem:[%s210 + $0xcc] sm:$0xf]
      %v278 = vld [vmem:[%s210 + $0xd0] sm:$0xf]
      %v279 = vld [vmem:[%s210 + $0xd4] sm:$0xf]
      %v280 = vld [vmem:[%s210 + $0xd8] sm:$0x1]
      %v281 = vld [vmem:[%s210 + $0xdc] sm:$0xf]
      %v282 = vld [vmem:[%s210 + $0xe0] sm:$0xf]
      %v283 = vld [vmem:[%s210 + $0xe4] sm:$0xf]
      %v284 = vld [vmem:[%s210 + $0xe8] sm:$0xf]
      %v285 = vld [vmem:[%s210 + $0xec] sm:$0x1]
      %v286 = vld [vmem:[%s210 + $0xf0] sm:$0xf]
      %v287 = vld [vmem:[%s210 + $0xf4] sm:$0xf]
      %v288 = vld [vmem:[%s210 + $0xf8] sm:$0xf]
      %v289 = vld [vmem:[%s210 + $0xfc] sm:$0xf]
      %v290 = vld [vmem:[%s210 + $0x100] sm:$0x1]
      %v291 = vld [vmem:[%s210 + $0x104] sm:$0xf]
      %v292 = vld [vmem:[%s210 + $0x108] sm:$0xf]
      %v293 = vld [vmem:[%s210 + $0x10c] sm:$0xf]
      %v294 = vld [vmem:[%s210 + $0x110] sm:$0xf]
      %v295 = vld [vmem:[%s210 + $0x114] sm:$0x1]
      %v296 = vld [vmem:[%s210 + $0x118] sm:$0xf]
      %v297 = vld [vmem:[%s210 + $0x11c] sm:$0xf]
      %v298 = vld [vmem:[%s210 + $0x120] sm:$0xf]
      %v299 = vld [vmem:[%s210 + $0x124] sm:$0xf]
      %v300 = vld [vmem:[%s210 + $0x128] sm:$0x1]
      %v301 = vld [vmem:[%s210 + $0x12c] sm:$0xf]
      %v302 = vld [vmem:[%s210 + $0x130] sm:$0xf]
      %v303 = vld [vmem:[%s210 + $0x134] sm:$0xf]
      %v304 = vld [vmem:[%s210 + $0x138] sm:$0xf]
      %v305 = vld [vmem:[%s210 + $0x13c] sm:$0x1]
      %v306 = vld [vmem:[%s210 + $0x140] sm:$0xf]
      %v307 = vld [vmem:[%s210 + $0x144] sm:$0xf]
      %v308 = vld [vmem:[%s210 + $0x148] sm:$0xf]
      %v309 = vld [vmem:[%s210 + $0x14c] sm:$0xf]
      %v310 = vld [vmem:[%s210 + $0x150] sm:$0x1]
      %v311 = vld [vmem:[%s210 + $0x154] sm:$0xf]
      %v312 = vld [vmem:[%s210 + $0x158] sm:$0xf]
      %v313 = vld [vmem:[%s210 + $0x15c] sm:$0xf]
      %v314 = vld [vmem:[%s210 + $0x160] sm:$0xf]
      %v315 = vld [vmem:[%s210 + $0x164] sm:$0x1]
      %v316 = vld [vmem:[%s210 + $0x168] sm:$0xf]
      %v317 = vld [vmem:[%s210 + $0x16c] sm:$0xf]
      %v318 = vld [vmem:[%s210 + $0x170] sm:$0xf]
      %v319 = vld [vmem:[%s210 + $0x174] sm:$0xf]
      %v320 = vld [vmem:[%s210 + $0x178] sm:$0x1]
      %v321 = vld [vmem:[%s210 + $0x17c] sm:$0xf]
      %v322 = vld [vmem:[%s210 + $0x180] sm:$0xf]
      %v323 = vld [vmem:[%s210 + $0x184] sm:$0xf]
      %v324 = vld [vmem:[%s210 + $0x188] sm:$0xf]
      %v325 = vld [vmem:[%s210 + $0x18c] sm:$0x1]
      %v326 = vld [vmem:[%s210 + $0x190] sm:$0xf]
      %v327 = vld [vmem:[%s210 + $0x194] sm:$0xf]
      %v328 = vld [vmem:[%s210 + $0x198] sm:$0xf]
      %v329 = vld [vmem:[%s210 + $0x19c] sm:$0xf]
      %v330 = vld [vmem:[%s210 + $0x1a0] sm:$0x1]
      %v331 = vld [vmem:[%s210 + $0x1a4] sm:$0xf]
      %v332 = vld [vmem:[%s210 + $0x1a8] sm:$0xf]
      %v333 = vld [vmem:[%s210 + $0x1ac] sm:$0xf]
      %v334 = vld [vmem:[%s210 + $0x1b0] sm:$0xf]
      %v335 = vld [vmem:[%s210 + $0x1b4] sm:$0x1]
      %v336 = vld [vmem:[%s210 + $0x1b8] sm:$0xf]
      %v337 = vld [vmem:[%s210 + $0x1bc] sm:$0xf]
      %v338 = vld [vmem:[%s210 + $0x1c0] sm:$0xf]
      %v339 = vld [vmem:[%s210 + $0x1c4] sm:$0xf]
      %v340 = vld [vmem:[%s210 + $0x1c8] sm:$0x1]
      %v341 = vld [vmem:[%s210 + $0x1cc] sm:$0xf]
      %v342 = vld [vmem:[%s210 + $0x1d0] sm:$0xf]
      %v343 = vld [vmem:[%s210 + $0x1d4] sm:$0xf]
      %v344 = vld [vmem:[%s210 + $0x1d8] sm:$0xf]
      %v345 = vld [vmem:[%s210 + $0x1dc] sm:$0x1]
      %v346 = vld [vmem:[%s210 + $0x1e0] sm:$0xf]
      %v347 = vld [vmem:[%s210 + $0x1e4] sm:$0xf]
      %v348 = vld [vmem:[%s210 + $0x1e8] sm:$0xf]
      %v349 = vld [vmem:[%s210 + $0x1ec] sm:$0xf]
      %v350 = vld [vmem:[%s210 + $0x1f0] sm:$0x1]
      %v351 = vld [vmem:[%s210 + $0x1f4] sm:$0xf]
      %v352 = vld [vmem:[%s210 + $0x1f8] sm:$0xf]
      %v353 = vld [vmem:[%s210 + $0x1fc] sm:$0xf]
      %v354 = vld [vmem:[%s210 + $0x200] sm:$0xf]
      %v355 = vld [vmem:[%s210 + $0x204] sm:$0x1]
      %v356 = vld [vmem:[%s210 + $0x208] sm:$0xf]
      %v357 = vld [vmem:[%s210 + $0x20c] sm:$0xf]
      %v358 = vld [vmem:[%s210 + $0x210] sm:$0xf]
      %v359 = vld [vmem:[%s210 + $0x214] sm:$0xf]
      %v360 = vld [vmem:[%s210 + $0x218] sm:$0x1]
      %v361 = vld [vmem:[%s210 + $0x21c] sm:$0xf]
      %v362 = vld [vmem:[%s210 + $0x220] sm:$0xf]
      %v363 = vld [vmem:[%s210 + $0x224] sm:$0xf]
      %v364 = vld [vmem:[%s210 + $0x228] sm:$0xf]
      %v365 = vld [vmem:[%s210 + $0x22c] sm:$0x1]
      %v366 = vld [vmem:[%s210 + $0x230] sm:$0xf]
      %v367 = vld [vmem:[%s210 + $0x234] sm:$0xf]
      %v368 = vld [vmem:[%s210 + $0x238] sm:$0xf]
      %v369 = vld [vmem:[%s210 + $0x23c] sm:$0xf]
      %v370 = vld [vmem:[%s210 + $0x240] sm:$0x1]
      %v371 = vld [vmem:[%s210 + $0x244] sm:$0xf]
      %v372 = vld [vmem:[%s210 + $0x248] sm:$0xf]
      %v373 = vld [vmem:[%s210 + $0x24c] sm:$0xf]
      %v374 = vld [vmem:[%s210 + $0x250] sm:$0xf]
      %v375 = vld [vmem:[%s210 + $0x254] sm:$0x1]
      %v376 = vld [vmem:[%s210 + $0x258] sm:$0xf]
      %v377 = vld [vmem:[%s210 + $0x25c] sm:$0xf]
      %v378 = vld [vmem:[%s210 + $0x260] sm:$0xf]
      %v379 = vld [vmem:[%s210 + $0x264] sm:$0xf]
      %v380 = vld [vmem:[%s210 + $0x268] sm:$0x1]
      %v381 = vld [vmem:[%s210 + $0x26c] sm:$0xf]
      %v382 = vld [vmem:[%s210 + $0x270] sm:$0xf]
      %v383 = vld [vmem:[%s210 + $0x274] sm:$0xf]
      %v384 = vld [vmem:[%s210 + $0x278] sm:$0xf]
      %v385 = vld [vmem:[%s210 + $0x27c] sm:$0x1]
      %v386 = vld [vmem:[%s210 + $0x280] sm:$0xf]
      %v387 = vld [vmem:[%s210 + $0x284] sm:$0xf]
      %v388 = vld [vmem:[%s210 + $0x288] sm:$0xf]
      %v389 = vld [vmem:[%s210 + $0x28c] sm:$0xf]
      %v390 = vld [vmem:[%s210 + $0x290] sm:$0x1]
      %v391 = vld [vmem:[%s216] sm:$0x3]
      %v392 = vunpack.c.l.bf16 %v391
      %v393 = vunpack.c.l.bf16 %v226
      %v394 = vunpack.c.l.bf16 %v227
      %v395 = vunpack.c.l.bf16 %v228
      %v396 = vunpack.c.l.bf16 %v229
      %v397 = vunpack.c.l.bf16 %v231
      %v398 = vunpack.c.l.bf16 %v232
      %v399 = vunpack.c.l.bf16 %v233
      %v400 = vunpack.c.l.bf16 %v234
      %v401 = vunpack.c.l.bf16 %v236
      %v402 = vunpack.c.l.bf16 %v237
      %v403 = vunpack.c.l.bf16 %v238
      %v404 = vunpack.c.l.bf16 %v239
      %v405 = vunpack.c.l.bf16 %v241
      %v406 = vunpack.c.l.bf16 %v242
      %v407 = vunpack.c.l.bf16 %v243
      %v408 = vunpack.c.l.bf16 %v244
      %v409 = vunpack.c.l.bf16 %v246
      %v410 = vunpack.c.l.bf16 %v247
      %v411 = vunpack.c.l.bf16 %v248
      %v412 = vunpack.c.l.bf16 %v249
      %v413 = vunpack.c.l.bf16 %v251
      %v414 = vunpack.c.l.bf16 %v252
      %v415 = vunpack.c.l.bf16 %v253
      %v416 = vunpack.c.l.bf16 %v254
      %v417 = vunpack.c.l.bf16 %v256
      %v418 = vunpack.c.l.bf16 %v257
      %v419 = vunpack.c.l.bf16 %v258
      %v420 = vunpack.c.l.bf16 %v259
      %v421 = vunpack.c.l.bf16 %v261
      %v422 = vunpack.c.l.bf16 %v262
      %v423 = vunpack.c.l.bf16 %v263
      %v424 = vunpack.c.l.bf16 %v264
      %v425 = vunpack.c.l.bf16 %v266
      %v426 = vunpack.c.l.bf16 %v267
      %v427 = vunpack.c.l.bf16 %v268
      %v428 = vunpack.c.l.bf16 %v269
      %v429 = vunpack.c.l.bf16 %v271
      %v430 = vunpack.c.l.bf16 %v272
      %v431 = vunpack.c.l.bf16 %v273
      %v432 = vunpack.c.l.bf16 %v274
      %v433 = vunpack.c.l.bf16 %v276
      %v434 = vunpack.c.l.bf16 %v277
      %v435 = vunpack.c.l.bf16 %v278
      %v436 = vunpack.c.l.bf16 %v279
      %v437 = vunpack.c.l.bf16 %v281
      %v438 = vunpack.c.l.bf16 %v282
      %v439 = vunpack.c.l.bf16 %v283
      %v440 = vunpack.c.l.bf16 %v284
      %v441 = vunpack.c.l.bf16 %v286
      %v442 = vunpack.c.l.bf16 %v287
      %v443 = vunpack.c.l.bf16 %v288
      %v444 = vunpack.c.l.bf16 %v289
      %v445 = vunpack.c.l.bf16 %v291
      %v446 = vunpack.c.l.bf16 %v292
      %v447 = vunpack.c.l.bf16 %v293
      %v448 = vunpack.c.l.bf16 %v294
      %v449 = vunpack.c.l.bf16 %v296
      %v450 = vunpack.c.l.bf16 %v297
      %v451 = vunpack.c.l.bf16 %v298
      %v452 = vunpack.c.l.bf16 %v299
      %v453 = vunpack.c.l.bf16 %v301
      %v454 = vunpack.c.l.bf16 %v302
      %v455 = vunpack.c.l.bf16 %v303
      %v456 = vunpack.c.l.bf16 %v304
      %v457 = vunpack.c.l.bf16 %v306
      %v458 = vunpack.c.l.bf16 %v307
      %v459 = vunpack.c.l.bf16 %v308
      %v460 = vunpack.c.l.bf16 %v309
      %v461 = vunpack.c.l.bf16 %v311
      %v462 = vunpack.c.l.bf16 %v312
      %v463 = vunpack.c.l.bf16 %v313
      %v464 = vunpack.c.l.bf16 %v314
      %v465 = vunpack.c.l.bf16 %v316
      %v466 = vunpack.c.l.bf16 %v317
      %v467 = vunpack.c.l.bf16 %v318
      %v468 = vunpack.c.l.bf16 %v319
      %v469 = vunpack.c.l.bf16 %v321
      %v470 = vunpack.c.l.bf16 %v322
      %v471 = vunpack.c.l.bf16 %v323
      %v472 = vunpack.c.l.bf16 %v324
      %v473 = vunpack.c.l.bf16 %v326
      %v474 = vunpack.c.l.bf16 %v327
      %v475 = vunpack.c.l.bf16 %v328
      %v476 = vunpack.c.l.bf16 %v329
      %v477 = vunpack.c.l.bf16 %v331
      %v478 = vunpack.c.l.bf16 %v332
      %v479 = vunpack.c.l.bf16 %v333
      %v480 = vunpack.c.l.bf16 %v334
      %v481 = vunpack.c.l.bf16 %v336
      %v482 = vunpack.c.l.bf16 %v337
      %v483 = vunpack.c.l.bf16 %v338
      %v484 = vunpack.c.l.bf16 %v339
      %v485 = vunpack.c.l.bf16 %v341
      %v486 = vunpack.c.l.bf16 %v342
      %v487 = vunpack.c.l.bf16 %v343
      %v488 = vunpack.c.l.bf16 %v344
      %v489 = vunpack.c.l.bf16 %v346
      %v490 = vunpack.c.l.bf16 %v347
      %v491 = vunpack.c.l.bf16 %v348
      %v492 = vunpack.c.l.bf16 %v349
      %v493 = vunpack.c.l.bf16 %v351
      %v494 = vunpack.c.l.bf16 %v352
      %v495 = vunpack.c.l.bf16 %v353
      %v496 = vunpack.c.l.bf16 %v354
      %v497 = vunpack.c.l.bf16 %v356
      %v498 = vunpack.c.l.bf16 %v357
      %v499 = vunpack.c.l.bf16 %v358
      %v500 = vunpack.c.l.bf16 %v359
      %v501 = vunpack.c.l.bf16 %v361
      %v502 = vunpack.c.l.bf16 %v362
      %v503 = vunpack.c.l.bf16 %v363
      %v504 = vunpack.c.l.bf16 %v364
      %v505 = vunpack.c.l.bf16 %v366
      %v506 = vunpack.c.l.bf16 %v367
      %v507 = vunpack.c.l.bf16 %v368
      %v508 = vunpack.c.l.bf16 %v369
      %v509 = vunpack.c.l.bf16 %v371
      %v510 = vunpack.c.l.bf16 %v372
      %v511 = vunpack.c.l.bf16 %v373
      %v512 = vunpack.c.l.bf16 %v374
      %v513 = vunpack.c.l.bf16 %v376
      %v514 = vunpack.c.l.bf16 %v377
      %v515 = vunpack.c.l.bf16 %v378
      %v516 = vunpack.c.l.bf16 %v379
      %v517 = vunpack.c.l.bf16 %v381
      %v518 = vunpack.c.l.bf16 %v382
      %v519 = vunpack.c.l.bf16 %v383
      %v520 = vunpack.c.l.bf16 %v384
      %v521 = vperm.slane %v392, 0
      %v522 = vmul.f32 %v393, %v521
      %v523 = vmul.f32 %v394, %v521
      %v524 = vmul.f32 %v395, %v521
      %v525 = vmul.f32 %v396, %v521
      %v526 = vmul.f32 %v397, %v521
      %v527 = vmul.f32 %v398, %v521
      %v528 = vmul.f32 %v399, %v521
      %v529 = vmul.f32 %v400, %v521
      %v530 = vmul.f32 %v401, %v521
      %v531 = vmul.f32 %v402, %v521
      %v532 = vmul.f32 %v403, %v521
      %v533 = vmul.f32 %v404, %v521
      %v534 = vmul.f32 %v405, %v521
      %v535 = vmul.f32 %v406, %v521
      %v536 = vmul.f32 %v407, %v521
      %v537 = vmul.f32 %v408, %v521
      %v538 = vmul.f32 %v409, %v521
      %v539 = vmul.f32 %v410, %v521
      %v540 = vmul.f32 %v411, %v521
      %v541 = vmul.f32 %v412, %v521
      %v542 = vmul.f32 %v413, %v521
      %v543 = vmul.f32 %v414, %v521
      %v544 = vmul.f32 %v415, %v521
      %v545 = vmul.f32 %v416, %v521
      %v546 = vmul.f32 %v417, %v521
      %v547 = vmul.f32 %v418, %v521
      %v548 = vmul.f32 %v419, %v521
      %v549 = vmul.f32 %v420, %v521
      %v550 = vmul.f32 %v421, %v521
      %v551 = vmul.f32 %v422, %v521
      %v552 = vmul.f32 %v423, %v521
      %v553 = vmul.f32 %v424, %v521
      %v554 = vmul.f32 %v425, %v521
      %v555 = vmul.f32 %v426, %v521
      %v556 = vmul.f32 %v427, %v521
      %v557 = vmul.f32 %v428, %v521
      %v558 = vmul.f32 %v429, %v521
      %v559 = vmul.f32 %v430, %v521
      %v560 = vmul.f32 %v431, %v521
      %v561 = vmul.f32 %v432, %v521
      %v562 = vmul.f32 %v433, %v521
      %v563 = vmul.f32 %v434, %v521
      %v564 = vmul.f32 %v435, %v521
      %v565 = vmul.f32 %v436, %v521
      %v566 = vmul.f32 %v437, %v521
      %v567 = vmul.f32 %v438, %v521
      %v568 = vmul.f32 %v439, %v521
      %v569 = vmul.f32 %v440, %v521
      %v570 = vmul.f32 %v441, %v521
      %v571 = vmul.f32 %v442, %v521
      %v572 = vmul.f32 %v443, %v521
      %v573 = vmul.f32 %v444, %v521
      %v574 = vmul.f32 %v445, %v521
      %v575 = vmul.f32 %v446, %v521
      %v576 = vmul.f32 %v447, %v521
      %v577 = vmul.f32 %v448, %v521
      %v578 = vmul.f32 %v449, %v521
      %v579 = vmul.f32 %v450, %v521
      %v580 = vmul.f32 %v451, %v521
      %v581 = vmul.f32 %v452, %v521
      %v582 = vmul.f32 %v453, %v521
      %v583 = vmul.f32 %v454, %v521
      %v584 = vmul.f32 %v455, %v521
      %v585 = vmul.f32 %v456, %v521
      %v586 = vmul.f32 %v457, %v521
      %v587 = vmul.f32 %v458, %v521
      %v588 = vmul.f32 %v459, %v521
      %v589 = vmul.f32 %v460, %v521
      %v590 = vmul.f32 %v461, %v521
      %v591 = vmul.f32 %v462, %v521
      %v592 = vmul.f32 %v463, %v521
      %v593 = vmul.f32 %v464, %v521
      %v594 = vmul.f32 %v465, %v521
      %v595 = vmul.f32 %v466, %v521
      %v596 = vmul.f32 %v467, %v521
      %v597 = vmul.f32 %v468, %v521
      %v598 = vmul.f32 %v469, %v521
      %v599 = vmul.f32 %v470, %v521
      %v600 = vmul.f32 %v471, %v521
      %v601 = vmul.f32 %v472, %v521
      %v602 = vmul.f32 %v473, %v521
      %v603 = vmul.f32 %v474, %v521
      %v604 = vmul.f32 %v475, %v521
      %v605 = vmul.f32 %v476, %v521
      %v606 = vmul.f32 %v477, %v521
      %v607 = vmul.f32 %v478, %v521
      %v608 = vmul.f32 %v479, %v521
      %v609 = vmul.f32 %v480, %v521
      %v610 = vmul.f32 %v481, %v521
      %v611 = vmul.f32 %v482, %v521
      %v612 = vmul.f32 %v483, %v521
      %v613 = vmul.f32 %v484, %v521
      %v614 = vmul.f32 %v485, %v521
      %v615 = vmul.f32 %v486, %v521
      %v616 = vmul.f32 %v487, %v521
      %v617 = vmul.f32 %v488, %v521
      %v618 = vmul.f32 %v489, %v521
      %v619 = vmul.f32 %v490, %v521
      %v620 = vmul.f32 %v491, %v521
      %v621 = vmul.f32 %v492, %v521
      %v622 = vmul.f32 %v493, %v521
      %v623 = vmul.f32 %v494, %v521
      %v624 = vmul.f32 %v495, %v521
      %v625 = vmul.f32 %v496, %v521
      %v626 = vmul.f32 %v497, %v521
      %v627 = vmul.f32 %v498, %v521
      %v628 = vmul.f32 %v499, %v521
      %v629 = vmul.f32 %v500, %v521
      %v630 = vmul.f32 %v501, %v521
      %v631 = vmul.f32 %v502, %v521
      %v632 = vmul.f32 %v503, %v521
      %v633 = vmul.f32 %v504, %v521
      %v634 = vmul.f32 %v505, %v521
      %v635 = vmul.f32 %v506, %v521
      %v636 = vmul.f32 %v507, %v521
      %v637 = vmul.f32 %v508, %v521
      %v638 = vmul.f32 %v509, %v521
      %v639 = vmul.f32 %v510, %v521
      %v640 = vmul.f32 %v511, %v521
      %v641 = vmul.f32 %v512, %v521
      %v642 = vmul.f32 %v513, %v521
      %v643 = vmul.f32 %v514, %v521
      %v644 = vmul.f32 %v515, %v521
      %v645 = vmul.f32 %v516, %v521
      %v646 = vmul.f32 %v517, %v521
      %v647 = vmul.f32 %v518, %v521
      %v648 = vmul.f32 %v519, %v521
      %v649 = vmul.f32 %v520, %v521
      %vm650 = vcmask 130048
      %v651 = vsel %vm650, %v522, 0.0
      %652 = vadd.xlane.f32.xlu0 %v651
      %v653 = vpop.xlane.xlu0 %652
      %v654 = vsel %vm650, %v523, 0.0
      %655 = vadd.xlane.f32.xlu0 %v654
      %v656 = vpop.xlane.xlu0 %655
      %v657 = vsel %vm650, %v524, 0.0
      %658 = vadd.xlane.f32.xlu0 %v657
      %v659 = vpop.xlane.xlu0 %658
      %v660 = vsel %vm650, %v525, 0.0
      %661 = vadd.xlane.f32.xlu0 %v660
      %v662 = vpop.xlane.xlu0 %661
      %v663 = vsel %vm650, %v526, 0.0
      %664 = vadd.xlane.f32.xlu0 %v663
      %v665 = vpop.xlane.xlu0 %664
      %v666 = vsel %vm650, %v527, 0.0
      %667 = vadd.xlane.f32.xlu0 %v666
      %v668 = vpop.xlane.xlu0 %667
      %v669 = vsel %vm650, %v528, 0.0
      %670 = vadd.xlane.f32.xlu0 %v669
      %v671 = vpop.xlane.xlu0 %670
      %v672 = vsel %vm650, %v529, 0.0
      %673 = vadd.xlane.f32.xlu0 %v672
      %v674 = vpop.xlane.xlu0 %673
      %v675 = vsel %vm650, %v530, 0.0
      %676 = vadd.xlane.f32.xlu0 %v675
      %v677 = vpop.xlane.xlu0 %676
      %v678 = vsel %vm650, %v531, 0.0
      %679 = vadd.xlane.f32.xlu0 %v678
      %v680 = vpop.xlane.xlu0 %679
      %v681 = vsel %vm650, %v532, 0.0
      %682 = vadd.xlane.f32.xlu0 %v681
      %v683 = vpop.xlane.xlu0 %682
      %v684 = vsel %vm650, %v533, 0.0
      %685 = vadd.xlane.f32.xlu0 %v684
      %v686 = vpop.xlane.xlu0 %685
      %v687 = vsel %vm650, %v534, 0.0
      %688 = vadd.xlane.f32.xlu0 %v687
      %v689 = vpop.xlane.xlu0 %688
      %v690 = vsel %vm650, %v535, 0.0
      %691 = vadd.xlane.f32.xlu0 %v690
      %v692 = vpop.xlane.xlu0 %691
      %v693 = vsel %vm650, %v536, 0.0
      %694 = vadd.xlane.f32.xlu0 %v693
      %v695 = vpop.xlane.xlu0 %694
      %v696 = vsel %vm650, %v537, 0.0
      %697 = vadd.xlane.f32.xlu0 %v696
      %v698 = vpop.xlane.xlu0 %697
      %v699 = vsel %vm650, %v538, 0.0
      %700 = vadd.xlane.f32.xlu0 %v699
      %v701 = vpop.xlane.xlu0 %700
      %v702 = vsel %vm650, %v539, 0.0
      %703 = vadd.xlane.f32.xlu0 %v702
      %v704 = vpop.xlane.xlu0 %703
      %v705 = vsel %vm650, %v540, 0.0
      %706 = vadd.xlane.f32.xlu0 %v705
      %v707 = vpop.xlane.xlu0 %706
      %v708 = vsel %vm650, %v541, 0.0
      %709 = vadd.xlane.f32.xlu0 %v708
      %v710 = vpop.xlane.xlu0 %709
      %v711 = vsel %vm650, %v542, 0.0
      %712 = vadd.xlane.f32.xlu0 %v711
      %v713 = vpop.xlane.xlu0 %712
      %v714 = vsel %vm650, %v543, 0.0
      %715 = vadd.xlane.f32.xlu0 %v714
      %v716 = vpop.xlane.xlu0 %715
      %v717 = vsel %vm650, %v544, 0.0
      %718 = vadd.xlane.f32.xlu0 %v717
      %v719 = vpop.xlane.xlu0 %718
      %v720 = vsel %vm650, %v545, 0.0
      %721 = vadd.xlane.f32.xlu0 %v720
      %v722 = vpop.xlane.xlu0 %721
      %v723 = vsel %vm650, %v546, 0.0
      %724 = vadd.xlane.f32.xlu0 %v723
      %v725 = vpop.xlane.xlu0 %724
      %v726 = vsel %vm650, %v547, 0.0
      %727 = vadd.xlane.f32.xlu0 %v726
      %v728 = vpop.xlane.xlu0 %727
      %v729 = vsel %vm650, %v548, 0.0
      %730 = vadd.xlane.f32.xlu0 %v729
      %v731 = vpop.xlane.xlu0 %730
      %v732 = vsel %vm650, %v549, 0.0
      %733 = vadd.xlane.f32.xlu0 %v732
      %v734 = vpop.xlane.xlu0 %733
      %v735 = vsel %vm650, %v550, 0.0
      %736 = vadd.xlane.f32.xlu0 %v735
      %v737 = vpop.xlane.xlu0 %736
      %v738 = vsel %vm650, %v551, 0.0
      %739 = vadd.xlane.f32.xlu0 %v738
      %v740 = vpop.xlane.xlu0 %739
      %v741 = vsel %vm650, %v552, 0.0
      %742 = vadd.xlane.f32.xlu0 %v741
      %v743 = vpop.xlane.xlu0 %742
      %v744 = vsel %vm650, %v553, 0.0
      %745 = vadd.xlane.f32.xlu0 %v744
      %v746 = vpop.xlane.xlu0 %745
      %v747 = vsel %vm650, %v554, 0.0
      %748 = vadd.xlane.f32.xlu0 %v747
      %v749 = vpop.xlane.xlu0 %748
      %v750 = vsel %vm650, %v555, 0.0
      %751 = vadd.xlane.f32.xlu0 %v750
      %v752 = vpop.xlane.xlu0 %751
      %v753 = vsel %vm650, %v556, 0.0
      %754 = vadd.xlane.f32.xlu0 %v753
      %v755 = vpop.xlane.xlu0 %754
      %v756 = vsel %vm650, %v557, 0.0
      %757 = vadd.xlane.f32.xlu0 %v756
      %v758 = vpop.xlane.xlu0 %757
      %v759 = vsel %vm650, %v558, 0.0
      %760 = vadd.xlane.f32.xlu0 %v759
      %v761 = vpop.xlane.xlu0 %760
      %v762 = vsel %vm650, %v559, 0.0
      %763 = vadd.xlane.f32.xlu0 %v762
      %v764 = vpop.xlane.xlu0 %763
      %v765 = vsel %vm650, %v560, 0.0
      %766 = vadd.xlane.f32.xlu0 %v765
      %v767 = vpop.xlane.xlu0 %766
      %v768 = vsel %vm650, %v561, 0.0
      %769 = vadd.xlane.f32.xlu0 %v768
      %v770 = vpop.xlane.xlu0 %769
      %v771 = vsel %vm650, %v562, 0.0
      %772 = vadd.xlane.f32.xlu0 %v771
      %v773 = vpop.xlane.xlu0 %772
      %v774 = vsel %vm650, %v563, 0.0
      %775 = vadd.xlane.f32.xlu0 %v774
      %v776 = vpop.xlane.xlu0 %775
      %v777 = vsel %vm650, %v564, 0.0
      %778 = vadd.xlane.f32.xlu0 %v777
      %v779 = vpop.xlane.xlu0 %778
      %v780 = vsel %vm650, %v565, 0.0
      %781 = vadd.xlane.f32.xlu0 %v780
      %v782 = vpop.xlane.xlu0 %781
      %v783 = vsel %vm650, %v566, 0.0
      %784 = vadd.xlane.f32.xlu0 %v783
      %v785 = vpop.xlane.xlu0 %784
      %v786 = vsel %vm650, %v567, 0.0
      %787 = vadd.xlane.f32.xlu0 %v786
      %v788 = vpop.xlane.xlu0 %787
      %v789 = vsel %vm650, %v568, 0.0
      %790 = vadd.xlane.f32.xlu0 %v789
      %v791 = vpop.xlane.xlu0 %790
      %v792 = vsel %vm650, %v569, 0.0
      %793 = vadd.xlane.f32.xlu0 %v792
      %v794 = vpop.xlane.xlu0 %793
      %v795 = vsel %vm650, %v570, 0.0
      %796 = vadd.xlane.f32.xlu0 %v795
      %v797 = vpop.xlane.xlu0 %796
      %v798 = vsel %vm650, %v571, 0.0
      %799 = vadd.xlane.f32.xlu0 %v798
      %v800 = vpop.xlane.xlu0 %799
      %v801 = vsel %vm650, %v572, 0.0
      %802 = vadd.xlane.f32.xlu0 %v801
      %v803 = vpop.xlane.xlu0 %802
      %v804 = vsel %vm650, %v573, 0.0
      %805 = vadd.xlane.f32.xlu0 %v804
      %v806 = vpop.xlane.xlu0 %805
      %v807 = vsel %vm650, %v574, 0.0
      %808 = vadd.xlane.f32.xlu0 %v807
      %v809 = vpop.xlane.xlu0 %808
      %v810 = vsel %vm650, %v575, 0.0
      %811 = vadd.xlane.f32.xlu0 %v810
      %v812 = vpop.xlane.xlu0 %811
      %v813 = vsel %vm650, %v576, 0.0
      %814 = vadd.xlane.f32.xlu0 %v813
      %v815 = vpop.xlane.xlu0 %814
      %v816 = vsel %vm650, %v577, 0.0
      %817 = vadd.xlane.f32.xlu0 %v816
      %v818 = vpop.xlane.xlu0 %817
      %v819 = vsel %vm650, %v578, 0.0
      %820 = vadd.xlane.f32.xlu0 %v819
      %v821 = vpop.xlane.xlu0 %820
      %v822 = vsel %vm650, %v579, 0.0
      %823 = vadd.xlane.f32.xlu0 %v822
      %v824 = vpop.xlane.xlu0 %823
      %v825 = vsel %vm650, %v580, 0.0
      %826 = vadd.xlane.f32.xlu0 %v825
      %v827 = vpop.xlane.xlu0 %826
      %v828 = vsel %vm650, %v581, 0.0
      %829 = vadd.xlane.f32.xlu0 %v828
      %v830 = vpop.xlane.xlu0 %829
      %v831 = vsel %vm650, %v582, 0.0
      %832 = vadd.xlane.f32.xlu0 %v831
      %v833 = vpop.xlane.xlu0 %832
      %v834 = vsel %vm650, %v583, 0.0
      %835 = vadd.xlane.f32.xlu0 %v834
      %v836 = vpop.xlane.xlu0 %835
      %v837 = vsel %vm650, %v584, 0.0
      %838 = vadd.xlane.f32.xlu0 %v837
      %v839 = vpop.xlane.xlu0 %838
      %v840 = vsel %vm650, %v585, 0.0
      %841 = vadd.xlane.f32.xlu0 %v840
      %v842 = vpop.xlane.xlu0 %841
      %v843 = vsel %vm650, %v586, 0.0
      %844 = vadd.xlane.f32.xlu0 %v843
      %v845 = vpop.xlane.xlu0 %844
      %v846 = vsel %vm650, %v587, 0.0
      %847 = vadd.xlane.f32.xlu0 %v846
      %v848 = vpop.xlane.xlu0 %847
      %v849 = vsel %vm650, %v588, 0.0
      %850 = vadd.xlane.f32.xlu0 %v849
      %v851 = vpop.xlane.xlu0 %850
      %v852 = vsel %vm650, %v589, 0.0
      %853 = vadd.xlane.f32.xlu0 %v852
      %v854 = vpop.xlane.xlu0 %853
      %v855 = vsel %vm650, %v590, 0.0
      %856 = vadd.xlane.f32.xlu0 %v855
      %v857 = vpop.xlane.xlu0 %856
      %v858 = vsel %vm650, %v591, 0.0
      %859 = vadd.xlane.f32.xlu0 %v858
      %v860 = vpop.xlane.xlu0 %859
      %v861 = vsel %vm650, %v592, 0.0
      %862 = vadd.xlane.f32.xlu0 %v861
      %v863 = vpop.xlane.xlu0 %862
      %v864 = vsel %vm650, %v593, 0.0
      %865 = vadd.xlane.f32.xlu0 %v864
      %v866 = vpop.xlane.xlu0 %865
      %v867 = vsel %vm650, %v594, 0.0
      %868 = vadd.xlane.f32.xlu0 %v867
      %v869 = vpop.xlane.xlu0 %868
      %v870 = vsel %vm650, %v595, 0.0
      %871 = vadd.xlane.f32.xlu0 %v870
      %v872 = vpop.xlane.xlu0 %871
      %v873 = vsel %vm650, %v596, 0.0
      %874 = vadd.xlane.f32.xlu0 %v873
      %v875 = vpop.xlane.xlu0 %874
      %v876 = vsel %vm650, %v597, 0.0
      %877 = vadd.xlane.f32.xlu0 %v876
      %v878 = vpop.xlane.xlu0 %877
      %v879 = vsel %vm650, %v598, 0.0
      %880 = vadd.xlane.f32.xlu0 %v879
      %v881 = vpop.xlane.xlu0 %880
      %v882 = vsel %vm650, %v599, 0.0
      %883 = vadd.xlane.f32.xlu0 %v882
      %v884 = vpop.xlane.xlu0 %883
      %v885 = vsel %vm650, %v600, 0.0
      %886 = vadd.xlane.f32.xlu0 %v885
      %v887 = vpop.xlane.xlu0 %886
      %v888 = vsel %vm650, %v601, 0.0
      %889 = vadd.xlane.f32.xlu0 %v888
      %v890 = vpop.xlane.xlu0 %889
      %v891 = vsel %vm650, %v602, 0.0
      %892 = vadd.xlane.f32.xlu0 %v891
      %v893 = vpop.xlane.xlu0 %892
      %v894 = vsel %vm650, %v603, 0.0
      %895 = vadd.xlane.f32.xlu0 %v894
      %v896 = vpop.xlane.xlu0 %895
      %v897 = vsel %vm650, %v604, 0.0
      %898 = vadd.xlane.f32.xlu0 %v897
      %v899 = vpop.xlane.xlu0 %898
      %v900 = vsel %vm650, %v605, 0.0
      %901 = vadd.xlane.f32.xlu0 %v900
      %v902 = vpop.xlane.xlu0 %901
      %v903 = vsel %vm650, %v606, 0.0
      %904 = vadd.xlane.f32.xlu0 %v903
      %v905 = vpop.xlane.xlu0 %904
      %v906 = vsel %vm650, %v607, 0.0
      %907 = vadd.xlane.f32.xlu0 %v906
      %v908 = vpop.xlane.xlu0 %907
      %v909 = vsel %vm650, %v608, 0.0
      %910 = vadd.xlane.f32.xlu0 %v909
      %v911 = vpop.xlane.xlu0 %910
      %v912 = vsel %vm650, %v609, 0.0
      %913 = vadd.xlane.f32.xlu0 %v912
      %v914 = vpop.xlane.xlu0 %913
      %v915 = vsel %vm650, %v610, 0.0
      %916 = vadd.xlane.f32.xlu0 %v915
      %v917 = vpop.xlane.xlu0 %916
      %v918 = vsel %vm650, %v611, 0.0
      %919 = vadd.xlane.f32.xlu0 %v918
      %v920 = vpop.xlane.xlu0 %919
      %v921 = vsel %vm650, %v612, 0.0
      %922 = vadd.xlane.f32.xlu0 %v921
      %v923 = vpop.xlane.xlu0 %922
      %v924 = vsel %vm650, %v613, 0.0
      %925 = vadd.xlane.f32.xlu0 %v924
      %v926 = vpop.xlane.xlu0 %925
      %v927 = vsel %vm650, %v614, 0.0
      %928 = vadd.xlane.f32.xlu0 %v927
      %v929 = vpop.xlane.xlu0 %928
      %v930 = vsel %vm650, %v615, 0.0
      %931 = vadd.xlane.f32.xlu0 %v930
      %v932 = vpop.xlane.xlu0 %931
      %v933 = vsel %vm650, %v616, 0.0
      %934 = vadd.xlane.f32.xlu0 %v933
      %v935 = vpop.xlane.xlu0 %934
      %v936 = vsel %vm650, %v617, 0.0
      %937 = vadd.xlane.f32.xlu0 %v936
      %v938 = vpop.xlane.xlu0 %937
      %v939 = vsel %vm650, %v618, 0.0
      %940 = vadd.xlane.f32.xlu0 %v939
      %v941 = vpop.xlane.xlu0 %940
      %v942 = vsel %vm650, %v619, 0.0
      %943 = vadd.xlane.f32.xlu0 %v942
      %v944 = vpop.xlane.xlu0 %943
      %v945 = vsel %vm650, %v620, 0.0
      %946 = vadd.xlane.f32.xlu0 %v945
      %v947 = vpop.xlane.xlu0 %946
      %v948 = vsel %vm650, %v621, 0.0
      %949 = vadd.xlane.f32.xlu0 %v948
      %v950 = vpop.xlane.xlu0 %949
      %v951 = vsel %vm650, %v622, 0.0
      %952 = vadd.xlane.f32.xlu0 %v951
      %v953 = vpop.xlane.xlu0 %952
      %v954 = vsel %vm650, %v623, 0.0
      %955 = vadd.xlane.f32.xlu0 %v954
      %v956 = vpop.xlane.xlu0 %955
      %v957 = vsel %vm650, %v624, 0.0
      %958 = vadd.xlane.f32.xlu0 %v957
      %v959 = vpop.xlane.xlu0 %958
      %v960 = vsel %vm650, %v625, 0.0
      %961 = vadd.xlane.f32.xlu0 %v960
      %v962 = vpop.xlane.xlu0 %961
      %v963 = vsel %vm650, %v626, 0.0
      %964 = vadd.xlane.f32.xlu0 %v963
      %v965 = vpop.xlane.xlu0 %964
      %v966 = vsel %vm650, %v627, 0.0
      %967 = vadd.xlane.f32.xlu0 %v966
      %v968 = vpop.xlane.xlu0 %967
      %v969 = vsel %vm650, %v628, 0.0
      %970 = vadd.xlane.f32.xlu0 %v969
      %v971 = vpop.xlane.xlu0 %970
      %v972 = vsel %vm650, %v629, 0.0
      %973 = vadd.xlane.f32.xlu0 %v972
      %v974 = vpop.xlane.xlu0 %973
      %v975 = vsel %vm650, %v630, 0.0
      %976 = vadd.xlane.f32.xlu0 %v975
      %v977 = vpop.xlane.xlu0 %976
      %v978 = vsel %vm650, %v631, 0.0
      %979 = vadd.xlane.f32.xlu0 %v978
      %v980 = vpop.xlane.xlu0 %979
      %v981 = vsel %vm650, %v632, 0.0
      %982 = vadd.xlane.f32.xlu0 %v981
      %v983 = vpop.xlane.xlu0 %982
      %v984 = vsel %vm650, %v633, 0.0
      %985 = vadd.xlane.f32.xlu0 %v984
      %v986 = vpop.xlane.xlu0 %985
      %v987 = vsel %vm650, %v634, 0.0
      %988 = vadd.xlane.f32.xlu0 %v987
      %v989 = vpop.xlane.xlu0 %988
      %v990 = vsel %vm650, %v635, 0.0
      %991 = vadd.xlane.f32.xlu0 %v990
      %v992 = vpop.xlane.xlu0 %991
      %v993 = vsel %vm650, %v636, 0.0
      %994 = vadd.xlane.f32.xlu0 %v993
      %v995 = vpop.xlane.xlu0 %994
      %v996 = vsel %vm650, %v637, 0.0
      %997 = vadd.xlane.f32.xlu0 %v996
      %v998 = vpop.xlane.xlu0 %997
      %v999 = vsel %vm650, %v638, 0.0
      %1000 = vadd.xlane.f32.xlu0 %v999
      %v1001 = vpop.xlane.xlu0 %1000
      %v1002 = vsel %vm650, %v639, 0.0
      %1003 = vadd.xlane.f32.xlu0 %v1002
      %v1004 = vpop.xlane.xlu0 %1003
      %v1005 = vsel %vm650, %v640, 0.0
      %1006 = vadd.xlane.f32.xlu0 %v1005
      %v1007 = vpop.xlane.xlu0 %1006
      %v1008 = vsel %vm650, %v641, 0.0
      %1009 = vadd.xlane.f32.xlu0 %v1008
      %v1010 = vpop.xlane.xlu0 %1009
      %v1011 = vsel %vm650, %v642, 0.0
      %1012 = vadd.xlane.f32.xlu0 %v1011
      %v1013 = vpop.xlane.xlu0 %1012
      %v1014 = vsel %vm650, %v643, 0.0
      %1015 = vadd.xlane.f32.xlu0 %v1014
      %v1016 = vpop.xlane.xlu0 %1015
      %v1017 = vsel %vm650, %v644, 0.0
      %1018 = vadd.xlane.f32.xlu0 %v1017
      %v1019 = vpop.xlane.xlu0 %1018
      %v1020 = vsel %vm650, %v645, 0.0
      %1021 = vadd.xlane.f32.xlu0 %v1020
      %v1022 = vpop.xlane.xlu0 %1021
      %v1023 = vsel %vm650, %v646, 0.0
      %1024 = vadd.xlane.f32.xlu0 %v1023
      %v1025 = vpop.xlane.xlu0 %1024
      %v1026 = vsel %vm650, %v647, 0.0
      %1027 = vadd.xlane.f32.xlu0 %v1026
      %v1028 = vpop.xlane.xlu0 %1027
      %v1029 = vsel %vm650, %v648, 0.0
      %1030 = vadd.xlane.f32.xlu0 %v1029
      %v1031 = vpop.xlane.xlu0 %1030
      %v1032 = vsel %vm650, %v649, 0.0
      %1033 = vadd.xlane.f32.xlu0 %v1032
      %v1034 = vpop.xlane.xlu0 %1033
      %v1035 = vadd.f32 %v653, 0.0
      %v1036 = vadd.f32 %v656, 0.0
      %v1037 = vadd.f32 %v659, 0.0
      %v1038 = vadd.f32 %v662, 0.0
      %v1039 = vadd.f32 %v665, 0.0
      %v1040 = vadd.f32 %v668, 0.0
      %v1041 = vadd.f32 %v671, 0.0
      %v1042 = vadd.f32 %v674, 0.0
      %v1043 = vadd.f32 %v677, 0.0
      %v1044 = vadd.f32 %v680, 0.0
      %v1045 = vadd.f32 %v683, 0.0
      %v1046 = vadd.f32 %v686, 0.0
      %v1047 = vadd.f32 %v689, 0.0
      %v1048 = vadd.f32 %v692, 0.0
      %v1049 = vadd.f32 %v695, 0.0
      %v1050 = vadd.f32 %v698, 0.0
      %v1051 = vadd.f32 %v701, 0.0
      %v1052 = vadd.f32 %v704, 0.0
      %v1053 = vadd.f32 %v707, 0.0
      %v1054 = vadd.f32 %v710, 0.0
      %v1055 = vadd.f32 %v713, 0.0
      %v1056 = vadd.f32 %v716, 0.0
      %v1057 = vadd.f32 %v719, 0.0
      %v1058 = vadd.f32 %v722, 0.0
      %v1059 = vadd.f32 %v725, 0.0
      %v1060 = vadd.f32 %v728, 0.0
      %v1061 = vadd.f32 %v731, 0.0
      %v1062 = vadd.f32 %v734, 0.0
      %v1063 = vadd.f32 %v737, 0.0
      %v1064 = vadd.f32 %v740, 0.0
      %v1065 = vadd.f32 %v743, 0.0
      %v1066 = vadd.f32 %v746, 0.0
      %v1067 = vadd.f32 %v749, 0.0
      %v1068 = vadd.f32 %v752, 0.0
      %v1069 = vadd.f32 %v755, 0.0
      %v1070 = vadd.f32 %v758, 0.0
      %v1071 = vadd.f32 %v761, 0.0
      %v1072 = vadd.f32 %v764, 0.0
      %v1073 = vadd.f32 %v767, 0.0
      %v1074 = vadd.f32 %v770, 0.0
      %v1075 = vadd.f32 %v773, 0.0
      %v1076 = vadd.f32 %v776, 0.0
      %v1077 = vadd.f32 %v779, 0.0
      %v1078 = vadd.f32 %v782, 0.0
      %v1079 = vadd.f32 %v785, 0.0
      %v1080 = vadd.f32 %v788, 0.0
      %v1081 = vadd.f32 %v791, 0.0
      %v1082 = vadd.f32 %v794, 0.0
      %v1083 = vadd.f32 %v797, 0.0
      %v1084 = vadd.f32 %v800, 0.0
      %v1085 = vadd.f32 %v803, 0.0
      %v1086 = vadd.f32 %v806, 0.0
      %v1087 = vadd.f32 %v809, 0.0
      %v1088 = vadd.f32 %v812, 0.0
      %v1089 = vadd.f32 %v815, 0.0
      %v1090 = vadd.f32 %v818, 0.0
      %v1091 = vadd.f32 %v821, 0.0
      %v1092 = vadd.f32 %v824, 0.0
      %v1093 = vadd.f32 %v827, 0.0
      %v1094 = vadd.f32 %v830, 0.0
      %v1095 = vadd.f32 %v833, 0.0
      %v1096 = vadd.f32 %v836, 0.0
      %v1097 = vadd.f32 %v839, 0.0
      %v1098 = vadd.f32 %v842, 0.0
      %v1099 = vadd.f32 %v845, 0.0
      %v1100 = vadd.f32 %v848, 0.0
      %v1101 = vadd.f32 %v851, 0.0
      %v1102 = vadd.f32 %v854, 0.0
      %v1103 = vadd.f32 %v857, 0.0
      %v1104 = vadd.f32 %v860, 0.0
      %v1105 = vadd.f32 %v863, 0.0
      %v1106 = vadd.f32 %v866, 0.0
      %v1107 = vadd.f32 %v869, 0.0
      %v1108 = vadd.f32 %v872, 0.0
      %v1109 = vadd.f32 %v875, 0.0
      %v1110 = vadd.f32 %v878, 0.0
      %v1111 = vadd.f32 %v881, 0.0
      %v1112 = vadd.f32 %v884, 0.0
      %v1113 = vadd.f32 %v887, 0.0
      %v1114 = vadd.f32 %v890, 0.0
      %v1115 = vadd.f32 %v893, 0.0
      %v1116 = vadd.f32 %v896, 0.0
      %v1117 = vadd.f32 %v899, 0.0
      %v1118 = vadd.f32 %v902, 0.0
      %v1119 = vadd.f32 %v905, 0.0
      %v1120 = vadd.f32 %v908, 0.0
      %v1121 = vadd.f32 %v911, 0.0
      %v1122 = vadd.f32 %v914, 0.0
      %v1123 = vadd.f32 %v917, 0.0
      %v1124 = vadd.f32 %v920, 0.0
      %v1125 = vadd.f32 %v923, 0.0
      %v1126 = vadd.f32 %v926, 0.0
      %v1127 = vadd.f32 %v929, 0.0
      %v1128 = vadd.f32 %v932, 0.0
      %v1129 = vadd.f32 %v935, 0.0
      %v1130 = vadd.f32 %v938, 0.0
      %v1131 = vadd.f32 %v941, 0.0
      %v1132 = vadd.f32 %v944, 0.0
      %v1133 = vadd.f32 %v947, 0.0
      %v1134 = vadd.f32 %v950, 0.0
      %v1135 = vadd.f32 %v953, 0.0
      %v1136 = vadd.f32 %v956, 0.0
      %v1137 = vadd.f32 %v959, 0.0
      %v1138 = vadd.f32 %v962, 0.0
      %v1139 = vadd.f32 %v965, 0.0
      %v1140 = vadd.f32 %v968, 0.0
      %v1141 = vadd.f32 %v971, 0.0
      %v1142 = vadd.f32 %v974, 0.0
      %v1143 = vadd.f32 %v977, 0.0
      %v1144 = vadd.f32 %v980, 0.0
      %v1145 = vadd.f32 %v983, 0.0
      %v1146 = vadd.f32 %v986, 0.0
      %v1147 = vadd.f32 %v989, 0.0
      %v1148 = vadd.f32 %v992, 0.0
      %v1149 = vadd.f32 %v995, 0.0
      %v1150 = vadd.f32 %v998, 0.0
      %v1151 = vadd.f32 %v1001, 0.0
      %v1152 = vadd.f32 %v1004, 0.0
      %v1153 = vadd.f32 %v1007, 0.0
      %v1154 = vadd.f32 %v1010, 0.0
      %v1155 = vadd.f32 %v1013, 0.0
      %v1156 = vadd.f32 %v1016, 0.0
      %v1157 = vadd.f32 %v1019, 0.0
      %v1158 = vadd.f32 %v1022, 0.0
      %v1159 = vadd.f32 %v1025, 0.0
      %v1160 = vadd.f32 %v1028, 0.0
      %v1161 = vadd.f32 %v1031, 0.0
      %v1162 = vadd.f32 %v1034, 0.0
      %v1163 = vunpack.c.l.bf16 %v230
      %v1164 = vunpack.c.l.bf16 %v235
      %v1165 = vunpack.c.l.bf16 %v240
      %v1166 = vunpack.c.l.bf16 %v245
      %v1167 = vunpack.c.l.bf16 %v250
      %v1168 = vunpack.c.l.bf16 %v255
      %v1169 = vunpack.c.l.bf16 %v260
      %v1170 = vunpack.c.l.bf16 %v265
      %v1171 = vunpack.c.l.bf16 %v270
      %v1172 = vunpack.c.l.bf16 %v275
      %v1173 = vunpack.c.l.bf16 %v280
      %v1174 = vunpack.c.l.bf16 %v285
      %v1175 = vunpack.c.l.bf16 %v290
      %v1176 = vunpack.c.l.bf16 %v295
      %v1177 = vunpack.c.l.bf16 %v300
      %v1178 = vunpack.c.l.bf16 %v305
      %v1179 = vunpack.c.l.bf16 %v310
      %v1180 = vunpack.c.l.bf16 %v315
      %v1181 = vunpack.c.l.bf16 %v320
      %v1182 = vunpack.c.l.bf16 %v325
      %v1183 = vunpack.c.l.bf16 %v330
      %v1184 = vunpack.c.l.bf16 %v335
      %v1185 = vunpack.c.l.bf16 %v340
      %v1186 = vunpack.c.l.bf16 %v345
      %v1187 = vunpack.c.l.bf16 %v350
      %v1188 = vunpack.c.l.bf16 %v355
      %v1189 = vunpack.c.l.bf16 %v360
      %v1190 = vunpack.c.l.bf16 %v365
      %v1191 = vunpack.c.l.bf16 %v370
      %v1192 = vunpack.c.l.bf16 %v375
      %v1193 = vunpack.c.l.bf16 %v380
      %v1194 = vunpack.c.l.bf16 %v385
      %v1195 = vperm.slane %v392, 1
      %v1196 = vmul.f32 %v393, %v1195
      %v1197 = vmul.f32 %v394, %v1195
      %v1198 = vmul.f32 %v395, %v1195
      %v1199 = vmul.f32 %v396, %v1195
      %v1200 = vmul.f32 %v1163, %v1195
      %v1201 = vmul.f32 %v397, %v1195
      %v1202 = vmul.f32 %v398, %v1195
      %v1203 = vmul.f32 %v399, %v1195
      %v1204 = vmul.f32 %v400, %v1195
      %v1205 = vmul.f32 %v1164, %v1195
      %v1206 = vmul.f32 %v401, %v1195
      %v1207 = vmul.f32 %v402, %v1195
      %v1208 = vmul.f32 %v403, %v1195
      %v1209 = vmul.f32 %v404, %v1195
      %v1210 = vmul.f32 %v1165, %v1195
      %v1211 = vmul.f32 %v405, %v1195
      %v1212 = vmul.f32 %v406, %v1195
      %v1213 = vmul.f32 %v407, %v1195
      %v1214 = vmul.f32 %v408, %v1195
      %v1215 = vmul.f32 %v1166, %v1195
      %v1216 = vmul.f32 %v409, %v1195
      %v1217 = vmul.f32 %v410, %v1195
      %v1218 = vmul.f32 %v411, %v1195
      %v1219 = vmul.f32 %v412, %v1195
      %v1220 = vmul.f32 %v1167, %v1195
      %v1221 = vmul.f32 %v413, %v1195
      %v1222 = vmul.f32 %v414, %v1195
      %v1223 = vmul.f32 %v415, %v1195
      %v1224 = vmul.f32 %v416, %v1195
      %v1225 = vmul.f32 %v1168, %v1195
      %v1226 = vmul.f32 %v417, %v1195
      %v1227 = vmul.f32 %v418, %v1195
      %v1228 = vmul.f32 %v419, %v1195
      %v1229 = vmul.f32 %v420, %v1195
      %v1230 = vmul.f32 %v1169, %v1195
      %v1231 = vmul.f32 %v421, %v1195
      %v1232 = vmul.f32 %v422, %v1195
      %v1233 = vmul.f32 %v423, %v1195
      %v1234 = vmul.f32 %v424, %v1195
      %v1235 = vmul.f32 %v1170, %v1195
      %v1236 = vmul.f32 %v425, %v1195
      %v1237 = vmul.f32 %v426, %v1195
      %v1238 = vmul.f32 %v427, %v1195
      %v1239 = vmul.f32 %v428, %v1195
      %v1240 = vmul.f32 %v1171, %v1195
      %v1241 = vmul.f32 %v429, %v1195
      %v1242 = vmul.f32 %v430, %v1195
      %v1243 = vmul.f32 %v431, %v1195
      %v1244 = vmul.f32 %v432, %v1195
      %v1245 = vmul.f32 %v1172, %v1195
      %v1246 = vmul.f32 %v433, %v1195
      %v1247 = vmul.f32 %v434, %v1195
      %v1248 = vmul.f32 %v435, %v1195
      %v1249 = vmul.f32 %v436, %v1195
      %v1250 = vmul.f32 %v1173, %v1195
      %v1251 = vmul.f32 %v437, %v1195
      %v1252 = vmul.f32 %v438, %v1195
      %v1253 = vmul.f32 %v439, %v1195
      %v1254 = vmul.f32 %v440, %v1195
      %v1255 = vmul.f32 %v1174, %v1195
      %v1256 = vmul.f32 %v441, %v1195
      %v1257 = vmul.f32 %v442, %v1195
      %v1258 = vmul.f32 %v443, %v1195
      %v1259 = vmul.f32 %v444, %v1195
      %v1260 = vmul.f32 %v1175, %v1195
      %v1261 = vmul.f32 %v445, %v1195
      %v1262 = vmul.f32 %v446, %v1195
      %v1263 = vmul.f32 %v447, %v1195
      %v1264 = vmul.f32 %v448, %v1195
      %v1265 = vmul.f32 %v1176, %v1195
      %v1266 = vmul.f32 %v449, %v1195
      %v1267 = vmul.f32 %v450, %v1195
      %v1268 = vmul.f32 %v451, %v1195
      %v1269 = vmul.f32 %v452, %v1195
      %v1270 = vmul.f32 %v1177, %v1195
      %v1271 = vmul.f32 %v453, %v1195
      %v1272 = vmul.f32 %v454, %v1195
      %v1273 = vmul.f32 %v455, %v1195
      %v1274 = vmul.f32 %v456, %v1195
      %v1275 = vmul.f32 %v1178, %v1195
      %v1276 = vmul.f32 %v457, %v1195
      %v1277 = vmul.f32 %v458, %v1195
      %v1278 = vmul.f32 %v459, %v1195
      %v1279 = vmul.f32 %v460, %v1195
      %v1280 = vmul.f32 %v1179, %v1195
      %v1281 = vmul.f32 %v461, %v1195
      %v1282 = vmul.f32 %v462, %v1195
      %v1283 = vmul.f32 %v463, %v1195
      %v1284 = vmul.f32 %v464, %v1195
      %v1285 = vmul.f32 %v1180, %v1195
      %v1286 = vmul.f32 %v465, %v1195
      %v1287 = vmul.f32 %v466, %v1195
      %v1288 = vmul.f32 %v467, %v1195
      %v1289 = vmul.f32 %v468, %v1195
      %v1290 = vmul.f32 %v1181, %v1195
      %v1291 = vmul.f32 %v469, %v1195
      %v1292 = vmul.f32 %v470, %v1195
      %v1293 = vmul.f32 %v471, %v1195
      %v1294 = vmul.f32 %v472, %v1195
      %v1295 = vmul.f32 %v1182, %v1195
      %v1296 = vmul.f32 %v473, %v1195
      %v1297 = vmul.f32 %v474, %v1195
      %v1298 = vmul.f32 %v475, %v1195
      %v1299 = vmul.f32 %v476, %v1195
      %v1300 = vmul.f32 %v1183, %v1195
      %v1301 = vmul.f32 %v477, %v1195
      %v1302 = vmul.f32 %v478, %v1195
      %v1303 = vmul.f32 %v479, %v1195
      %v1304 = vmul.f32 %v480, %v1195
      %v1305 = vmul.f32 %v1184, %v1195
      %v1306 = vmul.f32 %v481, %v1195
      %v1307 = vmul.f32 %v482, %v1195
      %v1308 = vmul.f32 %v483, %v1195
      %v1309 = vmul.f32 %v484, %v1195
      %v1310 = vmul.f32 %v1185, %v1195
      %v1311 = vmul.f32 %v485, %v1195
      %v1312 = vmul.f32 %v486, %v1195
      %v1313 = vmul.f32 %v487, %v1195
      %v1314 = vmul.f32 %v488, %v1195
      %v1315 = vmul.f32 %v1186, %v1195
      %v1316 = vmul.f32 %v489, %v1195
      %v1317 = vmul.f32 %v490, %v1195
      %v1318 = vmul.f32 %v491, %v1195
      %v1319 = vmul.f32 %v492, %v1195
      %v1320 = vmul.f32 %v1187, %v1195
      %v1321 = vmul.f32 %v493, %v1195
      %v1322 = vmul.f32 %v494, %v1195
      %v1323 = vmul.f32 %v495, %v1195
      %v1324 = vmul.f32 %v496, %v1195
      %v1325 = vmul.f32 %v1188, %v1195
      %v1326 = vmul.f32 %v497, %v1195
      %v1327 = vmul.f32 %v498, %v1195
      %v1328 = vmul.f32 %v499, %v1195
      %v1329 = vmul.f32 %v500, %v1195
      %v1330 = vmul.f32 %v1189, %v1195
      %v1331 = vmul.f32 %v501, %v1195
      %v1332 = vmul.f32 %v502, %v1195
      %v1333 = vmul.f32 %v503, %v1195
      %v1334 = vmul.f32 %v504, %v1195
      %v1335 = vmul.f32 %v1190, %v1195
      %v1336 = vmul.f32 %v505, %v1195
      %v1337 = vmul.f32 %v506, %v1195
      %v1338 = vmul.f32 %v507, %v1195
      %v1339 = vmul.f32 %v508, %v1195
      %v1340 = vmul.f32 %v1191, %v1195
      %v1341 = vmul.f32 %v509, %v1195
      %v1342 = vmul.f32 %v510, %v1195
      %v1343 = vmul.f32 %v511, %v1195
      %v1344 = vmul.f32 %v512, %v1195
      %v1345 = vmul.f32 %v1192, %v1195
      %v1346 = vmul.f32 %v513, %v1195
      %v1347 = vmul.f32 %v514, %v1195
      %v1348 = vmul.f32 %v515, %v1195
      %v1349 = vmul.f32 %v516, %v1195
      %v1350 = vmul.f32 %v1193, %v1195
      %v1351 = vmul.f32 %v517, %v1195
      %v1352 = vmul.f32 %v518, %v1195
      %v1353 = vmul.f32 %v519, %v1195
      %v1354 = vmul.f32 %v520, %v1195
      %v1355 = vmul.f32 %v1194, %v1195
      %vm1356 = vcmask 130049
      %v1357 = vsel %vm1356, %v1196, 0.0
      %1358 = vadd.xlane.f32.xlu0 %v1357
      %v1359 = vpop.xlane.xlu0 %1358
      %v1360 = vsel %vm650, %v1197, 0.0
      %1361 = vadd.xlane.f32.xlu0 %v1360
      %v1362 = vpop.xlane.xlu0 %1361
      %v1363 = vsel %vm650, %v1198, 0.0
      %1364 = vadd.xlane.f32.xlu0 %v1363
      %v1365 = vpop.xlane.xlu0 %1364
      %v1366 = vsel %vm650, %v1199, 0.0
      %1367 = vadd.xlane.f32.xlu0 %v1366
      %v1368 = vpop.xlane.xlu0 %1367
      %vm1369 = vcmask 122880
      %v1370 = vsel %vm1369, %v1200, 0.0
      %1371 = vadd.xlane.f32.xlu0 %v1370
      %v1372 = vpop.xlane.xlu0 %1371
      %v1373 = vsel %vm1356, %v1201, 0.0
      %1374 = vadd.xlane.f32.xlu0 %v1373
      %v1375 = vpop.xlane.xlu0 %1374
      %v1376 = vsel %vm650, %v1202, 0.0
      %1377 = vadd.xlane.f32.xlu0 %v1376
      %v1378 = vpop.xlane.xlu0 %1377
      %v1379 = vsel %vm650, %v1203, 0.0
      %1380 = vadd.xlane.f32.xlu0 %v1379
      %v1381 = vpop.xlane.xlu0 %1380
      %v1382 = vsel %vm650, %v1204, 0.0
      %1383 = vadd.xlane.f32.xlu0 %v1382
      %v1384 = vpop.xlane.xlu0 %1383
      %v1385 = vsel %vm1369, %v1205, 0.0
      %1386 = vadd.xlane.f32.xlu0 %v1385
      %v1387 = vpop.xlane.xlu0 %1386
      %v1388 = vsel %vm1356, %v1206, 0.0
      %1389 = vadd.xlane.f32.xlu0 %v1388
      %v1390 = vpop.xlane.xlu0 %1389
      %v1391 = vsel %vm650, %v1207, 0.0
      %1392 = vadd.xlane.f32.xlu0 %v1391
      %v1393 = vpop.xlane.xlu0 %1392
      %v1394 = vsel %vm650, %v1208, 0.0
      %1395 = vadd.xlane.f32.xlu0 %v1394
      %v1396 = vpop.xlane.xlu0 %1395
      %v1397 = vsel %vm650, %v1209, 0.0
      %1398 = vadd.xlane.f32.xlu0 %v1397
      %v1399 = vpop.xlane.xlu0 %1398
      %v1400 = vsel %vm1369, %v1210, 0.0
      %1401 = vadd.xlane.f32.xlu0 %v1400
      %v1402 = vpop.xlane.xlu0 %1401
      %v1403 = vsel %vm1356, %v1211, 0.0
      %1404 = vadd.xlane.f32.xlu0 %v1403
      %v1405 = vpop.xlane.xlu0 %1404
      %v1406 = vsel %vm650, %v1212, 0.0
      %1407 = vadd.xlane.f32.xlu0 %v1406
      %v1408 = vpop.xlane.xlu0 %1407
      %v1409 = vsel %vm650, %v1213, 0.0
      %1410 = vadd.xlane.f32.xlu0 %v1409
      %v1411 = vpop.xlane.xlu0 %1410
      %v1412 = vsel %vm650, %v1214, 0.0
      %1413 = vadd.xlane.f32.xlu0 %v1412
      %v1414 = vpop.xlane.xlu0 %1413
      %v1415 = vsel %vm1369, %v1215, 0.0
      %1416 = vadd.xlane.f32.xlu0 %v1415
      %v1417 = vpop.xlane.xlu0 %1416
      %v1418 = vsel %vm1356, %v1216, 0.0
      %1419 = vadd.xlane.f32.xlu0 %v1418
      %v1420 = vpop.xlane.xlu0 %1419
      %v1421 = vsel %vm650, %v1217, 0.0
      %1422 = vadd.xlane.f32.xlu0 %v1421
      %v1423 = vpop.xlane.xlu0 %1422
      %v1424 = vsel %vm650, %v1218, 0.0
      %1425 = vadd.xlane.f32.xlu0 %v1424
      %v1426 = vpop.xlane.xlu0 %1425
      %v1427 = vsel %vm650, %v1219, 0.0
      %1428 = vadd.xlane.f32.xlu0 %v1427
      %v1429 = vpop.xlane.xlu0 %1428
      %v1430 = vsel %vm1369, %v1220, 0.0
      %1431 = vadd.xlane.f32.xlu0 %v1430
      %v1432 = vpop.xlane.xlu0 %1431
      %v1433 = vsel %vm1356, %v1221, 0.0
      %1434 = vadd.xlane.f32.xlu0 %v1433
      %v1435 = vpop.xlane.xlu0 %1434
      %v1436 = vsel %vm650, %v1222, 0.0
      %1437 = vadd.xlane.f32.xlu0 %v1436
      %v1438 = vpop.xlane.xlu0 %1437
      %v1439 = vsel %vm650, %v1223, 0.0
      %1440 = vadd.xlane.f32.xlu0 %v1439
      %v1441 = vpop.xlane.xlu0 %1440
      %v1442 = vsel %vm650, %v1224, 0.0
      %1443 = vadd.xlane.f32.xlu0 %v1442
      %v1444 = vpop.xlane.xlu0 %1443
      %v1445 = vsel %vm1369, %v1225, 0.0
      %1446 = vadd.xlane.f32.xlu0 %v1445
      %v1447 = vpop.xlane.xlu0 %1446
      %v1448 = vsel %vm1356, %v1226, 0.0
      %1449 = vadd.xlane.f32.xlu0 %v1448
      %v1450 = vpop.xlane.xlu0 %1449
      %v1451 = vsel %vm650, %v1227, 0.0
      %1452 = vadd.xlane.f32.xlu0 %v1451
      %v1453 = vpop.xlane.xlu0 %1452
      %v1454 = vsel %vm650, %v1228, 0.0
      %1455 = vadd.xlane.f32.xlu0 %v1454
      %v1456 = vpop.xlane.xlu0 %1455
      %v1457 = vsel %vm650, %v1229, 0.0
      %1458 = vadd.xlane.f32.xlu0 %v1457
      %v1459 = vpop.xlane.xlu0 %1458
      %v1460 = vsel %vm1369, %v1230, 0.0
      %1461 = vadd.xlane.f32.xlu0 %v1460
      %v1462 = vpop.xlane.xlu0 %1461
      %v1463 = vsel %vm1356, %v1231, 0.0
      %1464 = vadd.xlane.f32.xlu0 %v1463
      %v1465 = vpop.xlane.xlu0 %1464
      %v1466 = vsel %vm650, %v1232, 0.0
      %1467 = vadd.xlane.f32.xlu0 %v1466
      %v1468 = vpop.xlane.xlu0 %1467
      %v1469 = vsel %vm650, %v1233, 0.0
      %1470 = vadd.xlane.f32.xlu0 %v1469
      %v1471 = vpop.xlane.xlu0 %1470
      %v1472 = vsel %vm650, %v1234, 0.0
      %1473 = vadd.xlane.f32.xlu0 %v1472
      %v1474 = vpop.xlane.xlu0 %1473
      %v1475 = vsel %vm1369, %v1235, 0.0
      %1476 = vadd.xlane.f32.xlu0 %v1475
      %v1477 = vpop.xlane.xlu0 %1476
      %v1478 = vsel %vm1356, %v1236, 0.0
      %1479 = vadd.xlane.f32.xlu0 %v1478
      %v1480 = vpop.xlane.xlu0 %1479
      %v1481 = vsel %vm650, %v1237, 0.0
      %1482 = vadd.xlane.f32.xlu0 %v1481
      %v1483 = vpop.xlane.xlu0 %1482
      %v1484 = vsel %vm650, %v1238, 0.0
      %1485 = vadd.xlane.f32.xlu0 %v1484
      %v1486 = vpop.xlane.xlu0 %1485
      %v1487 = vsel %vm650, %v1239, 0.0
      %1488 = vadd.xlane.f32.xlu0 %v1487
      %v1489 = vpop.xlane.xlu0 %1488
      %v1490 = vsel %vm1369, %v1240, 0.0
      %1491 = vadd.xlane.f32.xlu0 %v1490
      %v1492 = vpop.xlane.xlu0 %1491
      %v1493 = vsel %vm1356, %v1241, 0.0
      %1494 = vadd.xlane.f32.xlu0 %v1493
      %v1495 = vpop.xlane.xlu0 %1494
      %v1496 = vsel %vm650, %v1242, 0.0
      %1497 = vadd.xlane.f32.xlu0 %v1496
      %v1498 = vpop.xlane.xlu0 %1497
      %v1499 = vsel %vm650, %v1243, 0.0
      %1500 = vadd.xlane.f32.xlu0 %v1499
      %v1501 = vpop.xlane.xlu0 %1500
      %v1502 = vsel %vm650, %v1244, 0.0
      %1503 = vadd.xlane.f32.xlu0 %v1502
      %v1504 = vpop.xlane.xlu0 %1503
      %v1505 = vsel %vm1369, %v1245, 0.0
      %1506 = vadd.xlane.f32.xlu0 %v1505
      %v1507 = vpop.xlane.xlu0 %1506
      %v1508 = vsel %vm1356, %v1246, 0.0
      %1509 = vadd.xlane.f32.xlu0 %v1508
      %v1510 = vpop.xlane.xlu0 %1509
      %v1511 = vsel %vm650, %v1247, 0.0
      %1512 = vadd.xlane.f32.xlu0 %v1511
      %v1513 = vpop.xlane.xlu0 %1512
      %v1514 = vsel %vm650, %v1248, 0.0
      %1515 = vadd.xlane.f32.xlu0 %v1514
      %v1516 = vpop.xlane.xlu0 %1515
      %v1517 = vsel %vm650, %v1249, 0.0
      %1518 = vadd.xlane.f32.xlu0 %v1517
      %v1519 = vpop.xlane.xlu0 %1518
      %v1520 = vsel %vm1369, %v1250, 0.0
      %1521 = vadd.xlane.f32.xlu0 %v1520
      %v1522 = vpop.xlane.xlu0 %1521
      %v1523 = vsel %vm1356, %v1251, 0.0
      %1524 = vadd.xlane.f32.xlu0 %v1523
      %v1525 = vpop.xlane.xlu0 %1524
      %v1526 = vsel %vm650, %v1252, 0.0
      %1527 = vadd.xlane.f32.xlu0 %v1526
      %v1528 = vpop.xlane.xlu0 %1527
      %v1529 = vsel %vm650, %v1253, 0.0
      %1530 = vadd.xlane.f32.xlu0 %v1529
      %v1531 = vpop.xlane.xlu0 %1530
      %v1532 = vsel %vm650, %v1254, 0.0
      %1533 = vadd.xlane.f32.xlu0 %v1532
      %v1534 = vpop.xlane.xlu0 %1533
      %v1535 = vsel %vm1369, %v1255, 0.0
      %1536 = vadd.xlane.f32.xlu0 %v1535
      %v1537 = vpop.xlane.xlu0 %1536
      %v1538 = vsel %vm1356, %v1256, 0.0
      %1539 = vadd.xlane.f32.xlu0 %v1538
      %v1540 = vpop.xlane.xlu0 %1539
      %v1541 = vsel %vm650, %v1257, 0.0
      %1542 = vadd.xlane.f32.xlu0 %v1541
      %v1543 = vpop.xlane.xlu0 %1542
      %v1544 = vsel %vm650, %v1258, 0.0
      %1545 = vadd.xlane.f32.xlu0 %v1544
      %v1546 = vpop.xlane.xlu0 %1545
      %v1547 = vsel %vm650, %v1259, 0.0
      %1548 = vadd.xlane.f32.xlu0 %v1547
      %v1549 = vpop.xlane.xlu0 %1548
      %v1550 = vsel %vm1369, %v1260, 0.0
      %1551 = vadd.xlane.f32.xlu0 %v1550
      %v1552 = vpop.xlane.xlu0 %1551
      %v1553 = vsel %vm1356, %v1261, 0.0
      %1554 = vadd.xlane.f32.xlu0 %v1553
      %v1555 = vpop.xlane.xlu0 %1554
      %v1556 = vsel %vm650, %v1262, 0.0
      %1557 = vadd.xlane.f32.xlu0 %v1556
      %v1558 = vpop.xlane.xlu0 %1557
      %v1559 = vsel %vm650, %v1263, 0.0
      %1560 = vadd.xlane.f32.xlu0 %v1559
      %v1561 = vpop.xlane.xlu0 %1560
      %v1562 = vsel %vm650, %v1264, 0.0
      %1563 = vadd.xlane.f32.xlu0 %v1562
      %v1564 = vpop.xlane.xlu0 %1563
      %v1565 = vsel %vm1369, %v1265, 0.0
      %1566 = vadd.xlane.f32.xlu0 %v1565
      %v1567 = vpop.xlane.xlu0 %1566
      %v1568 = vsel %vm1356, %v1266, 0.0
      %1569 = vadd.xlane.f32.xlu0 %v1568
      %v1570 = vpop.xlane.xlu0 %1569
      %v1571 = vsel %vm650, %v1267, 0.0
      %1572 = vadd.xlane.f32.xlu0 %v1571
      %v1573 = vpop.xlane.xlu0 %1572
      %v1574 = vsel %vm650, %v1268, 0.0
      %1575 = vadd.xlane.f32.xlu0 %v1574
      %v1576 = vpop.xlane.xlu0 %1575
      %v1577 = vsel %vm650, %v1269, 0.0
      %1578 = vadd.xlane.f32.xlu0 %v1577
      %v1579 = vpop.xlane.xlu0 %1578
      %v1580 = vsel %vm1369, %v1270, 0.0
      %1581 = vadd.xlane.f32.xlu0 %v1580
      %v1582 = vpop.xlane.xlu0 %1581
      %v1583 = vsel %vm1356, %v1271, 0.0
      %1584 = vadd.xlane.f32.xlu0 %v1583
      %v1585 = vpop.xlane.xlu0 %1584
      %v1586 = vsel %vm650, %v1272, 0.0
      %1587 = vadd.xlane.f32.xlu0 %v1586
      %v1588 = vpop.xlane.xlu0 %1587
      %v1589 = vsel %vm650, %v1273, 0.0
      %1590 = vadd.xlane.f32.xlu0 %v1589
      %v1591 = vpop.xlane.xlu0 %1590
      %v1592 = vsel %vm650, %v1274, 0.0
      %1593 = vadd.xlane.f32.xlu0 %v1592
      %v1594 = vpop.xlane.xlu0 %1593
      %v1595 = vsel %vm1369, %v1275, 0.0
      %1596 = vadd.xlane.f32.xlu0 %v1595
      %v1597 = vpop.xlane.xlu0 %1596
      %v1598 = vsel %vm1356, %v1276, 0.0
      %1599 = vadd.xlane.f32.xlu0 %v1598
      %v1600 = vpop.xlane.xlu0 %1599
      %v1601 = vsel %vm650, %v1277, 0.0
      %1602 = vadd.xlane.f32.xlu0 %v1601
      %v1603 = vpop.xlane.xlu0 %1602
      %v1604 = vsel %vm650, %v1278, 0.0
      %1605 = vadd.xlane.f32.xlu0 %v1604
      %v1606 = vpop.xlane.xlu0 %1605
      %v1607 = vsel %vm650, %v1279, 0.0
      %1608 = vadd.xlane.f32.xlu0 %v1607
      %v1609 = vpop.xlane.xlu0 %1608
      %v1610 = vsel %vm1369, %v1280, 0.0
      %1611 = vadd.xlane.f32.xlu0 %v1610
      %v1612 = vpop.xlane.xlu0 %1611
      %v1613 = vsel %vm1356, %v1281, 0.0
      %1614 = vadd.xlane.f32.xlu0 %v1613
      %v1615 = vpop.xlane.xlu0 %1614
      %v1616 = vsel %vm650, %v1282, 0.0
      %1617 = vadd.xlane.f32.xlu0 %v1616
      %v1618 = vpop.xlane.xlu0 %1617
      %v1619 = vsel %vm650, %v1283, 0.0
      %1620 = vadd.xlane.f32.xlu0 %v1619
      %v1621 = vpop.xlane.xlu0 %1620
      %v1622 = vsel %vm650, %v1284, 0.0
      %1623 = vadd.xlane.f32.xlu0 %v1622
      %v1624 = vpop.xlane.xlu0 %1623
      %v1625 = vsel %vm1369, %v1285, 0.0
      %1626 = vadd.xlane.f32.xlu0 %v1625
      %v1627 = vpop.xlane.xlu0 %1626
      %v1628 = vsel %vm1356, %v1286, 0.0
      %1629 = vadd.xlane.f32.xlu0 %v1628
      %v1630 = vpop.xlane.xlu0 %1629
      %v1631 = vsel %vm650, %v1287, 0.0
      %1632 = vadd.xlane.f32.xlu0 %v1631
      %v1633 = vpop.xlane.xlu0 %1632
      %v1634 = vsel %vm650, %v1288, 0.0
      %1635 = vadd.xlane.f32.xlu0 %v1634
      %v1636 = vpop.xlane.xlu0 %1635
      %v1637 = vsel %vm650, %v1289, 0.0
      %1638 = vadd.xlane.f32.xlu0 %v1637
      %v1639 = vpop.xlane.xlu0 %1638
      %v1640 = vsel %vm1369, %v1290, 0.0
      %1641 = vadd.xlane.f32.xlu0 %v1640
      %v1642 = vpop.xlane.xlu0 %1641
      %v1643 = vsel %vm1356, %v1291, 0.0
      %1644 = vadd.xlane.f32.xlu0 %v1643
      %v1645 = vpop.xlane.xlu0 %1644
      %v1646 = vsel %vm650, %v1292, 0.0
      %1647 = vadd.xlane.f32.xlu0 %v1646
      %v1648 = vpop.xlane.xlu0 %1647
      %v1649 = vsel %vm650, %v1293, 0.0
      %1650 = vadd.xlane.f32.xlu0 %v1649
      %v1651 = vpop.xlane.xlu0 %1650
      %v1652 = vsel %vm650, %v1294, 0.0
      %1653 = vadd.xlane.f32.xlu0 %v1652
      %v1654 = vpop.xlane.xlu0 %1653
      %v1655 = vsel %vm1369, %v1295, 0.0
      %1656 = vadd.xlane.f32.xlu0 %v1655
      %v1657 = vpop.xlane.xlu0 %1656
      %v1658 = vsel %vm1356, %v1296, 0.0
      %1659 = vadd.xlane.f32.xlu0 %v1658
      %v1660 = vpop.xlane.xlu0 %1659
      %v1661 = vsel %vm650, %v1297, 0.0
      %1662 = vadd.xlane.f32.xlu0 %v1661
      %v1663 = vpop.xlane.xlu0 %1662
      %v1664 = vsel %vm650, %v1298, 0.0
      %1665 = vadd.xlane.f32.xlu0 %v1664
      %v1666 = vpop.xlane.xlu0 %1665
      %v1667 = vsel %vm650, %v1299, 0.0
      %1668 = vadd.xlane.f32.xlu0 %v1667
      %v1669 = vpop.xlane.xlu0 %1668
      %v1670 = vsel %vm1369, %v1300, 0.0
      %1671 = vadd.xlane.f32.xlu0 %v1670
      %v1672 = vpop.xlane.xlu0 %1671
      %v1673 = vsel %vm1356, %v1301, 0.0
      %1674 = vadd.xlane.f32.xlu0 %v1673
      %v1675 = vpop.xlane.xlu0 %1674
      %v1676 = vsel %vm650, %v1302, 0.0
      %1677 = vadd.xlane.f32.xlu0 %v1676
      %v1678 = vpop.xlane.xlu0 %1677
      %v1679 = vsel %vm650, %v1303, 0.0
      %1680 = vadd.xlane.f32.xlu0 %v1679
      %v1681 = vpop.xlane.xlu0 %1680
      %v1682 = vsel %vm650, %v1304, 0.0
      %1683 = vadd.xlane.f32.xlu0 %v1682
      %v1684 = vpop.xlane.xlu0 %1683
      %v1685 = vsel %vm1369, %v1305, 0.0
      %1686 = vadd.xlane.f32.xlu0 %v1685
      %v1687 = vpop.xlane.xlu0 %1686
      %v1688 = vsel %vm1356, %v1306, 0.0
      %1689 = vadd.xlane.f32.xlu0 %v1688
      %v1690 = vpop.xlane.xlu0 %1689
      %v1691 = vsel %vm650, %v1307, 0.0
      %1692 = vadd.xlane.f32.xlu0 %v1691
      %v1693 = vpop.xlane.xlu0 %1692
      %v1694 = vsel %vm650, %v1308, 0.0
      %1695 = vadd.xlane.f32.xlu0 %v1694
      %v1696 = vpop.xlane.xlu0 %1695
      %v1697 = vsel %vm650, %v1309, 0.0
      %1698 = vadd.xlane.f32.xlu0 %v1697
      %v1699 = vpop.xlane.xlu0 %1698
      %v1700 = vsel %vm1369, %v1310, 0.0
      %1701 = vadd.xlane.f32.xlu0 %v1700
      %v1702 = vpop.xlane.xlu0 %1701
      %v1703 = vsel %vm1356, %v1311, 0.0
      %1704 = vadd.xlane.f32.xlu0 %v1703
      %v1705 = vpop.xlane.xlu0 %1704
      %v1706 = vsel %vm650, %v1312, 0.0
      %1707 = vadd.xlane.f32.xlu0 %v1706
      %v1708 = vpop.xlane.xlu0 %1707
      %v1709 = vsel %vm650, %v1313, 0.0
      %1710 = vadd.xlane.f32.xlu0 %v1709
      %v1711 = vpop.xlane.xlu0 %1710
      %v1712 = vsel %vm650, %v1314, 0.0
      %1713 = vadd.xlane.f32.xlu0 %v1712
      %v1714 = vpop.xlane.xlu0 %1713
      %v1715 = vsel %vm1369, %v1315, 0.0
      %1716 = vadd.xlane.f32.xlu0 %v1715
      %v1717 = vpop.xlane.xlu0 %1716
      %v1718 = vsel %vm1356, %v1316, 0.0
      %1719 = vadd.xlane.f32.xlu0 %v1718
      %v1720 = vpop.xlane.xlu0 %1719
      %v1721 = vsel %vm650, %v1317, 0.0
      %1722 = vadd.xlane.f32.xlu0 %v1721
      %v1723 = vpop.xlane.xlu0 %1722
      %v1724 = vsel %vm650, %v1318, 0.0
      %1725 = vadd.xlane.f32.xlu0 %v1724
      %v1726 = vpop.xlane.xlu0 %1725
      %v1727 = vsel %vm650, %v1319, 0.0
      %1728 = vadd.xlane.f32.xlu0 %v1727
      %v1729 = vpop.xlane.xlu0 %1728
      %v1730 = vsel %vm1369, %v1320, 0.0
      %1731 = vadd.xlane.f32.xlu0 %v1730
      %v1732 = vpop.xlane.xlu0 %1731
      %v1733 = vsel %vm1356, %v1321, 0.0
      %1734 = vadd.xlane.f32.xlu0 %v1733
      %v1735 = vpop.xlane.xlu0 %1734
      %v1736 = vsel %vm650, %v1322, 0.0
      %1737 = vadd.xlane.f32.xlu0 %v1736
      %v1738 = vpop.xlane.xlu0 %1737
      %v1739 = vsel %vm650, %v1323, 0.0
      %1740 = vadd.xlane.f32.xlu0 %v1739
      %v1741 = vpop.xlane.xlu0 %1740
      %v1742 = vsel %vm650, %v1324, 0.0
      %1743 = vadd.xlane.f32.xlu0 %v1742
      %v1744 = vpop.xlane.xlu0 %1743
      %v1745 = vsel %vm1369, %v1325, 0.0
      %1746 = vadd.xlane.f32.xlu0 %v1745
      %v1747 = vpop.xlane.xlu0 %1746
      %v1748 = vsel %vm1356, %v1326, 0.0
      %1749 = vadd.xlane.f32.xlu0 %v1748
      %v1750 = vpop.xlane.xlu0 %1749
      %v1751 = vsel %vm650, %v1327, 0.0
      %1752 = vadd.xlane.f32.xlu0 %v1751
      %v1753 = vpop.xlane.xlu0 %1752
      %v1754 = vsel %vm650, %v1328, 0.0
      %1755 = vadd.xlane.f32.xlu0 %v1754
      %v1756 = vpop.xlane.xlu0 %1755
      %v1757 = vsel %vm650, %v1329, 0.0
      %1758 = vadd.xlane.f32.xlu0 %v1757
      %v1759 = vpop.xlane.xlu0 %1758
      %v1760 = vsel %vm1369, %v1330, 0.0
      %1761 = vadd.xlane.f32.xlu0 %v1760
      %v1762 = vpop.xlane.xlu0 %1761
      %v1763 = vsel %vm1356, %v1331, 0.0
      %1764 = vadd.xlane.f32.xlu0 %v1763
      %v1765 = vpop.xlane.xlu0 %1764
      %v1766 = vsel %vm650, %v1332, 0.0
      %1767 = vadd.xlane.f32.xlu0 %v1766
      %v1768 = vpop.xlane.xlu0 %1767
      %v1769 = vsel %vm650, %v1333, 0.0
      %1770 = vadd.xlane.f32.xlu0 %v1769
      %v1771 = vpop.xlane.xlu0 %1770
      %v1772 = vsel %vm650, %v1334, 0.0
      %1773 = vadd.xlane.f32.xlu0 %v1772
      %v1774 = vpop.xlane.xlu0 %1773
      %v1775 = vsel %vm1369, %v1335, 0.0
      %1776 = vadd.xlane.f32.xlu0 %v1775
      %v1777 = vpop.xlane.xlu0 %1776
      %v1778 = vsel %vm1356, %v1336, 0.0
      %1779 = vadd.xlane.f32.xlu0 %v1778
      %v1780 = vpop.xlane.xlu0 %1779
      %v1781 = vsel %vm650, %v1337, 0.0
      %1782 = vadd.xlane.f32.xlu0 %v1781
      %v1783 = vpop.xlane.xlu0 %1782
      %v1784 = vsel %vm650, %v1338, 0.0
      %1785 = vadd.xlane.f32.xlu0 %v1784
      %v1786 = vpop.xlane.xlu0 %1785
      %v1787 = vsel %vm650, %v1339, 0.0
      %1788 = vadd.xlane.f32.xlu0 %v1787
      %v1789 = vpop.xlane.xlu0 %1788
      %v1790 = vsel %vm1369, %v1340, 0.0
      %1791 = vadd.xlane.f32.xlu0 %v1790
      %v1792 = vpop.xlane.xlu0 %1791
      %v1793 = vsel %vm1356, %v1341, 0.0
      %1794 = vadd.xlane.f32.xlu0 %v1793
      %v1795 = vpop.xlane.xlu0 %1794
      %v1796 = vsel %vm650, %v1342, 0.0
      %1797 = vadd.xlane.f32.xlu0 %v1796
      %v1798 = vpop.xlane.xlu0 %1797
      %v1799 = vsel %vm650, %v1343, 0.0
      %1800 = vadd.xlane.f32.xlu0 %v1799
      %v1801 = vpop.xlane.xlu0 %1800
      %v1802 = vsel %vm650, %v1344, 0.0
      %1803 = vadd.xlane.f32.xlu0 %v1802
      %v1804 = vpop.xlane.xlu0 %1803
      %v1805 = vsel %vm1369, %v1345, 0.0
      %1806 = vadd.xlane.f32.xlu0 %v1805
      %v1807 = vpop.xlane.xlu0 %1806
      %v1808 = vsel %vm1356, %v1346, 0.0
      %1809 = vadd.xlane.f32.xlu0 %v1808
      %v1810 = vpop.xlane.xlu0 %1809
      %v1811 = vsel %vm650, %v1347, 0.0
      %1812 = vadd.xlane.f32.xlu0 %v1811
      %v1813 = vpop.xlane.xlu0 %1812
      %v1814 = vsel %vm650, %v1348, 0.0
      %1815 = vadd.xlane.f32.xlu0 %v1814
      %v1816 = vpop.xlane.xlu0 %1815
      %v1817 = vsel %vm650, %v1349, 0.0
      %1818 = vadd.xlane.f32.xlu0 %v1817
      %v1819 = vpop.xlane.xlu0 %1818
      %v1820 = vsel %vm1369, %v1350, 0.0
      %1821 = vadd.xlane.f32.xlu0 %v1820
      %v1822 = vpop.xlane.xlu0 %1821
      %v1823 = vsel %vm1356, %v1351, 0.0
      %1824 = vadd.xlane.f32.xlu0 %v1823
      %v1825 = vpop.xlane.xlu0 %1824
      %v1826 = vsel %vm650, %v1352, 0.0
      %1827 = vadd.xlane.f32.xlu0 %v1826
      %v1828 = vpop.xlane.xlu0 %1827
      %v1829 = vsel %vm650, %v1353, 0.0
      %1830 = vadd.xlane.f32.xlu0 %v1829
      %v1831 = vpop.xlane.xlu0 %1830
      %v1832 = vsel %vm650, %v1354, 0.0
      %1833 = vadd.xlane.f32.xlu0 %v1832
      %v1834 = vpop.xlane.xlu0 %1833
      %v1835 = vsel %vm1369, %v1355, 0.0
      %1836 = vadd.xlane.f32.xlu0 %v1835
      %v1837 = vpop.xlane.xlu0 %1836
      %vm1998 = vcmask 1046528
      %v1999 = vrot.slane %v1359, 1
      %v2000 = vrot.slane %v1362, 1
      %v2001 = vsel %vm1998, %v1999, %v2000
      %v2002 = vrot.slane %v1365, 1
      %v2003 = vsel %vm1998, %v2000, %v2002
      %v2004 = vrot.slane %v1368, 1
      %v2005 = vsel %vm1998, %v2002, %v2004
      %v2006 = vrot.slane %v1372, 1
      %v2007 = vsel %vm1998, %v2004, %v2006
      %v2008 = vrot.slane %v1375, 1
      %v2009 = vrot.slane %v1378, 1
      %v2010 = vsel %vm1998, %v2008, %v2009
      %v2011 = vrot.slane %v1381, 1
      %v2012 = vsel %vm1998, %v2009, %v2011
      %v2013 = vrot.slane %v1384, 1
      %v2014 = vsel %vm1998, %v2011, %v2013
      %v2015 = vrot.slane %v1387, 1
      %v2016 = vsel %vm1998, %v2013, %v2015
      %v2017 = vrot.slane %v1390, 1
      %v2018 = vrot.slane %v1393, 1
      %v2019 = vsel %vm1998, %v2017, %v2018
      %v2020 = vrot.slane %v1396, 1
      %v2021 = vsel %vm1998, %v2018, %v2020
      %v2022 = vrot.slane %v1399, 1
      %v2023 = vsel %vm1998, %v2020, %v2022
      %v2024 = vrot.slane %v1402, 1
      %v2025 = vsel %vm1998, %v2022, %v2024
      %v2026 = vrot.slane %v1405, 1
      %v2027 = vrot.slane %v1408, 1
      %v2028 = vsel %vm1998, %v2026, %v2027
      %v2029 = vrot.slane %v1411, 1
      %v2030 = vsel %vm1998, %v2027, %v2029
      %v2031 = vrot.slane %v1414, 1
      %v2032 = vsel %vm1998, %v2029, %v2031
      %v2033 = vrot.slane %v1417, 1
      %v2034 = vsel %vm1998, %v2031, %v2033
      %v2035 = vrot.slane %v1420, 1
      %v2036 = vrot.slane %v1423, 1
      %v2037 = vsel %vm1998, %v2035, %v2036
      %v2038 = vrot.slane %v1426, 1
      %v2039 = vsel %vm1998, %v2036, %v2038
      %v2040 = vrot.slane %v1429, 1
      %v2041 = vsel %vm1998, %v2038, %v2040
      %v2042 = vrot.slane %v1432, 1
      %v2043 = vsel %vm1998, %v2040, %v2042
      %v2044 = vrot.slane %v1435, 1
      %v2045 = vrot.slane %v1438, 1
      %v2046 = vsel %vm1998, %v2044, %v2045
      %v2047 = vrot.slane %v1441, 1
      %v2048 = vsel %vm1998, %v2045, %v2047
      %v2049 = vrot.slane %v1444, 1
      %v2050 = vsel %vm1998, %v2047, %v2049
      %v2051 = vrot.slane %v1447, 1
      %v2052 = vsel %vm1998, %v2049, %v2051
      %v2053 = vrot.slane %v1450, 1
      %v2054 = vrot.slane %v1453, 1
      %v2055 = vsel %vm1998, %v2053, %v2054
      %v2056 = vrot.slane %v1456, 1
      %v2057 = vsel %vm1998, %v2054, %v2056
      %v2058 = vrot.slane %v1459, 1
      %v2059 = vsel %vm1998, %v2056, %v2058
      %v2060 = vrot.slane %v1462, 1
      %v2061 = vsel %vm1998, %v2058, %v2060
      %v2062 = vrot.slane %v1465, 1
      %v2063 = vrot.slane %v1468, 1
      %v2064 = vsel %vm1998, %v2062, %v2063
      %v2065 = vrot.slane %v1471, 1
      %v2066 = vsel %vm1998, %v2063, %v2065
      %v2067 = vrot.slane %v1474, 1
      %v2068 = vsel %vm1998, %v2065, %v2067
      %v2069 = vrot.slane %v1477, 1
      %v2070 = vsel %vm1998, %v2067, %v2069
      %v2071 = vrot.slane %v1480, 1
      %v2072 = vrot.slane %v1483, 1
      %v2073 = vsel %vm1998, %v2071, %v2072
      %v2074 = vrot.slane %v1486, 1
      %v2075 = vsel %vm1998, %v2072, %v2074
      %v2076 = vrot.slane %v1489, 1
      %v2077 = vsel %vm1998, %v2074, %v2076
      %v2078 = vrot.slane %v1492, 1
      %v2079 = vsel %vm1998, %v2076, %v2078
      %v2080 = vrot.slane %v1495, 1
      %v2081 = vrot.slane %v1498, 1
      %v2082 = vsel %vm1998, %v2080, %v2081
      %v2083 = vrot.slane %v1501, 1
      %v2084 = vsel %vm1998, %v2081, %v2083
      %v2085 = vrot.slane %v1504, 1
      %v2086 = vsel %vm1998, %v2083, %v2085
      %v2087 = vrot.slane %v1507, 1
      %v2088 = vsel %vm1998, %v2085, %v2087
      %v2089 = vrot.slane %v1510, 1
      %v2090 = vrot.slane %v1513, 1
      %v2091 = vsel %vm1998, %v2089, %v2090
      %v2092 = vrot.slane %v1516, 1
      %v2093 = vsel %vm1998, %v2090, %v2092
      %v2094 = vrot.slane %v1519, 1
      %v2095 = vsel %vm1998, %v2092, %v2094
      %v2096 = vrot.slane %v1522, 1
      %v2097 = vsel %vm1998, %v2094, %v2096
      %v2098 = vrot.slane %v1525, 1
      %v2099 = vrot.slane %v1528, 1
      %v2100 = vsel %vm1998, %v2098, %v2099
      %v2101 = vrot.slane %v1531, 1
      %v2102 = vsel %vm1998, %v2099, %v2101
      %v2103 = vrot.slane %v1534, 1
      %v2104 = vsel %vm1998, %v2101, %v2103
      %v2105 = vrot.slane %v1537, 1
      %v2106 = vsel %vm1998, %v2103, %v2105
      %v2107 = vrot.slane %v1540, 1
      %v2108 = vrot.slane %v1543, 1
      %v2109 = vsel %vm1998, %v2107, %v2108
      %v2110 = vrot.slane %v1546, 1
      %v2111 = vsel %vm1998, %v2108, %v2110
      %v2112 = vrot.slane %v1549, 1
      %v2113 = vsel %vm1998, %v2110, %v2112
      %v2114 = vrot.slane %v1552, 1
      %v2115 = vsel %vm1998, %v2112, %v2114
      %v2116 = vrot.slane %v1555, 1
      %v2117 = vrot.slane %v1558, 1
      %v2118 = vsel %vm1998, %v2116, %v2117
      %v2119 = vrot.slane %v1561, 1
      %v2120 = vsel %vm1998, %v2117, %v2119
      %v2121 = vrot.slane %v1564, 1
      %v2122 = vsel %vm1998, %v2119, %v2121
      %v2123 = vrot.slane %v1567, 1
      %v2124 = vsel %vm1998, %v2121, %v2123
      %v2125 = vrot.slane %v1570, 1
      %v2126 = vrot.slane %v1573, 1
      %v2127 = vsel %vm1998, %v2125, %v2126
      %v2128 = vrot.slane %v1576, 1
      %v2129 = vsel %vm1998, %v2126, %v2128
      %v2130 = vrot.slane %v1579, 1
      %v2131 = vsel %vm1998, %v2128, %v2130
      %v2132 = vrot.slane %v1582, 1
      %v2133 = vsel %vm1998, %v2130, %v2132
      %v2134 = vrot.slane %v1585, 1
      %v2135 = vrot.slane %v1588, 1
      %v2136 = vsel %vm1998, %v2134, %v2135
      %v2137 = vrot.slane %v1591, 1
      %v2138 = vsel %vm1998, %v2135, %v2137
      %v2139 = vrot.slane %v1594, 1
      %v2140 = vsel %vm1998, %v2137, %v2139
      %v2141 = vrot.slane %v1597, 1
      %v2142 = vsel %vm1998, %v2139, %v2141
      %v2143 = vrot.slane %v1600, 1
      %v2144 = vrot.slane %v1603, 1
      %v2145 = vsel %vm1998, %v2143, %v2144
      %v2146 = vrot.slane %v1606, 1
      %v2147 = vsel %vm1998, %v2144, %v2146
      %v2148 = vrot.slane %v1609, 1
      %v2149 = vsel %vm1998, %v2146, %v2148
      %v2150 = vrot.slane %v1612, 1
      %v2151 = vsel %vm1998, %v2148, %v2150
      %v2152 = vrot.slane %v1615, 1
      %v2153 = vrot.slane %v1618, 1
      %v2154 = vsel %vm1998, %v2152, %v2153
      %v2155 = vrot.slane %v1621, 1
      %v2156 = vsel %vm1998, %v2153, %v2155
      %v2157 = vrot.slane %v1624, 1
      %v2158 = vsel %vm1998, %v2155, %v2157
      %v2159 = vrot.slane %v1627, 1
      %v2160 = vsel %vm1998, %v2157, %v2159
      %v2161 = vrot.slane %v1630, 1
      %v2162 = vrot.slane %v1633, 1
      %v2163 = vsel %vm1998, %v2161, %v2162
      %v2164 = vrot.slane %v1636, 1
      %v2165 = vsel %vm1998, %v2162, %v2164
      %v2166 = vrot.slane %v1639, 1
      %v2167 = vsel %vm1998, %v2164, %v2166
      %v2168 = vrot.slane %v1642, 1
      %v2169 = vsel %vm1998, %v2166, %v2168
      %v2170 = vrot.slane %v1645, 1
      %v2171 = vrot.slane %v1648, 1
      %v2172 = vsel %vm1998, %v2170, %v2171
      %v2173 = vrot.slane %v1651, 1
      %v2174 = vsel %vm1998, %v2171, %v2173
      %v2175 = vrot.slane %v1654, 1
      %v2176 = vsel %vm1998, %v2173, %v2175
      %v2177 = vrot.slane %v1657, 1
      %v2178 = vsel %vm1998, %v2175, %v2177
      %v2179 = vrot.slane %v1660, 1
      %v2180 = vrot.slane %v1663, 1
      %v2181 = vsel %vm1998, %v2179, %v2180
      %v2182 = vrot.slane %v1666, 1
      %v2183 = vsel %vm1998, %v2180, %v2182
      %v2184 = vrot.slane %v1669, 1
      %v2185 = vsel %vm1998, %v2182, %v2184
      %v2186 = vrot.slane %v1672, 1
      %v2187 = vsel %vm1998, %v2184, %v2186
      %v2188 = vrot.slane %v1675, 1
      %v2189 = vrot.slane %v1678, 1
      %v2190 = vsel %vm1998, %v2188, %v2189
      %v2191 = vrot.slane %v1681, 1
      %v2192 = vsel %vm1998, %v2189, %v2191
      %v2193 = vrot.slane %v1684, 1
      %v2194 = vsel %vm1998, %v2191, %v2193
      %v2195 = vrot.slane %v1687, 1
      %v2196 = vsel %vm1998, %v2193, %v2195
      %v2197 = vrot.slane %v1690, 1
      %v2198 = vrot.slane %v1693, 1
      %v2199 = vsel %vm1998, %v2197, %v2198
      %v2200 = vrot.slane %v1696, 1
      %v2201 = vsel %vm1998, %v2198, %v2200
      %v2202 = vrot.slane %v1699, 1
      %v2203 = vsel %vm1998, %v2200, %v2202
      %v2204 = vrot.slane %v1702, 1
      %v2205 = vsel %vm1998, %v2202, %v2204
      %v2206 = vrot.slane %v1705, 1
      %v2207 = vrot.slane %v1708, 1
      %v2208 = vsel %vm1998, %v2206, %v2207
      %v2209 = vrot.slane %v1711, 1
      %v2210 = vsel %vm1998, %v2207, %v2209
      %v2211 = vrot.slane %v1714, 1
      %v2212 = vsel %vm1998, %v2209, %v2211
      %v2213 = vrot.slane %v1717, 1
      %v2214 = vsel %vm1998, %v2211, %v2213
      %v2215 = vrot.slane %v1720, 1
      %v2216 = vrot.slane %v1723, 1
      %v2217 = vsel %vm1998, %v2215, %v2216
      %v2218 = vrot.slane %v1726, 1
      %v2219 = vsel %vm1998, %v2216, %v2218
      %v2220 = vrot.slane %v1729, 1
      %v2221 = vsel %vm1998, %v2218, %v2220
      %v2222 = vrot.slane %v1732, 1
      %v2223 = vsel %vm1998, %v2220, %v2222
      %v2224 = vrot.slane %v1735, 1
      %v2225 = vrot.slane %v1738, 1
      %v2226 = vsel %vm1998, %v2224, %v2225
      %v2227 = vrot.slane %v1741, 1
      %v2228 = vsel %vm1998, %v2225, %v2227
      %v2229 = vrot.slane %v1744, 1
      %v2230 = vsel %vm1998, %v2227, %v2229
      %v2231 = vrot.slane %v1747, 1
      %v2232 = vsel %vm1998, %v2229, %v2231
      %v2233 = vrot.slane %v1750, 1
      %v2234 = vrot.slane %v1753, 1
      %v2235 = vsel %vm1998, %v2233, %v2234
      %v2236 = vrot.slane %v1756, 1
      %v2237 = vsel %vm1998, %v2234, %v2236
      %v2238 = vrot.slane %v1759, 1
      %v2239 = vsel %vm1998, %v2236, %v2238
      %v2240 = vrot.slane %v1762, 1
      %v2241 = vsel %vm1998, %v2238, %v2240
      %v2242 = vrot.slane %v1765, 1
      %v2243 = vrot.slane %v1768, 1
      %v2244 = vsel %vm1998, %v2242, %v2243
      %v2245 = vrot.slane %v1771, 1
      %v2246 = vsel %vm1998, %v2243, %v2245
      %v2247 = vrot.slane %v1774, 1
      %v2248 = vsel %vm1998, %v2245, %v2247
      %v2249 = vrot.slane %v1777, 1
      %v2250 = vsel %vm1998, %v2247, %v2249
      %v2251 = vrot.slane %v1780, 1
      %v2252 = vrot.slane %v1783, 1
      %v2253 = vsel %vm1998, %v2251, %v2252
      %v2254 = vrot.slane %v1786, 1
      %v2255 = vsel %vm1998, %v2252, %v2254
      %v2256 = vrot.slane %v1789, 1
      %v2257 = vsel %vm1998, %v2254, %v2256
      %v2258 = vrot.slane %v1792, 1
      %v2259 = vsel %vm1998, %v2256, %v2258
      %v2260 = vrot.slane %v1795, 1
      %v2261 = vrot.slane %v1798, 1
      %v2262 = vsel %vm1998, %v2260, %v2261
      %v2263 = vrot.slane %v1801, 1
      %v2264 = vsel %vm1998, %v2261, %v2263
      %v2265 = vrot.slane %v1804, 1
      %v2266 = vsel %vm1998, %v2263, %v2265
      %v2267 = vrot.slane %v1807, 1
      %v2268 = vsel %vm1998, %v2265, %v2267
      %v2269 = vrot.slane %v1810, 1
      %v2270 = vrot.slane %v1813, 1
      %v2271 = vsel %vm1998, %v2269, %v2270
      %v2272 = vrot.slane %v1816, 1
      %v2273 = vsel %vm1998, %v2270, %v2272
      %v2274 = vrot.slane %v1819, 1
      %v2275 = vsel %vm1998, %v2272, %v2274
      %v2276 = vrot.slane %v1822, 1
      %v2277 = vsel %vm1998, %v2274, %v2276
      %v2278 = vrot.slane %v1825, 1
      %v2279 = vrot.slane %v1828, 1
      %v2280 = vsel %vm1998, %v2278, %v2279
      %v2281 = vrot.slane %v1831, 1
      %v2282 = vsel %vm1998, %v2279, %v2281
      %v2283 = vrot.slane %v1834, 1
      %v2284 = vsel %vm1998, %v2281, %v2283
      %v2285 = vrot.slane %v1837, 1
      %v2286 = vsel %vm1998, %v2283, %v2285
      %v2415 = vadd.f32 %v1035, %v2001
      %v2416 = vadd.f32 %v1036, %v2003
      %v2417 = vadd.f32 %v1037, %v2005
      %v2418 = vadd.f32 %v1038, %v2007
      %v2419 = vadd.f32 %v1039, %v2010
      %v2420 = vadd.f32 %v1040, %v2012
      %v2421 = vadd.f32 %v1041, %v2014
      %v2422 = vadd.f32 %v1042, %v2016
      %v2423 = vadd.f32 %v1043, %v2019
      %v2424 = vadd.f32 %v1044, %v2021
      %v2425 = vadd.f32 %v1045, %v2023
      %v2426 = vadd.f32 %v1046, %v2025
      %v2427 = vadd.f32 %v1047, %v2028
      %v2428 = vadd.f32 %v1048, %v2030
      %v2429 = vadd.f32 %v1049, %v2032
      %v2430 = vadd.f32 %v1050, %v2034
      %v2431 = vadd.f32 %v1051, %v2037
      %v2432 = vadd.f32 %v1052, %v2039
      %v2433 = vadd.f32 %v1053, %v2041
      %v2434 = vadd.f32 %v1054, %v2043
      %v2435 = vadd.f32 %v1055, %v2046
      %v2436 = vadd.f32 %v1056, %v2048
      %v2437 = vadd.f32 %v1057, %v2050
      %v2438 = vadd.f32 %v1058, %v2052
      %v2439 = vadd.f32 %v1059, %v2055
      %v2440 = vadd.f32 %v1060, %v2057
      %v2441 = vadd.f32 %v1061, %v2059
      %v2442 = vadd.f32 %v1062, %v2061
      %v2443 = vadd.f32 %v1063, %v2064
      %v2444 = vadd.f32 %v1064, %v2066
      %v2445 = vadd.f32 %v1065, %v2068
      %v2446 = vadd.f32 %v1066, %v2070
      %v2447 = vadd.f32 %v1067, %v2073
      %v2448 = vadd.f32 %v1068, %v2075
      %v2449 = vadd.f32 %v1069, %v2077
      %v2450 = vadd.f32 %v1070, %v2079
      %v2451 = vadd.f32 %v1071, %v2082
      %v2452 = vadd.f32 %v1072, %v2084
      %v2453 = vadd.f32 %v1073, %v2086
      %v2454 = vadd.f32 %v1074, %v2088
      %v2455 = vadd.f32 %v1075, %v2091
      %v2456 = vadd.f32 %v1076, %v2093
      %v2457 = vadd.f32 %v1077, %v2095
      %v2458 = vadd.f32 %v1078, %v2097
      %v2459 = vadd.f32 %v1079, %v2100
      %v2460 = vadd.f32 %v1080, %v2102
      %v2461 = vadd.f32 %v1081, %v2104
      %v2462 = vadd.f32 %v1082, %v2106
      %v2463 = vadd.f32 %v1083, %v2109
      %v2464 = vadd.f32 %v1084, %v2111
      %v2465 = vadd.f32 %v1085, %v2113
      %v2466 = vadd.f32 %v1086, %v2115
      %v2467 = vadd.f32 %v1087, %v2118
      %v2468 = vadd.f32 %v1088, %v2120
      %v2469 = vadd.f32 %v1089, %v2122
      %v2470 = vadd.f32 %v1090, %v2124
      %v2471 = vadd.f32 %v1091, %v2127
      %v2472 = vadd.f32 %v1092, %v2129
      %v2473 = vadd.f32 %v1093, %v2131
      %v2474 = vadd.f32 %v1094, %v2133
      %v2475 = vadd.f32 %v1095, %v2136
      %v2476 = vadd.f32 %v1096, %v2138
      %v2477 = vadd.f32 %v1097, %v2140
      %v2478 = vadd.f32 %v1098, %v2142
      %v2479 = vadd.f32 %v1099, %v2145
      %v2480 = vadd.f32 %v1100, %v2147
      %v2481 = vadd.f32 %v1101, %v2149
      %v2482 = vadd.f32 %v1102, %v2151
      %v2483 = vadd.f32 %v1103, %v2154
      %v2484 = vadd.f32 %v1104, %v2156
      %v2485 = vadd.f32 %v1105, %v2158
      %v2486 = vadd.f32 %v1106, %v2160
      %v2487 = vadd.f32 %v1107, %v2163
      %v2488 = vadd.f32 %v1108, %v2165
      %v2489 = vadd.f32 %v1109, %v2167
      %v2490 = vadd.f32 %v1110, %v2169
      %v2491 = vadd.f32 %v1111, %v2172
      %v2492 = vadd.f32 %v1112, %v2174
      %v2493 = vadd.f32 %v1113, %v2176
      %v2494 = vadd.f32 %v1114, %v2178
      %v2495 = vadd.f32 %v1115, %v2181
      %v2496 = vadd.f32 %v1116, %v2183
      %v2497 = vadd.f32 %v1117, %v2185
      %v2498 = vadd.f32 %v1118, %v2187
      %v2499 = vadd.f32 %v1119, %v2190
      %v2500 = vadd.f32 %v1120, %v2192
      %v2501 = vadd.f32 %v1121, %v2194
      %v2502 = vadd.f32 %v1122, %v2196
      %v2503 = vadd.f32 %v1123, %v2199
      %v2504 = vadd.f32 %v1124, %v2201
      %v2505 = vadd.f32 %v1125, %v2203
      %v2506 = vadd.f32 %v1126, %v2205
      %v2507 = vadd.f32 %v1127, %v2208
      %v2508 = vadd.f32 %v1128, %v2210
      %v2509 = vadd.f32 %v1129, %v2212
      %v2510 = vadd.f32 %v1130, %v2214
      %v2511 = vadd.f32 %v1131, %v2217
      %v2512 = vadd.f32 %v1132, %v2219
      %v2513 = vadd.f32 %v1133, %v2221
      %v2514 = vadd.f32 %v1134, %v2223
      %v2515 = vadd.f32 %v1135, %v2226
      %v2516 = vadd.f32 %v1136, %v2228
      %v2517 = vadd.f32 %v1137, %v2230
      %v2518 = vadd.f32 %v1138, %v2232
      %v2519 = vadd.f32 %v1139, %v2235
      %v2520 = vadd.f32 %v1140, %v2237
      %v2521 = vadd.f32 %v1141, %v2239
      %v2522 = vadd.f32 %v1142, %v2241
      %v2523 = vadd.f32 %v1143, %v2244
      %v2524 = vadd.f32 %v1144, %v2246
      %v2525 = vadd.f32 %v1145, %v2248
      %v2526 = vadd.f32 %v1146, %v2250
      %v2527 = vadd.f32 %v1147, %v2253
      %v2528 = vadd.f32 %v1148, %v2255
      %v2529 = vadd.f32 %v1149, %v2257
      %v2530 = vadd.f32 %v1150, %v2259
      %v2531 = vadd.f32 %v1151, %v2262
      %v2532 = vadd.f32 %v1152, %v2264
      %v2533 = vadd.f32 %v1153, %v2266
      %v2534 = vadd.f32 %v1154, %v2268
      %v2535 = vadd.f32 %v1155, %v2271
      %v2536 = vadd.f32 %v1156, %v2273
      %v2537 = vadd.f32 %v1157, %v2275
      %v2538 = vadd.f32 %v1158, %v2277
      %v2539 = vadd.f32 %v1159, %v2280
      %v2540 = vadd.f32 %v1160, %v2282
      %v2541 = vadd.f32 %v1161, %v2284
      %v2542 = vadd.f32 %v1162, %v2286
      %v2543 = vunpack.c.l.bf16 %v386
      %v2544 = vunpack.c.l.bf16 %v387
      %v2545 = vunpack.c.l.bf16 %v388
      %v2546 = vunpack.c.l.bf16 %v389
      %v2547 = vperm.slane %v392, 2
      %v2548 = vmul.f32 %v397, %v2547
      %v2549 = vmul.f32 %v398, %v2547
      %v2550 = vmul.f32 %v399, %v2547
      %v2551 = vmul.f32 %v400, %v2547
      %v2552 = vmul.f32 %v401, %v2547
      %v2553 = vmul.f32 %v402, %v2547
      %v2554 = vmul.f32 %v403, %v2547
      %v2555 = vmul.f32 %v404, %v2547
      %v2556 = vmul.f32 %v405, %v2547
      %v2557 = vmul.f32 %v406, %v2547
      %v2558 = vmul.f32 %v407, %v2547
      %v2559 = vmul.f32 %v408, %v2547
      %v2560 = vmul.f32 %v409, %v2547
      %v2561 = vmul.f32 %v410, %v2547
      %v2562 = vmul.f32 %v411, %v2547
      %v2563 = vmul.f32 %v412, %v2547
      %v2564 = vmul.f32 %v413, %v2547
      %v2565 = vmul.f32 %v414, %v2547
      %v2566 = vmul.f32 %v415, %v2547
      %v2567 = vmul.f32 %v416, %v2547
      %v2568 = vmul.f32 %v417, %v2547
      %v2569 = vmul.f32 %v418, %v2547
      %v2570 = vmul.f32 %v419, %v2547
      %v2571 = vmul.f32 %v420, %v2547
      %v2572 = vmul.f32 %v421, %v2547
      %v2573 = vmul.f32 %v422, %v2547
      %v2574 = vmul.f32 %v423, %v2547
      %v2575 = vmul.f32 %v424, %v2547
      %v2576 = vmul.f32 %v425, %v2547
      %v2577 = vmul.f32 %v426, %v2547
      %v2578 = vmul.f32 %v427, %v2547
      %v2579 = vmul.f32 %v428, %v2547
      %v2580 = vmul.f32 %v429, %v2547
      %v2581 = vmul.f32 %v430, %v2547
      %v2582 = vmul.f32 %v431, %v2547
      %v2583 = vmul.f32 %v432, %v2547
      %v2584 = vmul.f32 %v433, %v2547
      %v2585 = vmul.f32 %v434, %v2547
      %v2586 = vmul.f32 %v435, %v2547
      %v2587 = vmul.f32 %v436, %v2547
      %v2588 = vmul.f32 %v437, %v2547
      %v2589 = vmul.f32 %v438, %v2547
      %v2590 = vmul.f32 %v439, %v2547
      %v2591 = vmul.f32 %v440, %v2547
      %v2592 = vmul.f32 %v441, %v2547
      %v2593 = vmul.f32 %v442, %v2547
      %v2594 = vmul.f32 %v443, %v2547
      %v2595 = vmul.f32 %v444, %v2547
      %v2596 = vmul.f32 %v445, %v2547
      %v2597 = vmul.f32 %v446, %v2547
      %v2598 = vmul.f32 %v447, %v2547
      %v2599 = vmul.f32 %v448, %v2547
      %v2600 = vmul.f32 %v449, %v2547
      %v2601 = vmul.f32 %v450, %v2547
      %v2602 = vmul.f32 %v451, %v2547
      %v2603 = vmul.f32 %v452, %v2547
      %v2604 = vmul.f32 %v453, %v2547
      %v2605 = vmul.f32 %v454, %v2547
      %v2606 = vmul.f32 %v455, %v2547
      %v2607 = vmul.f32 %v456, %v2547
      %v2608 = vmul.f32 %v457, %v2547
      %v2609 = vmul.f32 %v458, %v2547
      %v2610 = vmul.f32 %v459, %v2547
      %v2611 = vmul.f32 %v460, %v2547
      %v2612 = vmul.f32 %v461, %v2547
      %v2613 = vmul.f32 %v462, %v2547
      %v2614 = vmul.f32 %v463, %v2547
      %v2615 = vmul.f32 %v464, %v2547
      %v2616 = vmul.f32 %v465, %v2547
      %v2617 = vmul.f32 %v466, %v2547
      %v2618 = vmul.f32 %v467, %v2547
      %v2619 = vmul.f32 %v468, %v2547
      %v2620 = vmul.f32 %v469, %v2547
      %v2621 = vmul.f32 %v470, %v2547
      %v2622 = vmul.f32 %v471, %v2547
      %v2623 = vmul.f32 %v472, %v2547
      %v2624 = vmul.f32 %v473, %v2547
      %v2625 = vmul.f32 %v474, %v2547
      %v2626 = vmul.f32 %v475, %v2547
      %v2627 = vmul.f32 %v476, %v2547
      %v2628 = vmul.f32 %v477, %v2547
      %v2629 = vmul.f32 %v478, %v2547
      %v2630 = vmul.f32 %v479, %v2547
      %v2631 = vmul.f32 %v480, %v2547
      %v2632 = vmul.f32 %v481, %v2547
      %v2633 = vmul.f32 %v482, %v2547
      %v2634 = vmul.f32 %v483, %v2547
      %v2635 = vmul.f32 %v484, %v2547
      %v2636 = vmul.f32 %v485, %v2547
      %v2637 = vmul.f32 %v486, %v2547
      %v2638 = vmul.f32 %v487, %v2547
      %v2639 = vmul.f32 %v488, %v2547
      %v2640 = vmul.f32 %v489, %v2547
      %v2641 = vmul.f32 %v490, %v2547
      %v2642 = vmul.f32 %v491, %v2547
      %v2643 = vmul.f32 %v492, %v2547
      %v2644 = vmul.f32 %v493, %v2547
      %v2645 = vmul.f32 %v494, %v2547
      %v2646 = vmul.f32 %v495, %v2547
      %v2647 = vmul.f32 %v496, %v2547
      %v2648 = vmul.f32 %v497, %v2547
      %v2649 = vmul.f32 %v498, %v2547
      %v2650 = vmul.f32 %v499, %v2547
      %v2651 = vmul.f32 %v500, %v2547
      %v2652 = vmul.f32 %v501, %v2547
      %v2653 = vmul.f32 %v502, %v2547
      %v2654 = vmul.f32 %v503, %v2547
      %v2655 = vmul.f32 %v504, %v2547
      %v2656 = vmul.f32 %v505, %v2547
      %v2657 = vmul.f32 %v506, %v2547
      %v2658 = vmul.f32 %v507, %v2547
      %v2659 = vmul.f32 %v508, %v2547
      %v2660 = vmul.f32 %v509, %v2547
      %v2661 = vmul.f32 %v510, %v2547
      %v2662 = vmul.f32 %v511, %v2547
      %v2663 = vmul.f32 %v512, %v2547
      %v2664 = vmul.f32 %v513, %v2547
      %v2665 = vmul.f32 %v514, %v2547
      %v2666 = vmul.f32 %v515, %v2547
      %v2667 = vmul.f32 %v516, %v2547
      %v2668 = vmul.f32 %v517, %v2547
      %v2669 = vmul.f32 %v518, %v2547
      %v2670 = vmul.f32 %v519, %v2547
      %v2671 = vmul.f32 %v520, %v2547
      %v2672 = vmul.f32 %v2543, %v2547
      %v2673 = vmul.f32 %v2544, %v2547
      %v2674 = vmul.f32 %v2545, %v2547
      %v2675 = vmul.f32 %v2546, %v2547
      %v2676 = vsel %vm650, %v2548, 0.0
      %2677 = vadd.xlane.f32.xlu0 %v2676
      %v2678 = vpop.xlane.xlu0 %2677
      %v2679 = vsel %vm650, %v2549, 0.0
      %2680 = vadd.xlane.f32.xlu0 %v2679
      %v2681 = vpop.xlane.xlu0 %2680
      %v2682 = vsel %vm650, %v2550, 0.0
      %2683 = vadd.xlane.f32.xlu0 %v2682
      %v2684 = vpop.xlane.xlu0 %2683
      %v2685 = vsel %vm650, %v2551, 0.0
      %2686 = vadd.xlane.f32.xlu0 %v2685
      %v2687 = vpop.xlane.xlu0 %2686
      %v2688 = vsel %vm650, %v2552, 0.0
      %2689 = vadd.xlane.f32.xlu0 %v2688
      %v2690 = vpop.xlane.xlu0 %2689
      %v2691 = vsel %vm650, %v2553, 0.0
      %2692 = vadd.xlane.f32.xlu0 %v2691
      %v2693 = vpop.xlane.xlu0 %2692
      %v2694 = vsel %vm650, %v2554, 0.0
      %2695 = vadd.xlane.f32.xlu0 %v2694
      %v2696 = vpop.xlane.xlu0 %2695
      %v2697 = vsel %vm650, %v2555, 0.0
      %2698 = vadd.xlane.f32.xlu0 %v2697
      %v2699 = vpop.xlane.xlu0 %2698
      %v2700 = vsel %vm650, %v2556, 0.0
      %2701 = vadd.xlane.f32.xlu0 %v2700
      %v2702 = vpop.xlane.xlu0 %2701
      %v2703 = vsel %vm650, %v2557, 0.0
      %2704 = vadd.xlane.f32.xlu0 %v2703
      %v2705 = vpop.xlane.xlu0 %2704
      %v2706 = vsel %vm650, %v2558, 0.0
      %2707 = vadd.xlane.f32.xlu0 %v2706
      %v2708 = vpop.xlane.xlu0 %2707
      %v2709 = vsel %vm650, %v2559, 0.0
      %2710 = vadd.xlane.f32.xlu0 %v2709
      %v2711 = vpop.xlane.xlu0 %2710
      %v2712 = vsel %vm650, %v2560, 0.0
      %2713 = vadd.xlane.f32.xlu0 %v2712
      %v2714 = vpop.xlane.xlu0 %2713
      %v2715 = vsel %vm650, %v2561, 0.0
      %2716 = vadd.xlane.f32.xlu0 %v2715
      %v2717 = vpop.xlane.xlu0 %2716
      %v2718 = vsel %vm650, %v2562, 0.0
      %2719 = vadd.xlane.f32.xlu0 %v2718
      %v2720 = vpop.xlane.xlu0 %2719
      %v2721 = vsel %vm650, %v2563, 0.0
      %2722 = vadd.xlane.f32.xlu0 %v2721
      %v2723 = vpop.xlane.xlu0 %2722
      %v2724 = vsel %vm650, %v2564, 0.0
      %2725 = vadd.xlane.f32.xlu0 %v2724
      %v2726 = vpop.xlane.xlu0 %2725
      %v2727 = vsel %vm650, %v2565, 0.0
      %2728 = vadd.xlane.f32.xlu0 %v2727
      %v2729 = vpop.xlane.xlu0 %2728
      %v2730 = vsel %vm650, %v2566, 0.0
      %2731 = vadd.xlane.f32.xlu0 %v2730
      %v2732 = vpop.xlane.xlu0 %2731
      %v2733 = vsel %vm650, %v2567, 0.0
      %2734 = vadd.xlane.f32.xlu0 %v2733
      %v2735 = vpop.xlane.xlu0 %2734
      %v2736 = vsel %vm650, %v2568, 0.0
      %2737 = vadd.xlane.f32.xlu0 %v2736
      %v2738 = vpop.xlane.xlu0 %2737
      %v2739 = vsel %vm650, %v2569, 0.0
      %2740 = vadd.xlane.f32.xlu0 %v2739
      %v2741 = vpop.xlane.xlu0 %2740
      %v2742 = vsel %vm650, %v2570, 0.0
      %2743 = vadd.xlane.f32.xlu0 %v2742
      %v2744 = vpop.xlane.xlu0 %2743
      %v2745 = vsel %vm650, %v2571, 0.0
      %2746 = vadd.xlane.f32.xlu0 %v2745
      %v2747 = vpop.xlane.xlu0 %2746
      %v2748 = vsel %vm650, %v2572, 0.0
      %2749 = vadd.xlane.f32.xlu0 %v2748
      %v2750 = vpop.xlane.xlu0 %2749
      %v2751 = vsel %vm650, %v2573, 0.0
      %2752 = vadd.xlane.f32.xlu0 %v2751
      %v2753 = vpop.xlane.xlu0 %2752
      %v2754 = vsel %vm650, %v2574, 0.0
      %2755 = vadd.xlane.f32.xlu0 %v2754
      %v2756 = vpop.xlane.xlu0 %2755
      %v2757 = vsel %vm650, %v2575, 0.0
      %2758 = vadd.xlane.f32.xlu0 %v2757
      %v2759 = vpop.xlane.xlu0 %2758
      %v2760 = vsel %vm650, %v2576, 0.0
      %2761 = vadd.xlane.f32.xlu0 %v2760
      %v2762 = vpop.xlane.xlu0 %2761
      %v2763 = vsel %vm650, %v2577, 0.0
      %2764 = vadd.xlane.f32.xlu0 %v2763
      %v2765 = vpop.xlane.xlu0 %2764
      %v2766 = vsel %vm650, %v2578, 0.0
      %2767 = vadd.xlane.f32.xlu0 %v2766
      %v2768 = vpop.xlane.xlu0 %2767
      %v2769 = vsel %vm650, %v2579, 0.0
      %2770 = vadd.xlane.f32.xlu0 %v2769
      %v2771 = vpop.xlane.xlu0 %2770
      %v2772 = vsel %vm650, %v2580, 0.0
      %2773 = vadd.xlane.f32.xlu0 %v2772
      %v2774 = vpop.xlane.xlu0 %2773
      %v2775 = vsel %vm650, %v2581, 0.0
      %2776 = vadd.xlane.f32.xlu0 %v2775
      %v2777 = vpop.xlane.xlu0 %2776
      %v2778 = vsel %vm650, %v2582, 0.0
      %2779 = vadd.xlane.f32.xlu0 %v2778
      %v2780 = vpop.xlane.xlu0 %2779
      %v2781 = vsel %vm650, %v2583, 0.0
      %2782 = vadd.xlane.f32.xlu0 %v2781
      %v2783 = vpop.xlane.xlu0 %2782
      %v2784 = vsel %vm650, %v2584, 0.0
      %2785 = vadd.xlane.f32.xlu0 %v2784
      %v2786 = vpop.xlane.xlu0 %2785
      %v2787 = vsel %vm650, %v2585, 0.0
      %2788 = vadd.xlane.f32.xlu0 %v2787
      %v2789 = vpop.xlane.xlu0 %2788
      %v2790 = vsel %vm650, %v2586, 0.0
      %2791 = vadd.xlane.f32.xlu0 %v2790
      %v2792 = vpop.xlane.xlu0 %2791
      %v2793 = vsel %vm650, %v2587, 0.0
      %2794 = vadd.xlane.f32.xlu0 %v2793
      %v2795 = vpop.xlane.xlu0 %2794
      %v2796 = vsel %vm650, %v2588, 0.0
      %2797 = vadd.xlane.f32.xlu0 %v2796
      %v2798 = vpop.xlane.xlu0 %2797
      %v2799 = vsel %vm650, %v2589, 0.0
      %2800 = vadd.xlane.f32.xlu0 %v2799
      %v2801 = vpop.xlane.xlu0 %2800
      %v2802 = vsel %vm650, %v2590, 0.0
      %2803 = vadd.xlane.f32.xlu0 %v2802
      %v2804 = vpop.xlane.xlu0 %2803
      %v2805 = vsel %vm650, %v2591, 0.0
      %2806 = vadd.xlane.f32.xlu0 %v2805
      %v2807 = vpop.xlane.xlu0 %2806
      %v2808 = vsel %vm650, %v2592, 0.0
      %2809 = vadd.xlane.f32.xlu0 %v2808
      %v2810 = vpop.xlane.xlu0 %2809
      %v2811 = vsel %vm650, %v2593, 0.0
      %2812 = vadd.xlane.f32.xlu0 %v2811
      %v2813 = vpop.xlane.xlu0 %2812
      %v2814 = vsel %vm650, %v2594, 0.0
      %2815 = vadd.xlane.f32.xlu0 %v2814
      %v2816 = vpop.xlane.xlu0 %2815
      %v2817 = vsel %vm650, %v2595, 0.0
      %2818 = vadd.xlane.f32.xlu0 %v2817
      %v2819 = vpop.xlane.xlu0 %2818
      %v2820 = vsel %vm650, %v2596, 0.0
      %2821 = vadd.xlane.f32.xlu0 %v2820
      %v2822 = vpop.xlane.xlu0 %2821
      %v2823 = vsel %vm650, %v2597, 0.0
      %2824 = vadd.xlane.f32.xlu0 %v2823
      %v2825 = vpop.xlane.xlu0 %2824
      %v2826 = vsel %vm650, %v2598, 0.0
      %2827 = vadd.xlane.f32.xlu0 %v2826
      %v2828 = vpop.xlane.xlu0 %2827
      %v2829 = vsel %vm650, %v2599, 0.0
      %2830 = vadd.xlane.f32.xlu0 %v2829
      %v2831 = vpop.xlane.xlu0 %2830
      %v2832 = vsel %vm650, %v2600, 0.0
      %2833 = vadd.xlane.f32.xlu0 %v2832
      %v2834 = vpop.xlane.xlu0 %2833
      %v2835 = vsel %vm650, %v2601, 0.0
      %2836 = vadd.xlane.f32.xlu0 %v2835
      %v2837 = vpop.xlane.xlu0 %2836
      %v2838 = vsel %vm650, %v2602, 0.0
      %2839 = vadd.xlane.f32.xlu0 %v2838
      %v2840 = vpop.xlane.xlu0 %2839
      %v2841 = vsel %vm650, %v2603, 0.0
      %2842 = vadd.xlane.f32.xlu0 %v2841
      %v2843 = vpop.xlane.xlu0 %2842
      %v2844 = vsel %vm650, %v2604, 0.0
      %2845 = vadd.xlane.f32.xlu0 %v2844
      %v2846 = vpop.xlane.xlu0 %2845
      %v2847 = vsel %vm650, %v2605, 0.0
      %2848 = vadd.xlane.f32.xlu0 %v2847
      %v2849 = vpop.xlane.xlu0 %2848
      %v2850 = vsel %vm650, %v2606, 0.0
      %2851 = vadd.xlane.f32.xlu0 %v2850
      %v2852 = vpop.xlane.xlu0 %2851
      %v2853 = vsel %vm650, %v2607, 0.0
      %2854 = vadd.xlane.f32.xlu0 %v2853
      %v2855 = vpop.xlane.xlu0 %2854
      %v2856 = vsel %vm650, %v2608, 0.0
      %2857 = vadd.xlane.f32.xlu0 %v2856
      %v2858 = vpop.xlane.xlu0 %2857
      %v2859 = vsel %vm650, %v2609, 0.0
      %2860 = vadd.xlane.f32.xlu0 %v2859
      %v2861 = vpop.xlane.xlu0 %2860
      %v2862 = vsel %vm650, %v2610, 0.0
      %2863 = vadd.xlane.f32.xlu0 %v2862
      %v2864 = vpop.xlane.xlu0 %2863
      %v2865 = vsel %vm650, %v2611, 0.0
      %2866 = vadd.xlane.f32.xlu0 %v2865
      %v2867 = vpop.xlane.xlu0 %2866
      %v2868 = vsel %vm650, %v2612, 0.0
      %2869 = vadd.xlane.f32.xlu0 %v2868
      %v2870 = vpop.xlane.xlu0 %2869
      %v2871 = vsel %vm650, %v2613, 0.0
      %2872 = vadd.xlane.f32.xlu0 %v2871
      %v2873 = vpop.xlane.xlu0 %2872
      %v2874 = vsel %vm650, %v2614, 0.0
      %2875 = vadd.xlane.f32.xlu0 %v2874
      %v2876 = vpop.xlane.xlu0 %2875
      %v2877 = vsel %vm650, %v2615, 0.0
      %2878 = vadd.xlane.f32.xlu0 %v2877
      %v2879 = vpop.xlane.xlu0 %2878
      %v2880 = vsel %vm650, %v2616, 0.0
      %2881 = vadd.xlane.f32.xlu0 %v2880
      %v2882 = vpop.xlane.xlu0 %2881
      %v2883 = vsel %vm650, %v2617, 0.0
      %2884 = vadd.xlane.f32.xlu0 %v2883
      %v2885 = vpop.xlane.xlu0 %2884
      %v2886 = vsel %vm650, %v2618, 0.0
      %2887 = vadd.xlane.f32.xlu0 %v2886
      %v2888 = vpop.xlane.xlu0 %2887
      %v2889 = vsel %vm650, %v2619, 0.0
      %2890 = vadd.xlane.f32.xlu0 %v2889
      %v2891 = vpop.xlane.xlu0 %2890
      %v2892 = vsel %vm650, %v2620, 0.0
      %2893 = vadd.xlane.f32.xlu0 %v2892
      %v2894 = vpop.xlane.xlu0 %2893
      %v2895 = vsel %vm650, %v2621, 0.0
      %2896 = vadd.xlane.f32.xlu0 %v2895
      %v2897 = vpop.xlane.xlu0 %2896
      %v2898 = vsel %vm650, %v2622, 0.0
      %2899 = vadd.xlane.f32.xlu0 %v2898
      %v2900 = vpop.xlane.xlu0 %2899
      %v2901 = vsel %vm650, %v2623, 0.0
      %2902 = vadd.xlane.f32.xlu0 %v2901
      %v2903 = vpop.xlane.xlu0 %2902
      %v2904 = vsel %vm650, %v2624, 0.0
      %2905 = vadd.xlane.f32.xlu0 %v2904
      %v2906 = vpop.xlane.xlu0 %2905
      %v2907 = vsel %vm650, %v2625, 0.0
      %2908 = vadd.xlane.f32.xlu0 %v2907
      %v2909 = vpop.xlane.xlu0 %2908
      %v2910 = vsel %vm650, %v2626, 0.0
      %2911 = vadd.xlane.f32.xlu0 %v2910
      %v2912 = vpop.xlane.xlu0 %2911
      %v2913 = vsel %vm650, %v2627, 0.0
      %2914 = vadd.xlane.f32.xlu0 %v2913
      %v2915 = vpop.xlane.xlu0 %2914
      %v2916 = vsel %vm650, %v2628, 0.0
      %2917 = vadd.xlane.f32.xlu0 %v2916
      %v2918 = vpop.xlane.xlu0 %2917
      %v2919 = vsel %vm650, %v2629, 0.0
      %2920 = vadd.xlane.f32.xlu0 %v2919
      %v2921 = vpop.xlane.xlu0 %2920
      %v2922 = vsel %vm650, %v2630, 0.0
      %2923 = vadd.xlane.f32.xlu0 %v2922
      %v2924 = vpop.xlane.xlu0 %2923
      %v2925 = vsel %vm650, %v2631, 0.0
      %2926 = vadd.xlane.f32.xlu0 %v2925
      %v2927 = vpop.xlane.xlu0 %2926
      %v2928 = vsel %vm650, %v2632, 0.0
      %2929 = vadd.xlane.f32.xlu0 %v2928
      %v2930 = vpop.xlane.xlu0 %2929
      %v2931 = vsel %vm650, %v2633, 0.0
      %2932 = vadd.xlane.f32.xlu0 %v2931
      %v2933 = vpop.xlane.xlu0 %2932
      %v2934 = vsel %vm650, %v2634, 0.0
      %2935 = vadd.xlane.f32.xlu0 %v2934
      %v2936 = vpop.xlane.xlu0 %2935
      %v2937 = vsel %vm650, %v2635, 0.0
      %2938 = vadd.xlane.f32.xlu0 %v2937
      %v2939 = vpop.xlane.xlu0 %2938
      %v2940 = vsel %vm650, %v2636, 0.0
      %2941 = vadd.xlane.f32.xlu0 %v2940
      %v2942 = vpop.xlane.xlu0 %2941
      %v2943 = vsel %vm650, %v2637, 0.0
      %2944 = vadd.xlane.f32.xlu0 %v2943
      %v2945 = vpop.xlane.xlu0 %2944
      %v2946 = vsel %vm650, %v2638, 0.0
      %2947 = vadd.xlane.f32.xlu0 %v2946
      %v2948 = vpop.xlane.xlu0 %2947
      %v2949 = vsel %vm650, %v2639, 0.0
      %2950 = vadd.xlane.f32.xlu0 %v2949
      %v2951 = vpop.xlane.xlu0 %2950
      %v2952 = vsel %vm650, %v2640, 0.0
      %2953 = vadd.xlane.f32.xlu0 %v2952
      %v2954 = vpop.xlane.xlu0 %2953
      %v2955 = vsel %vm650, %v2641, 0.0
      %2956 = vadd.xlane.f32.xlu0 %v2955
      %v2957 = vpop.xlane.xlu0 %2956
      %v2958 = vsel %vm650, %v2642, 0.0
      %2959 = vadd.xlane.f32.xlu0 %v2958
      %v2960 = vpop.xlane.xlu0 %2959
      %v2961 = vsel %vm650, %v2643, 0.0
      %2962 = vadd.xlane.f32.xlu0 %v2961
      %v2963 = vpop.xlane.xlu0 %2962
      %v2964 = vsel %vm650, %v2644, 0.0
      %2965 = vadd.xlane.f32.xlu0 %v2964
      %v2966 = vpop.xlane.xlu0 %2965
      %v2967 = vsel %vm650, %v2645, 0.0
      %2968 = vadd.xlane.f32.xlu0 %v2967
      %v2969 = vpop.xlane.xlu0 %2968
      %v2970 = vsel %vm650, %v2646, 0.0
      %2971 = vadd.xlane.f32.xlu0 %v2970
      %v2972 = vpop.xlane.xlu0 %2971
      %v2973 = vsel %vm650, %v2647, 0.0
      %2974 = vadd.xlane.f32.xlu0 %v2973
      %v2975 = vpop.xlane.xlu0 %2974
      %v2976 = vsel %vm650, %v2648, 0.0
      %2977 = vadd.xlane.f32.xlu0 %v2976
      %v2978 = vpop.xlane.xlu0 %2977
      %v2979 = vsel %vm650, %v2649, 0.0
      %2980 = vadd.xlane.f32.xlu0 %v2979
      %v2981 = vpop.xlane.xlu0 %2980
      %v2982 = vsel %vm650, %v2650, 0.0
      %2983 = vadd.xlane.f32.xlu0 %v2982
      %v2984 = vpop.xlane.xlu0 %2983
      %v2985 = vsel %vm650, %v2651, 0.0
      %2986 = vadd.xlane.f32.xlu0 %v2985
      %v2987 = vpop.xlane.xlu0 %2986
      %v2988 = vsel %vm650, %v2652, 0.0
      %2989 = vadd.xlane.f32.xlu0 %v2988
      %v2990 = vpop.xlane.xlu0 %2989
      %v2991 = vsel %vm650, %v2653, 0.0
      %2992 = vadd.xlane.f32.xlu0 %v2991
      %v2993 = vpop.xlane.xlu0 %2992
      %v2994 = vsel %vm650, %v2654, 0.0
      %2995 = vadd.xlane.f32.xlu0 %v2994
      %v2996 = vpop.xlane.xlu0 %2995
      %v2997 = vsel %vm650, %v2655, 0.0
      %2998 = vadd.xlane.f32.xlu0 %v2997
      %v2999 = vpop.xlane.xlu0 %2998
      %v3000 = vsel %vm650, %v2656, 0.0
      %3001 = vadd.xlane.f32.xlu0 %v3000
      %v3002 = vpop.xlane.xlu0 %3001
      %v3003 = vsel %vm650, %v2657, 0.0
      %3004 = vadd.xlane.f32.xlu0 %v3003
      %v3005 = vpop.xlane.xlu0 %3004
      %v3006 = vsel %vm650, %v2658, 0.0
      %3007 = vadd.xlane.f32.xlu0 %v3006
      %v3008 = vpop.xlane.xlu0 %3007
      %v3009 = vsel %vm650, %v2659, 0.0
      %3010 = vadd.xlane.f32.xlu0 %v3009
      %v3011 = vpop.xlane.xlu0 %3010
      %v3012 = vsel %vm650, %v2660, 0.0
      %3013 = vadd.xlane.f32.xlu0 %v3012
      %v3014 = vpop.xlane.xlu0 %3013
      %v3015 = vsel %vm650, %v2661, 0.0
      %3016 = vadd.xlane.f32.xlu0 %v3015
      %v3017 = vpop.xlane.xlu0 %3016
      %v3018 = vsel %vm650, %v2662, 0.0
      %3019 = vadd.xlane.f32.xlu0 %v3018
      %v3020 = vpop.xlane.xlu0 %3019
      %v3021 = vsel %vm650, %v2663, 0.0
      %3022 = vadd.xlane.f32.xlu0 %v3021
      %v3023 = vpop.xlane.xlu0 %3022
      %v3024 = vsel %vm650, %v2664, 0.0
      %3025 = vadd.xlane.f32.xlu0 %v3024
      %v3026 = vpop.xlane.xlu0 %3025
      %v3027 = vsel %vm650, %v2665, 0.0
      %3028 = vadd.xlane.f32.xlu0 %v3027
      %v3029 = vpop.xlane.xlu0 %3028
      %v3030 = vsel %vm650, %v2666, 0.0
      %3031 = vadd.xlane.f32.xlu0 %v3030
      %v3032 = vpop.xlane.xlu0 %3031
      %v3033 = vsel %vm650, %v2667, 0.0
      %3034 = vadd.xlane.f32.xlu0 %v3033
      %v3035 = vpop.xlane.xlu0 %3034
      %v3036 = vsel %vm650, %v2668, 0.0
      %3037 = vadd.xlane.f32.xlu0 %v3036
      %v3038 = vpop.xlane.xlu0 %3037
      %v3039 = vsel %vm650, %v2669, 0.0
      %3040 = vadd.xlane.f32.xlu0 %v3039
      %v3041 = vpop.xlane.xlu0 %3040
      %v3042 = vsel %vm650, %v2670, 0.0
      %3043 = vadd.xlane.f32.xlu0 %v3042
      %v3044 = vpop.xlane.xlu0 %3043
      %v3045 = vsel %vm650, %v2671, 0.0
      %3046 = vadd.xlane.f32.xlu0 %v3045
      %v3047 = vpop.xlane.xlu0 %3046
      %v3048 = vsel %vm650, %v2672, 0.0
      %3049 = vadd.xlane.f32.xlu0 %v3048
      %v3050 = vpop.xlane.xlu0 %3049
      %v3051 = vsel %vm650, %v2673, 0.0
      %3052 = vadd.xlane.f32.xlu0 %v3051
      %v3053 = vpop.xlane.xlu0 %3052
      %v3054 = vsel %vm650, %v2674, 0.0
      %3055 = vadd.xlane.f32.xlu0 %v3054
      %v3056 = vpop.xlane.xlu0 %3055
      %v3057 = vsel %vm650, %v2675, 0.0
      %3058 = vadd.xlane.f32.xlu0 %v3057
      %v3059 = vpop.xlane.xlu0 %3058
      %v3060 = vadd.f32 %v2415, %v2678
      %v3061 = vadd.f32 %v2416, %v2681
      %v3062 = vadd.f32 %v2417, %v2684
      %v3063 = vadd.f32 %v2418, %v2687
      %v3064 = vadd.f32 %v2419, %v2690
      %v3065 = vadd.f32 %v2420, %v2693
      %v3066 = vadd.f32 %v2421, %v2696
      %v3067 = vadd.f32 %v2422, %v2699
      %v3068 = vadd.f32 %v2423, %v2702
      %v3069 = vadd.f32 %v2424, %v2705
      %v3070 = vadd.f32 %v2425, %v2708
      %v3071 = vadd.f32 %v2426, %v2711
      %v3072 = vadd.f32 %v2427, %v2714
      %v3073 = vadd.f32 %v2428, %v2717
      %v3074 = vadd.f32 %v2429, %v2720
      %v3075 = vadd.f32 %v2430, %v2723
      %v3076 = vadd.f32 %v2431, %v2726
      %v3077 = vadd.f32 %v2432, %v2729
      %v3078 = vadd.f32 %v2433, %v2732
      %v3079 = vadd.f32 %v2434, %v2735
      %v3080 = vadd.f32 %v2435, %v2738
      %v3081 = vadd.f32 %v2436, %v2741
      %v3082 = vadd.f32 %v2437, %v2744
      %v3083 = vadd.f32 %v2438, %v2747
      %v3084 = vadd.f32 %v2439, %v2750
      %v3085 = vadd.f32 %v2440, %v2753
      %v3086 = vadd.f32 %v2441, %v2756
      %v3087 = vadd.f32 %v2442, %v2759
      %v3088 = vadd.f32 %v2443, %v2762
      %v3089 = vadd.f32 %v2444, %v2765
      %v3090 = vadd.f32 %v2445, %v2768
      %v3091 = vadd.f32 %v2446, %v2771
      %v3092 = vadd.f32 %v2447, %v2774
      %v3093 = vadd.f32 %v2448, %v2777
      %v3094 = vadd.f32 %v2449, %v2780
      %v3095 = vadd.f32 %v2450, %v2783
      %v3096 = vadd.f32 %v2451, %v2786
      %v3097 = vadd.f32 %v2452, %v2789
      %v3098 = vadd.f32 %v2453, %v2792
      %v3099 = vadd.f32 %v2454, %v2795
      %v3100 = vadd.f32 %v2455, %v2798
      %v3101 = vadd.f32 %v2456, %v2801
      %v3102 = vadd.f32 %v2457, %v2804
      %v3103 = vadd.f32 %v2458, %v2807
      %v3104 = vadd.f32 %v2459, %v2810
      %v3105 = vadd.f32 %v2460, %v2813
      %v3106 = vadd.f32 %v2461, %v2816
      %v3107 = vadd.f32 %v2462, %v2819
      %v3108 = vadd.f32 %v2463, %v2822
      %v3109 = vadd.f32 %v2464, %v2825
      %v3110 = vadd.f32 %v2465, %v2828
      %v3111 = vadd.f32 %v2466, %v2831
      %v3112 = vadd.f32 %v2467, %v2834
      %v3113 = vadd.f32 %v2468, %v2837
      %v3114 = vadd.f32 %v2469, %v2840
      %v3115 = vadd.f32 %v2470, %v2843
      %v3116 = vadd.f32 %v2471, %v2846
      %v3117 = vadd.f32 %v2472, %v2849
      %v3118 = vadd.f32 %v2473, %v2852
      %v3119 = vadd.f32 %v2474, %v2855
      %v3120 = vadd.f32 %v2475, %v2858
      %v3121 = vadd.f32 %v2476, %v2861
      %v3122 = vadd.f32 %v2477, %v2864
      %v3123 = vadd.f32 %v2478, %v2867
      %v3124 = vadd.f32 %v2479, %v2870
      %v3125 = vadd.f32 %v2480, %v2873
      %v3126 = vadd.f32 %v2481, %v2876
      %v3127 = vadd.f32 %v2482, %v2879
      %v3128 = vadd.f32 %v2483, %v2882
      %v3129 = vadd.f32 %v2484, %v2885
      %v3130 = vadd.f32 %v2485, %v2888
      %v3131 = vadd.f32 %v2486, %v2891
      %v3132 = vadd.f32 %v2487, %v2894
      %v3133 = vadd.f32 %v2488, %v2897
      %v3134 = vadd.f32 %v2489, %v2900
      %v3135 = vadd.f32 %v2490, %v2903
      %v3136 = vadd.f32 %v2491, %v2906
      %v3137 = vadd.f32 %v2492, %v2909
      %v3138 = vadd.f32 %v2493, %v2912
      %v3139 = vadd.f32 %v2494, %v2915
      %v3140 = vadd.f32 %v2495, %v2918
      %v3141 = vadd.f32 %v2496, %v2921
      %v3142 = vadd.f32 %v2497, %v2924
      %v3143 = vadd.f32 %v2498, %v2927
      %v3144 = vadd.f32 %v2499, %v2930
      %v3145 = vadd.f32 %v2500, %v2933
      %v3146 = vadd.f32 %v2501, %v2936
      %v3147 = vadd.f32 %v2502, %v2939
      %v3148 = vadd.f32 %v2503, %v2942
      %v3149 = vadd.f32 %v2504, %v2945
      %v3150 = vadd.f32 %v2505, %v2948
      %v3151 = vadd.f32 %v2506, %v2951
      %v3152 = vadd.f32 %v2507, %v2954
      %v3153 = vadd.f32 %v2508, %v2957
      %v3154 = vadd.f32 %v2509, %v2960
      %v3155 = vadd.f32 %v2510, %v2963
      %v3156 = vadd.f32 %v2511, %v2966
      %v3157 = vadd.f32 %v2512, %v2969
      %v3158 = vadd.f32 %v2513, %v2972
      %v3159 = vadd.f32 %v2514, %v2975
      %v3160 = vadd.f32 %v2515, %v2978
      %v3161 = vadd.f32 %v2516, %v2981
      %v3162 = vadd.f32 %v2517, %v2984
      %v3163 = vadd.f32 %v2518, %v2987
      %v3164 = vadd.f32 %v2519, %v2990
      %v3165 = vadd.f32 %v2520, %v2993
      %v3166 = vadd.f32 %v2521, %v2996
      %v3167 = vadd.f32 %v2522, %v2999
      %v3168 = vadd.f32 %v2523, %v3002
      %v3169 = vadd.f32 %v2524, %v3005
      %v3170 = vadd.f32 %v2525, %v3008
      %v3171 = vadd.f32 %v2526, %v3011
      %v3172 = vadd.f32 %v2527, %v3014
      %v3173 = vadd.f32 %v2528, %v3017
      %v3174 = vadd.f32 %v2529, %v3020
      %v3175 = vadd.f32 %v2530, %v3023
      %v3176 = vadd.f32 %v2531, %v3026
      %v3177 = vadd.f32 %v2532, %v3029
      %v3178 = vadd.f32 %v2533, %v3032
      %v3179 = vadd.f32 %v2534, %v3035
      %v3180 = vadd.f32 %v2535, %v3038
      %v3181 = vadd.f32 %v2536, %v3041
      %v3182 = vadd.f32 %v2537, %v3044
      %v3183 = vadd.f32 %v2538, %v3047
      %v3184 = vadd.f32 %v2539, %v3050
      %v3185 = vadd.f32 %v2540, %v3053
      %v3186 = vadd.f32 %v2541, %v3056
      %v3187 = vadd.f32 %v2542, %v3059
      %v3188 = vunpack.c.l.bf16 %v390
      %v3189 = vperm.slane %v392, 3
      %v3190 = vmul.f32 %v397, %v3189
      %v3191 = vmul.f32 %v398, %v3189
      %v3192 = vmul.f32 %v399, %v3189
      %v3193 = vmul.f32 %v400, %v3189
      %v3194 = vmul.f32 %v1164, %v3189
      %v3195 = vmul.f32 %v401, %v3189
      %v3196 = vmul.f32 %v402, %v3189
      %v3197 = vmul.f32 %v403, %v3189
      %v3198 = vmul.f32 %v404, %v3189
      %v3199 = vmul.f32 %v1165, %v3189
      %v3200 = vmul.f32 %v405, %v3189
      %v3201 = vmul.f32 %v406, %v3189
      %v3202 = vmul.f32 %v407, %v3189
      %v3203 = vmul.f32 %v408, %v3189
      %v3204 = vmul.f32 %v1166, %v3189
      %v3205 = vmul.f32 %v409, %v3189
      %v3206 = vmul.f32 %v410, %v3189
      %v3207 = vmul.f32 %v411, %v3189
      %v3208 = vmul.f32 %v412, %v3189
      %v3209 = vmul.f32 %v1167, %v3189
      %v3210 = vmul.f32 %v413, %v3189
      %v3211 = vmul.f32 %v414, %v3189
      %v3212 = vmul.f32 %v415, %v3189
      %v3213 = vmul.f32 %v416, %v3189
      %v3214 = vmul.f32 %v1168, %v3189
      %v3215 = vmul.f32 %v417, %v3189
      %v3216 = vmul.f32 %v418, %v3189
      %v3217 = vmul.f32 %v419, %v3189
      %v3218 = vmul.f32 %v420, %v3189
      %v3219 = vmul.f32 %v1169, %v3189
      %v3220 = vmul.f32 %v421, %v3189
      %v3221 = vmul.f32 %v422, %v3189
      %v3222 = vmul.f32 %v423, %v3189
      %v3223 = vmul.f32 %v424, %v3189
      %v3224 = vmul.f32 %v1170, %v3189
      %v3225 = vmul.f32 %v425, %v3189
      %v3226 = vmul.f32 %v426, %v3189
      %v3227 = vmul.f32 %v427, %v3189
      %v3228 = vmul.f32 %v428, %v3189
      %v3229 = vmul.f32 %v1171, %v3189
      %v3230 = vmul.f32 %v429, %v3189
      %v3231 = vmul.f32 %v430, %v3189
      %v3232 = vmul.f32 %v431, %v3189
      %v3233 = vmul.f32 %v432, %v3189
      %v3234 = vmul.f32 %v1172, %v3189
      %v3235 = vmul.f32 %v433, %v3189
      %v3236 = vmul.f32 %v434, %v3189
      %v3237 = vmul.f32 %v435, %v3189
      %v3238 = vmul.f32 %v436, %v3189
      %v3239 = vmul.f32 %v1173, %v3189
      %v3240 = vmul.f32 %v437, %v3189
      %v3241 = vmul.f32 %v438, %v3189
      %v3242 = vmul.f32 %v439, %v3189
      %v3243 = vmul.f32 %v440, %v3189
      %v3244 = vmul.f32 %v1174, %v3189
      %v3245 = vmul.f32 %v441, %v3189
      %v3246 = vmul.f32 %v442, %v3189
      %v3247 = vmul.f32 %v443, %v3189
      %v3248 = vmul.f32 %v444, %v3189
      %v3249 = vmul.f32 %v1175, %v3189
      %v3250 = vmul.f32 %v445, %v3189
      %v3251 = vmul.f32 %v446, %v3189
      %v3252 = vmul.f32 %v447, %v3189
      %v3253 = vmul.f32 %v448, %v3189
      %v3254 = vmul.f32 %v1176, %v3189
      %v3255 = vmul.f32 %v449, %v3189
      %v3256 = vmul.f32 %v450, %v3189
      %v3257 = vmul.f32 %v451, %v3189
      %v3258 = vmul.f32 %v452, %v3189
      %v3259 = vmul.f32 %v1177, %v3189
      %v3260 = vmul.f32 %v453, %v3189
      %v3261 = vmul.f32 %v454, %v3189
      %v3262 = vmul.f32 %v455, %v3189
      %v3263 = vmul.f32 %v456, %v3189
      %v3264 = vmul.f32 %v1178, %v3189
      %v3265 = vmul.f32 %v457, %v3189
      %v3266 = vmul.f32 %v458, %v3189
      %v3267 = vmul.f32 %v459, %v3189
      %v3268 = vmul.f32 %v460, %v3189
      %v3269 = vmul.f32 %v1179, %v3189
      %v3270 = vmul.f32 %v461, %v3189
      %v3271 = vmul.f32 %v462, %v3189
      %v3272 = vmul.f32 %v463, %v3189
      %v3273 = vmul.f32 %v464, %v3189
      %v3274 = vmul.f32 %v1180, %v3189
      %v3275 = vmul.f32 %v465, %v3189
      %v3276 = vmul.f32 %v466, %v3189
      %v3277 = vmul.f32 %v467, %v3189
      %v3278 = vmul.f32 %v468, %v3189
      %v3279 = vmul.f32 %v1181, %v3189
      %v3280 = vmul.f32 %v469, %v3189
      %v3281 = vmul.f32 %v470, %v3189
      %v3282 = vmul.f32 %v471, %v3189
      %v3283 = vmul.f32 %v472, %v3189
      %v3284 = vmul.f32 %v1182, %v3189
      %v3285 = vmul.f32 %v473, %v3189
      %v3286 = vmul.f32 %v474, %v3189
      %v3287 = vmul.f32 %v475, %v3189
      %v3288 = vmul.f32 %v476, %v3189
      %v3289 = vmul.f32 %v1183, %v3189
      %v3290 = vmul.f32 %v477, %v3189
      %v3291 = vmul.f32 %v478, %v3189
      %v3292 = vmul.f32 %v479, %v3189
      %v3293 = vmul.f32 %v480, %v3189
      %v3294 = vmul.f32 %v1184, %v3189
      %v3295 = vmul.f32 %v481, %v3189
      %v3296 = vmul.f32 %v482, %v3189
      %v3297 = vmul.f32 %v483, %v3189
      %v3298 = vmul.f32 %v484, %v3189
      %v3299 = vmul.f32 %v1185, %v3189
      %v3300 = vmul.f32 %v485, %v3189
      %v3301 = vmul.f32 %v486, %v3189
      %v3302 = vmul.f32 %v487, %v3189
      %v3303 = vmul.f32 %v488, %v3189
      %v3304 = vmul.f32 %v1186, %v3189
      %v3305 = vmul.f32 %v489, %v3189
      %v3306 = vmul.f32 %v490, %v3189
      %v3307 = vmul.f32 %v491, %v3189
      %v3308 = vmul.f32 %v492, %v3189
      %v3309 = vmul.f32 %v1187, %v3189
      %v3310 = vmul.f32 %v493, %v3189
      %v3311 = vmul.f32 %v494, %v3189
      %v3312 = vmul.f32 %v495, %v3189
      %v3313 = vmul.f32 %v496, %v3189
      %v3314 = vmul.f32 %v1188, %v3189
      %v3315 = vmul.f32 %v497, %v3189
      %v3316 = vmul.f32 %v498, %v3189
      %v3317 = vmul.f32 %v499, %v3189
      %v3318 = vmul.f32 %v500, %v3189
      %v3319 = vmul.f32 %v1189, %v3189
      %v3320 = vmul.f32 %v501, %v3189
      %v3321 = vmul.f32 %v502, %v3189
      %v3322 = vmul.f32 %v503, %v3189
      %v3323 = vmul.f32 %v504, %v3189
      %v3324 = vmul.f32 %v1190, %v3189
      %v3325 = vmul.f32 %v505, %v3189
      %v3326 = vmul.f32 %v506, %v3189
      %v3327 = vmul.f32 %v507, %v3189
      %v3328 = vmul.f32 %v508, %v3189
      %v3329 = vmul.f32 %v1191, %v3189
      %v3330 = vmul.f32 %v509, %v3189
      %v3331 = vmul.f32 %v510, %v3189
      %v3332 = vmul.f32 %v511, %v3189
      %v3333 = vmul.f32 %v512, %v3189
      %v3334 = vmul.f32 %v1192, %v3189
      %v3335 = vmul.f32 %v513, %v3189
      %v3336 = vmul.f32 %v514, %v3189
      %v3337 = vmul.f32 %v515, %v3189
      %v3338 = vmul.f32 %v516, %v3189
      %v3339 = vmul.f32 %v1193, %v3189
      %v3340 = vmul.f32 %v517, %v3189
      %v3341 = vmul.f32 %v518, %v3189
      %v3342 = vmul.f32 %v519, %v3189
      %v3343 = vmul.f32 %v520, %v3189
      %v3344 = vmul.f32 %v1194, %v3189
      %v3345 = vmul.f32 %v2543, %v3189
      %v3346 = vmul.f32 %v2544, %v3189
      %v3347 = vmul.f32 %v2545, %v3189
      %v3348 = vmul.f32 %v2546, %v3189
      %v3349 = vmul.f32 %v3188, %v3189
      %v3350 = vsel %vm1356, %v3190, 0.0
      %3351 = vadd.xlane.f32.xlu0 %v3350
      %v3352 = vpop.xlane.xlu0 %3351
      %v3353 = vsel %vm650, %v3191, 0.0
      %3354 = vadd.xlane.f32.xlu0 %v3353
      %v3355 = vpop.xlane.xlu0 %3354
      %v3356 = vsel %vm650, %v3192, 0.0
      %3357 = vadd.xlane.f32.xlu0 %v3356
      %v3358 = vpop.xlane.xlu0 %3357
      %v3359 = vsel %vm650, %v3193, 0.0
      %3360 = vadd.xlane.f32.xlu0 %v3359
      %v3361 = vpop.xlane.xlu0 %3360
      %v3362 = vsel %vm1369, %v3194, 0.0
      %3363 = vadd.xlane.f32.xlu0 %v3362
      %v3364 = vpop.xlane.xlu0 %3363
      %v3365 = vsel %vm1356, %v3195, 0.0
      %3366 = vadd.xlane.f32.xlu0 %v3365
      %v3367 = vpop.xlane.xlu0 %3366
      %v3368 = vsel %vm650, %v3196, 0.0
      %3369 = vadd.xlane.f32.xlu0 %v3368
      %v3370 = vpop.xlane.xlu0 %3369
      %v3371 = vsel %vm650, %v3197, 0.0
      %3372 = vadd.xlane.f32.xlu0 %v3371
      %v3373 = vpop.xlane.xlu0 %3372
      %v3374 = vsel %vm650, %v3198, 0.0
      %3375 = vadd.xlane.f32.xlu0 %v3374
      %v3376 = vpop.xlane.xlu0 %3375
      %v3377 = vsel %vm1369, %v3199, 0.0
      %3378 = vadd.xlane.f32.xlu0 %v3377
      %v3379 = vpop.xlane.xlu0 %3378
      %v3380 = vsel %vm1356, %v3200, 0.0
      %3381 = vadd.xlane.f32.xlu0 %v3380
      %v3382 = vpop.xlane.xlu0 %3381
      %v3383 = vsel %vm650, %v3201, 0.0
      %3384 = vadd.xlane.f32.xlu0 %v3383
      %v3385 = vpop.xlane.xlu0 %3384
      %v3386 = vsel %vm650, %v3202, 0.0
      %3387 = vadd.xlane.f32.xlu0 %v3386
      %v3388 = vpop.xlane.xlu0 %3387
      %v3389 = vsel %vm650, %v3203, 0.0
      %3390 = vadd.xlane.f32.xlu0 %v3389
      %v3391 = vpop.xlane.xlu0 %3390
      %v3392 = vsel %vm1369, %v3204, 0.0
      %3393 = vadd.xlane.f32.xlu0 %v3392
      %v3394 = vpop.xlane.xlu0 %3393
      %v3395 = vsel %vm1356, %v3205, 0.0
      %3396 = vadd.xlane.f32.xlu0 %v3395
      %v3397 = vpop.xlane.xlu0 %3396
      %v3398 = vsel %vm650, %v3206, 0.0
      %3399 = vadd.xlane.f32.xlu0 %v3398
      %v3400 = vpop.xlane.xlu0 %3399
      %v3401 = vsel %vm650, %v3207, 0.0
      %3402 = vadd.xlane.f32.xlu0 %v3401
      %v3403 = vpop.xlane.xlu0 %3402
      %v3404 = vsel %vm650, %v3208, 0.0
      %3405 = vadd.xlane.f32.xlu0 %v3404
      %v3406 = vpop.xlane.xlu0 %3405
      %v3407 = vsel %vm1369, %v3209, 0.0
      %3408 = vadd.xlane.f32.xlu0 %v3407
      %v3409 = vpop.xlane.xlu0 %3408
      %v3410 = vsel %vm1356, %v3210, 0.0
      %3411 = vadd.xlane.f32.xlu0 %v3410
      %v3412 = vpop.xlane.xlu0 %3411
      %v3413 = vsel %vm650, %v3211, 0.0
      %3414 = vadd.xlane.f32.xlu0 %v3413
      %v3415 = vpop.xlane.xlu0 %3414
      %v3416 = vsel %vm650, %v3212, 0.0
      %3417 = vadd.xlane.f32.xlu0 %v3416
      %v3418 = vpop.xlane.xlu0 %3417
      %v3419 = vsel %vm650, %v3213, 0.0
      %3420 = vadd.xlane.f32.xlu0 %v3419
      %v3421 = vpop.xlane.xlu0 %3420
      %v3422 = vsel %vm1369, %v3214, 0.0
      %3423 = vadd.xlane.f32.xlu0 %v3422
      %v3424 = vpop.xlane.xlu0 %3423
      %v3425 = vsel %vm1356, %v3215, 0.0
      %3426 = vadd.xlane.f32.xlu0 %v3425
      %v3427 = vpop.xlane.xlu0 %3426
      %v3428 = vsel %vm650, %v3216, 0.0
      %3429 = vadd.xlane.f32.xlu0 %v3428
      %v3430 = vpop.xlane.xlu0 %3429
      %v3431 = vsel %vm650, %v3217, 0.0
      %3432 = vadd.xlane.f32.xlu0 %v3431
      %v3433 = vpop.xlane.xlu0 %3432
      %v3434 = vsel %vm650, %v3218, 0.0
      %3435 = vadd.xlane.f32.xlu0 %v3434
      %v3436 = vpop.xlane.xlu0 %3435
      %v3437 = vsel %vm1369, %v3219, 0.0
      %3438 = vadd.xlane.f32.xlu0 %v3437
      %v3439 = vpop.xlane.xlu0 %3438
      %v3440 = vsel %vm1356, %v3220, 0.0
      %3441 = vadd.xlane.f32.xlu0 %v3440
      %v3442 = vpop.xlane.xlu0 %3441
      %v3443 = vsel %vm650, %v3221, 0.0
      %3444 = vadd.xlane.f32.xlu0 %v3443
      %v3445 = vpop.xlane.xlu0 %3444
      %v3446 = vsel %vm650, %v3222, 0.0
      %3447 = vadd.xlane.f32.xlu0 %v3446
      %v3448 = vpop.xlane.xlu0 %3447
      %v3449 = vsel %vm650, %v3223, 0.0
      %3450 = vadd.xlane.f32.xlu0 %v3449
      %v3451 = vpop.xlane.xlu0 %3450
      %v3452 = vsel %vm1369, %v3224, 0.0
      %3453 = vadd.xlane.f32.xlu0 %v3452
      %v3454 = vpop.xlane.xlu0 %3453
      %v3455 = vsel %vm1356, %v3225, 0.0
      %3456 = vadd.xlane.f32.xlu0 %v3455
      %v3457 = vpop.xlane.xlu0 %3456
      %v3458 = vsel %vm650, %v3226, 0.0
      %3459 = vadd.xlane.f32.xlu0 %v3458
      %v3460 = vpop.xlane.xlu0 %3459
      %v3461 = vsel %vm650, %v3227, 0.0
      %3462 = vadd.xlane.f32.xlu0 %v3461
      %v3463 = vpop.xlane.xlu0 %3462
      %v3464 = vsel %vm650, %v3228, 0.0
      %3465 = vadd.xlane.f32.xlu0 %v3464
      %v3466 = vpop.xlane.xlu0 %3465
      %v3467 = vsel %vm1369, %v3229, 0.0
      %3468 = vadd.xlane.f32.xlu0 %v3467
      %v3469 = vpop.xlane.xlu0 %3468
      %v3470 = vsel %vm1356, %v3230, 0.0
      %3471 = vadd.xlane.f32.xlu0 %v3470
      %v3472 = vpop.xlane.xlu0 %3471
      %v3473 = vsel %vm650, %v3231, 0.0
      %3474 = vadd.xlane.f32.xlu0 %v3473
      %v3475 = vpop.xlane.xlu0 %3474
      %v3476 = vsel %vm650, %v3232, 0.0
      %3477 = vadd.xlane.f32.xlu0 %v3476
      %v3478 = vpop.xlane.xlu0 %3477
      %v3479 = vsel %vm650, %v3233, 0.0
      %3480 = vadd.xlane.f32.xlu0 %v3479
      %v3481 = vpop.xlane.xlu0 %3480
      %v3482 = vsel %vm1369, %v3234, 0.0
      %3483 = vadd.xlane.f32.xlu0 %v3482
      %v3484 = vpop.xlane.xlu0 %3483
      %v3485 = vsel %vm1356, %v3235, 0.0
      %3486 = vadd.xlane.f32.xlu0 %v3485
      %v3487 = vpop.xlane.xlu0 %3486
      %v3488 = vsel %vm650, %v3236, 0.0
      %3489 = vadd.xlane.f32.xlu0 %v3488
      %v3490 = vpop.xlane.xlu0 %3489
      %v3491 = vsel %vm650, %v3237, 0.0
      %3492 = vadd.xlane.f32.xlu0 %v3491
      %v3493 = vpop.xlane.xlu0 %3492
      %v3494 = vsel %vm650, %v3238, 0.0
      %3495 = vadd.xlane.f32.xlu0 %v3494
      %v3496 = vpop.xlane.xlu0 %3495
      %v3497 = vsel %vm1369, %v3239, 0.0
      %3498 = vadd.xlane.f32.xlu0 %v3497
      %v3499 = vpop.xlane.xlu0 %3498
      %v3500 = vsel %vm1356, %v3240, 0.0
      %3501 = vadd.xlane.f32.xlu0 %v3500
      %v3502 = vpop.xlane.xlu0 %3501
      %v3503 = vsel %vm650, %v3241, 0.0
      %3504 = vadd.xlane.f32.xlu0 %v3503
      %v3505 = vpop.xlane.xlu0 %3504
      %v3506 = vsel %vm650, %v3242, 0.0
      %3507 = vadd.xlane.f32.xlu0 %v3506
      %v3508 = vpop.xlane.xlu0 %3507
      %v3509 = vsel %vm650, %v3243, 0.0
      %3510 = vadd.xlane.f32.xlu0 %v3509
      %v3511 = vpop.xlane.xlu0 %3510
      %v3512 = vsel %vm1369, %v3244, 0.0
      %3513 = vadd.xlane.f32.xlu0 %v3512
      %v3514 = vpop.xlane.xlu0 %3513
      %v3515 = vsel %vm1356, %v3245, 0.0
      %3516 = vadd.xlane.f32.xlu0 %v3515
      %v3517 = vpop.xlane.xlu0 %3516
      %v3518 = vsel %vm650, %v3246, 0.0
      %3519 = vadd.xlane.f32.xlu0 %v3518
      %v3520 = vpop.xlane.xlu0 %3519
      %v3521 = vsel %vm650, %v3247, 0.0
      %3522 = vadd.xlane.f32.xlu0 %v3521
      %v3523 = vpop.xlane.xlu0 %3522
      %v3524 = vsel %vm650, %v3248, 0.0
      %3525 = vadd.xlane.f32.xlu0 %v3524
      %v3526 = vpop.xlane.xlu0 %3525
      %v3527 = vsel %vm1369, %v3249, 0.0
      %3528 = vadd.xlane.f32.xlu0 %v3527
      %v3529 = vpop.xlane.xlu0 %3528
      %v3530 = vsel %vm1356, %v3250, 0.0
      %3531 = vadd.xlane.f32.xlu0 %v3530
      %v3532 = vpop.xlane.xlu0 %3531
      %v3533 = vsel %vm650, %v3251, 0.0
      %3534 = vadd.xlane.f32.xlu0 %v3533
      %v3535 = vpop.xlane.xlu0 %3534
      %v3536 = vsel %vm650, %v3252, 0.0
      %3537 = vadd.xlane.f32.xlu0 %v3536
      %v3538 = vpop.xlane.xlu0 %3537
      %v3539 = vsel %vm650, %v3253, 0.0
      %3540 = vadd.xlane.f32.xlu0 %v3539
      %v3541 = vpop.xlane.xlu0 %3540
      %v3542 = vsel %vm1369, %v3254, 0.0
      %3543 = vadd.xlane.f32.xlu0 %v3542
      %v3544 = vpop.xlane.xlu0 %3543
      %v3545 = vsel %vm1356, %v3255, 0.0
      %3546 = vadd.xlane.f32.xlu0 %v3545
      %v3547 = vpop.xlane.xlu0 %3546
      %v3548 = vsel %vm650, %v3256, 0.0
      %3549 = vadd.xlane.f32.xlu0 %v3548
      %v3550 = vpop.xlane.xlu0 %3549
      %v3551 = vsel %vm650, %v3257, 0.0
      %3552 = vadd.xlane.f32.xlu0 %v3551
      %v3553 = vpop.xlane.xlu0 %3552
      %v3554 = vsel %vm650, %v3258, 0.0
      %3555 = vadd.xlane.f32.xlu0 %v3554
      %v3556 = vpop.xlane.xlu0 %3555
      %v3557 = vsel %vm1369, %v3259, 0.0
      %3558 = vadd.xlane.f32.xlu0 %v3557
      %v3559 = vpop.xlane.xlu0 %3558
      %v3560 = vsel %vm1356, %v3260, 0.0
      %3561 = vadd.xlane.f32.xlu0 %v3560
      %v3562 = vpop.xlane.xlu0 %3561
      %v3563 = vsel %vm650, %v3261, 0.0
      %3564 = vadd.xlane.f32.xlu0 %v3563
      %v3565 = vpop.xlane.xlu0 %3564
      %v3566 = vsel %vm650, %v3262, 0.0
      %3567 = vadd.xlane.f32.xlu0 %v3566
      %v3568 = vpop.xlane.xlu0 %3567
      %v3569 = vsel %vm650, %v3263, 0.0
      %3570 = vadd.xlane.f32.xlu0 %v3569
      %v3571 = vpop.xlane.xlu0 %3570
      %v3572 = vsel %vm1369, %v3264, 0.0
      %3573 = vadd.xlane.f32.xlu0 %v3572
      %v3574 = vpop.xlane.xlu0 %3573
      %v3575 = vsel %vm1356, %v3265, 0.0
      %3576 = vadd.xlane.f32.xlu0 %v3575
      %v3577 = vpop.xlane.xlu0 %3576
      %v3578 = vsel %vm650, %v3266, 0.0
      %3579 = vadd.xlane.f32.xlu0 %v3578
      %v3580 = vpop.xlane.xlu0 %3579
      %v3581 = vsel %vm650, %v3267, 0.0
      %3582 = vadd.xlane.f32.xlu0 %v3581
      %v3583 = vpop.xlane.xlu0 %3582
      %v3584 = vsel %vm650, %v3268, 0.0
      %3585 = vadd.xlane.f32.xlu0 %v3584
      %v3586 = vpop.xlane.xlu0 %3585
      %v3587 = vsel %vm1369, %v3269, 0.0
      %3588 = vadd.xlane.f32.xlu0 %v3587
      %v3589 = vpop.xlane.xlu0 %3588
      %v3590 = vsel %vm1356, %v3270, 0.0
      %3591 = vadd.xlane.f32.xlu0 %v3590
      %v3592 = vpop.xlane.xlu0 %3591
      %v3593 = vsel %vm650, %v3271, 0.0
      %3594 = vadd.xlane.f32.xlu0 %v3593
      %v3595 = vpop.xlane.xlu0 %3594
      %v3596 = vsel %vm650, %v3272, 0.0
      %3597 = vadd.xlane.f32.xlu0 %v3596
      %v3598 = vpop.xlane.xlu0 %3597
      %v3599 = vsel %vm650, %v3273, 0.0
      %3600 = vadd.xlane.f32.xlu0 %v3599
      %v3601 = vpop.xlane.xlu0 %3600
      %v3602 = vsel %vm1369, %v3274, 0.0
      %3603 = vadd.xlane.f32.xlu0 %v3602
      %v3604 = vpop.xlane.xlu0 %3603
      %v3605 = vsel %vm1356, %v3275, 0.0
      %3606 = vadd.xlane.f32.xlu0 %v3605
      %v3607 = vpop.xlane.xlu0 %3606
      %v3608 = vsel %vm650, %v3276, 0.0
      %3609 = vadd.xlane.f32.xlu0 %v3608
      %v3610 = vpop.xlane.xlu0 %3609
      %v3611 = vsel %vm650, %v3277, 0.0
      %3612 = vadd.xlane.f32.xlu0 %v3611
      %v3613 = vpop.xlane.xlu0 %3612
      %v3614 = vsel %vm650, %v3278, 0.0
      %3615 = vadd.xlane.f32.xlu0 %v3614
      %v3616 = vpop.xlane.xlu0 %3615
      %v3617 = vsel %vm1369, %v3279, 0.0
      %3618 = vadd.xlane.f32.xlu0 %v3617
      %v3619 = vpop.xlane.xlu0 %3618
      %v3620 = vsel %vm1356, %v3280, 0.0
      %3621 = vadd.xlane.f32.xlu0 %v3620
      %v3622 = vpop.xlane.xlu0 %3621
      %v3623 = vsel %vm650, %v3281, 0.0
      %3624 = vadd.xlane.f32.xlu0 %v3623
      %v3625 = vpop.xlane.xlu0 %3624
      %v3626 = vsel %vm650, %v3282, 0.0
      %3627 = vadd.xlane.f32.xlu0 %v3626
      %v3628 = vpop.xlane.xlu0 %3627
      %v3629 = vsel %vm650, %v3283, 0.0
      %3630 = vadd.xlane.f32.xlu0 %v3629
      %v3631 = vpop.xlane.xlu0 %3630
      %v3632 = vsel %vm1369, %v3284, 0.0
      %3633 = vadd.xlane.f32.xlu0 %v3632
      %v3634 = vpop.xlane.xlu0 %3633
      %v3635 = vsel %vm1356, %v3285, 0.0
      %3636 = vadd.xlane.f32.xlu0 %v3635
      %v3637 = vpop.xlane.xlu0 %3636
      %v3638 = vsel %vm650, %v3286, 0.0
      %3639 = vadd.xlane.f32.xlu0 %v3638
      %v3640 = vpop.xlane.xlu0 %3639
      %v3641 = vsel %vm650, %v3287, 0.0
      %3642 = vadd.xlane.f32.xlu0 %v3641
      %v3643 = vpop.xlane.xlu0 %3642
      %v3644 = vsel %vm650, %v3288, 0.0
      %3645 = vadd.xlane.f32.xlu0 %v3644
      %v3646 = vpop.xlane.xlu0 %3645
      %v3647 = vsel %vm1369, %v3289, 0.0
      %3648 = vadd.xlane.f32.xlu0 %v3647
      %v3649 = vpop.xlane.xlu0 %3648
      %v3650 = vsel %vm1356, %v3290, 0.0
      %3651 = vadd.xlane.f32.xlu0 %v3650
      %v3652 = vpop.xlane.xlu0 %3651
      %v3653 = vsel %vm650, %v3291, 0.0
      %3654 = vadd.xlane.f32.xlu0 %v3653
      %v3655 = vpop.xlane.xlu0 %3654
      %v3656 = vsel %vm650, %v3292, 0.0
      %3657 = vadd.xlane.f32.xlu0 %v3656
      %v3658 = vpop.xlane.xlu0 %3657
      %v3659 = vsel %vm650, %v3293, 0.0
      %3660 = vadd.xlane.f32.xlu0 %v3659
      %v3661 = vpop.xlane.xlu0 %3660
      %v3662 = vsel %vm1369, %v3294, 0.0
      %3663 = vadd.xlane.f32.xlu0 %v3662
      %v3664 = vpop.xlane.xlu0 %3663
      %v3665 = vsel %vm1356, %v3295, 0.0
      %3666 = vadd.xlane.f32.xlu0 %v3665
      %v3667 = vpop.xlane.xlu0 %3666
      %v3668 = vsel %vm650, %v3296, 0.0
      %3669 = vadd.xlane.f32.xlu0 %v3668
      %v3670 = vpop.xlane.xlu0 %3669
      %v3671 = vsel %vm650, %v3297, 0.0
      %3672 = vadd.xlane.f32.xlu0 %v3671
      %v3673 = vpop.xlane.xlu0 %3672
      %v3674 = vsel %vm650, %v3298, 0.0
      %3675 = vadd.xlane.f32.xlu0 %v3674
      %v3676 = vpop.xlane.xlu0 %3675
      %v3677 = vsel %vm1369, %v3299, 0.0
      %3678 = vadd.xlane.f32.xlu0 %v3677
      %v3679 = vpop.xlane.xlu0 %3678
      %v3680 = vsel %vm1356, %v3300, 0.0
      %3681 = vadd.xlane.f32.xlu0 %v3680
      %v3682 = vpop.xlane.xlu0 %3681
      %v3683 = vsel %vm650, %v3301, 0.0
      %3684 = vadd.xlane.f32.xlu0 %v3683
      %v3685 = vpop.xlane.xlu0 %3684
      %v3686 = vsel %vm650, %v3302, 0.0
      %3687 = vadd.xlane.f32.xlu0 %v3686
      %v3688 = vpop.xlane.xlu0 %3687
      %v3689 = vsel %vm650, %v3303, 0.0
      %3690 = vadd.xlane.f32.xlu0 %v3689
      %v3691 = vpop.xlane.xlu0 %3690
      %v3692 = vsel %vm1369, %v3304, 0.0
      %3693 = vadd.xlane.f32.xlu0 %v3692
      %v3694 = vpop.xlane.xlu0 %3693
      %v3695 = vsel %vm1356, %v3305, 0.0
      %3696 = vadd.xlane.f32.xlu0 %v3695
      %v3697 = vpop.xlane.xlu0 %3696
      %v3698 = vsel %vm650, %v3306, 0.0
      %3699 = vadd.xlane.f32.xlu0 %v3698
      %v3700 = vpop.xlane.xlu0 %3699
      %v3701 = vsel %vm650, %v3307, 0.0
      %3702 = vadd.xlane.f32.xlu0 %v3701
      %v3703 = vpop.xlane.xlu0 %3702
      %v3704 = vsel %vm650, %v3308, 0.0
      %3705 = vadd.xlane.f32.xlu0 %v3704
      %v3706 = vpop.xlane.xlu0 %3705
      %v3707 = vsel %vm1369, %v3309, 0.0
      %3708 = vadd.xlane.f32.xlu0 %v3707
      %v3709 = vpop.xlane.xlu0 %3708
      %v3710 = vsel %vm1356, %v3310, 0.0
      %3711 = vadd.xlane.f32.xlu0 %v3710
      %v3712 = vpop.xlane.xlu0 %3711
      %v3713 = vsel %vm650, %v3311, 0.0
      %3714 = vadd.xlane.f32.xlu0 %v3713
      %v3715 = vpop.xlane.xlu0 %3714
      %v3716 = vsel %vm650, %v3312, 0.0
      %3717 = vadd.xlane.f32.xlu0 %v3716
      %v3718 = vpop.xlane.xlu0 %3717
      %v3719 = vsel %vm650, %v3313, 0.0
      %3720 = vadd.xlane.f32.xlu0 %v3719
      %v3721 = vpop.xlane.xlu0 %3720
      %v3722 = vsel %vm1369, %v3314, 0.0
      %3723 = vadd.xlane.f32.xlu0 %v3722
      %v3724 = vpop.xlane.xlu0 %3723
      %v3725 = vsel %vm1356, %v3315, 0.0
      %3726 = vadd.xlane.f32.xlu0 %v3725
      %v3727 = vpop.xlane.xlu0 %3726
      %v3728 = vsel %vm650, %v3316, 0.0
      %3729 = vadd.xlane.f32.xlu0 %v3728
      %v3730 = vpop.xlane.xlu0 %3729
      %v3731 = vsel %vm650, %v3317, 0.0
      %3732 = vadd.xlane.f32.xlu0 %v3731
      %v3733 = vpop.xlane.xlu0 %3732
      %v3734 = vsel %vm650, %v3318, 0.0
      %3735 = vadd.xlane.f32.xlu0 %v3734
      %v3736 = vpop.xlane.xlu0 %3735
      %v3737 = vsel %vm1369, %v3319, 0.0
      %3738 = vadd.xlane.f32.xlu0 %v3737
      %v3739 = vpop.xlane.xlu0 %3738
      %v3740 = vsel %vm1356, %v3320, 0.0
      %3741 = vadd.xlane.f32.xlu0 %v3740
      %v3742 = vpop.xlane.xlu0 %3741
      %v3743 = vsel %vm650, %v3321, 0.0
      %3744 = vadd.xlane.f32.xlu0 %v3743
      %v3745 = vpop.xlane.xlu0 %3744
      %v3746 = vsel %vm650, %v3322, 0.0
      %3747 = vadd.xlane.f32.xlu0 %v3746
      %v3748 = vpop.xlane.xlu0 %3747
      %v3749 = vsel %vm650, %v3323, 0.0
      %3750 = vadd.xlane.f32.xlu0 %v3749
      %v3751 = vpop.xlane.xlu0 %3750
      %v3752 = vsel %vm1369, %v3324, 0.0
      %3753 = vadd.xlane.f32.xlu0 %v3752
      %v3754 = vpop.xlane.xlu0 %3753
      %v3755 = vsel %vm1356, %v3325, 0.0
      %3756 = vadd.xlane.f32.xlu0 %v3755
      %v3757 = vpop.xlane.xlu0 %3756
      %v3758 = vsel %vm650, %v3326, 0.0
      %3759 = vadd.xlane.f32.xlu0 %v3758
      %v3760 = vpop.xlane.xlu0 %3759
      %v3761 = vsel %vm650, %v3327, 0.0
      %3762 = vadd.xlane.f32.xlu0 %v3761
      %v3763 = vpop.xlane.xlu0 %3762
      %v3764 = vsel %vm650, %v3328, 0.0
      %3765 = vadd.xlane.f32.xlu0 %v3764
      %v3766 = vpop.xlane.xlu0 %3765
      %v3767 = vsel %vm1369, %v3329, 0.0
      %3768 = vadd.xlane.f32.xlu0 %v3767
      %v3769 = vpop.xlane.xlu0 %3768
      %v3770 = vsel %vm1356, %v3330, 0.0
      %3771 = vadd.xlane.f32.xlu0 %v3770
      %v3772 = vpop.xlane.xlu0 %3771
      %v3773 = vsel %vm650, %v3331, 0.0
      %3774 = vadd.xlane.f32.xlu0 %v3773
      %v3775 = vpop.xlane.xlu0 %3774
      %v3776 = vsel %vm650, %v3332, 0.0
      %3777 = vadd.xlane.f32.xlu0 %v3776
      %v3778 = vpop.xlane.xlu0 %3777
      %v3779 = vsel %vm650, %v3333, 0.0
      %3780 = vadd.xlane.f32.xlu0 %v3779
      %v3781 = vpop.xlane.xlu0 %3780
      %v3782 = vsel %vm1369, %v3334, 0.0
      %3783 = vadd.xlane.f32.xlu0 %v3782
      %v3784 = vpop.xlane.xlu0 %3783
      %v3785 = vsel %vm1356, %v3335, 0.0
      %3786 = vadd.xlane.f32.xlu0 %v3785
      %v3787 = vpop.xlane.xlu0 %3786
      %v3788 = vsel %vm650, %v3336, 0.0
      %3789 = vadd.xlane.f32.xlu0 %v3788
      %v3790 = vpop.xlane.xlu0 %3789
      %v3791 = vsel %vm650, %v3337, 0.0
      %3792 = vadd.xlane.f32.xlu0 %v3791
      %v3793 = vpop.xlane.xlu0 %3792
      %v3794 = vsel %vm650, %v3338, 0.0
      %3795 = vadd.xlane.f32.xlu0 %v3794
      %v3796 = vpop.xlane.xlu0 %3795
      %v3797 = vsel %vm1369, %v3339, 0.0
      %3798 = vadd.xlane.f32.xlu0 %v3797
      %v3799 = vpop.xlane.xlu0 %3798
      %v3800 = vsel %vm1356, %v3340, 0.0
      %3801 = vadd.xlane.f32.xlu0 %v3800
      %v3802 = vpop.xlane.xlu0 %3801
      %v3803 = vsel %vm650, %v3341, 0.0
      %3804 = vadd.xlane.f32.xlu0 %v3803
      %v3805 = vpop.xlane.xlu0 %3804
      %v3806 = vsel %vm650, %v3342, 0.0
      %3807 = vadd.xlane.f32.xlu0 %v3806
      %v3808 = vpop.xlane.xlu0 %3807
      %v3809 = vsel %vm650, %v3343, 0.0
      %3810 = vadd.xlane.f32.xlu0 %v3809
      %v3811 = vpop.xlane.xlu0 %3810
      %v3812 = vsel %vm1369, %v3344, 0.0
      %3813 = vadd.xlane.f32.xlu0 %v3812
      %v3814 = vpop.xlane.xlu0 %3813
      %v3815 = vsel %vm1356, %v3345, 0.0
      %3816 = vadd.xlane.f32.xlu0 %v3815
      %v3817 = vpop.xlane.xlu0 %3816
      %v3818 = vsel %vm650, %v3346, 0.0
      %3819 = vadd.xlane.f32.xlu0 %v3818
      %v3820 = vpop.xlane.xlu0 %3819
      %v3821 = vsel %vm650, %v3347, 0.0
      %3822 = vadd.xlane.f32.xlu0 %v3821
      %v3823 = vpop.xlane.xlu0 %3822
      %v3824 = vsel %vm650, %v3348, 0.0
      %3825 = vadd.xlane.f32.xlu0 %v3824
      %v3826 = vpop.xlane.xlu0 %3825
      %v3827 = vsel %vm1369, %v3349, 0.0
      %3828 = vadd.xlane.f32.xlu0 %v3827
      %v3829 = vpop.xlane.xlu0 %3828
      %v3990 = vrot.slane %v3352, 1
      %v3991 = vrot.slane %v3355, 1
      %v3992 = vsel %vm1998, %v3990, %v3991
      %v3993 = vrot.slane %v3358, 1
      %v3994 = vsel %vm1998, %v3991, %v3993
      %v3995 = vrot.slane %v3361, 1
      %v3996 = vsel %vm1998, %v3993, %v3995
      %v3997 = vrot.slane %v3364, 1
      %v3998 = vsel %vm1998, %v3995, %v3997
      %v3999 = vrot.slane %v3367, 1
      %v4000 = vrot.slane %v3370, 1
      %v4001 = vsel %vm1998, %v3999, %v4000
      %v4002 = vrot.slane %v3373, 1
      %v4003 = vsel %vm1998, %v4000, %v4002
      %v4004 = vrot.slane %v3376, 1
      %v4005 = vsel %vm1998, %v4002, %v4004
      %v4006 = vrot.slane %v3379, 1
      %v4007 = vsel %vm1998, %v4004, %v4006
      %v4008 = vrot.slane %v3382, 1
      %v4009 = vrot.slane %v3385, 1
      %v4010 = vsel %vm1998, %v4008, %v4009
      %v4011 = vrot.slane %v3388, 1
      %v4012 = vsel %vm1998, %v4009, %v4011
      %v4013 = vrot.slane %v3391, 1
      %v4014 = vsel %vm1998, %v4011, %v4013
      %v4015 = vrot.slane %v3394, 1
      %v4016 = vsel %vm1998, %v4013, %v4015
      %v4017 = vrot.slane %v3397, 1
      %v4018 = vrot.slane %v3400, 1
      %v4019 = vsel %vm1998, %v4017, %v4018
      %v4020 = vrot.slane %v3403, 1
      %v4021 = vsel %vm1998, %v4018, %v4020
      %v4022 = vrot.slane %v3406, 1
      %v4023 = vsel %vm1998, %v4020, %v4022
      %v4024 = vrot.slane %v3409, 1
      %v4025 = vsel %vm1998, %v4022, %v4024
      %v4026 = vrot.slane %v3412, 1
      %v4027 = vrot.slane %v3415, 1
      %v4028 = vsel %vm1998, %v4026, %v4027
      %v4029 = vrot.slane %v3418, 1
      %v4030 = vsel %vm1998, %v4027, %v4029
      %v4031 = vrot.slane %v3421, 1
      %v4032 = vsel %vm1998, %v4029, %v4031
      %v4033 = vrot.slane %v3424, 1
      %v4034 = vsel %vm1998, %v4031, %v4033
      %v4035 = vrot.slane %v3427, 1
      %v4036 = vrot.slane %v3430, 1
      %v4037 = vsel %vm1998, %v4035, %v4036
      %v4038 = vrot.slane %v3433, 1
      %v4039 = vsel %vm1998, %v4036, %v4038
      %v4040 = vrot.slane %v3436, 1
      %v4041 = vsel %vm1998, %v4038, %v4040
      %v4042 = vrot.slane %v3439, 1
      %v4043 = vsel %vm1998, %v4040, %v4042
      %v4044 = vrot.slane %v3442, 1
      %v4045 = vrot.slane %v3445, 1
      %v4046 = vsel %vm1998, %v4044, %v4045
      %v4047 = vrot.slane %v3448, 1
      %v4048 = vsel %vm1998, %v4045, %v4047
      %v4049 = vrot.slane %v3451, 1
      %v4050 = vsel %vm1998, %v4047, %v4049
      %v4051 = vrot.slane %v3454, 1
      %v4052 = vsel %vm1998, %v4049, %v4051
      %v4053 = vrot.slane %v3457, 1
      %v4054 = vrot.slane %v3460, 1
      %v4055 = vsel %vm1998, %v4053, %v4054
      %v4056 = vrot.slane %v3463, 1
      %v4057 = vsel %vm1998, %v4054, %v4056
      %v4058 = vrot.slane %v3466, 1
      %v4059 = vsel %vm1998, %v4056, %v4058
      %v4060 = vrot.slane %v3469, 1
      %v4061 = vsel %vm1998, %v4058, %v4060
      %v4062 = vrot.slane %v3472, 1
      %v4063 = vrot.slane %v3475, 1
      %v4064 = vsel %vm1998, %v4062, %v4063
      %v4065 = vrot.slane %v3478, 1
      %v4066 = vsel %vm1998, %v4063, %v4065
      %v4067 = vrot.slane %v3481, 1
      %v4068 = vsel %vm1998, %v4065, %v4067
      %v4069 = vrot.slane %v3484, 1
      %v4070 = vsel %vm1998, %v4067, %v4069
      %v4071 = vrot.slane %v3487, 1
      %v4072 = vrot.slane %v3490, 1
      %v4073 = vsel %vm1998, %v4071, %v4072
      %v4074 = vrot.slane %v3493, 1
      %v4075 = vsel %vm1998, %v4072, %v4074
      %v4076 = vrot.slane %v3496, 1
      %v4077 = vsel %vm1998, %v4074, %v4076
      %v4078 = vrot.slane %v3499, 1
      %v4079 = vsel %vm1998, %v4076, %v4078
      %v4080 = vrot.slane %v3502, 1
      %v4081 = vrot.slane %v3505, 1
      %v4082 = vsel %vm1998, %v4080, %v4081
      %v4083 = vrot.slane %v3508, 1
      %v4084 = vsel %vm1998, %v4081, %v4083
      %v4085 = vrot.slane %v3511, 1
      %v4086 = vsel %vm1998, %v4083, %v4085
      %v4087 = vrot.slane %v3514, 1
      %v4088 = vsel %vm1998, %v4085, %v4087
      %v4089 = vrot.slane %v3517, 1
      %v4090 = vrot.slane %v3520, 1
      %v4091 = vsel %vm1998, %v4089, %v4090
      %v4092 = vrot.slane %v3523, 1
      %v4093 = vsel %vm1998, %v4090, %v4092
      %v4094 = vrot.slane %v3526, 1
      %v4095 = vsel %vm1998, %v4092, %v4094
      %v4096 = vrot.slane %v3529, 1
      %v4097 = vsel %vm1998, %v4094, %v4096
      %v4098 = vrot.slane %v3532, 1
      %v4099 = vrot.slane %v3535, 1
      %v4100 = vsel %vm1998, %v4098, %v4099
      %v4101 = vrot.slane %v3538, 1
      %v4102 = vsel %vm1998, %v4099, %v4101
      %v4103 = vrot.slane %v3541, 1
      %v4104 = vsel %vm1998, %v4101, %v4103
      %v4105 = vrot.slane %v3544, 1
      %v4106 = vsel %vm1998, %v4103, %v4105
      %v4107 = vrot.slane %v3547, 1
      %v4108 = vrot.slane %v3550, 1
      %v4109 = vsel %vm1998, %v4107, %v4108
      %v4110 = vrot.slane %v3553, 1
      %v4111 = vsel %vm1998, %v4108, %v4110
      %v4112 = vrot.slane %v3556, 1
      %v4113 = vsel %vm1998, %v4110, %v4112
      %v4114 = vrot.slane %v3559, 1
      %v4115 = vsel %vm1998, %v4112, %v4114
      %v4116 = vrot.slane %v3562, 1
      %v4117 = vrot.slane %v3565, 1
      %v4118 = vsel %vm1998, %v4116, %v4117
      %v4119 = vrot.slane %v3568, 1
      %v4120 = vsel %vm1998, %v4117, %v4119
      %v4121 = vrot.slane %v3571, 1
      %v4122 = vsel %vm1998, %v4119, %v4121
      %v4123 = vrot.slane %v3574, 1
      %v4124 = vsel %vm1998, %v4121, %v4123
      %v4125 = vrot.slane %v3577, 1
      %v4126 = vrot.slane %v3580, 1
      %v4127 = vsel %vm1998, %v4125, %v4126
      %v4128 = vrot.slane %v3583, 1
      %v4129 = vsel %vm1998, %v4126, %v4128
      %v4130 = vrot.slane %v3586, 1
      %v4131 = vsel %vm1998, %v4128, %v4130
      %v4132 = vrot.slane %v3589, 1
      %v4133 = vsel %vm1998, %v4130, %v4132
      %v4134 = vrot.slane %v3592, 1
      %v4135 = vrot.slane %v3595, 1
      %v4136 = vsel %vm1998, %v4134, %v4135
      %v4137 = vrot.slane %v3598, 1
      %v4138 = vsel %vm1998, %v4135, %v4137
      %v4139 = vrot.slane %v3601, 1
      %v4140 = vsel %vm1998, %v4137, %v4139
      %v4141 = vrot.slane %v3604, 1
      %v4142 = vsel %vm1998, %v4139, %v4141
      %v4143 = vrot.slane %v3607, 1
      %v4144 = vrot.slane %v3610, 1
      %v4145 = vsel %vm1998, %v4143, %v4144
      %v4146 = vrot.slane %v3613, 1
      %v4147 = vsel %vm1998, %v4144, %v4146
      %v4148 = vrot.slane %v3616, 1
      %v4149 = vsel %vm1998, %v4146, %v4148
      %v4150 = vrot.slane %v3619, 1
      %v4151 = vsel %vm1998, %v4148, %v4150
      %v4152 = vrot.slane %v3622, 1
      %v4153 = vrot.slane %v3625, 1
      %v4154 = vsel %vm1998, %v4152, %v4153
      %v4155 = vrot.slane %v3628, 1
      %v4156 = vsel %vm1998, %v4153, %v4155
      %v4157 = vrot.slane %v3631, 1
      %v4158 = vsel %vm1998, %v4155, %v4157
      %v4159 = vrot.slane %v3634, 1
      %v4160 = vsel %vm1998, %v4157, %v4159
      %v4161 = vrot.slane %v3637, 1
      %v4162 = vrot.slane %v3640, 1
      %v4163 = vsel %vm1998, %v4161, %v4162
      %v4164 = vrot.slane %v3643, 1
      %v4165 = vsel %vm1998, %v4162, %v4164
      %v4166 = vrot.slane %v3646, 1
      %v4167 = vsel %vm1998, %v4164, %v4166
      %v4168 = vrot.slane %v3649, 1
      %v4169 = vsel %vm1998, %v4166, %v4168
      %v4170 = vrot.slane %v3652, 1
      %v4171 = vrot.slane %v3655, 1
      %v4172 = vsel %vm1998, %v4170, %v4171
      %v4173 = vrot.slane %v3658, 1
      %v4174 = vsel %vm1998, %v4171, %v4173
      %v4175 = vrot.slane %v3661, 1
      %v4176 = vsel %vm1998, %v4173, %v4175
      %v4177 = vrot.slane %v3664, 1
      %v4178 = vsel %vm1998, %v4175, %v4177
      %v4179 = vrot.slane %v3667, 1
      %v4180 = vrot.slane %v3670, 1
      %v4181 = vsel %vm1998, %v4179, %v4180
      %v4182 = vrot.slane %v3673, 1
      %v4183 = vsel %vm1998, %v4180, %v4182
      %v4184 = vrot.slane %v3676, 1
      %v4185 = vsel %vm1998, %v4182, %v4184
      %v4186 = vrot.slane %v3679, 1
      %v4187 = vsel %vm1998, %v4184, %v4186
      %v4188 = vrot.slane %v3682, 1
      %v4189 = vrot.slane %v3685, 1
      %v4190 = vsel %vm1998, %v4188, %v4189
      %v4191 = vrot.slane %v3688, 1
      %v4192 = vsel %vm1998, %v4189, %v4191
      %v4193 = vrot.slane %v3691, 1
      %v4194 = vsel %vm1998, %v4191, %v4193
      %v4195 = vrot.slane %v3694, 1
      %v4196 = vsel %vm1998, %v4193, %v4195
      %v4197 = vrot.slane %v3697, 1
      %v4198 = vrot.slane %v3700, 1
      %v4199 = vsel %vm1998, %v4197, %v4198
      %v4200 = vrot.slane %v3703, 1
      %v4201 = vsel %vm1998, %v4198, %v4200
      %v4202 = vrot.slane %v3706, 1
      %v4203 = vsel %vm1998, %v4200, %v4202
      %v4204 = vrot.slane %v3709, 1
      %v4205 = vsel %vm1998, %v4202, %v4204
      %v4206 = vrot.slane %v3712, 1
      %v4207 = vrot.slane %v3715, 1
      %v4208 = vsel %vm1998, %v4206, %v4207
      %v4209 = vrot.slane %v3718, 1
      %v4210 = vsel %vm1998, %v4207, %v4209
      %v4211 = vrot.slane %v3721, 1
      %v4212 = vsel %vm1998, %v4209, %v4211
      %v4213 = vrot.slane %v3724, 1
      %v4214 = vsel %vm1998, %v4211, %v4213
      %v4215 = vrot.slane %v3727, 1
      %v4216 = vrot.slane %v3730, 1
      %v4217 = vsel %vm1998, %v4215, %v4216
      %v4218 = vrot.slane %v3733, 1
      %v4219 = vsel %vm1998, %v4216, %v4218
      %v4220 = vrot.slane %v3736, 1
      %v4221 = vsel %vm1998, %v4218, %v4220
      %v4222 = vrot.slane %v3739, 1
      %v4223 = vsel %vm1998, %v4220, %v4222
      %v4224 = vrot.slane %v3742, 1
      %v4225 = vrot.slane %v3745, 1
      %v4226 = vsel %vm1998, %v4224, %v4225
      %v4227 = vrot.slane %v3748, 1
      %v4228 = vsel %vm1998, %v4225, %v4227
      %v4229 = vrot.slane %v3751, 1
      %v4230 = vsel %vm1998, %v4227, %v4229
      %v4231 = vrot.slane %v3754, 1
      %v4232 = vsel %vm1998, %v4229, %v4231
      %v4233 = vrot.slane %v3757, 1
      %v4234 = vrot.slane %v3760, 1
      %v4235 = vsel %vm1998, %v4233, %v4234
      %v4236 = vrot.slane %v3763, 1
      %v4237 = vsel %vm1998, %v4234, %v4236
      %v4238 = vrot.slane %v3766, 1
      %v4239 = vsel %vm1998, %v4236, %v4238
      %v4240 = vrot.slane %v3769, 1
      %v4241 = vsel %vm1998, %v4238, %v4240
      %v4242 = vrot.slane %v3772, 1
      %v4243 = vrot.slane %v3775, 1
      %v4244 = vsel %vm1998, %v4242, %v4243
      %v4245 = vrot.slane %v3778, 1
      %v4246 = vsel %vm1998, %v4243, %v4245
      %v4247 = vrot.slane %v3781, 1
      %v4248 = vsel %vm1998, %v4245, %v4247
      %v4249 = vrot.slane %v3784, 1
      %v4250 = vsel %vm1998, %v4247, %v4249
      %v4251 = vrot.slane %v3787, 1
      %v4252 = vrot.slane %v3790, 1
      %v4253 = vsel %vm1998, %v4251, %v4252
      %v4254 = vrot.slane %v3793, 1
      %v4255 = vsel %vm1998, %v4252, %v4254
      %v4256 = vrot.slane %v3796, 1
      %v4257 = vsel %vm1998, %v4254, %v4256
      %v4258 = vrot.slane %v3799, 1
      %v4259 = vsel %vm1998, %v4256, %v4258
      %v4260 = vrot.slane %v3802, 1
      %v4261 = vrot.slane %v3805, 1
      %v4262 = vsel %vm1998, %v4260, %v4261
      %v4263 = vrot.slane %v3808, 1
      %v4264 = vsel %vm1998, %v4261, %v4263
      %v4265 = vrot.slane %v3811, 1
      %v4266 = vsel %vm1998, %v4263, %v4265
      %v4267 = vrot.slane %v3814, 1
      %v4268 = vsel %vm1998, %v4265, %v4267
      %v4269 = vrot.slane %v3817, 1
      %v4270 = vrot.slane %v3820, 1
      %v4271 = vsel %vm1998, %v4269, %v4270
      %v4272 = vrot.slane %v3823, 1
      %v4273 = vsel %vm1998, %v4270, %v4272
      %v4274 = vrot.slane %v3826, 1
      %v4275 = vsel %vm1998, %v4272, %v4274
      %v4276 = vrot.slane %v3829, 1
      %v4277 = vsel %vm1998, %v4274, %v4276
      %v4406 = vadd.f32 %v3060, %v3992
      %v4407 = vadd.f32 %v3061, %v3994
      %v4408 = vadd.f32 %v3062, %v3996
      %v4409 = vadd.f32 %v3063, %v3998
      %v4410 = vadd.f32 %v3064, %v4001
      %v4411 = vadd.f32 %v3065, %v4003
      %v4412 = vadd.f32 %v3066, %v4005
      %v4413 = vadd.f32 %v3067, %v4007
      %v4414 = vadd.f32 %v3068, %v4010
      %v4415 = vadd.f32 %v3069, %v4012
      %v4416 = vadd.f32 %v3070, %v4014
      %v4417 = vadd.f32 %v3071, %v4016
      %v4418 = vadd.f32 %v3072, %v4019
      %v4419 = vadd.f32 %v3073, %v4021
      %v4420 = vadd.f32 %v3074, %v4023
      %v4421 = vadd.f32 %v3075, %v4025
      %v4422 = vadd.f32 %v3076, %v4028
      %v4423 = vadd.f32 %v3077, %v4030
      %v4424 = vadd.f32 %v3078, %v4032
      %v4425 = vadd.f32 %v3079, %v4034
      %v4426 = vadd.f32 %v3080, %v4037
      %v4427 = vadd.f32 %v3081, %v4039
      %v4428 = vadd.f32 %v3082, %v4041
      %v4429 = vadd.f32 %v3083, %v4043
      %v4430 = vadd.f32 %v3084, %v4046
      %v4431 = vadd.f32 %v3085, %v4048
      %v4432 = vadd.f32 %v3086, %v4050
      %v4433 = vadd.f32 %v3087, %v4052
      %v4434 = vadd.f32 %v3088, %v4055
      %v4435 = vadd.f32 %v3089, %v4057
      %v4436 = vadd.f32 %v3090, %v4059
      %v4437 = vadd.f32 %v3091, %v4061
      %v4438 = vadd.f32 %v3092, %v4064
      %v4439 = vadd.f32 %v3093, %v4066
      %v4440 = vadd.f32 %v3094, %v4068
      %v4441 = vadd.f32 %v3095, %v4070
      %v4442 = vadd.f32 %v3096, %v4073
      %v4443 = vadd.f32 %v3097, %v4075
      %v4444 = vadd.f32 %v3098, %v4077
      %v4445 = vadd.f32 %v3099, %v4079
      %v4446 = vadd.f32 %v3100, %v4082
      %v4447 = vadd.f32 %v3101, %v4084
      %v4448 = vadd.f32 %v3102, %v4086
      %v4449 = vadd.f32 %v3103, %v4088
      %v4450 = vadd.f32 %v3104, %v4091
      %v4451 = vadd.f32 %v3105, %v4093
      %v4452 = vadd.f32 %v3106, %v4095
      %v4453 = vadd.f32 %v3107, %v4097
      %v4454 = vadd.f32 %v3108, %v4100
      %v4455 = vadd.f32 %v3109, %v4102
      %v4456 = vadd.f32 %v3110, %v4104
      %v4457 = vadd.f32 %v3111, %v4106
      %v4458 = vadd.f32 %v3112, %v4109
      %v4459 = vadd.f32 %v3113, %v4111
      %v4460 = vadd.f32 %v3114, %v4113
      %v4461 = vadd.f32 %v3115, %v4115
      %v4462 = vadd.f32 %v3116, %v4118
      %v4463 = vadd.f32 %v3117, %v4120
      %v4464 = vadd.f32 %v3118, %v4122
      %v4465 = vadd.f32 %v3119, %v4124
      %v4466 = vadd.f32 %v3120, %v4127
      %v4467 = vadd.f32 %v3121, %v4129
      %v4468 = vadd.f32 %v3122, %v4131
      %v4469 = vadd.f32 %v3123, %v4133
      %v4470 = vadd.f32 %v3124, %v4136
      %v4471 = vadd.f32 %v3125, %v4138
      %v4472 = vadd.f32 %v3126, %v4140
      %v4473 = vadd.f32 %v3127, %v4142
      %v4474 = vadd.f32 %v3128, %v4145
      %v4475 = vadd.f32 %v3129, %v4147
      %v4476 = vadd.f32 %v3130, %v4149
      %v4477 = vadd.f32 %v3131, %v4151
      %v4478 = vadd.f32 %v3132, %v4154
      %v4479 = vadd.f32 %v3133, %v4156
      %v4480 = vadd.f32 %v3134, %v4158
      %v4481 = vadd.f32 %v3135, %v4160
      %v4482 = vadd.f32 %v3136, %v4163
      %v4483 = vadd.f32 %v3137, %v4165
      %v4484 = vadd.f32 %v3138, %v4167
      %v4485 = vadd.f32 %v3139, %v4169
      %v4486 = vadd.f32 %v3140, %v4172
      %v4487 = vadd.f32 %v3141, %v4174
      %v4488 = vadd.f32 %v3142, %v4176
      %v4489 = vadd.f32 %v3143, %v4178
      %v4490 = vadd.f32 %v3144, %v4181
      %v4491 = vadd.f32 %v3145, %v4183
      %v4492 = vadd.f32 %v3146, %v4185
      %v4493 = vadd.f32 %v3147, %v4187
      %v4494 = vadd.f32 %v3148, %v4190
      %v4495 = vadd.f32 %v3149, %v4192
      %v4496 = vadd.f32 %v3150, %v4194
      %v4497 = vadd.f32 %v3151, %v4196
      %v4498 = vadd.f32 %v3152, %v4199
      %v4499 = vadd.f32 %v3153, %v4201
      %v4500 = vadd.f32 %v3154, %v4203
      %v4501 = vadd.f32 %v3155, %v4205
      %v4502 = vadd.f32 %v3156, %v4208
      %v4503 = vadd.f32 %v3157, %v4210
      %v4504 = vadd.f32 %v3158, %v4212
      %v4505 = vadd.f32 %v3159, %v4214
      %v4506 = vadd.f32 %v3160, %v4217
      %v4507 = vadd.f32 %v3161, %v4219
      %v4508 = vadd.f32 %v3162, %v4221
      %v4509 = vadd.f32 %v3163, %v4223
      %v4510 = vadd.f32 %v3164, %v4226
      %v4511 = vadd.f32 %v3165, %v4228
      %v4512 = vadd.f32 %v3166, %v4230
      %v4513 = vadd.f32 %v3167, %v4232
      %v4514 = vadd.f32 %v3168, %v4235
      %v4515 = vadd.f32 %v3169, %v4237
      %v4516 = vadd.f32 %v3170, %v4239
      %v4517 = vadd.f32 %v3171, %v4241
      %v4518 = vadd.f32 %v3172, %v4244
      %v4519 = vadd.f32 %v3173, %v4246
      %v4520 = vadd.f32 %v3174, %v4248
      %v4521 = vadd.f32 %v3175, %v4250
      %v4522 = vadd.f32 %v3176, %v4253
      %v4523 = vadd.f32 %v3177, %v4255
      %v4524 = vadd.f32 %v3178, %v4257
      %v4525 = vadd.f32 %v3179, %v4259
      %v4526 = vadd.f32 %v3180, %v4262
      %v4527 = vadd.f32 %v3181, %v4264
      %v4528 = vadd.f32 %v3182, %v4266
      %v4529 = vadd.f32 %v3183, %v4268
      %v4530 = vadd.f32 %v3184, %v4271
      %v4531 = vadd.f32 %v3185, %v4273
      %v4532 = vadd.f32 %v3186, %v4275
      %v4533 = vadd.f32 %v3187, %v4277
      %v4534 = vld [vmem:[#allocation2] sm:$0x1]
      %v4536 = vperm.slane %v4534, 0
      %4537 = vset.pattern.permute.xlu0 0
      %4538 = vperm.xlu0 %4537, %v4536
      %v4539 = vpop.permute.xlu0 %4538
      %v4541 = vadd.f32 %v4406, %v4539
      %v4542 = vadd.f32 %v4407, %v4539
      %v4543 = vadd.f32 %v4408, %v4539
      %v4544 = vadd.f32 %v4409, %v4539
      %v4545 = vadd.f32 %v4410, %v4539
      %v4546 = vadd.f32 %v4411, %v4539
      %v4547 = vadd.f32 %v4412, %v4539
      %v4548 = vadd.f32 %v4413, %v4539
      %v4549 = vadd.f32 %v4414, %v4539
      %v4550 = vadd.f32 %v4415, %v4539
      %v4551 = vadd.f32 %v4416, %v4539
      %v4552 = vadd.f32 %v4417, %v4539
      %v4553 = vadd.f32 %v4418, %v4539
      %v4554 = vadd.f32 %v4419, %v4539
      %v4555 = vadd.f32 %v4420, %v4539
      %v4556 = vadd.f32 %v4421, %v4539
      %v4557 = vadd.f32 %v4422, %v4539
      %v4558 = vadd.f32 %v4423, %v4539
      %v4559 = vadd.f32 %v4424, %v4539
      %v4560 = vadd.f32 %v4425, %v4539
      %v4561 = vadd.f32 %v4426, %v4539
      %v4562 = vadd.f32 %v4427, %v4539
      %v4563 = vadd.f32 %v4428, %v4539
      %v4564 = vadd.f32 %v4429, %v4539
      %v4565 = vadd.f32 %v4430, %v4539
      %v4566 = vadd.f32 %v4431, %v4539
      %v4567 = vadd.f32 %v4432, %v4539
      %v4568 = vadd.f32 %v4433, %v4539
      %v4569 = vadd.f32 %v4434, %v4539
      %v4570 = vadd.f32 %v4435, %v4539
      %v4571 = vadd.f32 %v4436, %v4539
      %v4572 = vadd.f32 %v4437, %v4539
      %v4573 = vadd.f32 %v4438, %v4539
      %v4574 = vadd.f32 %v4439, %v4539
      %v4575 = vadd.f32 %v4440, %v4539
      %v4576 = vadd.f32 %v4441, %v4539
      %v4577 = vadd.f32 %v4442, %v4539
      %v4578 = vadd.f32 %v4443, %v4539
      %v4579 = vadd.f32 %v4444, %v4539
      %v4580 = vadd.f32 %v4445, %v4539
      %v4581 = vadd.f32 %v4446, %v4539
      %v4582 = vadd.f32 %v4447, %v4539
      %v4583 = vadd.f32 %v4448, %v4539
      %v4584 = vadd.f32 %v4449, %v4539
      %v4585 = vadd.f32 %v4450, %v4539
      %v4586 = vadd.f32 %v4451, %v4539
      %v4587 = vadd.f32 %v4452, %v4539
      %v4588 = vadd.f32 %v4453, %v4539
      %v4589 = vadd.f32 %v4454, %v4539
      %v4590 = vadd.f32 %v4455, %v4539
      %v4591 = vadd.f32 %v4456, %v4539
      %v4592 = vadd.f32 %v4457, %v4539
      %v4593 = vadd.f32 %v4458, %v4539
      %v4594 = vadd.f32 %v4459, %v4539
      %v4595 = vadd.f32 %v4460, %v4539
      %v4596 = vadd.f32 %v4461, %v4539
      %v4597 = vadd.f32 %v4462, %v4539
      %v4598 = vadd.f32 %v4463, %v4539
      %v4599 = vadd.f32 %v4464, %v4539
      %v4600 = vadd.f32 %v4465, %v4539
      %v4601 = vadd.f32 %v4466, %v4539
      %v4602 = vadd.f32 %v4467, %v4539
      %v4603 = vadd.f32 %v4468, %v4539
      %v4604 = vadd.f32 %v4469, %v4539
      %v4605 = vadd.f32 %v4470, %v4539
      %v4606 = vadd.f32 %v4471, %v4539
      %v4607 = vadd.f32 %v4472, %v4539
      %v4608 = vadd.f32 %v4473, %v4539
      %v4609 = vadd.f32 %v4474, %v4539
      %v4610 = vadd.f32 %v4475, %v4539
      %v4611 = vadd.f32 %v4476, %v4539
      %v4612 = vadd.f32 %v4477, %v4539
      %v4613 = vadd.f32 %v4478, %v4539
      %v4614 = vadd.f32 %v4479, %v4539
      %v4615 = vadd.f32 %v4480, %v4539
      %v4616 = vadd.f32 %v4481, %v4539
      %v4617 = vadd.f32 %v4482, %v4539
      %v4618 = vadd.f32 %v4483, %v4539
      %v4619 = vadd.f32 %v4484, %v4539
      %v4620 = vadd.f32 %v4485, %v4539
      %v4621 = vadd.f32 %v4486, %v4539
      %v4622 = vadd.f32 %v4487, %v4539
      %v4623 = vadd.f32 %v4488, %v4539
      %v4624 = vadd.f32 %v4489, %v4539
      %v4625 = vadd.f32 %v4490, %v4539
      %v4626 = vadd.f32 %v4491, %v4539
      %v4627 = vadd.f32 %v4492, %v4539
      %v4628 = vadd.f32 %v4493, %v4539
      %v4629 = vadd.f32 %v4494, %v4539
      %v4630 = vadd.f32 %v4495, %v4539
      %v4631 = vadd.f32 %v4496, %v4539
      %v4632 = vadd.f32 %v4497, %v4539
      %v4633 = vadd.f32 %v4498, %v4539
      %v4634 = vadd.f32 %v4499, %v4539
      %v4635 = vadd.f32 %v4500, %v4539
      %v4636 = vadd.f32 %v4501, %v4539
      %v4637 = vadd.f32 %v4502, %v4539
      %v4638 = vadd.f32 %v4503, %v4539
      %v4639 = vadd.f32 %v4504, %v4539
      %v4640 = vadd.f32 %v4505, %v4539
      %v4641 = vadd.f32 %v4506, %v4539
      %v4642 = vadd.f32 %v4507, %v4539
      %v4643 = vadd.f32 %v4508, %v4539
      %v4644 = vadd.f32 %v4509, %v4539
      %v4645 = vadd.f32 %v4510, %v4539
      %v4646 = vadd.f32 %v4511, %v4539
      %v4647 = vadd.f32 %v4512, %v4539
      %v4648 = vadd.f32 %v4513, %v4539
      %v4649 = vadd.f32 %v4514, %v4539
      %v4650 = vadd.f32 %v4515, %v4539
      %v4651 = vadd.f32 %v4516, %v4539
      %v4652 = vadd.f32 %v4517, %v4539
      %v4653 = vadd.f32 %v4518, %v4539
      %v4654 = vadd.f32 %v4519, %v4539
      %v4655 = vadd.f32 %v4520, %v4539
      %v4656 = vadd.f32 %v4521, %v4539
      %v4657 = vadd.f32 %v4522, %v4539
      %v4658 = vadd.f32 %v4523, %v4539
      %v4659 = vadd.f32 %v4524, %v4539
      %v4660 = vadd.f32 %v4525, %v4539
      %v4661 = vadd.f32 %v4526, %v4539
      %v4662 = vadd.f32 %v4527, %v4539
      %v4663 = vadd.f32 %v4528, %v4539
      %v4664 = vadd.f32 %v4529, %v4539
      %v4665 = vadd.f32 %v4530, %v4539
      %v4666 = vadd.f32 %v4531, %v4539
      %v4667 = vadd.f32 %v4532, %v4539
      %v4668 = vadd.f32 %v4533, %v4539
      %v4669 = vtanh.pop %v4541
      %v4670 = vtanh.pop %v4542
      %v4671 = vtanh.pop %v4543
      %v4672 = vtanh.pop %v4544
      %v4673 = vtanh.pop %v4545
      %v4674 = vtanh.pop %v4546
      %v4675 = vtanh.pop %v4547
      %v4676 = vtanh.pop %v4548
      %v4677 = vtanh.pop %v4549
      %v4678 = vtanh.pop %v4550
      %v4679 = vtanh.pop %v4551
      %v4680 = vtanh.pop %v4552
      %v4681 = vtanh.pop %v4553
      %v4682 = vtanh.pop %v4554
      %v4683 = vtanh.pop %v4555
      %v4684 = vtanh.pop %v4556
      %v4685 = vtanh.pop %v4557
      %v4686 = vtanh.pop %v4558
      %v4687 = vtanh.pop %v4559
      %v4688 = vtanh.pop %v4560
      %v4689 = vtanh.pop %v4561
      %v4690 = vtanh.pop %v4562
      %v4691 = vtanh.pop %v4563
      %v4692 = vtanh.pop %v4564
      %v4693 = vtanh.pop %v4565
      %v4694 = vtanh.pop %v4566
      %v4695 = vtanh.pop %v4567
      %v4696 = vtanh.pop %v4568
      %v4697 = vtanh.pop %v4569
      %v4698 = vtanh.pop %v4570
      %v4699 = vtanh.pop %v4571
      %v4700 = vtanh.pop %v4572
      %v4701 = vtanh.pop %v4573
      %v4702 = vtanh.pop %v4574
      %v4703 = vtanh.pop %v4575
      %v4704 = vtanh.pop %v4576
      %v4705 = vtanh.pop %v4577
      %v4706 = vtanh.pop %v4578
      %v4707 = vtanh.pop %v4579
      %v4708 = vtanh.pop %v4580
      %v4709 = vtanh.pop %v4581
      %v4710 = vtanh.pop %v4582
      %v4711 = vtanh.pop %v4583
      %v4712 = vtanh.pop %v4584
      %v4713 = vtanh.pop %v4585
      %v4714 = vtanh.pop %v4586
      %v4715 = vtanh.pop %v4587
      %v4716 = vtanh.pop %v4588
      %v4717 = vtanh.pop %v4589
      %v4718 = vtanh.pop %v4590
      %v4719 = vtanh.pop %v4591
      %v4720 = vtanh.pop %v4592
      %v4721 = vtanh.pop %v4593
      %v4722 = vtanh.pop %v4594
      %v4723 = vtanh.pop %v4595
      %v4724 = vtanh.pop %v4596
      %v4725 = vtanh.pop %v4597
      %v4726 = vtanh.pop %v4598
      %v4727 = vtanh.pop %v4599
      %v4728 = vtanh.pop %v4600
      %v4729 = vtanh.pop %v4601
      %v4730 = vtanh.pop %v4602
      %v4731 = vtanh.pop %v4603
      %v4732 = vtanh.pop %v4604
      %v4733 = vtanh.pop %v4605
      %v4734 = vtanh.pop %v4606
      %v4735 = vtanh.pop %v4607
      %v4736 = vtanh.pop %v4608
      %v4737 = vtanh.pop %v4609
      %v4738 = vtanh.pop %v4610
      %v4739 = vtanh.pop %v4611
      %v4740 = vtanh.pop %v4612
      %v4741 = vtanh.pop %v4613
      %v4742 = vtanh.pop %v4614
      %v4743 = vtanh.pop %v4615
      %v4744 = vtanh.pop %v4616
      %v4745 = vtanh.pop %v4617
      %v4746 = vtanh.pop %v4618
      %v4747 = vtanh.pop %v4619
      %v4748 = vtanh.pop %v4620
      %v4749 = vtanh.pop %v4621
      %v4750 = vtanh.pop %v4622
      %v4751 = vtanh.pop %v4623
      %v4752 = vtanh.pop %v4624
      %v4753 = vtanh.pop %v4625
      %v4754 = vtanh.pop %v4626
      %v4755 = vtanh.pop %v4627
      %v4756 = vtanh.pop %v4628
      %v4757 = vtanh.pop %v4629
      %v4758 = vtanh.pop %v4630
      %v4759 = vtanh.pop %v4631
      %v4760 = vtanh.pop %v4632
      %v4761 = vtanh.pop %v4633
      %v4762 = vtanh.pop %v4634
      %v4763 = vtanh.pop %v4635
      %v4764 = vtanh.pop %v4636
      %v4765 = vtanh.pop %v4637
      %v4766 = vtanh.pop %v4638
      %v4767 = vtanh.pop %v4639
      %v4768 = vtanh.pop %v4640
      %v4769 = vtanh.pop %v4641
      %v4770 = vtanh.pop %v4642
      %v4771 = vtanh.pop %v4643
      %v4772 = vtanh.pop %v4644
      %v4773 = vtanh.pop %v4645
      %v4774 = vtanh.pop %v4646
      %v4775 = vtanh.pop %v4647
      %v4776 = vtanh.pop %v4648
      %v4777 = vtanh.pop %v4649
      %v4778 = vtanh.pop %v4650
      %v4779 = vtanh.pop %v4651
      %v4780 = vtanh.pop %v4652
      %v4781 = vtanh.pop %v4653
      %v4782 = vtanh.pop %v4654
      %v4783 = vtanh.pop %v4655
      %v4784 = vtanh.pop %v4656
      %v4785 = vtanh.pop %v4657
      %v4786 = vtanh.pop %v4658
      %v4787 = vtanh.pop %v4659
      %v4788 = vtanh.pop %v4660
      %v4789 = vtanh.pop %v4661
      %v4790 = vtanh.pop %v4662
      %v4791 = vtanh.pop %v4663
      %v4792 = vtanh.pop %v4664
      %v4793 = vtanh.pop %v4665
      %v4794 = vtanh.pop %v4666
      %v4795 = vtanh.pop %v4667
      %v4796 = vtanh.pop %v4668
      %4925 = vset.pattern.permute.xlu0 0
      %4926 = vperm.xlu0 %4925, %v4669
      %v4927 = vpop.permute.xlu0 %4926
      %4928 = vset.pattern.permute.xlu0 0
      %4929 = vperm.xlu0 %4928, %v4670
      %v4930 = vpop.permute.xlu0 %4929
      %4931 = vset.pattern.permute.xlu0 0
      %4932 = vperm.xlu0 %4931, %v4671
      %v4933 = vpop.permute.xlu0 %4932
      %4934 = vset.pattern.permute.xlu0 0
      %4935 = vperm.xlu0 %4934, %v4672
      %v4936 = vpop.permute.xlu0 %4935
      %4937 = vset.pattern.permute.xlu0 0
      %4938 = vperm.xlu0 %4937, %v4673
      %v4939 = vpop.permute.xlu0 %4938
      %4940 = vset.pattern.permute.xlu0 0
      %4941 = vperm.xlu0 %4940, %v4674
      %v4942 = vpop.permute.xlu0 %4941
      %4943 = vset.pattern.permute.xlu0 0
      %4944 = vperm.xlu0 %4943, %v4675
      %v4945 = vpop.permute.xlu0 %4944
      %4946 = vset.pattern.permute.xlu0 0
      %4947 = vperm.xlu0 %4946, %v4676
      %v4948 = vpop.permute.xlu0 %4947
      %4949 = vset.pattern.permute.xlu0 0
      %4950 = vperm.xlu0 %4949, %v4677
      %v4951 = vpop.permute.xlu0 %4950
      %4952 = vset.pattern.permute.xlu0 0
      %4953 = vperm.xlu0 %4952, %v4678
      %v4954 = vpop.permute.xlu0 %4953
      %4955 = vset.pattern.permute.xlu0 0
      %4956 = vperm.xlu0 %4955, %v4679
      %v4957 = vpop.permute.xlu0 %4956
      %4958 = vset.pattern.permute.xlu0 0
      %4959 = vperm.xlu0 %4958, %v4680
      %v4960 = vpop.permute.xlu0 %4959
      %4961 = vset.pattern.permute.xlu0 0
      %4962 = vperm.xlu0 %4961, %v4681
      %v4963 = vpop.permute.xlu0 %4962
      %4964 = vset.pattern.permute.xlu0 0
      %4965 = vperm.xlu0 %4964, %v4682
      %v4966 = vpop.permute.xlu0 %4965
      %4967 = vset.pattern.permute.xlu0 0
      %4968 = vperm.xlu0 %4967, %v4683
      %v4969 = vpop.permute.xlu0 %4968
      %4970 = vset.pattern.permute.xlu0 0
      %4971 = vperm.xlu0 %4970, %v4684
      %v4972 = vpop.permute.xlu0 %4971
      %4973 = vset.pattern.permute.xlu0 0
      %4974 = vperm.xlu0 %4973, %v4685
      %v4975 = vpop.permute.xlu0 %4974
      %4976 = vset.pattern.permute.xlu0 0
      %4977 = vperm.xlu0 %4976, %v4686
      %v4978 = vpop.permute.xlu0 %4977
      %4979 = vset.pattern.permute.xlu0 0
      %4980 = vperm.xlu0 %4979, %v4687
      %v4981 = vpop.permute.xlu0 %4980
      %4982 = vset.pattern.permute.xlu0 0
      %4983 = vperm.xlu0 %4982, %v4688
      %v4984 = vpop.permute.xlu0 %4983
      %4985 = vset.pattern.permute.xlu0 0
      %4986 = vperm.xlu0 %4985, %v4689
      %v4987 = vpop.permute.xlu0 %4986
      %4988 = vset.pattern.permute.xlu0 0
      %4989 = vperm.xlu0 %4988, %v4690
      %v4990 = vpop.permute.xlu0 %4989
      %4991 = vset.pattern.permute.xlu0 0
      %4992 = vperm.xlu0 %4991, %v4691
      %v4993 = vpop.permute.xlu0 %4992
      %4994 = vset.pattern.permute.xlu0 0
      %4995 = vperm.xlu0 %4994, %v4692
      %v4996 = vpop.permute.xlu0 %4995
      %4997 = vset.pattern.permute.xlu0 0
      %4998 = vperm.xlu0 %4997, %v4693
      %v4999 = vpop.permute.xlu0 %4998
      %5000 = vset.pattern.permute.xlu0 0
      %5001 = vperm.xlu0 %5000, %v4694
      %v5002 = vpop.permute.xlu0 %5001
      %5003 = vset.pattern.permute.xlu0 0
      %5004 = vperm.xlu0 %5003, %v4695
      %v5005 = vpop.permute.xlu0 %5004
      %5006 = vset.pattern.permute.xlu0 0
      %5007 = vperm.xlu0 %5006, %v4696
      %v5008 = vpop.permute.xlu0 %5007
      %5009 = vset.pattern.permute.xlu0 0
      %5010 = vperm.xlu0 %5009, %v4697
      %v5011 = vpop.permute.xlu0 %5010
      %5012 = vset.pattern.permute.xlu0 0
      %5013 = vperm.xlu0 %5012, %v4698
      %v5014 = vpop.permute.xlu0 %5013
      %5015 = vset.pattern.permute.xlu0 0
      %5016 = vperm.xlu0 %5015, %v4699
      %v5017 = vpop.permute.xlu0 %5016
      %5018 = vset.pattern.permute.xlu0 0
      %5019 = vperm.xlu0 %5018, %v4700
      %v5020 = vpop.permute.xlu0 %5019
      %5021 = vset.pattern.permute.xlu0 0
      %5022 = vperm.xlu0 %5021, %v4701
      %v5023 = vpop.permute.xlu0 %5022
      %5024 = vset.pattern.permute.xlu0 0
      %5025 = vperm.xlu0 %5024, %v4702
      %v5026 = vpop.permute.xlu0 %5025
      %5027 = vset.pattern.permute.xlu0 0
      %5028 = vperm.xlu0 %5027, %v4703
      %v5029 = vpop.permute.xlu0 %5028
      %5030 = vset.pattern.permute.xlu0 0
      %5031 = vperm.xlu0 %5030, %v4704
      %v5032 = vpop.permute.xlu0 %5031
      %5033 = vset.pattern.permute.xlu0 0
      %5034 = vperm.xlu0 %5033, %v4705
      %v5035 = vpop.permute.xlu0 %5034
      %5036 = vset.pattern.permute.xlu0 0
      %5037 = vperm.xlu0 %5036, %v4706
      %v5038 = vpop.permute.xlu0 %5037
      %5039 = vset.pattern.permute.xlu0 0
      %5040 = vperm.xlu0 %5039, %v4707
      %v5041 = vpop.permute.xlu0 %5040
      %5042 = vset.pattern.permute.xlu0 0
      %5043 = vperm.xlu0 %5042, %v4708
      %v5044 = vpop.permute.xlu0 %5043
      %5045 = vset.pattern.permute.xlu0 0
      %5046 = vperm.xlu0 %5045, %v4709
      %v5047 = vpop.permute.xlu0 %5046
      %5048 = vset.pattern.permute.xlu0 0
      %5049 = vperm.xlu0 %5048, %v4710
      %v5050 = vpop.permute.xlu0 %5049
      %5051 = vset.pattern.permute.xlu0 0
      %5052 = vperm.xlu0 %5051, %v4711
      %v5053 = vpop.permute.xlu0 %5052
      %5054 = vset.pattern.permute.xlu0 0
      %5055 = vperm.xlu0 %5054, %v4712
      %v5056 = vpop.permute.xlu0 %5055
      %5057 = vset.pattern.permute.xlu0 0
      %5058 = vperm.xlu0 %5057, %v4713
      %v5059 = vpop.permute.xlu0 %5058
      %5060 = vset.pattern.permute.xlu0 0
      %5061 = vperm.xlu0 %5060, %v4714
      %v5062 = vpop.permute.xlu0 %5061
      %5063 = vset.pattern.permute.xlu0 0
      %5064 = vperm.xlu0 %5063, %v4715
      %v5065 = vpop.permute.xlu0 %5064
      %5066 = vset.pattern.permute.xlu0 0
      %5067 = vperm.xlu0 %5066, %v4716
      %v5068 = vpop.permute.xlu0 %5067
      %5069 = vset.pattern.permute.xlu0 0
      %5070 = vperm.xlu0 %5069, %v4717
      %v5071 = vpop.permute.xlu0 %5070
      %5072 = vset.pattern.permute.xlu0 0
      %5073 = vperm.xlu0 %5072, %v4718
      %v5074 = vpop.permute.xlu0 %5073
      %5075 = vset.pattern.permute.xlu0 0
      %5076 = vperm.xlu0 %5075, %v4719
      %v5077 = vpop.permute.xlu0 %5076
      %5078 = vset.pattern.permute.xlu0 0
      %5079 = vperm.xlu0 %5078, %v4720
      %v5080 = vpop.permute.xlu0 %5079
      %5081 = vset.pattern.permute.xlu0 0
      %5082 = vperm.xlu0 %5081, %v4721
      %v5083 = vpop.permute.xlu0 %5082
      %5084 = vset.pattern.permute.xlu0 0
      %5085 = vperm.xlu0 %5084, %v4722
      %v5086 = vpop.permute.xlu0 %5085
      %5087 = vset.pattern.permute.xlu0 0
      %5088 = vperm.xlu0 %5087, %v4723
      %v5089 = vpop.permute.xlu0 %5088
      %5090 = vset.pattern.permute.xlu0 0
      %5091 = vperm.xlu0 %5090, %v4724
      %v5092 = vpop.permute.xlu0 %5091
      %5093 = vset.pattern.permute.xlu0 0
      %5094 = vperm.xlu0 %5093, %v4725
      %v5095 = vpop.permute.xlu0 %5094
      %5096 = vset.pattern.permute.xlu0 0
      %5097 = vperm.xlu0 %5096, %v4726
      %v5098 = vpop.permute.xlu0 %5097
      %5099 = vset.pattern.permute.xlu0 0
      %5100 = vperm.xlu0 %5099, %v4727
      %v5101 = vpop.permute.xlu0 %5100
      %5102 = vset.pattern.permute.xlu0 0
      %5103 = vperm.xlu0 %5102, %v4728
      %v5104 = vpop.permute.xlu0 %5103
      %5105 = vset.pattern.permute.xlu0 0
      %5106 = vperm.xlu0 %5105, %v4729
      %v5107 = vpop.permute.xlu0 %5106
      %5108 = vset.pattern.permute.xlu0 0
      %5109 = vperm.xlu0 %5108, %v4730
      %v5110 = vpop.permute.xlu0 %5109
      %5111 = vset.pattern.permute.xlu0 0
      %5112 = vperm.xlu0 %5111, %v4731
      %v5113 = vpop.permute.xlu0 %5112
      %5114 = vset.pattern.permute.xlu0 0
      %5115 = vperm.xlu0 %5114, %v4732
      %v5116 = vpop.permute.xlu0 %5115
      %5117 = vset.pattern.permute.xlu0 0
      %5118 = vperm.xlu0 %5117, %v4733
      %v5119 = vpop.permute.xlu0 %5118
      %5120 = vset.pattern.permute.xlu0 0
      %5121 = vperm.xlu0 %5120, %v4734
      %v5122 = vpop.permute.xlu0 %5121
      %5123 = vset.pattern.permute.xlu0 0
      %5124 = vperm.xlu0 %5123, %v4735
      %v5125 = vpop.permute.xlu0 %5124
      %5126 = vset.pattern.permute.xlu0 0
      %5127 = vperm.xlu0 %5126, %v4736
      %v5128 = vpop.permute.xlu0 %5127
      %5129 = vset.pattern.permute.xlu0 0
      %5130 = vperm.xlu0 %5129, %v4737
      %v5131 = vpop.permute.xlu0 %5130
      %5132 = vset.pattern.permute.xlu0 0
      %5133 = vperm.xlu0 %5132, %v4738
      %v5134 = vpop.permute.xlu0 %5133
      %5135 = vset.pattern.permute.xlu0 0
      %5136 = vperm.xlu0 %5135, %v4739
      %v5137 = vpop.permute.xlu0 %5136
      %5138 = vset.pattern.permute.xlu0 0
      %5139 = vperm.xlu0 %5138, %v4740
      %v5140 = vpop.permute.xlu0 %5139
      %5141 = vset.pattern.permute.xlu0 0
      %5142 = vperm.xlu0 %5141, %v4741
      %v5143 = vpop.permute.xlu0 %5142
      %5144 = vset.pattern.permute.xlu0 0
      %5145 = vperm.xlu0 %5144, %v4742
      %v5146 = vpop.permute.xlu0 %5145
      %5147 = vset.pattern.permute.xlu0 0
      %5148 = vperm.xlu0 %5147, %v4743
      %v5149 = vpop.permute.xlu0 %5148
      %5150 = vset.pattern.permute.xlu0 0
      %5151 = vperm.xlu0 %5150, %v4744
      %v5152 = vpop.permute.xlu0 %5151
      %5153 = vset.pattern.permute.xlu0 0
      %5154 = vperm.xlu0 %5153, %v4745
      %v5155 = vpop.permute.xlu0 %5154
      %5156 = vset.pattern.permute.xlu0 0
      %5157 = vperm.xlu0 %5156, %v4746
      %v5158 = vpop.permute.xlu0 %5157
      %5159 = vset.pattern.permute.xlu0 0
      %5160 = vperm.xlu0 %5159, %v4747
      %v5161 = vpop.permute.xlu0 %5160
      %5162 = vset.pattern.permute.xlu0 0
      %5163 = vperm.xlu0 %5162, %v4748
      %v5164 = vpop.permute.xlu0 %5163
      %5165 = vset.pattern.permute.xlu0 0
      %5166 = vperm.xlu0 %5165, %v4749
      %v5167 = vpop.permute.xlu0 %5166
      %5168 = vset.pattern.permute.xlu0 0
      %5169 = vperm.xlu0 %5168, %v4750
      %v5170 = vpop.permute.xlu0 %5169
      %5171 = vset.pattern.permute.xlu0 0
      %5172 = vperm.xlu0 %5171, %v4751
      %v5173 = vpop.permute.xlu0 %5172
      %5174 = vset.pattern.permute.xlu0 0
      %5175 = vperm.xlu0 %5174, %v4752
      %v5176 = vpop.permute.xlu0 %5175
      %5177 = vset.pattern.permute.xlu0 0
      %5178 = vperm.xlu0 %5177, %v4753
      %v5179 = vpop.permute.xlu0 %5178
      %5180 = vset.pattern.permute.xlu0 0
      %5181 = vperm.xlu0 %5180, %v4754
      %v5182 = vpop.permute.xlu0 %5181
      %5183 = vset.pattern.permute.xlu0 0
      %5184 = vperm.xlu0 %5183, %v4755
      %v5185 = vpop.permute.xlu0 %5184
      %5186 = vset.pattern.permute.xlu0 0
      %5187 = vperm.xlu0 %5186, %v4756
      %v5188 = vpop.permute.xlu0 %5187
      %5189 = vset.pattern.permute.xlu0 0
      %5190 = vperm.xlu0 %5189, %v4757
      %v5191 = vpop.permute.xlu0 %5190
      %5192 = vset.pattern.permute.xlu0 0
      %5193 = vperm.xlu0 %5192, %v4758
      %v5194 = vpop.permute.xlu0 %5193
      %5195 = vset.pattern.permute.xlu0 0
      %5196 = vperm.xlu0 %5195, %v4759
      %v5197 = vpop.permute.xlu0 %5196
      %5198 = vset.pattern.permute.xlu0 0
      %5199 = vperm.xlu0 %5198, %v4760
      %v5200 = vpop.permute.xlu0 %5199
      %5201 = vset.pattern.permute.xlu0 0
      %5202 = vperm.xlu0 %5201, %v4761
      %v5203 = vpop.permute.xlu0 %5202
      %5204 = vset.pattern.permute.xlu0 0
      %5205 = vperm.xlu0 %5204, %v4762
      %v5206 = vpop.permute.xlu0 %5205
      %5207 = vset.pattern.permute.xlu0 0
      %5208 = vperm.xlu0 %5207, %v4763
      %v5209 = vpop.permute.xlu0 %5208
      %5210 = vset.pattern.permute.xlu0 0
      %5211 = vperm.xlu0 %5210, %v4764
      %v5212 = vpop.permute.xlu0 %5211
      %5213 = vset.pattern.permute.xlu0 0
      %5214 = vperm.xlu0 %5213, %v4765
      %v5215 = vpop.permute.xlu0 %5214
      %5216 = vset.pattern.permute.xlu0 0
      %5217 = vperm.xlu0 %5216, %v4766
      %v5218 = vpop.permute.xlu0 %5217
      %5219 = vset.pattern.permute.xlu0 0
      %5220 = vperm.xlu0 %5219, %v4767
      %v5221 = vpop.permute.xlu0 %5220
      %5222 = vset.pattern.permute.xlu0 0
      %5223 = vperm.xlu0 %5222, %v4768
      %v5224 = vpop.permute.xlu0 %5223
      %5225 = vset.pattern.permute.xlu0 0
      %5226 = vperm.xlu0 %5225, %v4769
      %v5227 = vpop.permute.xlu0 %5226
      %5228 = vset.pattern.permute.xlu0 0
      %5229 = vperm.xlu0 %5228, %v4770
      %v5230 = vpop.permute.xlu0 %5229
      %5231 = vset.pattern.permute.xlu0 0
      %5232 = vperm.xlu0 %5231, %v4771
      %v5233 = vpop.permute.xlu0 %5232
      %5234 = vset.pattern.permute.xlu0 0
      %5235 = vperm.xlu0 %5234, %v4772
      %v5236 = vpop.permute.xlu0 %5235
      %5237 = vset.pattern.permute.xlu0 0
      %5238 = vperm.xlu0 %5237, %v4773
      %v5239 = vpop.permute.xlu0 %5238
      %5240 = vset.pattern.permute.xlu0 0
      %5241 = vperm.xlu0 %5240, %v4774
      %v5242 = vpop.permute.xlu0 %5241
      %5243 = vset.pattern.permute.xlu0 0
      %5244 = vperm.xlu0 %5243, %v4775
      %v5245 = vpop.permute.xlu0 %5244
      %5246 = vset.pattern.permute.xlu0 0
      %5247 = vperm.xlu0 %5246, %v4776
      %v5248 = vpop.permute.xlu0 %5247
      %5249 = vset.pattern.permute.xlu0 0
      %5250 = vperm.xlu0 %5249, %v4777
      %v5251 = vpop.permute.xlu0 %5250
      %5252 = vset.pattern.permute.xlu0 0
      %5253 = vperm.xlu0 %5252, %v4778
      %v5254 = vpop.permute.xlu0 %5253
      %5255 = vset.pattern.permute.xlu0 0
      %5256 = vperm.xlu0 %5255, %v4779
      %v5257 = vpop.permute.xlu0 %5256
      %5258 = vset.pattern.permute.xlu0 0
      %5259 = vperm.xlu0 %5258, %v4780
      %v5260 = vpop.permute.xlu0 %5259
      %5261 = vset.pattern.permute.xlu0 0
      %5262 = vperm.xlu0 %5261, %v4781
      %v5263 = vpop.permute.xlu0 %5262
      %5264 = vset.pattern.permute.xlu0 0
      %5265 = vperm.xlu0 %5264, %v4782
      %v5266 = vpop.permute.xlu0 %5265
      %5267 = vset.pattern.permute.xlu0 0
      %5268 = vperm.xlu0 %5267, %v4783
      %v5269 = vpop.permute.xlu0 %5268
      %5270 = vset.pattern.permute.xlu0 0
      %5271 = vperm.xlu0 %5270, %v4784
      %v5272 = vpop.permute.xlu0 %5271
      %5273 = vset.pattern.permute.xlu0 0
      %5274 = vperm.xlu0 %5273, %v4785
      %v5275 = vpop.permute.xlu0 %5274
      %5276 = vset.pattern.permute.xlu0 0
      %5277 = vperm.xlu0 %5276, %v4786
      %v5278 = vpop.permute.xlu0 %5277
      %5279 = vset.pattern.permute.xlu0 0
      %5280 = vperm.xlu0 %5279, %v4787
      %v5281 = vpop.permute.xlu0 %5280
      %5282 = vset.pattern.permute.xlu0 0
      %5283 = vperm.xlu0 %5282, %v4788
      %v5284 = vpop.permute.xlu0 %5283
      %5285 = vset.pattern.permute.xlu0 0
      %5286 = vperm.xlu0 %5285, %v4789
      %v5287 = vpop.permute.xlu0 %5286
      %5288 = vset.pattern.permute.xlu0 0
      %5289 = vperm.xlu0 %5288, %v4790
      %v5290 = vpop.permute.xlu0 %5289
      %5291 = vset.pattern.permute.xlu0 0
      %5292 = vperm.xlu0 %5291, %v4791
      %v5293 = vpop.permute.xlu0 %5292
      %5294 = vset.pattern.permute.xlu0 0
      %5295 = vperm.xlu0 %5294, %v4792
      %v5296 = vpop.permute.xlu0 %5295
      %5297 = vset.pattern.permute.xlu0 0
      %5298 = vperm.xlu0 %5297, %v4793
      %v5299 = vpop.permute.xlu0 %5298
      %5300 = vset.pattern.permute.xlu0 0
      %5301 = vperm.xlu0 %5300, %v4794
      %v5302 = vpop.permute.xlu0 %5301
      %5303 = vset.pattern.permute.xlu0 0
      %5304 = vperm.xlu0 %5303, %v4795
      %v5305 = vpop.permute.xlu0 %5304
      %5306 = vset.pattern.permute.xlu0 0
      %5307 = vperm.xlu0 %5306, %v4796
      %v5308 = vpop.permute.xlu0 %5307
      %v5309 = vlaneseq
      %v5310 = vand.u32 %v5309, 127
      %v5311 = vperm.slane %v4927, %v5310
      %v5312 = vadd.s32 %v5310, 4294967288
      %v5313 = vperm.slane %v4930, %v5312
      %vm5314 = vcmask 130112
      %v5315 = vsel %vm5314, %v5313, %v5311
      %v5316 = vadd.s32 %v5310, 4294967280
      %v5317 = vperm.slane %v4933, %v5316
      %vm5318 = vcmask 195712
      %v5319 = vsel %vm5318, %v5317, %v5315
      %v5320 = vadd.s32 %v5310, 4294967272
      %v5321 = vperm.slane %v4936, %v5320
      %vm5322 = vcmask 261312
      %v5323 = vsel %vm5322, %v5321, %v5319
      %v5324 = vperm.slane %v4939, %v5310
      %v5325 = vperm.slane %v4942, %v5312
      %v5326 = vsel %vm5314, %v5325, %v5324
      %v5327 = vperm.slane %v4945, %v5316
      %v5328 = vsel %vm5318, %v5327, %v5326
      %v5329 = vperm.slane %v4948, %v5320
      %v5330 = vsel %vm5322, %v5329, %v5328
      %v5331 = vperm.slane %v4951, %v5310
      %v5332 = vperm.slane %v4954, %v5312
      %v5333 = vsel %vm5314, %v5332, %v5331
      %v5334 = vperm.slane %v4957, %v5316
      %v5335 = vsel %vm5318, %v5334, %v5333
      %v5336 = vperm.slane %v4960, %v5320
      %v5337 = vsel %vm5322, %v5336, %v5335
      %v5338 = vperm.slane %v4963, %v5310
      %v5339 = vperm.slane %v4966, %v5312
      %v5340 = vsel %vm5314, %v5339, %v5338
      %v5341 = vperm.slane %v4969, %v5316
      %v5342 = vsel %vm5318, %v5341, %v5340
      %v5343 = vperm.slane %v4972, %v5320
      %v5344 = vsel %vm5322, %v5343, %v5342
      %v5345 = vperm.slane %v4975, %v5310
      %v5346 = vperm.slane %v4978, %v5312
      %v5347 = vsel %vm5314, %v5346, %v5345
      %v5348 = vperm.slane %v4981, %v5316
      %v5349 = vsel %vm5318, %v5348, %v5347
      %v5350 = vperm.slane %v4984, %v5320
      %v5351 = vsel %vm5322, %v5350, %v5349
      %v5352 = vperm.slane %v4987, %v5310
      %v5353 = vperm.slane %v4990, %v5312
      %v5354 = vsel %vm5314, %v5353, %v5352
      %v5355 = vperm.slane %v4993, %v5316
      %v5356 = vsel %vm5318, %v5355, %v5354
      %v5357 = vperm.slane %v4996, %v5320
      %v5358 = vsel %vm5322, %v5357, %v5356
      %v5359 = vperm.slane %v4999, %v5310
      %v5360 = vperm.slane %v5002, %v5312
      %v5361 = vsel %vm5314, %v5360, %v5359
      %v5362 = vperm.slane %v5005, %v5316
      %v5363 = vsel %vm5318, %v5362, %v5361
      %v5364 = vperm.slane %v5008, %v5320
      %v5365 = vsel %vm5322, %v5364, %v5363
      %v5366 = vperm.slane %v5011, %v5310
      %v5367 = vperm.slane %v5014, %v5312
      %v5368 = vsel %vm5314, %v5367, %v5366
      %v5369 = vperm.slane %v5017, %v5316
      %v5370 = vsel %vm5318, %v5369, %v5368
      %v5371 = vperm.slane %v5020, %v5320
      %v5372 = vsel %vm5322, %v5371, %v5370
      %v5373 = vperm.slane %v5023, %v5310
      %v5374 = vperm.slane %v5026, %v5312
      %v5375 = vsel %vm5314, %v5374, %v5373
      %v5376 = vperm.slane %v5029, %v5316
      %v5377 = vsel %vm5318, %v5376, %v5375
      %v5378 = vperm.slane %v5032, %v5320
      %v5379 = vsel %vm5322, %v5378, %v5377
      %v5380 = vperm.slane %v5035, %v5310
      %v5381 = vperm.slane %v5038, %v5312
      %v5382 = vsel %vm5314, %v5381, %v5380
      %v5383 = vperm.slane %v5041, %v5316
      %v5384 = vsel %vm5318, %v5383, %v5382
      %v5385 = vperm.slane %v5044, %v5320
      %v5386 = vsel %vm5322, %v5385, %v5384
      %v5387 = vperm.slane %v5047, %v5310
      %v5388 = vperm.slane %v5050, %v5312
      %v5389 = vsel %vm5314, %v5388, %v5387
      %v5390 = vperm.slane %v5053, %v5316
      %v5391 = vsel %vm5318, %v5390, %v5389
      %v5392 = vperm.slane %v5056, %v5320
      %v5393 = vsel %vm5322, %v5392, %v5391
      %v5394 = vperm.slane %v5059, %v5310
      %v5395 = vperm.slane %v5062, %v5312
      %v5396 = vsel %vm5314, %v5395, %v5394
      %v5397 = vperm.slane %v5065, %v5316
      %v5398 = vsel %vm5318, %v5397, %v5396
      %v5399 = vperm.slane %v5068, %v5320
      %v5400 = vsel %vm5322, %v5399, %v5398
      %v5401 = vperm.slane %v5071, %v5310
      %v5402 = vperm.slane %v5074, %v5312
      %v5403 = vsel %vm5314, %v5402, %v5401
      %v5404 = vperm.slane %v5077, %v5316
      %v5405 = vsel %vm5318, %v5404, %v5403
      %v5406 = vperm.slane %v5080, %v5320
      %v5407 = vsel %vm5322, %v5406, %v5405
      %v5408 = vperm.slane %v5083, %v5310
      %v5409 = vperm.slane %v5086, %v5312
      %v5410 = vsel %vm5314, %v5409, %v5408
      %v5411 = vperm.slane %v5089, %v5316
      %v5412 = vsel %vm5318, %v5411, %v5410
      %v5413 = vperm.slane %v5092, %v5320
      %v5414 = vsel %vm5322, %v5413, %v5412
      %v5415 = vperm.slane %v5095, %v5310
      %v5416 = vperm.slane %v5098, %v5312
      %v5417 = vsel %vm5314, %v5416, %v5415
      %v5418 = vperm.slane %v5101, %v5316
      %v5419 = vsel %vm5318, %v5418, %v5417
      %v5420 = vperm.slane %v5104, %v5320
      %v5421 = vsel %vm5322, %v5420, %v5419
      %v5422 = vperm.slane %v5107, %v5310
      %v5423 = vperm.slane %v5110, %v5312
      %v5424 = vsel %vm5314, %v5423, %v5422
      %v5425 = vperm.slane %v5113, %v5316
      %v5426 = vsel %vm5318, %v5425, %v5424
      %v5427 = vperm.slane %v5116, %v5320
      %v5428 = vsel %vm5322, %v5427, %v5426
      %v5429 = vperm.slane %v5119, %v5310
      %v5430 = vperm.slane %v5122, %v5312
      %v5431 = vsel %vm5314, %v5430, %v5429
      %v5432 = vperm.slane %v5125, %v5316
      %v5433 = vsel %vm5318, %v5432, %v5431
      %v5434 = vperm.slane %v5128, %v5320
      %v5435 = vsel %vm5322, %v5434, %v5433
      %v5436 = vperm.slane %v5131, %v5310
      %v5437 = vperm.slane %v5134, %v5312
      %v5438 = vsel %vm5314, %v5437, %v5436
      %v5439 = vperm.slane %v5137, %v5316
      %v5440 = vsel %vm5318, %v5439, %v5438
      %v5441 = vperm.slane %v5140, %v5320
      %v5442 = vsel %vm5322, %v5441, %v5440
      %v5443 = vperm.slane %v5143, %v5310
      %v5444 = vperm.slane %v5146, %v5312
      %v5445 = vsel %vm5314, %v5444, %v5443
      %v5446 = vperm.slane %v5149, %v5316
      %v5447 = vsel %vm5318, %v5446, %v5445
      %v5448 = vperm.slane %v5152, %v5320
      %v5449 = vsel %vm5322, %v5448, %v5447
      %v5450 = vperm.slane %v5155, %v5310
      %v5451 = vperm.slane %v5158, %v5312
      %v5452 = vsel %vm5314, %v5451, %v5450
      %v5453 = vperm.slane %v5161, %v5316
      %v5454 = vsel %vm5318, %v5453, %v5452
      %v5455 = vperm.slane %v5164, %v5320
      %v5456 = vsel %vm5322, %v5455, %v5454
      %v5457 = vperm.slane %v5167, %v5310
      %v5458 = vperm.slane %v5170, %v5312
      %v5459 = vsel %vm5314, %v5458, %v5457
      %v5460 = vperm.slane %v5173, %v5316
      %v5461 = vsel %vm5318, %v5460, %v5459
      %v5462 = vperm.slane %v5176, %v5320
      %v5463 = vsel %vm5322, %v5462, %v5461
      %v5464 = vperm.slane %v5179, %v5310
      %v5465 = vperm.slane %v5182, %v5312
      %v5466 = vsel %vm5314, %v5465, %v5464
      %v5467 = vperm.slane %v5185, %v5316
      %v5468 = vsel %vm5318, %v5467, %v5466
      %v5469 = vperm.slane %v5188, %v5320
      %v5470 = vsel %vm5322, %v5469, %v5468
      %v5471 = vperm.slane %v5191, %v5310
      %v5472 = vperm.slane %v5194, %v5312
      %v5473 = vsel %vm5314, %v5472, %v5471
      %v5474 = vperm.slane %v5197, %v5316
      %v5475 = vsel %vm5318, %v5474, %v5473
      %v5476 = vperm.slane %v5200, %v5320
      %v5477 = vsel %vm5322, %v5476, %v5475
      %v5478 = vperm.slane %v5203, %v5310
      %v5479 = vperm.slane %v5206, %v5312
      %v5480 = vsel %vm5314, %v5479, %v5478
      %v5481 = vperm.slane %v5209, %v5316
      %v5482 = vsel %vm5318, %v5481, %v5480
      %v5483 = vperm.slane %v5212, %v5320
      %v5484 = vsel %vm5322, %v5483, %v5482
      %v5485 = vperm.slane %v5215, %v5310
      %v5486 = vperm.slane %v5218, %v5312
      %v5487 = vsel %vm5314, %v5486, %v5485
      %v5488 = vperm.slane %v5221, %v5316
      %v5489 = vsel %vm5318, %v5488, %v5487
      %v5490 = vperm.slane %v5224, %v5320
      %v5491 = vsel %vm5322, %v5490, %v5489
      %v5492 = vperm.slane %v5227, %v5310
      %v5493 = vperm.slane %v5230, %v5312
      %v5494 = vsel %vm5314, %v5493, %v5492
      %v5495 = vperm.slane %v5233, %v5316
      %v5496 = vsel %vm5318, %v5495, %v5494
      %v5497 = vperm.slane %v5236, %v5320
      %v5498 = vsel %vm5322, %v5497, %v5496
      %v5499 = vperm.slane %v5239, %v5310
      %v5500 = vperm.slane %v5242, %v5312
      %v5501 = vsel %vm5314, %v5500, %v5499
      %v5502 = vperm.slane %v5245, %v5316
      %v5503 = vsel %vm5318, %v5502, %v5501
      %v5504 = vperm.slane %v5248, %v5320
      %v5505 = vsel %vm5322, %v5504, %v5503
      %v5506 = vperm.slane %v5251, %v5310
      %v5507 = vperm.slane %v5254, %v5312
      %v5508 = vsel %vm5314, %v5507, %v5506
      %v5509 = vperm.slane %v5257, %v5316
      %v5510 = vsel %vm5318, %v5509, %v5508
      %v5511 = vperm.slane %v5260, %v5320
      %v5512 = vsel %vm5322, %v5511, %v5510
      %v5513 = vperm.slane %v5263, %v5310
      %v5514 = vperm.slane %v5266, %v5312
      %v5515 = vsel %vm5314, %v5514, %v5513
      %v5516 = vperm.slane %v5269, %v5316
      %v5517 = vsel %vm5318, %v5516, %v5515
      %v5518 = vperm.slane %v5272, %v5320
      %v5519 = vsel %vm5322, %v5518, %v5517
      %v5520 = vperm.slane %v5275, %v5310
      %v5521 = vperm.slane %v5278, %v5312
      %v5522 = vsel %vm5314, %v5521, %v5520
      %v5523 = vperm.slane %v5281, %v5316
      %v5524 = vsel %vm5318, %v5523, %v5522
      %v5525 = vperm.slane %v5284, %v5320
      %v5526 = vsel %vm5322, %v5525, %v5524
      %v5527 = vperm.slane %v5287, %v5310
      %v5528 = vperm.slane %v5290, %v5312
      %v5529 = vsel %vm5314, %v5528, %v5527
      %v5530 = vperm.slane %v5293, %v5316
      %v5531 = vsel %vm5318, %v5530, %v5529
      %v5532 = vperm.slane %v5296, %v5320
      %v5533 = vsel %vm5322, %v5532, %v5531
      %v5534 = vperm.slane %v5299, %v5310
      %v5535 = vperm.slane %v5302, %v5312
      %v5536 = vsel %vm5314, %v5535, %v5534
      %v5537 = vperm.slane %v5305, %v5316
      %v5538 = vsel %vm5318, %v5537, %v5536
      %v5539 = vperm.slane %v5308, %v5320
      %v5540 = vsel %vm5322, %v5539, %v5538
      %vm5541 = vcmask 1041409
      %v5542 = vsel %vm5541, %v5330, %v5323
      %vm5543 = vcmask 1042434
      %v5544 = vsel %vm5543, %v5337, %v5542
      %vm5545 = vcmask 1043459
      %v5546 = vsel %vm5545, %v5344, %v5544
      %vm5547 = vcmask 1044484
      %v5548 = vsel %vm5547, %v5351, %v5546
      %vm5549 = vcmask 1045509
      %v5550 = vsel %vm5549, %v5358, %v5548
      %vm5551 = vcmask 1046534
      %v5552 = vsel %vm5551, %v5365, %v5550
      %vm5553 = vcmask 1047559
      %v5554 = vsel %vm5553, %v5372, %v5552
      %v5555 = vsel %vm5541, %v5386, %v5379
      %v5556 = vsel %vm5543, %v5393, %v5555
      %v5557 = vsel %vm5545, %v5400, %v5556
      %v5558 = vsel %vm5547, %v5407, %v5557
      %v5559 = vsel %vm5549, %v5414, %v5558
      %v5560 = vsel %vm5551, %v5421, %v5559
      %v5561 = vsel %vm5553, %v5428, %v5560
      %v5562 = vsel %vm5541, %v5442, %v5435
      %v5563 = vsel %vm5543, %v5449, %v5562
      %v5564 = vsel %vm5545, %v5456, %v5563
      %v5565 = vsel %vm5547, %v5463, %v5564
      %v5566 = vsel %vm5549, %v5470, %v5565
      %v5567 = vsel %vm5551, %v5477, %v5566
      %v5568 = vsel %vm5553, %v5484, %v5567
      %v5569 = vsel %vm5541, %v5498, %v5491
      %v5570 = vsel %vm5543, %v5505, %v5569
      %v5571 = vsel %vm5545, %v5512, %v5570
      %v5572 = vsel %vm5547, %v5519, %v5571
      %v5573 = vsel %vm5549, %v5526, %v5572
      %v5574 = vsel %vm5551, %v5533, %v5573
      %v5575 = vsel %vm5553, %v5540, %v5574
      %vm5580 = vcmask 261120
      %5581 = vst.msk [vmem:[%s223] sm:$0xff] %vm5580, %v5554
      %5582 = vst.msk [vmem:[%s223 + $0x8] sm:$0xff] %vm5580, %v5561
      %5583 = vst.msk [vmem:[%s223 + $0x10] sm:$0xff] %vm5580, %v5568
      %5584 = vst.msk [vmem:[%s223 + $0x18] sm:$0xff] %vm5580, %v5575
      %s5585 = smul.u32 %s21, 4
      %s5586 = sadd.s32 %s5585, %s20
      %p5587 = scmp.lt.s32.totalorder %s5586, 7
      %s5588 = scalar_select %p5587, %s5586, 7
      %s5589 = smul.addr %s5588, 4
      %s5590 = smul.addr %s5589, 8
      %s5591 = scalar_lea.vmem %s3, %s5590
      // Predicated region
      $region33: #{conditional_generator_forward.9} parent=31 // pred_check
        %p5592 = pneg %p127
      $region34: #{conditional_generator_forward.9} parent=31 // pred_check_branch
        %5594 = sbr.rel (%p5592) target = $region36
      $region35: #{conditional_generator_forward.9} parent=31 // pred_region
        %s5595 = smul.u32 %s21, 4
        %s5596 = sadd.s32 %s5595, %s20
      $region36: #{conditional_generator_forward.9} parent=31 // pred_fallthru
        _
    $region32: #{conditional_generator_forward.9} parent=5 // pred_fallthru
      _
    %p5597 = scmp.le.s32.totalorder 2, %s11
    // Predicated region
    $region37: #{conditional_generator_forward.9} parent=5 // pred_check
      %p5598 = pneg %p5597
    $region38: #{conditional_generator_forward.9} parent=5 // pred_check_branch
      %5600 = sbr.rel (%p5598) target = $region40
    $region39: #{conditional_generator_forward.9} parent=5 // pred_region
      %s5601 = ssub.s32 %s11, 2
      // Predicated region
      $region41: #{conditional_generator_forward.9} parent=39 // pred_check
        %p5602 = pneg %p133
      $region42: #{conditional_generator_forward.9} parent=39 // pred_check_branch
        %5604 = sbr.rel (%p5602) target = $region44
      $region43: #{conditional_generator_forward.9} parent=39 // pred_region
        %s5605 = smul.u32 %s23, 4
        %s5606 = sadd.s32 %s5605, %s22
        %p5607 = scmp.lt.s32.totalorder %s5606, 7
        %s5608 = scalar_select %p5607, %s5606, 7
        %s5609 = smul.addr %s5608, 4
        %s5610 = smul.addr %s5609, 8
        %s5611 = scalar_lea.vmem %s3, %s5610
      $region44: #{conditional_generator_forward.9} parent=39 // pred_fallthru
        _
    $region40: #{conditional_generator_forward.9} parent=5 // pred_fallthru
      _
  $region6: #{conditional_generator_forward.9} parent=0 // loop_footer
    %s15 = sadd.s32 1, %s11
  $region7: #{conditional_generator_forward.9} parent=0 // loop_footer_branch
    %10 = sbr.rel target = $region3
  $region8: #{conditional_generator_forward.9} parent=0 // loop_exit
    _

</llo_original>
